<compile_context>
chip_gen: v5e
topology: v5e:2x2
jax: 0.10.0
libtpu: 0.0.40
codegen_flags: <defaults>
</compile_context>

<pallas_src>
import functools

import jax
import jax.numpy as jnp
from jax.experimental import pallas as pl
from jax.experimental.pallas import tpu as pltpu


def _round_up(x, m):
    return (x + m - 1) // m * m


# ----------------------------------------------------------------------------
# Pallas kernels
# ----------------------------------------------------------------------------

def _gemm_act_kernel(a_ref, w_ref, b_ref, o_ref, *, relu):
    """out = act(A @ W + b); BN already folded into W/b."""
    acc = jnp.dot(a_ref[...], w_ref[...], preferred_element_type=jnp.float32)
    acc = acc + b_ref[...]
    if relu:
        acc = jnp.maximum(acc, 0.0)
    o_ref[...] = acc.astype(o_ref.dtype)


def _gemm_res_relu_kernel(a_ref, w_ref, b_ref, r_ref, o_ref):
    """out = relu(A @ W + b + residual): conv2+bn2 + identity shortcut + relu."""
    acc = jnp.dot(a_ref[...], w_ref[...], preferred_element_type=jnp.float32)
    acc = acc + b_ref[...] + r_ref[...].astype(jnp.float32)
    o_ref[...] = jnp.maximum(acc, 0.0).astype(o_ref.dtype)


def _gemm_gemm_relu_kernel(a_ref, w_ref, b_ref, a2_ref, w2_ref, b2_ref, o_ref):
    """out = relu(A@W + b + A2@W2 + b2): conv2+bn2 + downsample(1x1 conv+bn)."""
    acc = jnp.dot(a_ref[...], w_ref[...], preferred_element_type=jnp.float32)
    acc = acc + jnp.dot(a2_ref[...], w2_ref[...],
                        preferred_element_type=jnp.float32)
    acc = acc + b_ref[...] + b2_ref[...]
    o_ref[...] = jnp.maximum(acc, 0.0).astype(o_ref.dtype)


def _maxpool_3x3_s2_kernel(x_ref, o_ref, *, oh, ow):
    """x_ref: (4, hp, wp, N, C) phase-split padded activation.

    Phase p = (kh%2)*2 + (kw%2); the nine shifted windows are read directly
    from the (single) input ref — all offsets are on leading, tile-granular
    dims, so no unaligned sublane access and no 9x window duplication in HBM.
    """
    acc = None
    for kh in range(3):
        for kw in range(3):
            p = (kh % 2) * 2 + (kw % 2)
            win = x_ref[p, pl.ds(kh // 2, oh), pl.ds(kw // 2, ow), :, :]
            acc = win if acc is None else jnp.maximum(acc, win)
    o_ref[...] = acc.astype(o_ref.dtype)


def _avgpool_fc_kernel(x_ref, w_ref, b_ref, o_ref):
    """Fused global-average-pool + fc: logits = mean_hw(x) @ W + b."""
    pooled = jnp.mean(x_ref[...].astype(jnp.float32), axis=1)        # (Nb, C)
    o_ref[...] = (
        jnp.dot(pooled.astype(w_ref.dtype), w_ref[...],
                preferred_element_type=jnp.float32)
        + b_ref[...]
    )


# ----------------------------------------------------------------------------
# Pallas wrappers
# ----------------------------------------------------------------------------

def _gemm_tiling(m):
    """Row tiling: pad M only to a multiple of 8; >=2 tiles when possible so
    both v7x TensorCores get a grid iteration (no-op on v5e/v6e)."""
    mp8 = _round_up(max(m, 1), 8)
    if mp8 <= 8:
        tm = mp8
    elif mp8 <= 256:
        tm = _round_up(mp8 // 2, 8)
    else:
        tm = 128
    mp = _round_up(mp8, tm)
    return tm, mp


def fused_conv_gemm(a, w, b, *, relu=True, residual=None,
                    a2=None, w2=None, b2=None, n_out, out_dtype=jnp.bfloat16):
    """out = epilogue(A @ W + b), epilogue fuses ReLU / residual / 2nd GEMM.

    a: (M, K) bf16 im2col patches.  w: (Kp, Np) bf16, b: (1, Np) f32 — BN
    already folded and padded at init.  residual: (M, n_out) identity shortcut.
    a2/w2/b2: second GEMM (downsample conv1x1+bn shortcut).  Returns
    (M, n_out) out_dtype.
    """
    M, K = a.shape
    Kp, Np = w.shape
    tm, Mp = _gemm_tiling(M)
    a_p = jnp.pad(a, ((0, Mp - M), (0, Kp - K)))

    in_arrays = [a_p, w, b]
    in_specs = [
        pl.BlockSpec((tm, Kp), lambda i: (i, 0)),
        pl.BlockSpec((Kp, Np), lambda i: (0, 0)),
        pl.BlockSpec((1, Np), lambda i: (0, 0)),
    ]
    if a2 is not None:
        M2, K2 = a2.shape
        K2p = w2.shape[0]
        a2_p = jnp.pad(a2, ((0, Mp - M2), (0, K2p - K2)))
        in_arrays += [a2_p, w2, b2]
        in_specs += [
            pl.BlockSpec((tm, K2p), lambda i: (i, 0)),
            pl.BlockSpec((K2p, Np), lambda i: (0, 0)),
            pl.BlockSpec((1, Np), lambda i: (0, 0)),
        ]
        kernel = _gemm_gemm_relu_kernel
    elif residual is not None:
        r_p = jnp.pad(residual, ((0, Mp - residual.shape[0]),
                                 (0, Np - residual.shape[1])))
        in_arrays += [r_p]
        in_specs += [pl.BlockSpec((tm, Np), lambda i: (i, 0))]
        kernel = _gemm_res_relu_kernel
    else:
        kernel = functools.partial(_gemm_act_kernel, relu=relu)

    out = pl.pallas_call(
        kernel,
        out_shape=jax.ShapeDtypeStruct((Mp, Np), out_dtype),
        grid=(Mp // tm,),
        in_specs=in_specs,
        out_specs=pl.BlockSpec((tm, Np), lambda i: (i, 0)),
        compiler_params=pltpu.CompilerParams(
            dimension_semantics=("parallel",)),
    )(*in_arrays)
    return out[:M, :n_out]


def maxpool_3x3_s2_p1(x):
    """3x3 stride-2 pad-1 max pool.  x: (N, H, W, C), post-ReLU, so zero
    padding is equivalent to -inf padding here."""
    N, H, W, C = x.shape
    assert H % 2 == 0 and W % 2 == 0
    OH, OW = (H + 2 - 3) // 2 + 1, (W + 2 - 3) // 2 + 1
    xp = jnp.pad(x, ((0, 0), (1, 1), (1, 1), (0, 0)))
    hp, wp = (H + 2) // 2, (W + 2) // 2
    # Phase split (same total bytes as xp — no 9x window duplication):
    # phases[a*2+b, r, s, n, c] = xp[n, 2r+a, 2s+b, c]
    phases = (xp.reshape(N, hp, 2, wp, 2, C)
                .transpose(2, 4, 1, 3, 0, 5)
                .reshape(4, hp, wp, N, C))
    out = pl.pallas_call(
        functools.partial(_maxpool_3x3_s2_kernel, oh=OH, ow=OW),
        out_shape=jax.ShapeDtypeStruct((OH, OW, N, C), x.dtype),
        grid=(1,),
        in_specs=[pl.BlockSpec((4, hp, wp, N, C),
                               lambda i: (0, 0, 0, 0, 0))],
        out_specs=pl.BlockSpec((OH, OW, N, C), lambda i: (0, 0, 0, 0)),
    )(phases)
    return jnp.transpose(out, (2, 0, 1, 3))          # -> (N, OH, OW, C)


def pallas_avgpool_fc(x_nhwc, fc):
    """Fused global average pool + final Linear(n_features -> n_class)."""
    N, H, W, C = x_nhwc.shape
    Np = fc["w"].shape[1]
    Nb = _round_up(N, 8)
    x3 = jnp.pad(x_nhwc.reshape(N, H * W, C), ((0, Nb - N), (0, 0), (0, 0)))
    out = pl.pallas_call(
        _avgpool_fc_kernel,
        out_shape=jax.ShapeDtypeStruct((Nb, Np), jnp.float32),
        grid=(1,),
        in_specs=[
            pl.BlockSpec((Nb, H * W, C), lambda i: (0, 0, 0)),
            pl.BlockSpec((C, Np), lambda i: (0, 0)),
            pl.BlockSpec((1, Np), lambda i: (0, 0)),
        ],
        out_specs=pl.BlockSpec((Nb, Np), lambda i: (0, 0)),
    )(x3, fc["w"], fc["b"])
    return out[:N, :fc["n_class"]]


# ----------------------------------------------------------------------------
# ResNet building blocks (im2col glue in plain JAX, compute in Pallas)
# ----------------------------------------------------------------------------

def im2col(x, kh, kw, stride, padding):
    """Extract conv patches -> (N*OH*OW, kh*kw*C).  Plain-JAX glue fused by XLA
    under jit.
    # TODO(synk): replace with in-kernel K-tap accumulation over shifted views
    # of the padded input to avoid materializing the patch matrix in HBM.
    """
    N, H, W, C = x.shape
    xp = jnp.pad(x, ((0, 0), (padding, padding), (padding, padding), (0, 0)))
    OH = (H + 2 * padding - kh) // stride + 1
    OW = (W + 2 * padding - kw) // stride + 1
    cols = []
    for i in range(kh):
        for j in range(kw):
            cols.append(xp[:, i:i + stride * (OH - 1) + 1:stride,
                           j:j + stride * (OW - 1) + 1:stride, :])
    a = jnp.concatenate(cols, axis=-1).reshape(N * OH * OW, kh * kw * C)
    return a, (N, OH, OW)


def basic_block(x, p):
    """timm BasicBlock: conv3x3+bn+relu, conv3x3+bn, (+shortcut), add, relu —
    realized as two fused Pallas GEMM calls."""
    N, H, W, C = x.shape
    stride = p["stride"]

    c1 = p["conv1"]
    a1, (_, oh, ow) = im2col(x, c1["kh"], c1["kw"], stride, 1)
    h = fused_conv_gemm(a1, c1["w"], c1["b"], relu=True, n_out=c1["cout"])
    h = h.reshape(N, oh, ow, c1["cout"])

    c2 = p["conv2"]
    a_main, _ = im2col(h, c2["kh"], c2["kw"], 1, 1)
    if "down" in p:
        d = p["down"]
        a_sc, _ = im2col(x, d["kh"], d["kw"], stride, 0)   # decimated input
        y = fused_conv_gemm(a_main, c2["w"], c2["b"],
                            a2=a_sc, w2=d["w"], b2=d["b"], n_out=c2["cout"])
    else:
        y = fused_conv_gemm(a_main, c2["w"], c2["b"],
                            residual=x.reshape(N * H * W, C),
                            n_out=c2["cout"])
    return y.reshape(N, oh, ow, c2["cout"])


def resnet_forward(params, x_nchw):
    """NCHW in -> (N, n_class) logits out (eval mode; BN uses running stats)."""
    x = jnp.transpose(x_nchw, (0, 2, 3, 1)).astype(jnp.bfloat16)  # NHWC, bf16
    st = params["stem"]
    a, (n, oh, ow) = im2col(x, st["kh"], st["kw"], 2, 3)          # 7x7/2 pad 3
    x = fused_conv_gemm(a, st["w"], st["b"], relu=True, n_out=st["cout"])
    x = x.reshape(n, oh, ow, st["cout"])
    x = maxpool_3x3_s2_p1(x)
    for blocks in params["layers"]:
        for blk in blocks:
            x = basic_block(x, blk)
    return pallas_avgpool_fc(x, params["fc"])


# ----------------------------------------------------------------------------
# Deterministic parameter init: synthetic weights, BN folded at init time
# ----------------------------------------------------------------------------

def _fold_conv_bn(w_oihw, bn, eps=1e-5):
    """Fold eval-mode BatchNorm into the conv's GEMM weight/bias (once, at
    init): y = conv(x, W*s) + (beta - mean*s), s = gamma/sqrt(var+eps)."""
    O, I, KH, KW = w_oihw.shape
    scale = bn["gamma"] / jnp.sqrt(bn["var"] + eps)
    bias = bn["beta"] - bn["mean"] * scale
    w_mat = jnp.transpose(w_oihw, (2, 3, 1, 0)).reshape(KH * KW * I, O)
    w_mat = w_mat * scale[None, :]
    K = KH * KW * I
    Kp = _round_up(K, 128)
    Np = _round_up(O, 128)
    return {
        "w": jnp.pad(w_mat, ((0, Kp - K), (0, Np - O))).astype(jnp.bfloat16),
        "b": jnp.pad(bias, (0, Np - O)).reshape(1, Np).astype(jnp.float32),
        "kh": KH, "kw": KW, "cout": O,
    }


def init_resnet_params(key, in_ch=3, widths=(8, 16, 32, 64), n_class=2):
    keys = iter(jax.random.split(key, 256))

    def conv_w(o, i, k):
        fan_in = i * k * k
        return jax.random.normal(next(keys), (o, i, k, k), jnp.float32) \
            / jnp.sqrt(jnp.float32(fan_in))

    def bn_p(c):
        return dict(
            gamma=1.0 + 0.05 * jax.random.normal(next(keys), (c,), jnp.float32),
            beta=0.05 * jax.random.normal(next(keys), (c,), jnp.float32),
            mean=0.05 * jax.random.normal(next(keys), (c,), jnp.float32),
            var=1.0 + 0.05 * jnp.abs(
                jax.random.normal(next(keys), (c,), jnp.float32)),
        )

    params = {"stem": _fold_conv_bn(conv_w(widths[0], in_ch, 7),
                                    bn_p(widths[0]))}
    layers = []
    in_c = widths[0]
    for li, w in enumerate(widths):
        blocks = []
        for bi in range(2):                       # BasicBlock x [2, 2, 2, 2]
            stride = 2 if (li > 0 and bi == 0) else 1
            blk = {
                "conv1": _fold_conv_bn(conv_w(w, in_c, 3), bn_p(w)),
                "conv2": _fold_conv_bn(conv_w(w, w, 3), bn_p(w)),
                "stride": stride,
            }
            if stride != 1 or in_c != w:
                blk["down"] = _fold_conv_bn(conv_w(w, in_c, 1), bn_p(w))
            blocks.append(blk)
            in_c = w
        layers.append(blocks)
    params["layers"] = layers

    # Replaced head: nn.Linear(n_features, n_class).
    fc_w = jax.random.normal(next(keys), (n_class, in_c), jnp.float32) \
        / jnp.sqrt(jnp.float32(in_c))
    fc_b = 0.01 * jax.random.normal(next(keys), (n_class,), jnp.float32)
    Np = _round_up(n_class, 128)
    params["fc"] = {
        "w": jnp.pad(fc_w.T, ((0, 0), (0, Np - n_class))).astype(jnp.bfloat16),
        "b": jnp.pad(fc_b, (0, Np - n_class)).reshape(1, Np).astype(jnp.float32),
        "n_class": n_class,
    }
    return params


# ----------------------------------------------------------------------------

if __name__ == "__main__":
    key = jax.random.PRNGKey(0)
    pkey, xkey = jax.random.split(key)
    params = init_resnet_params(pkey, in_ch=3, widths=(8, 16, 32, 64), n_class=2)
    # Small NCHW input consistent with an ImageNet-style ResNet forward.
    x = jax.random.normal(xkey, (2, 3, 32, 32), jnp.float32)
    forward = jax.jit(functools.partial(resnet_forward, params))
    logits = forward(x)
    jax.block_until_ready(logits)
    assert logits.shape == (2, 2) and logits.dtype == jnp.float32
    print("KERNEL_OK")
</pallas_src>

<mosaic_0001>
module attributes {stable_mosaic.version = 11 : i64} {
  func.func @_gemm_act_kernel(%arg0: i32, %arg1: memref<128x256xbf16, #tpu.memory_space<vmem>>, %arg2: memref<256x128xbf16, #tpu.memory_space<vmem>>, %arg3: memref<1x128xf32, #tpu.memory_space<vmem>>, %arg4: memref<128x128xbf16, #tpu.memory_space<vmem>>) attributes {dimension_semantics = [#tpu.dimension_semantics<parallel>], iteration_bounds = array<i64: 4>, scalar_prefetch = 0 : i64, scratch_operands = 0 : i64, tpu.core_type = #tpu.core_type<tc>, window_params = [{transform_indices = @transform_0, window_bounds = array<i64: 128, 256>}, {pipeline_mode = #tpu.pipeline_mode<synchronous>, transform_indices = @transform_1, window_bounds = array<i64: 256, 128>}, {pipeline_mode = #tpu.pipeline_mode<synchronous>, transform_indices = @transform_2, window_bounds = array<i64: 1, 128>}, {transform_indices = @transform_3, window_bounds = array<i64: 128, 128>}]} {
    %c0 = arith.constant 0 : index
    %c0_0 = arith.constant 0 : index
    %0 = vector.load %arg1[%c0, %c0_0] : memref<128x256xbf16, #tpu.memory_space<vmem>>, vector<128x256xbf16>
    %c0_1 = arith.constant 0 : index
    %c0_2 = arith.constant 0 : index
    %1 = vector.load %arg2[%c0_1, %c0_2] : memref<256x128xbf16, #tpu.memory_space<vmem>>, vector<256x128xbf16>
    %cst = arith.constant dense<0.000000e+00> : vector<128x128xf32>
    %2 = tpu.matmul %0, %1, %cst {dimension_numbers = #tpu.dot_dimension_numbers<[1], [0], [0], [1], [0, 0, 1, 1], [], []>} : vector<128x256xbf16>, vector<256x128xbf16>, vector<128x128xf32> -> vector<128x128xf32>
    %c0_3 = arith.constant 0 : index
    %c0_4 = arith.constant 0 : index
    %3 = vector.load %arg3[%c0_3, %c0_4] : memref<1x128xf32, #tpu.memory_space<vmem>>, vector<1x128xf32>
    %4 = vector.broadcast %3 : vector<1x128xf32> to vector<128x128xf32>
    %5 = arith.addf %2, %4 : vector<128x128xf32>
    %cst_5 = arith.constant 0.000000e+00 : f32
    %6 = vector.broadcast %cst_5 : f32 to vector<128x128xf32>
    %7 = arith.maximumf %5, %6 : vector<128x128xf32>
    %8 = arith.truncf %7 : vector<128x128xf32> to vector<128x128xbf16>
    %c0_6 = arith.constant 0 : index
    %c0_7 = arith.constant 0 : index
    %9 = vector.load %arg4[%c0_6, %c0_7] : memref<128x128xbf16, #tpu.memory_space<vmem>>, vector<128x128xbf16>
    tpu.vector_store %arg4[%c0_6, %c0_7], %8 {strides = array<i32>} : memref<128x128xbf16, #tpu.memory_space<vmem>>, vector<128x128xbf16>,
    return
  }
  func.func @transform_0(%arg0: i32) -> (i32, i32) {
    %c0_i32 = arith.constant 0 : i32
    %c0_i32_0 = arith.constant 0 : i32
    return %arg0, %c0_i32 : i32, i32
  }
  func.func @transform_1(%arg0: i32) -> (i32, i32) {
    %c0_i32 = arith.constant 0 : i32
    %c0_i32_0 = arith.constant 0 : i32
    %c0_i32_1 = arith.constant 0 : i32
    return %c0_i32, %c0_i32_0 : i32, i32
  }
  func.func @transform_2(%arg0: i32) -> (i32, i32) {
    %c0_i32 = arith.constant 0 : i32
    %c0_i32_0 = arith.constant 0 : i32
    %c0_i32_1 = arith.constant 0 : i32
    return %c0_i32, %c0_i32_0 : i32, i32
  }
  func.func @transform_3(%arg0: i32) -> (i32, i32) {
    %c0_i32 = arith.constant 0 : i32
    %c0_i32_0 = arith.constant 0 : i32
    return %arg0, %c0_i32 : i32, i32
  }
}

module attributes {stable_mosaic.version = 11 : i64} {
  func.func @_maxpool_3x3_s2_kernel(%arg0: i32, %arg1: memref<4x9x9x2x8xbf16, #tpu.memory_space<vmem>>, %arg2: memref<8x8x2x8xbf16, #tpu.memory_space<vmem>>) attributes {dimension_semantics = [#tpu.dimension_semantics<arbitrary>], iteration_bounds = array<i64: 1>, scalar_prefetch = 0 : i64, scratch_operands = 0 : i64, tpu.core_type = #tpu.core_type<tc>, window_params = [{pipeline_mode = #tpu.pipeline_mode<synchronous>, transform_indices = @transform_0, window_bounds = array<i64: 4, 9, 9, 2, 8>}, {pipeline_mode = #tpu.pipeline_mode<synchronous>, transform_indices = @transform_1, window_bounds = array<i64: 8, 8, 2, 8>}]} {
    %c0 = arith.constant 0 : index
    %c0_0 = arith.constant 0 : index
    %c0_1 = arith.constant 0 : index
    %c0_2 = arith.constant 0 : index
    %c0_3 = arith.constant 0 : index
    %0 = vector.load %arg1[%c0, %c0_0, %c0_1, %c0_2, %c0_3] : memref<4x9x9x2x8xbf16, #tpu.memory_space<vmem>>, vector<1x8x8x2x8xbf16>
    %1 = vector.shape_cast %0 : vector<1x8x8x2x8xbf16> to vector<8x8x2x8xbf16>
    %c1 = arith.constant 1 : index
    %c0_4 = arith.constant 0 : index
    %c0_5 = arith.constant 0 : index
    %c0_6 = arith.constant 0 : index
    %c0_7 = arith.constant 0 : index
    %2 = vector.load %arg1[%c1, %c0_4, %c0_5, %c0_6, %c0_7] : memref<4x9x9x2x8xbf16, #tpu.memory_space<vmem>>, vector<1x8x8x2x8xbf16>
    %3 = vector.shape_cast %2 : vector<1x8x8x2x8xbf16> to vector<8x8x2x8xbf16>
    %4 = arith.maximumf %1, %3 : vector<8x8x2x8xbf16>
    %c0_8 = arith.constant 0 : index
    %c0_9 = arith.constant 0 : index
    %c1_10 = arith.constant 1 : index
    %c0_11 = arith.constant 0 : index
    %c0_12 = arith.constant 0 : index
    %5 = vector.load %arg1[%c0_8, %c0_9, %c1_10, %c0_11, %c0_12] : memref<4x9x9x2x8xbf16, #tpu.memory_space<vmem>>, vector<1x8x8x2x8xbf16>
    %6 = vector.shape_cast %5 : vector<1x8x8x2x8xbf16> to vector<8x8x2x8xbf16>
    %7 = arith.maximumf %4, %6 : vector<8x8x2x8xbf16>
    %c2 = arith.constant 2 : index
    %c0_13 = arith.constant 0 : index
    %c0_14 = arith.constant 0 : index
    %c0_15 = arith.constant 0 : index
    %c0_16 = arith.constant 0 : index
    %8 = vector.load %arg1[%c2, %c0_13, %c0_14, %c0_15, %c0_16] : memref<4x9x9x2x8xbf16, #tpu.memory_space<vmem>>, vector<1x8x8x2x8xbf16>
    %9 = vector.shape_cast %8 : vector<1x8x8x2x8xbf16> to vector<8x8x2x8xbf16>
    %10 = arith.maximumf %7, %9 : vector<8x8x2x8xbf16>
    %c3 = arith.constant 3 : index
    %c0_17 = arith.constant 0 : index
    %c0_18 = arith.constant 0 : index
    %c0_19 = arith.constant 0 : index
    %c0_20 = arith.constant 0 : index
    %11 = vector.load %arg1[%c3, %c0_17, %c0_18, %c0_19, %c0_20] : memref<4x9x9x2x8xbf16, #tpu.memory_space<vmem>>, vector<1x8x8x2x8xbf16>
    %12 = vector.shape_cast %11 : vector<1x8x8x2x8xbf16> to vector<8x8x2x8xbf16>
    %13 = arith.maximumf %10, %12 : vector<8x8x2x8xbf16>
    %c2_21 = arith.constant 2 : index
    %c0_22 = arith.constant 0 : index
    %c1_23 = arith.constant 1 : index
    %c0_24 = arith.constant 0 : index
    %c0_25 = arith.constant 0 : index
    %14 = vector.load %arg1[%c2_21, %c0_22, %c1_23, %c0_24, %c0_25] : memref<4x9x9x2x8xbf16, #tpu.memory_space<vmem>>, vector<1x8x8x2x8xbf16>
    %15 = vector.shape_cast %14 : vector<1x8x8x2x8xbf16> to vector<8x8x2x8xbf16>
    %16 = arith.maximumf %13, %15 : vector<8x8x2x8xbf16>
    %c0_26 = arith.constant 0 : index
    %c1_27 = arith.constant 1 : index
    %c0_28 = arith.constant 0 : index
    %c0_29 = arith.constant 0 : index
    %c0_30 = arith.constant 0 : index
    %17 = vector.load %arg1[%c0_26, %c1_27, %c0_28, %c0_29, %c0_30] : memref<4x9x9x2x8xbf16, #tpu.memory_space<vmem>>, vector<1x8x8x2x8xbf16>
    %18 = vector.shape_cast %17 : vector<1x8x8x2x8xbf16> to vector<8x8x2x8xbf16>
    %19 = arith.maximumf %16, %18 : vector<8x8x2x8xbf16>
    %c1_31 = arith.constant 1 : index
    %c1_32 = arith.constant 1 : index
    %c0_33 = arith.constant 0 : index
    %c0_34 = arith.constant 0 : index
    %c0_35 = arith.constant 0 : index
    %20 = vector.load %arg1[%c1_31, %c1_32, %c0_33, %c0_34, %c0_35] : memref<4x9x9x2x8xbf16, #tpu.memory_space<vmem>>, vector<1x8x8x2x8xbf16>
    %21 = vector.shape_cast %20 : vector<1x8x8x2x8xbf16> to vector<8x8x2x8xbf16>
    %22 = arith.maximumf %19, %21 : vector<8x8x2x8xbf16>
    %c0_36 = arith.constant 0 : index
    %c1_37 = arith.constant 1 : index
    %c1_38 = arith.constant 1 : index
    %c0_39 = arith.constant 0 : index
    %c0_40 = arith.constant 0 : index
    %23 = vector.load %arg1[%c0_36, %c1_37, %c1_38, %c0_39, %c0_40] : memref<4x9x9x2x8xbf16, #tpu.memory_space<vmem>>, vector<1x8x8x2x8xbf16>
    %24 = vector.shape_cast %23 : vector<1x8x8x2x8xbf16> to vector<8x8x2x8xbf16>
    %25 = arith.maximumf %22, %24 : vector<8x8x2x8xbf16>
    %c0_41 = arith.constant 0 : index
    %c0_42 = arith.constant 0 : index
    %c0_43 = arith.constant 0 : index
    %c0_44 = arith.constant 0 : index
    %26 = vector.load %arg2[%c0_41, %c0_42, %c0_43, %c0_44] : memref<8x8x2x8xbf16, #tpu.memory_space<vmem>>, vector<8x8x2x8xbf16>
    tpu.vector_store %arg2[%c0_41, %c0_42, %c0_43, %c0_44], %25 {strides = array<i32>} : memref<8x8x2x8xbf16, #tpu.memory_space<vmem>>, vector<8x8x2x8xbf16>,
    return
  }
  func.func @transform_0(%arg0: i32) -> (i32, i32, i32, i32, i32) {
    %c0_i32 = arith.constant 0 : i32
    %c0_i32_0 = arith.constant 0 : i32
    %c0_i32_1 = arith.constant 0 : i32
    %c0_i32_2 = arith.constant 0 : i32
    %c0_i32_3 = arith.constant 0 : i32
    %c0_i32_4 = arith.constant 0 : i32
    return %c0_i32, %c0_i32_0, %c0_i32_1, %c0_i32_2, %c0_i32_3 : i32, i32, i32, i32, i32
  }
  func.func @transform_1(%arg0: i32) -> (i32, i32, i32, i32) {
    %c0_i32 = arith.constant 0 : i32
    %c0_i32_0 = arith.constant 0 : i32
    %c0_i32_1 = arith.constant 0 : i32
    %c0_i32_2 = arith.constant 0 : i32
    %c0_i32_3 = arith.constant 0 : i32
    return %c0_i32, %c0_i32_0, %c0_i32_1, %c0_i32_2 : i32, i32, i32, i32
  }
}

module attributes {stable_mosaic.version = 11 : i64} {
  func.func @_gemm_act_kernel(%arg0: i32, %arg1: memref<64x128xbf16, #tpu.memory_space<vmem>>, %arg2: memref<128x128xbf16, #tpu.memory_space<vmem>>, %arg3: memref<1x128xf32, #tpu.memory_space<vmem>>, %arg4: memref<64x128xbf16, #tpu.memory_space<vmem>>) attributes {dimension_semantics = [#tpu.dimension_semantics<parallel>], iteration_bounds = array<i64: 2>, scalar_prefetch = 0 : i64, scratch_operands = 0 : i64, tpu.core_type = #tpu.core_type<tc>, window_params = [{transform_indices = @transform_0, window_bounds = array<i64: 64, 128>}, {pipeline_mode = #tpu.pipeline_mode<synchronous>, transform_indices = @transform_1, window_bounds = array<i64: 128, 128>}, {pipeline_mode = #tpu.pipeline_mode<synchronous>, transform_indices = @transform_2, window_bounds = array<i64: 1, 128>}, {transform_indices = @transform_3, window_bounds = array<i64: 64, 128>}]} {
    %c0 = arith.constant 0 : index
    %c0_0 = arith.constant 0 : index
    %0 = vector.load %arg1[%c0, %c0_0] : memref<64x128xbf16, #tpu.memory_space<vmem>>, vector<64x128xbf16>
    %c0_1 = arith.constant 0 : index
    %c0_2 = arith.constant 0 : index
    %1 = vector.load %arg2[%c0_1, %c0_2] : memref<128x128xbf16, #tpu.memory_space<vmem>>, vector<128x128xbf16>
    %cst = arith.constant dense<0.000000e+00> : vector<64x128xf32>
    %2 = tpu.matmul %0, %1, %cst {dimension_numbers = #tpu.dot_dimension_numbers<[1], [0], [0], [1], [0, 0, 1, 1], [], []>} : vector<64x128xbf16>, vector<128x128xbf16>, vector<64x128xf32> -> vector<64x128xf32>
    %c0_3 = arith.constant 0 : index
    %c0_4 = arith.constant 0 : index
    %3 = vector.load %arg3[%c0_3, %c0_4] : memref<1x128xf32, #tpu.memory_space<vmem>>, vector<1x128xf32>
    %4 = vector.broadcast %3 : vector<1x128xf32> to vector<64x128xf32>
    %5 = arith.addf %2, %4 : vector<64x128xf32>
    %cst_5 = arith.constant 0.000000e+00 : f32
    %6 = vector.broadcast %cst_5 : f32 to vector<64x128xf32>
    %7 = arith.maximumf %5, %6 : vector<64x128xf32>
    %8 = arith.truncf %7 : vector<64x128xf32> to vector<64x128xbf16>
    %c0_6 = arith.constant 0 : index
    %c0_7 = arith.constant 0 : index
    %9 = vector.load %arg4[%c0_6, %c0_7] : memref<64x128xbf16, #tpu.memory_space<vmem>>, vector<64x128xbf16>
    tpu.vector_store %arg4[%c0_6, %c0_7], %8 {strides = array<i32>} : memref<64x128xbf16, #tpu.memory_space<vmem>>, vector<64x128xbf16>,
    return
  }
  func.func @transform_0(%arg0: i32) -> (i32, i32) {
    %c0_i32 = arith.constant 0 : i32
    %c0_i32_0 = arith.constant 0 : i32
    return %arg0, %c0_i32 : i32, i32
  }
  func.func @transform_1(%arg0: i32) -> (i32, i32) {
    %c0_i32 = arith.constant 0 : i32
    %c0_i32_0 = arith.constant 0 : i32
    %c0_i32_1 = arith.constant 0 : i32
    return %c0_i32, %c0_i32_0 : i32, i32
  }
  func.func @transform_2(%arg0: i32) -> (i32, i32) {
    %c0_i32 = arith.constant 0 : i32
    %c0_i32_0 = arith.constant 0 : i32
    %c0_i32_1 = arith.constant 0 : i32
    return %c0_i32, %c0_i32_0 : i32, i32
  }
  func.func @transform_3(%arg0: i32) -> (i32, i32) {
    %c0_i32 = arith.constant 0 : i32
    %c0_i32_0 = arith.constant 0 : i32
    return %arg0, %c0_i32 : i32, i32
  }
}

module attributes {stable_mosaic.version = 11 : i64} {
  func.func @_gemm_res_relu_kernel(%arg0: i32, %arg1: memref<64x128xbf16, #tpu.memory_space<vmem>>, %arg2: memref<128x128xbf16, #tpu.memory_space<vmem>>, %arg3: memref<1x128xf32, #tpu.memory_space<vmem>>, %arg4: memref<64x128xbf16, #tpu.memory_space<vmem>>, %arg5: memref<64x128xbf16, #tpu.memory_space<vmem>>) attributes {dimension_semantics = [#tpu.dimension_semantics<parallel>], iteration_bounds = array<i64: 2>, scalar_prefetch = 0 : i64, scratch_operands = 0 : i64, tpu.core_type = #tpu.core_type<tc>, window_params = [{transform_indices = @transform_0, window_bounds = array<i64: 64, 128>}, {pipeline_mode = #tpu.pipeline_mode<synchronous>, transform_indices = @transform_1, window_bounds = array<i64: 128, 128>}, {pipeline_mode = #tpu.pipeline_mode<synchronous>, transform_indices = @transform_2, window_bounds = array<i64: 1, 128>}, {transform_indices = @transform_3, window_bounds = array<i64: 64, 128>}, {transform_indices = @transform_4, window_bounds = array<i64: 64, 128>}]} {
    %c0 = arith.constant 0 : index
    %c0_0 = arith.constant 0 : index
    %0 = vector.load %arg1[%c0, %c0_0] : memref<64x128xbf16, #tpu.memory_space<vmem>>, vector<64x128xbf16>
    %c0_1 = arith.constant 0 : index
    %c0_2 = arith.constant 0 : index
    %1 = vector.load %arg2[%c0_1, %c0_2] : memref<128x128xbf16, #tpu.memory_space<vmem>>, vector<128x128xbf16>
    %cst = arith.constant dense<0.000000e+00> : vector<64x128xf32>
    %2 = tpu.matmul %0, %1, %cst {dimension_numbers = #tpu.dot_dimension_numbers<[1], [0], [0], [1], [0, 0, 1, 1], [], []>} : vector<64x128xbf16>, vector<128x128xbf16>, vector<64x128xf32> -> vector<64x128xf32>
    %c0_3 = arith.constant 0 : index
    %c0_4 = arith.constant 0 : index
    %3 = vector.load %arg3[%c0_3, %c0_4] : memref<1x128xf32, #tpu.memory_space<vmem>>, vector<1x128xf32>
    %4 = vector.broadcast %3 : vector<1x128xf32> to vector<64x128xf32>
    %5 = arith.addf %2, %4 : vector<64x128xf32>
    %c0_5 = arith.constant 0 : index
    %c0_6 = arith.constant 0 : index
    %6 = vector.load %arg4[%c0_5, %c0_6] : memref<64x128xbf16, #tpu.memory_space<vmem>>, vector<64x128xbf16>
    %7 = arith.extf %6 : vector<64x128xbf16> to vector<64x128xf32>
    %8 = arith.addf %5, %7 : vector<64x128xf32>
    %cst_7 = arith.constant 0.000000e+00 : f32
    %9 = vector.broadcast %cst_7 : f32 to vector<64x128xf32>
    %10 = arith.maximumf %8, %9 : vector<64x128xf32>
    %11 = arith.truncf %10 : vector<64x128xf32> to vector<64x128xbf16>
    %c0_8 = arith.constant 0 : index
    %c0_9 = arith.constant 0 : index
    %12 = vector.load %arg5[%c0_8, %c0_9] : memref<64x128xbf16, #tpu.memory_space<vmem>>, vector<64x128xbf16>
    tpu.vector_store %arg5[%c0_8, %c0_9], %11 {strides = array<i32>} : memref<64x128xbf16, #tpu.memory_space<vmem>>, vector<64x128xbf16>,
    return
  }
  func.func @transform_0(%arg0: i32) -> (i32, i32) {
    %c0_i32 = arith.constant 0 : i32
    %c0_i32_0 = arith.constant 0 : i32
    return %arg0, %c0_i32 : i32, i32
  }
  func.func @transform_1(%arg0: i32) -> (i32, i32) {
    %c0_i32 = arith.constant 0 : i32
    %c0_i32_0 = arith.constant 0 : i32
    %c0_i32_1 = arith.constant 0 : i32
    return %c0_i32, %c0_i32_0 : i32, i32
  }
  func.func @transform_2(%arg0: i32) -> (i32, i32) {
    %c0_i32 = arith.constant 0 : i32
    %c0_i32_0 = arith.constant 0 : i32
    %c0_i32_1 = arith.constant 0 : i32
    return %c0_i32, %c0_i32_0 : i32, i32
  }
  func.func @transform_3(%arg0: i32) -> (i32, i32) {
    %c0_i32 = arith.constant 0 : i32
    %c0_i32_0 = arith.constant 0 : i32
    return %arg0, %c0_i32 : i32, i32
  }
  func.func @transform_4(%arg0: i32) -> (i32, i32) {
    %c0_i32 = arith.constant 0 : i32
    %c0_i32_0 = arith.constant 0 : i32
    return %arg0, %c0_i32 : i32, i32
  }
}

module attributes {stable_mosaic.version = 11 : i64} {
  func.func @_gemm_act_kernel(%arg0: i32, %arg1: memref<16x128xbf16, #tpu.memory_space<vmem>>, %arg2: memref<128x128xbf16, #tpu.memory_space<vmem>>, %arg3: memref<1x128xf32, #tpu.memory_space<vmem>>, %arg4: memref<16x128xbf16, #tpu.memory_space<vmem>>) attributes {dimension_semantics = [#tpu.dimension_semantics<parallel>], iteration_bounds = array<i64: 2>, scalar_prefetch = 0 : i64, scratch_operands = 0 : i64, tpu.core_type = #tpu.core_type<tc>, window_params = [{transform_indices = @transform_0, window_bounds = array<i64: 16, 128>}, {pipeline_mode = #tpu.pipeline_mode<synchronous>, transform_indices = @transform_1, window_bounds = array<i64: 128, 128>}, {pipeline_mode = #tpu.pipeline_mode<synchronous>, transform_indices = @transform_2, window_bounds = array<i64: 1, 128>}, {transform_indices = @transform_3, window_bounds = array<i64: 16, 128>}]} {
    %c0 = arith.constant 0 : index
    %c0_0 = arith.constant 0 : index
    %0 = vector.load %arg1[%c0, %c0_0] : memref<16x128xbf16, #tpu.memory_space<vmem>>, vector<16x128xbf16>
    %c0_1 = arith.constant 0 : index
    %c0_2 = arith.constant 0 : index
    %1 = vector.load %arg2[%c0_1, %c0_2] : memref<128x128xbf16, #tpu.memory_space<vmem>>, vector<128x128xbf16>
    %cst = arith.constant dense<0.000000e+00> : vector<16x128xf32>
    %2 = tpu.matmul %0, %1, %cst {dimension_numbers = #tpu.dot_dimension_numbers<[1], [0], [0], [1], [0, 0, 1, 1], [], []>} : vector<16x128xbf16>, vector<128x128xbf16>, vector<16x128xf32> -> vector<16x128xf32>
    %c0_3 = arith.constant 0 : index
    %c0_4 = arith.constant 0 : index
    %3 = vector.load %arg3[%c0_3, %c0_4] : memref<1x128xf32, #tpu.memory_space<vmem>>, vector<1x128xf32>
    %4 = vector.broadcast %3 : vector<1x128xf32> to vector<16x128xf32>
    %5 = arith.addf %2, %4 : vector<16x128xf32>
    %cst_5 = arith.constant 0.000000e+00 : f32
    %6 = vector.broadcast %cst_5 : f32 to vector<16x128xf32>
    %7 = arith.maximumf %5, %6 : vector<16x128xf32>
    %8 = arith.truncf %7 : vector<16x128xf32> to vector<16x128xbf16>
    %c0_6 = arith.constant 0 : index
    %c0_7 = arith.constant 0 : index
    %9 = vector.load %arg4[%c0_6, %c0_7] : memref<16x128xbf16, #tpu.memory_space<vmem>>, vector<16x128xbf16>
    tpu.vector_store %arg4[%c0_6, %c0_7], %8 {strides = array<i32>} : memref<16x128xbf16, #tpu.memory_space<vmem>>, vector<16x128xbf16>,
    return
  }
  func.func @transform_0(%arg0: i32) -> (i32, i32) {
    %c0_i32 = arith.constant 0 : i32
    %c0_i32_0 = arith.constant 0 : i32
    return %arg0, %c0_i32 : i32, i32
  }
  func.func @transform_1(%arg0: i32) -> (i32, i32) {
    %c0_i32 = arith.constant 0 : i32
    %c0_i32_0 = arith.constant 0 : i32
    %c0_i32_1 = arith.constant 0 : i32
    return %c0_i32, %c0_i32_0 : i32, i32
  }
  func.func @transform_2(%arg0: i32) -> (i32, i32) {
    %c0_i32 = arith.constant 0 : i32
    %c0_i32_0 = arith.constant 0 : i32
    %c0_i32_1 = arith.constant 0 : i32
    return %c0_i32, %c0_i32_0 : i32, i32
  }
  func.func @transform_3(%arg0: i32) -> (i32, i32) {
    %c0_i32 = arith.constant 0 : i32
    %c0_i32_0 = arith.constant 0 : i32
    return %arg0, %c0_i32 : i32, i32
  }
}

module attributes {stable_mosaic.version = 11 : i64} {
  func.func @_gemm_act_kernel(%arg0: i32, %arg1: memref<16x256xbf16, #tpu.memory_space<vmem>>, %arg2: memref<256x128xbf16, #tpu.memory_space<vmem>>, %arg3: memref<1x128xf32, #tpu.memory_space<vmem>>, %arg4: memref<16x128xbf16, #tpu.memory_space<vmem>>) attributes {dimension_semantics = [#tpu.dimension_semantics<parallel>], iteration_bounds = array<i64: 2>, scalar_prefetch = 0 : i64, scratch_operands = 0 : i64, tpu.core_type = #tpu.core_type<tc>, window_params = [{transform_indices = @transform_0, window_bounds = array<i64: 16, 256>}, {pipeline_mode = #tpu.pipeline_mode<synchronous>, transform_indices = @transform_1, window_bounds = array<i64: 256, 128>}, {pipeline_mode = #tpu.pipeline_mode<synchronous>, transform_indices = @transform_2, window_bounds = array<i64: 1, 128>}, {transform_indices = @transform_3, window_bounds = array<i64: 16, 128>}]} {
    %c0 = arith.constant 0 : index
    %c0_0 = arith.constant 0 : index
    %0 = vector.load %arg1[%c0, %c0_0] : memref<16x256xbf16, #tpu.memory_space<vmem>>, vector<16x256xbf16>
    %c0_1 = arith.constant 0 : index
    %c0_2 = arith.constant 0 : index
    %1 = vector.load %arg2[%c0_1, %c0_2] : memref<256x128xbf16, #tpu.memory_space<vmem>>, vector<256x128xbf16>
    %cst = arith.constant dense<0.000000e+00> : vector<16x128xf32>
    %2 = tpu.matmul %0, %1, %cst {dimension_numbers = #tpu.dot_dimension_numbers<[1], [0], [0], [1], [0, 0, 1, 1], [], []>} : vector<16x256xbf16>, vector<256x128xbf16>, vector<16x128xf32> -> vector<16x128xf32>
    %c0_3 = arith.constant 0 : index
    %c0_4 = arith.constant 0 : index
    %3 = vector.load %arg3[%c0_3, %c0_4] : memref<1x128xf32, #tpu.memory_space<vmem>>, vector<1x128xf32>
    %4 = vector.broadcast %3 : vector<1x128xf32> to vector<16x128xf32>
    %5 = arith.addf %2, %4 : vector<16x128xf32>
    %cst_5 = arith.constant 0.000000e+00 : f32
    %6 = vector.broadcast %cst_5 : f32 to vector<16x128xf32>
    %7 = arith.maximumf %5, %6 : vector<16x128xf32>
    %8 = arith.truncf %7 : vector<16x128xf32> to vector<16x128xbf16>
    %c0_6 = arith.constant 0 : index
    %c0_7 = arith.constant 0 : index
    %9 = vector.load %arg4[%c0_6, %c0_7] : memref<16x128xbf16, #tpu.memory_space<vmem>>, vector<16x128xbf16>
    tpu.vector_store %arg4[%c0_6, %c0_7], %8 {strides = array<i32>} : memref<16x128xbf16, #tpu.memory_space<vmem>>, vector<16x128xbf16>,
    return
  }
  func.func @transform_0(%arg0: i32) -> (i32, i32) {
    %c0_i32 = arith.constant 0 : i32
    %c0_i32_0 = arith.constant 0 : i32
    return %arg0, %c0_i32 : i32, i32
  }
  func.func @transform_1(%arg0: i32) -> (i32, i32) {
    %c0_i32 = arith.constant 0 : i32
    %c0_i32_0 = arith.constant 0 : i32
    %c0_i32_1 = arith.constant 0 : i32
    return %c0_i32, %c0_i32_0 : i32, i32
  }
  func.func @transform_2(%arg0: i32) -> (i32, i32) {
    %c0_i32 = arith.constant 0 : i32
    %c0_i32_0 = arith.constant 0 : i32
    %c0_i32_1 = arith.constant 0 : i32
    return %c0_i32, %c0_i32_0 : i32, i32
  }
  func.func @transform_3(%arg0: i32) -> (i32, i32) {
    %c0_i32 = arith.constant 0 : i32
    %c0_i32_0 = arith.constant 0 : i32
    return %arg0, %c0_i32 : i32, i32
  }
}

module attributes {stable_mosaic.version = 11 : i64} {
  func.func @_gemm_gemm_relu_kernel(%arg0: i32, %arg1: memref<16x256xbf16, #tpu.memory_space<vmem>>, %arg2: memref<256x128xbf16, #tpu.memory_space<vmem>>, %arg3: memref<1x128xf32, #tpu.memory_space<vmem>>, %arg4: memref<16x128xbf16, #tpu.memory_space<vmem>>, %arg5: memref<128x128xbf16, #tpu.memory_space<vmem>>, %arg6: memref<1x128xf32, #tpu.memory_space<vmem>>, %arg7: memref<16x128xbf16, #tpu.memory_space<vmem>>) attributes {dimension_semantics = [#tpu.dimension_semantics<parallel>], iteration_bounds = array<i64: 2>, scalar_prefetch = 0 : i64, scratch_operands = 0 : i64, tpu.core_type = #tpu.core_type<tc>, window_params = [{transform_indices = @transform_0, window_bounds = array<i64: 16, 256>}, {pipeline_mode = #tpu.pipeline_mode<synchronous>, transform_indices = @transform_1, window_bounds = array<i64: 256, 128>}, {pipeline_mode = #tpu.pipeline_mode<synchronous>, transform_indices = @transform_2, window_bounds = array<i64: 1, 128>}, {transform_indices = @transform_3, window_bounds = array<i64: 16, 128>}, {pipeline_mode = #tpu.pipeline_mode<synchronous>, transform_indices = @transform_4, window_bounds = array<i64: 128, 128>}, {pipeline_mode = #tpu.pipeline_mode<synchronous>, transform_indices = @transform_5, window_bounds = array<i64: 1, 128>}, {transform_indices = @transform_6, window_bounds = array<i64: 16, 128>}]} {
    %c0 = arith.constant 0 : index
    %c0_0 = arith.constant 0 : index
    %0 = vector.load %arg1[%c0, %c0_0] : memref<16x256xbf16, #tpu.memory_space<vmem>>, vector<16x256xbf16>
    %c0_1 = arith.constant 0 : index
    %c0_2 = arith.constant 0 : index
    %1 = vector.load %arg2[%c0_1, %c0_2] : memref<256x128xbf16, #tpu.memory_space<vmem>>, vector<256x128xbf16>
    %cst = arith.constant dense<0.000000e+00> : vector<16x128xf32>
    %2 = tpu.matmul %0, %1, %cst {dimension_numbers = #tpu.dot_dimension_numbers<[1], [0], [0], [1], [0, 0, 1, 1], [], []>} : vector<16x256xbf16>, vector<256x128xbf16>, vector<16x128xf32> -> vector<16x128xf32>
    %c0_3 = arith.constant 0 : index
    %c0_4 = arith.constant 0 : index
    %3 = vector.load %arg4[%c0_3, %c0_4] : memref<16x128xbf16, #tpu.memory_space<vmem>>, vector<16x128xbf16>
    %c0_5 = arith.constant 0 : index
    %c0_6 = arith.constant 0 : index
    %4 = vector.load %arg5[%c0_5, %c0_6] : memref<128x128xbf16, #tpu.memory_space<vmem>>, vector<128x128xbf16>
    %cst_7 = arith.constant dense<0.000000e+00> : vector<16x128xf32>
    %5 = tpu.matmul %3, %4, %cst_7 {dimension_numbers = #tpu.dot_dimension_numbers<[1], [0], [0], [1], [0, 0, 1, 1], [], []>} : vector<16x128xbf16>, vector<128x128xbf16>, vector<16x128xf32> -> vector<16x128xf32>
    %6 = arith.addf %2, %5 : vector<16x128xf32>
    %c0_8 = arith.constant 0 : index
    %c0_9 = arith.constant 0 : index
    %7 = vector.load %arg3[%c0_8, %c0_9] : memref<1x128xf32, #tpu.memory_space<vmem>>, vector<1x128xf32>
    %8 = vector.broadcast %7 : vector<1x128xf32> to vector<16x128xf32>
    %9 = arith.addf %6, %8 : vector<16x128xf32>
    %c0_10 = arith.constant 0 : index
    %c0_11 = arith.constant 0 : index
    %10 = vector.load %arg6[%c0_10, %c0_11] : memref<1x128xf32, #tpu.memory_space<vmem>>, vector<1x128xf32>
    %11 = vector.broadcast %10 : vector<1x128xf32> to vector<16x128xf32>
    %12 = arith.addf %9, %11 : vector<16x128xf32>
    %cst_12 = arith.constant 0.000000e+00 : f32
    %13 = vector.broadcast %cst_12 : f32 to vector<16x128xf32>
    %14 = arith.maximumf %12, %13 : vector<16x128xf32>
    %15 = arith.truncf %14 : vector<16x128xf32> to vector<16x128xbf16>
    %c0_13 = arith.constant 0 : index
    %c0_14 = arith.constant 0 : index
    %16 = vector.load %arg7[%c0_13, %c0_14] : memref<16x128xbf16, #tpu.memory_space<vmem>>, vector<16x128xbf16>
    tpu.vector_store %arg7[%c0_13, %c0_14], %15 {strides = array<i32>} : memref<16x128xbf16, #tpu.memory_space<vmem>>, vector<16x128xbf16>,
    return
  }
  func.func @transform_0(%arg0: i32) -> (i32, i32) {
    %c0_i32 = arith.constant 0 : i32
    %c0_i32_0 = arith.constant 0 : i32
    return %arg0, %c0_i32 : i32, i32
  }
  func.func @transform_1(%arg0: i32) -> (i32, i32) {
    %c0_i32 = arith.constant 0 : i32
    %c0_i32_0 = arith.constant 0 : i32
    %c0_i32_1 = arith.constant 0 : i32
    return %c0_i32, %c0_i32_0 : i32, i32
  }
  func.func @transform_2(%arg0: i32) -> (i32, i32) {
    %c0_i32 = arith.constant 0 : i32
    %c0_i32_0 = arith.constant 0 : i32
    %c0_i32_1 = arith.constant 0 : i32
    return %c0_i32, %c0_i32_0 : i32, i32
  }
  func.func @transform_3(%arg0: i32) -> (i32, i32) {
    %c0_i32 = arith.constant 0 : i32
    %c0_i32_0 = arith.constant 0 : i32
    return %arg0, %c0_i32 : i32, i32
  }
  func.func @transform_4(%arg0: i32) -> (i32, i32) {
    %c0_i32 = arith.constant 0 : i32
    %c0_i32_0 = arith.constant 0 : i32
    %c0_i32_1 = arith.constant 0 : i32
    return %c0_i32, %c0_i32_0 : i32, i32
  }
  func.func @transform_5(%arg0: i32) -> (i32, i32) {
    %c0_i32 = arith.constant 0 : i32
    %c0_i32_0 = arith.constant 0 : i32
    %c0_i32_1 = arith.constant 0 : i32
    return %c0_i32, %c0_i32_0 : i32, i32
  }
  func.func @transform_6(%arg0: i32) -> (i32, i32) {
    %c0_i32 = arith.constant 0 : i32
    %c0_i32_0 = arith.constant 0 : i32
    return %arg0, %c0_i32 : i32, i32
  }
}

module attributes {stable_mosaic.version = 11 : i64} {
  func.func @_gemm_res_relu_kernel(%arg0: i32, %arg1: memref<16x256xbf16, #tpu.memory_space<vmem>>, %arg2: memref<256x128xbf16, #tpu.memory_space<vmem>>, %arg3: memref<1x128xf32, #tpu.memory_space<vmem>>, %arg4: memref<16x128xbf16, #tpu.memory_space<vmem>>, %arg5: memref<16x128xbf16, #tpu.memory_space<vmem>>) attributes {dimension_semantics = [#tpu.dimension_semantics<parallel>], iteration_bounds = array<i64: 2>, scalar_prefetch = 0 : i64, scratch_operands = 0 : i64, tpu.core_type = #tpu.core_type<tc>, window_params = [{transform_indices = @transform_0, window_bounds = array<i64: 16, 256>}, {pipeline_mode = #tpu.pipeline_mode<synchronous>, transform_indices = @transform_1, window_bounds = array<i64: 256, 128>}, {pipeline_mode = #tpu.pipeline_mode<synchronous>, transform_indices = @transform_2, window_bounds = array<i64: 1, 128>}, {transform_indices = @transform_3, window_bounds = array<i64: 16, 128>}, {transform_indices = @transform_4, window_bounds = array<i64: 16, 128>}]} {
    %c0 = arith.constant 0 : index
    %c0_0 = arith.constant 0 : index
    %0 = vector.load %arg1[%c0, %c0_0] : memref<16x256xbf16, #tpu.memory_space<vmem>>, vector<16x256xbf16>
    %c0_1 = arith.constant 0 : index
    %c0_2 = arith.constant 0 : index
    %1 = vector.load %arg2[%c0_1, %c0_2] : memref<256x128xbf16, #tpu.memory_space<vmem>>, vector<256x128xbf16>
    %cst = arith.constant dense<0.000000e+00> : vector<16x128xf32>
    %2 = tpu.matmul %0, %1, %cst {dimension_numbers = #tpu.dot_dimension_numbers<[1], [0], [0], [1], [0, 0, 1, 1], [], []>} : vector<16x256xbf16>, vector<256x128xbf16>, vector<16x128xf32> -> vector<16x128xf32>
    %c0_3 = arith.constant 0 : index
    %c0_4 = arith.constant 0 : index
    %3 = vector.load %arg3[%c0_3, %c0_4] : memref<1x128xf32, #tpu.memory_space<vmem>>, vector<1x128xf32>
    %4 = vector.broadcast %3 : vector<1x128xf32> to vector<16x128xf32>
    %5 = arith.addf %2, %4 : vector<16x128xf32>
    %c0_5 = arith.constant 0 : index
    %c0_6 = arith.constant 0 : index
    %6 = vector.load %arg4[%c0_5, %c0_6] : memref<16x128xbf16, #tpu.memory_space<vmem>>, vector<16x128xbf16>
    %7 = arith.extf %6 : vector<16x128xbf16> to vector<16x128xf32>
    %8 = arith.addf %5, %7 : vector<16x128xf32>
    %cst_7 = arith.constant 0.000000e+00 : f32
    %9 = vector.broadcast %cst_7 : f32 to vector<16x128xf32>
    %10 = arith.maximumf %8, %9 : vector<16x128xf32>
    %11 = arith.truncf %10 : vector<16x128xf32> to vector<16x128xbf16>
    %c0_8 = arith.constant 0 : index
    %c0_9 = arith.constant 0 : index
    %12 = vector.load %arg5[%c0_8, %c0_9] : memref<16x128xbf16, #tpu.memory_space<vmem>>, vector<16x128xbf16>
    tpu.vector_store %arg5[%c0_8, %c0_9], %11 {strides = array<i32>} : memref<16x128xbf16, #tpu.memory_space<vmem>>, vector<16x128xbf16>,
    return
  }
  func.func @transform_0(%arg0: i32) -> (i32, i32) {
    %c0_i32 = arith.constant 0 : i32
    %c0_i32_0 = arith.constant 0 : i32
    return %arg0, %c0_i32 : i32, i32
  }
  func.func @transform_1(%arg0: i32) -> (i32, i32) {
    %c0_i32 = arith.constant 0 : i32
    %c0_i32_0 = arith.constant 0 : i32
    %c0_i32_1 = arith.constant 0 : i32
    return %c0_i32, %c0_i32_0 : i32, i32
  }
  func.func @transform_2(%arg0: i32) -> (i32, i32) {
    %c0_i32 = arith.constant 0 : i32
    %c0_i32_0 = arith.constant 0 : i32
    %c0_i32_1 = arith.constant 0 : i32
    return %c0_i32, %c0_i32_0 : i32, i32
  }
  func.func @transform_3(%arg0: i32) -> (i32, i32) {
    %c0_i32 = arith.constant 0 : i32
    %c0_i32_0 = arith.constant 0 : i32
    return %arg0, %c0_i32 : i32, i32
  }
  func.func @transform_4(%arg0: i32) -> (i32, i32) {
    %c0_i32 = arith.constant 0 : i32
    %c0_i32_0 = arith.constant 0 : i32
    return %arg0, %c0_i32 : i32, i32
  }
}

module attributes {stable_mosaic.version = 11 : i64} {
  func.func @_gemm_act_kernel(%arg0: i32, %arg1: memref<8x256xbf16, #tpu.memory_space<vmem>>, %arg2: memref<256x128xbf16, #tpu.memory_space<vmem>>, %arg3: memref<1x128xf32, #tpu.memory_space<vmem>>, %arg4: memref<8x128xbf16, #tpu.memory_space<vmem>>) attributes {dimension_semantics = [#tpu.dimension_semantics<parallel>], iteration_bounds = array<i64: 1>, scalar_prefetch = 0 : i64, scratch_operands = 0 : i64, tpu.core_type = #tpu.core_type<tc>, window_params = [{transform_indices = @transform_0, window_bounds = array<i64: 8, 256>}, {pipeline_mode = #tpu.pipeline_mode<synchronous>, transform_indices = @transform_1, window_bounds = array<i64: 256, 128>}, {pipeline_mode = #tpu.pipeline_mode<synchronous>, transform_indices = @transform_2, window_bounds = array<i64: 1, 128>}, {transform_indices = @transform_3, window_bounds = array<i64: 8, 128>}]} {
    %c0 = arith.constant 0 : index
    %c0_0 = arith.constant 0 : index
    %0 = vector.load %arg1[%c0, %c0_0] : memref<8x256xbf16, #tpu.memory_space<vmem>>, vector<8x256xbf16>
    %c0_1 = arith.constant 0 : index
    %c0_2 = arith.constant 0 : index
    %1 = vector.load %arg2[%c0_1, %c0_2] : memref<256x128xbf16, #tpu.memory_space<vmem>>, vector<256x128xbf16>
    %cst = arith.constant dense<0.000000e+00> : vector<8x128xf32>
    %2 = tpu.matmul %0, %1, %cst {dimension_numbers = #tpu.dot_dimension_numbers<[1], [0], [0], [1], [0, 0, 1, 1], [], []>} : vector<8x256xbf16>, vector<256x128xbf16>, vector<8x128xf32> -> vector<8x128xf32>
    %c0_3 = arith.constant 0 : index
    %c0_4 = arith.constant 0 : index
    %3 = vector.load %arg3[%c0_3, %c0_4] : memref<1x128xf32, #tpu.memory_space<vmem>>, vector<1x128xf32>
    %4 = vector.broadcast %3 : vector<1x128xf32> to vector<8x128xf32>
    %5 = arith.addf %2, %4 : vector<8x128xf32>
    %cst_5 = arith.constant 0.000000e+00 : f32
    %6 = vector.broadcast %cst_5 : f32 to vector<8x128xf32>
    %7 = arith.maximumf %5, %6 : vector<8x128xf32>
    %8 = arith.truncf %7 : vector<8x128xf32> to vector<8x128xbf16>
    %c0_6 = arith.constant 0 : index
    %c0_7 = arith.constant 0 : index
    %9 = vector.load %arg4[%c0_6, %c0_7] : memref<8x128xbf16, #tpu.memory_space<vmem>>, vector<8x128xbf16>
    tpu.vector_store %arg4[%c0_6, %c0_7], %8 {strides = array<i32>} : memref<8x128xbf16, #tpu.memory_space<vmem>>, vector<8x128xbf16>,
    return
  }
  func.func @transform_0(%arg0: i32) -> (i32, i32) {
    %c0_i32 = arith.constant 0 : i32
    %c0_i32_0 = arith.constant 0 : i32
    return %arg0, %c0_i32 : i32, i32
  }
  func.func @transform_1(%arg0: i32) -> (i32, i32) {
    %c0_i32 = arith.constant 0 : i32
    %c0_i32_0 = arith.constant 0 : i32
    %c0_i32_1 = arith.constant 0 : i32
    return %c0_i32, %c0_i32_0 : i32, i32
  }
  func.func @transform_2(%arg0: i32) -> (i32, i32) {
    %c0_i32 = arith.constant 0 : i32
    %c0_i32_0 = arith.constant 0 : i32
    %c0_i32_1 = arith.constant 0 : i32
    return %c0_i32, %c0_i32_0 : i32, i32
  }
  func.func @transform_3(%arg0: i32) -> (i32, i32) {
    %c0_i32 = arith.constant 0 : i32
    %c0_i32_0 = arith.constant 0 : i32
    return %arg0, %c0_i32 : i32, i32
  }
}

module attributes {stable_mosaic.version = 11 : i64} {
  func.func @_gemm_gemm_relu_kernel(%arg0: i32, %arg1: memref<8x384xbf16, #tpu.memory_space<vmem>>, %arg2: memref<384x128xbf16, #tpu.memory_space<vmem>>, %arg3: memref<1x128xf32, #tpu.memory_space<vmem>>, %arg4: memref<8x128xbf16, #tpu.memory_space<vmem>>, %arg5: memref<128x128xbf16, #tpu.memory_space<vmem>>, %arg6: memref<1x128xf32, #tpu.memory_space<vmem>>, %arg7: memref<8x128xbf16, #tpu.memory_space<vmem>>) attributes {dimension_semantics = [#tpu.dimension_semantics<parallel>], iteration_bounds = array<i64: 1>, scalar_prefetch = 0 : i64, scratch_operands = 0 : i64, tpu.core_type = #tpu.core_type<tc>, window_params = [{transform_indices = @transform_0, window_bounds = array<i64: 8, 384>}, {pipeline_mode = #tpu.pipeline_mode<synchronous>, transform_indices = @transform_1, window_bounds = array<i64: 384, 128>}, {pipeline_mode = #tpu.pipeline_mode<synchronous>, transform_indices = @transform_2, window_bounds = array<i64: 1, 128>}, {transform_indices = @transform_3, window_bounds = array<i64: 8, 128>}, {pipeline_mode = #tpu.pipeline_mode<synchronous>, transform_indices = @transform_4, window_bounds = array<i64: 128, 128>}, {pipeline_mode = #tpu.pipeline_mode<synchronous>, transform_indices = @transform_5, window_bounds = array<i64: 1, 128>}, {transform_indices = @transform_6, window_bounds = array<i64: 8, 128>}]} {
    %c0 = arith.constant 0 : index
    %c0_0 = arith.constant 0 : index
    %0 = vector.load %arg1[%c0, %c0_0] : memref<8x384xbf16, #tpu.memory_space<vmem>>, vector<8x384xbf16>
    %c0_1 = arith.constant 0 : index
    %c0_2 = arith.constant 0 : index
    %1 = vector.load %arg2[%c0_1, %c0_2] : memref<384x128xbf16, #tpu.memory_space<vmem>>, vector<384x128xbf16>
    %cst = arith.constant dense<0.000000e+00> : vector<8x128xf32>
    %2 = tpu.matmul %0, %1, %cst {dimension_numbers = #tpu.dot_dimension_numbers<[1], [0], [0], [1], [0, 0, 1, 1], [], []>} : vector<8x384xbf16>, vector<384x128xbf16>, vector<8x128xf32> -> vector<8x128xf32>
    %c0_3 = arith.constant 0 : index
    %c0_4 = arith.constant 0 : index
    %3 = vector.load %arg4[%c0_3, %c0_4] : memref<8x128xbf16, #tpu.memory_space<vmem>>, vector<8x128xbf16>
    %c0_5 = arith.constant 0 : index
    %c0_6 = arith.constant 0 : index
    %4 = vector.load %arg5[%c0_5, %c0_6] : memref<128x128xbf16, #tpu.memory_space<vmem>>, vector<128x128xbf16>
    %cst_7 = arith.constant dense<0.000000e+00> : vector<8x128xf32>
    %5 = tpu.matmul %3, %4, %cst_7 {dimension_numbers = #tpu.dot_dimension_numbers<[1], [0], [0], [1], [0, 0, 1, 1], [], []>} : vector<8x128xbf16>, vector<128x128xbf16>, vector<8x128xf32> -> vector<8x128xf32>
    %6 = arith.addf %2, %5 : vector<8x128xf32>
    %c0_8 = arith.constant 0 : index
    %c0_9 = arith.constant 0 : index
    %7 = vector.load %arg3[%c0_8, %c0_9] : memref<1x128xf32, #tpu.memory_space<vmem>>, vector<1x128xf32>
    %8 = vector.broadcast %7 : vector<1x128xf32> to vector<8x128xf32>
    %9 = arith.addf %6, %8 : vector<8x128xf32>
    %c0_10 = arith.constant 0 : index
    %c0_11 = arith.constant 0 : index
    %10 = vector.load %arg6[%c0_10, %c0_11] : memref<1x128xf32, #tpu.memory_space<vmem>>, vector<1x128xf32>
    %11 = vector.broadcast %10 : vector<1x128xf32> to vector<8x128xf32>
    %12 = arith.addf %9, %11 : vector<8x128xf32>
    %cst_12 = arith.constant 0.000000e+00 : f32
    %13 = vector.broadcast %cst_12 : f32 to vector<8x128xf32>
    %14 = arith.maximumf %12, %13 : vector<8x128xf32>
    %15 = arith.truncf %14 : vector<8x128xf32> to vector<8x128xbf16>
    %c0_13 = arith.constant 0 : index
    %c0_14 = arith.constant 0 : index
    %16 = vector.load %arg7[%c0_13, %c0_14] : memref<8x128xbf16, #tpu.memory_space<vmem>>, vector<8x128xbf16>
    tpu.vector_store %arg7[%c0_13, %c0_14], %15 {strides = array<i32>} : memref<8x128xbf16, #tpu.memory_space<vmem>>, vector<8x128xbf16>,
    return
  }
  func.func @transform_0(%arg0: i32) -> (i32, i32) {
    %c0_i32 = arith.constant 0 : i32
    %c0_i32_0 = arith.constant 0 : i32
    return %arg0, %c0_i32 : i32, i32
  }
  func.func @transform_1(%arg0: i32) -> (i32, i32) {
    %c0_i32 = arith.constant 0 : i32
    %c0_i32_0 = arith.constant 0 : i32
    %c0_i32_1 = arith.constant 0 : i32
    return %c0_i32, %c0_i32_0 : i32, i32
  }
  func.func @transform_2(%arg0: i32) -> (i32, i32) {
    %c0_i32 = arith.constant 0 : i32
    %c0_i32_0 = arith.constant 0 : i32
    %c0_i32_1 = arith.constant 0 : i32
    return %c0_i32, %c0_i32_0 : i32, i32
  }
  func.func @transform_3(%arg0: i32) -> (i32, i32) {
    %c0_i32 = arith.constant 0 : i32
    %c0_i32_0 = arith.constant 0 : i32
    return %arg0, %c0_i32 : i32, i32
  }
  func.func @transform_4(%arg0: i32) -> (i32, i32) {
    %c0_i32 = arith.constant 0 : i32
    %c0_i32_0 = arith.constant 0 : i32
    %c0_i32_1 = arith.constant 0 : i32
    return %c0_i32, %c0_i32_0 : i32, i32
  }
  func.func @transform_5(%arg0: i32) -> (i32, i32) {
    %c0_i32 = arith.constant 0 : i32
    %c0_i32_0 = arith.constant 0 : i32
    %c0_i32_1 = arith.constant 0 : i32
    return %c0_i32, %c0_i32_0 : i32, i32
  }
  func.func @transform_6(%arg0: i32) -> (i32, i32) {
    %c0_i32 = arith.constant 0 : i32
    %c0_i32_0 = arith.constant 0 : i32
    return %arg0, %c0_i32 : i32, i32
  }
}

module attributes {stable_mosaic.version = 11 : i64} {
  func.func @_gemm_act_kernel(%arg0: i32, %arg1: memref<8x384xbf16, #tpu.memory_space<vmem>>, %arg2: memref<384x128xbf16, #tpu.memory_space<vmem>>, %arg3: memref<1x128xf32, #tpu.memory_space<vmem>>, %arg4: memref<8x128xbf16, #tpu.memory_space<vmem>>) attributes {dimension_semantics = [#tpu.dimension_semantics<parallel>], iteration_bounds = array<i64: 1>, scalar_prefetch = 0 : i64, scratch_operands = 0 : i64, tpu.core_type = #tpu.core_type<tc>, window_params = [{transform_indices = @transform_0, window_bounds = array<i64: 8, 384>}, {pipeline_mode = #tpu.pipeline_mode<synchronous>, transform_indices = @transform_1, window_bounds = array<i64: 384, 128>}, {pipeline_mode = #tpu.pipeline_mode<synchronous>, transform_indices = @transform_2, window_bounds = array<i64: 1, 128>}, {transform_indices = @transform_3, window_bounds = array<i64: 8, 128>}]} {
    %c0 = arith.constant 0 : index
    %c0_0 = arith.constant 0 : index
    %0 = vector.load %arg1[%c0, %c0_0] : memref<8x384xbf16, #tpu.memory_space<vmem>>, vector<8x384xbf16>
    %c0_1 = arith.constant 0 : index
    %c0_2 = arith.constant 0 : index
    %1 = vector.load %arg2[%c0_1, %c0_2] : memref<384x128xbf16, #tpu.memory_space<vmem>>, vector<384x128xbf16>
    %cst = arith.constant dense<0.000000e+00> : vector<8x128xf32>
    %2 = tpu.matmul %0, %1, %cst {dimension_numbers = #tpu.dot_dimension_numbers<[1], [0], [0], [1], [0, 0, 1, 1], [], []>} : vector<8x384xbf16>, vector<384x128xbf16>, vector<8x128xf32> -> vector<8x128xf32>
    %c0_3 = arith.constant 0 : index
    %c0_4 = arith.constant 0 : index
    %3 = vector.load %arg3[%c0_3, %c0_4] : memref<1x128xf32, #tpu.memory_space<vmem>>, vector<1x128xf32>
    %4 = vector.broadcast %3 : vector<1x128xf32> to vector<8x128xf32>
    %5 = arith.addf %2, %4 : vector<8x128xf32>
    %cst_5 = arith.constant 0.000000e+00 : f32
    %6 = vector.broadcast %cst_5 : f32 to vector<8x128xf32>
    %7 = arith.maximumf %5, %6 : vector<8x128xf32>
    %8 = arith.truncf %7 : vector<8x128xf32> to vector<8x128xbf16>
    %c0_6 = arith.constant 0 : index
    %c0_7 = arith.constant 0 : index
    %9 = vector.load %arg4[%c0_6, %c0_7] : memref<8x128xbf16, #tpu.memory_space<vmem>>, vector<8x128xbf16>
    tpu.vector_store %arg4[%c0_6, %c0_7], %8 {strides = array<i32>} : memref<8x128xbf16, #tpu.memory_space<vmem>>, vector<8x128xbf16>,
    return
  }
  func.func @transform_0(%arg0: i32) -> (i32, i32) {
    %c0_i32 = arith.constant 0 : i32
    %c0_i32_0 = arith.constant 0 : i32
    return %arg0, %c0_i32 : i32, i32
  }
  func.func @transform_1(%arg0: i32) -> (i32, i32) {
    %c0_i32 = arith.constant 0 : i32
    %c0_i32_0 = arith.constant 0 : i32
    %c0_i32_1 = arith.constant 0 : i32
    return %c0_i32, %c0_i32_0 : i32, i32
  }
  func.func @transform_2(%arg0: i32) -> (i32, i32) {
    %c0_i32 = arith.constant 0 : i32
    %c0_i32_0 = arith.constant 0 : i32
    %c0_i32_1 = arith.constant 0 : i32
    return %c0_i32, %c0_i32_0 : i32, i32
  }
  func.func @transform_3(%arg0: i32) -> (i32, i32) {
    %c0_i32 = arith.constant 0 : i32
    %c0_i32_0 = arith.constant 0 : i32
    return %arg0, %c0_i32 : i32, i32
  }
}

module attributes {stable_mosaic.version = 11 : i64} {
  func.func @_gemm_res_relu_kernel(%arg0: i32, %arg1: memref<8x384xbf16, #tpu.memory_space<vmem>>, %arg2: memref<384x128xbf16, #tpu.memory_space<vmem>>, %arg3: memref<1x128xf32, #tpu.memory_space<vmem>>, %arg4: memref<8x128xbf16, #tpu.memory_space<vmem>>, %arg5: memref<8x128xbf16, #tpu.memory_space<vmem>>) attributes {dimension_semantics = [#tpu.dimension_semantics<parallel>], iteration_bounds = array<i64: 1>, scalar_prefetch = 0 : i64, scratch_operands = 0 : i64, tpu.core_type = #tpu.core_type<tc>, window_params = [{transform_indices = @transform_0, window_bounds = array<i64: 8, 384>}, {pipeline_mode = #tpu.pipeline_mode<synchronous>, transform_indices = @transform_1, window_bounds = array<i64: 384, 128>}, {pipeline_mode = #tpu.pipeline_mode<synchronous>, transform_indices = @transform_2, window_bounds = array<i64: 1, 128>}, {transform_indices = @transform_3, window_bounds = array<i64: 8, 128>}, {transform_indices = @transform_4, window_bounds = array<i64: 8, 128>}]} {
    %c0 = arith.constant 0 : index
    %c0_0 = arith.constant 0 : index
    %0 = vector.load %arg1[%c0, %c0_0] : memref<8x384xbf16, #tpu.memory_space<vmem>>, vector<8x384xbf16>
    %c0_1 = arith.constant 0 : index
    %c0_2 = arith.constant 0 : index
    %1 = vector.load %arg2[%c0_1, %c0_2] : memref<384x128xbf16, #tpu.memory_space<vmem>>, vector<384x128xbf16>
    %cst = arith.constant dense<0.000000e+00> : vector<8x128xf32>
    %2 = tpu.matmul %0, %1, %cst {dimension_numbers = #tpu.dot_dimension_numbers<[1], [0], [0], [1], [0, 0, 1, 1], [], []>} : vector<8x384xbf16>, vector<384x128xbf16>, vector<8x128xf32> -> vector<8x128xf32>
    %c0_3 = arith.constant 0 : index
    %c0_4 = arith.constant 0 : index
    %3 = vector.load %arg3[%c0_3, %c0_4] : memref<1x128xf32, #tpu.memory_space<vmem>>, vector<1x128xf32>
    %4 = vector.broadcast %3 : vector<1x128xf32> to vector<8x128xf32>
    %5 = arith.addf %2, %4 : vector<8x128xf32>
    %c0_5 = arith.constant 0 : index
    %c0_6 = arith.constant 0 : index
    %6 = vector.load %arg4[%c0_5, %c0_6] : memref<8x128xbf16, #tpu.memory_space<vmem>>, vector<8x128xbf16>
    %7 = arith.extf %6 : vector<8x128xbf16> to vector<8x128xf32>
    %8 = arith.addf %5, %7 : vector<8x128xf32>
    %cst_7 = arith.constant 0.000000e+00 : f32
    %9 = vector.broadcast %cst_7 : f32 to vector<8x128xf32>
    %10 = arith.maximumf %8, %9 : vector<8x128xf32>
    %11 = arith.truncf %10 : vector<8x128xf32> to vector<8x128xbf16>
    %c0_8 = arith.constant 0 : index
    %c0_9 = arith.constant 0 : index
    %12 = vector.load %arg5[%c0_8, %c0_9] : memref<8x128xbf16, #tpu.memory_space<vmem>>, vector<8x128xbf16>
    tpu.vector_store %arg5[%c0_8, %c0_9], %11 {strides = array<i32>} : memref<8x128xbf16, #tpu.memory_space<vmem>>, vector<8x128xbf16>,
    return
  }
  func.func @transform_0(%arg0: i32) -> (i32, i32) {
    %c0_i32 = arith.constant 0 : i32
    %c0_i32_0 = arith.constant 0 : i32
    return %arg0, %c0_i32 : i32, i32
  }
  func.func @transform_1(%arg0: i32) -> (i32, i32) {
    %c0_i32 = arith.constant 0 : i32
    %c0_i32_0 = arith.constant 0 : i32
    %c0_i32_1 = arith.constant 0 : i32
    return %c0_i32, %c0_i32_0 : i32, i32
  }
  func.func @transform_2(%arg0: i32) -> (i32, i32) {
    %c0_i32 = arith.constant 0 : i32
    %c0_i32_0 = arith.constant 0 : i32
    %c0_i32_1 = arith.constant 0 : i32
    return %c0_i32, %c0_i32_0 : i32, i32
  }
  func.func @transform_3(%arg0: i32) -> (i32, i32) {
    %c0_i32 = arith.constant 0 : i32
    %c0_i32_0 = arith.constant 0 : i32
    return %arg0, %c0_i32 : i32, i32
  }
  func.func @transform_4(%arg0: i32) -> (i32, i32) {
    %c0_i32 = arith.constant 0 : i32
    %c0_i32_0 = arith.constant 0 : i32
    return %arg0, %c0_i32 : i32, i32
  }
}

module attributes {stable_mosaic.version = 11 : i64} {
  func.func @_gemm_res_relu_kernel(%arg0: i32, %arg1: memref<8x640xbf16, #tpu.memory_space<vmem>>, %arg2: memref<640x128xbf16, #tpu.memory_space<vmem>>, %arg3: memref<1x128xf32, #tpu.memory_space<vmem>>, %arg4: memref<8x128xbf16, #tpu.memory_space<vmem>>, %arg5: memref<8x128xbf16, #tpu.memory_space<vmem>>) attributes {dimension_semantics = [#tpu.dimension_semantics<parallel>], iteration_bounds = array<i64: 1>, scalar_prefetch = 0 : i64, scratch_operands = 0 : i64, tpu.core_type = #tpu.core_type<tc>, window_params = [{transform_indices = @transform_0, window_bounds = array<i64: 8, 640>}, {pipeline_mode = #tpu.pipeline_mode<synchronous>, transform_indices = @transform_1, window_bounds = array<i64: 640, 128>}, {pipeline_mode = #tpu.pipeline_mode<synchronous>, transform_indices = @transform_2, window_bounds = array<i64: 1, 128>}, {transform_indices = @transform_3, window_bounds = array<i64: 8, 128>}, {transform_indices = @transform_4, window_bounds = array<i64: 8, 128>}]} {
    %c0 = arith.constant 0 : index
    %c0_0 = arith.constant 0 : index
    %0 = vector.load %arg1[%c0, %c0_0] : memref<8x640xbf16, #tpu.memory_space<vmem>>, vector<8x640xbf16>
    %c0_1 = arith.constant 0 : index
    %c0_2 = arith.constant 0 : index
    %1 = vector.load %arg2[%c0_1, %c0_2] : memref<640x128xbf16, #tpu.memory_space<vmem>>, vector<640x128xbf16>
    %cst = arith.constant dense<0.000000e+00> : vector<8x128xf32>
    %2 = tpu.matmul %0, %1, %cst {dimension_numbers = #tpu.dot_dimension_numbers<[1], [0], [0], [1], [0, 0, 1, 1], [], []>} : vector<8x640xbf16>, vector<640x128xbf16>, vector<8x128xf32> -> vector<8x128xf32>
    %c0_3 = arith.constant 0 : index
    %c0_4 = arith.constant 0 : index
    %3 = vector.load %arg3[%c0_3, %c0_4] : memref<1x128xf32, #tpu.memory_space<vmem>>, vector<1x128xf32>
    %4 = vector.broadcast %3 : vector<1x128xf32> to vector<8x128xf32>
    %5 = arith.addf %2, %4 : vector<8x128xf32>
    %c0_5 = arith.constant 0 : index
    %c0_6 = arith.constant 0 : index
    %6 = vector.load %arg4[%c0_5, %c0_6] : memref<8x128xbf16, #tpu.memory_space<vmem>>, vector<8x128xbf16>
    %7 = arith.extf %6 : vector<8x128xbf16> to vector<8x128xf32>
    %8 = arith.addf %5, %7 : vector<8x128xf32>
    %cst_7 = arith.constant 0.000000e+00 : f32
    %9 = vector.broadcast %cst_7 : f32 to vector<8x128xf32>
    %10 = arith.maximumf %8, %9 : vector<8x128xf32>
    %11 = arith.truncf %10 : vector<8x128xf32> to vector<8x128xbf16>
    %c0_8 = arith.constant 0 : index
    %c0_9 = arith.constant 0 : index
    %12 = vector.load %arg5[%c0_8, %c0_9] : memref<8x128xbf16, #tpu.memory_space<vmem>>, vector<8x128xbf16>
    tpu.vector_store %arg5[%c0_8, %c0_9], %11 {strides = array<i32>} : memref<8x128xbf16, #tpu.memory_space<vmem>>, vector<8x128xbf16>,
    return
  }
  func.func @transform_0(%arg0: i32) -> (i32, i32) {
    %c0_i32 = arith.constant 0 : i32
    %c0_i32_0 = arith.constant 0 : i32
    return %arg0, %c0_i32 : i32, i32
  }
  func.func @transform_1(%arg0: i32) -> (i32, i32) {
    %c0_i32 = arith.constant 0 : i32
    %c0_i32_0 = arith.constant 0 : i32
    %c0_i32_1 = arith.constant 0 : i32
    return %c0_i32, %c0_i32_0 : i32, i32
  }
  func.func @transform_2(%arg0: i32) -> (i32, i32) {
    %c0_i32 = arith.constant 0 : i32
    %c0_i32_0 = arith.constant 0 : i32
    %c0_i32_1 = arith.constant 0 : i32
    return %c0_i32, %c0_i32_0 : i32, i32
  }
  func.func @transform_3(%arg0: i32) -> (i32, i32) {
    %c0_i32 = arith.constant 0 : i32
    %c0_i32_0 = arith.constant 0 : i32
    return %arg0, %c0_i32 : i32, i32
  }
  func.func @transform_4(%arg0: i32) -> (i32, i32) {
    %c0_i32 = arith.constant 0 : i32
    %c0_i32_0 = arith.constant 0 : i32
    return %arg0, %c0_i32 : i32, i32
  }
}

module attributes {stable_mosaic.version = 11 : i64} {
  func.func @_gemm_act_kernel(%arg0: i32, %arg1: memref<8x640xbf16, #tpu.memory_space<vmem>>, %arg2: memref<640x128xbf16, #tpu.memory_space<vmem>>, %arg3: memref<1x128xf32, #tpu.memory_space<vmem>>, %arg4: memref<8x128xbf16, #tpu.memory_space<vmem>>) attributes {dimension_semantics = [#tpu.dimension_semantics<parallel>], iteration_bounds = array<i64: 1>, scalar_prefetch = 0 : i64, scratch_operands = 0 : i64, tpu.core_type = #tpu.core_type<tc>, window_params = [{transform_indices = @transform_0, window_bounds = array<i64: 8, 640>}, {pipeline_mode = #tpu.pipeline_mode<synchronous>, transform_indices = @transform_1, window_bounds = array<i64: 640, 128>}, {pipeline_mode = #tpu.pipeline_mode<synchronous>, transform_indices = @transform_2, window_bounds = array<i64: 1, 128>}, {transform_indices = @transform_3, window_bounds = array<i64: 8, 128>}]} {
    %c0 = arith.constant 0 : index
    %c0_0 = arith.constant 0 : index
    %0 = vector.load %arg1[%c0, %c0_0] : memref<8x640xbf16, #tpu.memory_space<vmem>>, vector<8x640xbf16>
    %c0_1 = arith.constant 0 : index
    %c0_2 = arith.constant 0 : index
    %1 = vector.load %arg2[%c0_1, %c0_2] : memref<640x128xbf16, #tpu.memory_space<vmem>>, vector<640x128xbf16>
    %cst = arith.constant dense<0.000000e+00> : vector<8x128xf32>
    %2 = tpu.matmul %0, %1, %cst {dimension_numbers = #tpu.dot_dimension_numbers<[1], [0], [0], [1], [0, 0, 1, 1], [], []>} : vector<8x640xbf16>, vector<640x128xbf16>, vector<8x128xf32> -> vector<8x128xf32>
    %c0_3 = arith.constant 0 : index
    %c0_4 = arith.constant 0 : index
    %3 = vector.load %arg3[%c0_3, %c0_4] : memref<1x128xf32, #tpu.memory_space<vmem>>, vector<1x128xf32>
    %4 = vector.broadcast %3 : vector<1x128xf32> to vector<8x128xf32>
    %5 = arith.addf %2, %4 : vector<8x128xf32>
    %cst_5 = arith.constant 0.000000e+00 : f32
    %6 = vector.broadcast %cst_5 : f32 to vector<8x128xf32>
    %7 = arith.maximumf %5, %6 : vector<8x128xf32>
    %8 = arith.truncf %7 : vector<8x128xf32> to vector<8x128xbf16>
    %c0_6 = arith.constant 0 : index
    %c0_7 = arith.constant 0 : index
    %9 = vector.load %arg4[%c0_6, %c0_7] : memref<8x128xbf16, #tpu.memory_space<vmem>>, vector<8x128xbf16>
    tpu.vector_store %arg4[%c0_6, %c0_7], %8 {strides = array<i32>} : memref<8x128xbf16, #tpu.memory_space<vmem>>, vector<8x128xbf16>,
    return
  }
  func.func @transform_0(%arg0: i32) -> (i32, i32) {
    %c0_i32 = arith.constant 0 : i32
    %c0_i32_0 = arith.constant 0 : i32
    return %arg0, %c0_i32 : i32, i32
  }
  func.func @transform_1(%arg0: i32) -> (i32, i32) {
    %c0_i32 = arith.constant 0 : i32
    %c0_i32_0 = arith.constant 0 : i32
    %c0_i32_1 = arith.constant 0 : i32
    return %c0_i32, %c0_i32_0 : i32, i32
  }
  func.func @transform_2(%arg0: i32) -> (i32, i32) {
    %c0_i32 = arith.constant 0 : i32
    %c0_i32_0 = arith.constant 0 : i32
    %c0_i32_1 = arith.constant 0 : i32
    return %c0_i32, %c0_i32_0 : i32, i32
  }
  func.func @transform_3(%arg0: i32) -> (i32, i32) {
    %c0_i32 = arith.constant 0 : i32
    %c0_i32_0 = arith.constant 0 : i32
    return %arg0, %c0_i32 : i32, i32
  }
}

module attributes {stable_mosaic.version = 11 : i64} {
  func.func @_gemm_gemm_relu_kernel(%arg0: i32, %arg1: memref<8x640xbf16, #tpu.memory_space<vmem>>, %arg2: memref<640x128xbf16, #tpu.memory_space<vmem>>, %arg3: memref<1x128xf32, #tpu.memory_space<vmem>>, %arg4: memref<8x128xbf16, #tpu.memory_space<vmem>>, %arg5: memref<128x128xbf16, #tpu.memory_space<vmem>>, %arg6: memref<1x128xf32, #tpu.memory_space<vmem>>, %arg7: memref<8x128xbf16, #tpu.memory_space<vmem>>) attributes {dimension_semantics = [#tpu.dimension_semantics<parallel>], iteration_bounds = array<i64: 1>, scalar_prefetch = 0 : i64, scratch_operands = 0 : i64, tpu.core_type = #tpu.core_type<tc>, window_params = [{transform_indices = @transform_0, window_bounds = array<i64: 8, 640>}, {pipeline_mode = #tpu.pipeline_mode<synchronous>, transform_indices = @transform_1, window_bounds = array<i64: 640, 128>}, {pipeline_mode = #tpu.pipeline_mode<synchronous>, transform_indices = @transform_2, window_bounds = array<i64: 1, 128>}, {transform_indices = @transform_3, window_bounds = array<i64: 8, 128>}, {pipeline_mode = #tpu.pipeline_mode<synchronous>, transform_indices = @transform_4, window_bounds = array<i64: 128, 128>}, {pipeline_mode = #tpu.pipeline_mode<synchronous>, transform_indices = @transform_5, window_bounds = array<i64: 1, 128>}, {transform_indices = @transform_6, window_bounds = array<i64: 8, 128>}]} {
    %c0 = arith.constant 0 : index
    %c0_0 = arith.constant 0 : index
    %0 = vector.load %arg1[%c0, %c0_0] : memref<8x640xbf16, #tpu.memory_space<vmem>>, vector<8x640xbf16>
    %c0_1 = arith.constant 0 : index
    %c0_2 = arith.constant 0 : index
    %1 = vector.load %arg2[%c0_1, %c0_2] : memref<640x128xbf16, #tpu.memory_space<vmem>>, vector<640x128xbf16>
    %cst = arith.constant dense<0.000000e+00> : vector<8x128xf32>
    %2 = tpu.matmul %0, %1, %cst {dimension_numbers = #tpu.dot_dimension_numbers<[1], [0], [0], [1], [0, 0, 1, 1], [], []>} : vector<8x640xbf16>, vector<640x128xbf16>, vector<8x128xf32> -> vector<8x128xf32>
    %c0_3 = arith.constant 0 : index
    %c0_4 = arith.constant 0 : index
    %3 = vector.load %arg4[%c0_3, %c0_4] : memref<8x128xbf16, #tpu.memory_space<vmem>>, vector<8x128xbf16>
    %c0_5 = arith.constant 0 : index
    %c0_6 = arith.constant 0 : index
    %4 = vector.load %arg5[%c0_5, %c0_6] : memref<128x128xbf16, #tpu.memory_space<vmem>>, vector<128x128xbf16>
    %cst_7 = arith.constant dense<0.000000e+00> : vector<8x128xf32>
    %5 = tpu.matmul %3, %4, %cst_7 {dimension_numbers = #tpu.dot_dimension_numbers<[1], [0], [0], [1], [0, 0, 1, 1], [], []>} : vector<8x128xbf16>, vector<128x128xbf16>, vector<8x128xf32> -> vector<8x128xf32>
    %6 = arith.addf %2, %5 : vector<8x128xf32>
    %c0_8 = arith.constant 0 : index
    %c0_9 = arith.constant 0 : index
    %7 = vector.load %arg3[%c0_8, %c0_9] : memref<1x128xf32, #tpu.memory_space<vmem>>, vector<1x128xf32>
    %8 = vector.broadcast %7 : vector<1x128xf32> to vector<8x128xf32>
    %9 = arith.addf %6, %8 : vector<8x128xf32>
    %c0_10 = arith.constant 0 : index
    %c0_11 = arith.constant 0 : index
    %10 = vector.load %arg6[%c0_10, %c0_11] : memref<1x128xf32, #tpu.memory_space<vmem>>, vector<1x128xf32>
    %11 = vector.broadcast %10 : vector<1x128xf32> to vector<8x128xf32>
    %12 = arith.addf %9, %11 : vector<8x128xf32>
    %cst_12 = arith.constant 0.000000e+00 : f32
    %13 = vector.broadcast %cst_12 : f32 to vector<8x128xf32>
    %14 = arith.maximumf %12, %13 : vector<8x128xf32>
    %15 = arith.truncf %14 : vector<8x128xf32> to vector<8x128xbf16>
    %c0_13 = arith.constant 0 : index
    %c0_14 = arith.constant 0 : index
    %16 = vector.load %arg7[%c0_13, %c0_14] : memref<8x128xbf16, #tpu.memory_space<vmem>>, vector<8x128xbf16>
    tpu.vector_store %arg7[%c0_13, %c0_14], %15 {strides = array<i32>} : memref<8x128xbf16, #tpu.memory_space<vmem>>, vector<8x128xbf16>,
    return
  }
  func.func @transform_0(%arg0: i32) -> (i32, i32) {
    %c0_i32 = arith.constant 0 : i32
    %c0_i32_0 = arith.constant 0 : i32
    return %arg0, %c0_i32 : i32, i32
  }
  func.func @transform_1(%arg0: i32) -> (i32, i32) {
    %c0_i32 = arith.constant 0 : i32
    %c0_i32_0 = arith.constant 0 : i32
    %c0_i32_1 = arith.constant 0 : i32
    return %c0_i32, %c0_i32_0 : i32, i32
  }
  func.func @transform_2(%arg0: i32) -> (i32, i32) {
    %c0_i32 = arith.constant 0 : i32
    %c0_i32_0 = arith.constant 0 : i32
    %c0_i32_1 = arith.constant 0 : i32
    return %c0_i32, %c0_i32_0 : i32, i32
  }
  func.func @transform_3(%arg0: i32) -> (i32, i32) {
    %c0_i32 = arith.constant 0 : i32
    %c0_i32_0 = arith.constant 0 : i32
    return %arg0, %c0_i32 : i32, i32
  }
  func.func @transform_4(%arg0: i32) -> (i32, i32) {
    %c0_i32 = arith.constant 0 : i32
    %c0_i32_0 = arith.constant 0 : i32
    %c0_i32_1 = arith.constant 0 : i32
    return %c0_i32, %c0_i32_0 : i32, i32
  }
  func.func @transform_5(%arg0: i32) -> (i32, i32) {
    %c0_i32 = arith.constant 0 : i32
    %c0_i32_0 = arith.constant 0 : i32
    %c0_i32_1 = arith.constant 0 : i32
    return %c0_i32, %c0_i32_0 : i32, i32
  }
  func.func @transform_6(%arg0: i32) -> (i32, i32) {
    %c0_i32 = arith.constant 0 : i32
    %c0_i32_0 = arith.constant 0 : i32
    return %arg0, %c0_i32 : i32, i32
  }
}

module attributes {stable_mosaic.version = 11 : i64} {
  func.func @_avgpool_fc_kernel(%arg0: i32, %arg1: memref<8x1x64xbf16, #tpu.memory_space<vmem>>, %arg2: memref<64x128xbf16, #tpu.memory_space<vmem>>, %arg3: memref<1x128xf32, #tpu.memory_space<vmem>>, %arg4: memref<8x128xf32, #tpu.memory_space<vmem>>) attributes {dimension_semantics = [#tpu.dimension_semantics<arbitrary>], iteration_bounds = array<i64: 1>, scalar_prefetch = 0 : i64, scratch_operands = 0 : i64, tpu.core_type = #tpu.core_type<tc>, window_params = [{pipeline_mode = #tpu.pipeline_mode<synchronous>, transform_indices = @transform_0, window_bounds = array<i64: 8, 1, 64>}, {pipeline_mode = #tpu.pipeline_mode<synchronous>, transform_indices = @transform_1, window_bounds = array<i64: 64, 128>}, {pipeline_mode = #tpu.pipeline_mode<synchronous>, transform_indices = @transform_2, window_bounds = array<i64: 1, 128>}, {pipeline_mode = #tpu.pipeline_mode<synchronous>, transform_indices = @transform_3, window_bounds = array<i64: 8, 128>}]} {
    %c0 = arith.constant 0 : index
    %c0_0 = arith.constant 0 : index
    %c0_1 = arith.constant 0 : index
    %0 = vector.load %arg1[%c0, %c0_0, %c0_1] : memref<8x1x64xbf16, #tpu.memory_space<vmem>>, vector<8x1x64xbf16>
    %1 = arith.extf %0 : vector<8x1x64xbf16> to vector<8x1x64xf32>
    %cst = arith.constant dense<0.000000e+00> : vector<8x64xf32>
    %2 = vector.multi_reduction <add>, %1, %cst [1] : vector<8x1x64xf32> to vector<8x64xf32>
    %cst_2 = arith.constant 1.000000e+00 : f32
    %3 = vector.broadcast %cst_2 : f32 to vector<8x64xf32>
    %4 = arith.divf %2, %3 : vector<8x64xf32>
    %5 = arith.truncf %4 : vector<8x64xf32> to vector<8x64xbf16>
    %c0_3 = arith.constant 0 : index
    %c0_4 = arith.constant 0 : index
    %6 = vector.load %arg2[%c0_3, %c0_4] : memref<64x128xbf16, #tpu.memory_space<vmem>>, vector<64x128xbf16>
    %cst_5 = arith.constant dense<0.000000e+00> : vector<8x128xf32>
    %7 = tpu.matmul %5, %6, %cst_5 {dimension_numbers = #tpu.dot_dimension_numbers<[1], [0], [0], [1], [0, 0, 1, 1], [], []>} : vector<8x64xbf16>, vector<64x128xbf16>, vector<8x128xf32> -> vector<8x128xf32>
    %c0_6 = arith.constant 0 : index
    %c0_7 = arith.constant 0 : index
    %8 = vector.load %arg3[%c0_6, %c0_7] : memref<1x128xf32, #tpu.memory_space<vmem>>, vector<1x128xf32>
    %9 = vector.broadcast %8 : vector<1x128xf32> to vector<8x128xf32>
    %10 = arith.addf %7, %9 : vector<8x128xf32>
    %c0_8 = arith.constant 0 : index
    %c0_9 = arith.constant 0 : index
    %11 = vector.load %arg4[%c0_8, %c0_9] : memref<8x128xf32, #tpu.memory_space<vmem>>, vector<8x128xf32>
    tpu.vector_store %arg4[%c0_8, %c0_9], %10 {strides = array<i32>} : memref<8x128xf32, #tpu.memory_space<vmem>>, vector<8x128xf32>,
    return
  }
  func.func @transform_0(%arg0: i32) -> (i32, i32, i32) {
    %c0_i32 = arith.constant 0 : i32
    %c0_i32_0 = arith.constant 0 : i32
    %c0_i32_1 = arith.constant 0 : i32
    %c0_i32_2 = arith.constant 0 : i32
    return %c0_i32, %c0_i32_0, %c0_i32_1 : i32, i32, i32
  }
  func.func @transform_1(%arg0: i32) -> (i32, i32) {
    %c0_i32 = arith.constant 0 : i32
    %c0_i32_0 = arith.constant 0 : i32
    %c0_i32_1 = arith.constant 0 : i32
    return %c0_i32, %c0_i32_0 : i32, i32
  }
  func.func @transform_2(%arg0: i32) -> (i32, i32) {
    %c0_i32 = arith.constant 0 : i32
    %c0_i32_0 = arith.constant 0 : i32
    %c0_i32_1 = arith.constant 0 : i32
    return %c0_i32, %c0_i32_0 : i32, i32
  }
  func.func @transform_3(%arg0: i32) -> (i32, i32) {
    %c0_i32 = arith.constant 0 : i32
    %c0_i32_0 = arith.constant 0 : i32
    %c0_i32_1 = arith.constant 0 : i32
    return %c0_i32, %c0_i32_0 : i32, i32
  }
}

</mosaic_0001>

<llo_original>
// kernel: resnet_forward.19
$region0: #{resnet_forward.19}
  #allocation0 [shape = 'u32[]', space=smem, size = 0x4, offset = 0x4, fixed_abs, tag = 'smem constant byte address 0x4 - core index']
  #allocation1 [shape = 'u32[72,128]{1,0:T(1,128)}', space=vmem, size = 0x9000, scoped, tag = 'internal scratch']
  %s0 = inlined_call_operand.vmem [shape: bf16[512,256], index: 0, kind: input, shape index: {}]
  %s1 = inlined_call_operand.vmem [shape: bf16[256,128], index: 1, kind: input, shape index: {}]
  %s2 = inlined_call_operand.vmem [shape: f32[1,128], index: 2, kind: input, shape index: {}]
  %s3 = inlined_call_operand.vmem [shape: bf16[512,128], index: 3, kind: output, shape index: {}]
  %s4 = sld [smem:[#allocation0]]
  $region45: #{resnet_forward.19} parent=0
    _
  %s6 = ssub.s32 1, %s4
  %s7 = scalar_select 0, %s6, %s4
  loop: start=0, step=1, limit=6
  $region2: #{resnet_forward.19} parent=0 // loop_pre_header
    _
  $region3: #{resnet_forward.19} parent=0 // loop_header
    %s9 = sphi 0, %s13
    %p10 = scmp.ge.s32.totalorder %s9, 6
    %s19 = sphi 0, %s21
    %s22 = sphi 0, %s19
    %s23 = sphi 0, %s22
    %s39 = sphi 0, %s23
    %s43 = sphi 0, %s43
    %s45 = sphi 0, %s43
    %s46 = sphi 0, %s45
    %s60 = sphi 0, %s46
    %s64 = sphi 0, %s64
    %s66 = sphi 0, %s64
    %s67 = sphi 0, %s66
    %s81 = sphi 0, %s67
    %s87 = sphi 0, %s89
    %s90 = sphi 0, %s87
    %s91 = sphi 0, %s90
    %s107 = sphi 0, %s91
  $region4: #{resnet_forward.19} parent=0 // loop_header_branch
    %12 = sbr.rel (%p10) target = $region8
  $region5: #{resnet_forward.19} parent=0 // loop_body
    %s14 = ssub.s32 %s9, 1
    %s15 = ssub.s32 %s9, 2
    %s16 = sadd.s32 %s9, 1
    %s17 = ssub.s32 %s9, %s16
    %p18 = scmp.eq.s32.totalorder %s17, 0
    %s20 = sadd.s32 %s19, 1
    %s21 = scalar_select %p18, %s19, %s20
    %p24 = pneg %p18
    %p25 = scmp.eq.s32.totalorder %s9, 3
    %p26 = por %p24, %p25
    %p27 = scmp.ne.s32.totalorder %s19, %s22
    %p28 = scmp.eq.s32.totalorder %s9, 0
    %p29 = por %p27, %p28
    %p30 = scmp.ne.s32.totalorder %s19, %s22
    %p31 = scmp.eq.s32.totalorder %s14, 3
    %p32 = por %p30, %p31
    %p33 = scmp.ne.s32.totalorder %s22, %s23
    %p34 = scmp.eq.s32.totalorder %s14, 0
    %p35 = por %p33, %p34
    %p36 = scmp.ne.s32.totalorder %s22, %s23
    %p37 = scmp.eq.s32.totalorder %s15, 3
    %p38 = por %p36, %p37
    %p40 = scmp.ne.s32.totalorder %s23, %s39
    %p41 = scmp.eq.s32.totalorder %s15, 0
    %p42 = por %p40, %p41
    %s44 = sadd.s32 %s43, 1
    %p47 = scmp.eq.s32.totalorder %s9, 3
    %p48 = scmp.ne.s32.totalorder %s43, %s45
    %p49 = scmp.eq.s32.totalorder %s9, 0
    %p50 = por %p48, %p49
    %p51 = scmp.ne.s32.totalorder %s43, %s45
    %p52 = scmp.eq.s32.totalorder %s14, 3
    %p53 = por %p51, %p52
    %p54 = scmp.ne.s32.totalorder %s45, %s46
    %p55 = scmp.eq.s32.totalorder %s14, 0
    %p56 = por %p54, %p55
    %p57 = scmp.ne.s32.totalorder %s45, %s46
    %p58 = scmp.eq.s32.totalorder %s15, 3
    %p59 = por %p57, %p58
    %p61 = scmp.ne.s32.totalorder %s46, %s60
    %p62 = scmp.eq.s32.totalorder %s15, 0
    %p63 = por %p61, %p62
    %s65 = sadd.s32 %s64, 1
    %p68 = scmp.eq.s32.totalorder %s9, 3
    %p69 = scmp.ne.s32.totalorder %s64, %s66
    %p70 = scmp.eq.s32.totalorder %s9, 0
    %p71 = por %p69, %p70
    %p72 = scmp.ne.s32.totalorder %s64, %s66
    %p73 = scmp.eq.s32.totalorder %s14, 3
    %p74 = por %p72, %p73
    %p75 = scmp.ne.s32.totalorder %s66, %s67
    %p76 = scmp.eq.s32.totalorder %s14, 0
    %p77 = por %p75, %p76
    %p78 = scmp.ne.s32.totalorder %s66, %s67
    %p79 = scmp.eq.s32.totalorder %s15, 3
    %p80 = por %p78, %p79
    %p82 = scmp.ne.s32.totalorder %s67, %s81
    %p83 = scmp.eq.s32.totalorder %s15, 0
    %p84 = por %p82, %p83
    %s85 = ssub.s32 %s9, %s16
    %p86 = scmp.eq.s32.totalorder %s85, 0
    %s88 = sadd.s32 %s87, 1
    %s89 = scalar_select %p86, %s87, %s88
    %p92 = pneg %p86
    %p93 = scmp.eq.s32.totalorder %s9, 3
    %p94 = por %p92, %p93
    %p95 = scmp.ne.s32.totalorder %s87, %s90
    %p96 = scmp.eq.s32.totalorder %s9, 0
    %p97 = por %p95, %p96
    %p98 = scmp.ne.s32.totalorder %s87, %s90
    %p99 = scmp.eq.s32.totalorder %s14, 3
    %p100 = por %p98, %p99
    %p101 = scmp.ne.s32.totalorder %s90, %s91
    %p102 = scmp.eq.s32.totalorder %s14, 0
    %p103 = por %p101, %p102
    %p104 = scmp.ne.s32.totalorder %s90, %s91
    %p105 = scmp.eq.s32.totalorder %s15, 3
    %p106 = por %p104, %p105
    %p108 = scmp.ne.s32.totalorder %s91, %s107
    %p109 = scmp.eq.s32.totalorder %s15, 0
    %p110 = por %p108, %p109
    %p111 = scmp.le.s32.totalorder 1, %s9
    %p112 = scmp.lt.s32.totalorder %s9, 5
    %p113 = pnand %p111, %p112
    %p114 = pneg %p113
    // Predicated region
    $region9: #{resnet_forward.19} parent=5 // pred_check
      _
    $region10: #{resnet_forward.19} parent=5 // pred_check_branch
      %116 = sbr.rel (%p113) target = $region12
    $region11: #{resnet_forward.19} parent=5 // pred_region
      %s117 = ssub.s32 %s9, 1
      // Predicated region
      $region13: #{resnet_forward.19} parent=11 // pred_check
        %p118 = pneg %p56
      $region14: #{resnet_forward.19} parent=11 // pred_check_branch
        %120 = sbr.rel (%p118) target = $region16
      $region15: #{resnet_forward.19} parent=11 // pred_region
        _
      $region16: #{resnet_forward.19} parent=11 // pred_fallthru
        _
      // Predicated region
      $region17: #{resnet_forward.19} parent=11 // pred_check
        %p121 = pneg %p77
      $region18: #{resnet_forward.19} parent=11 // pred_check_branch
        %123 = sbr.rel (%p121) target = $region20
      $region19: #{resnet_forward.19} parent=11 // pred_region
        _
      $region20: #{resnet_forward.19} parent=11 // pred_fallthru
        _
    $region12: #{resnet_forward.19} parent=5 // pred_fallthru
      _
    %p124 = scmp.lt.s32.totalorder %s9, 4
    // Predicated region
    $region21: #{resnet_forward.19} parent=5 // pred_check
      %p125 = pneg %p124
    $region22: #{resnet_forward.19} parent=5 // pred_check_branch
      %127 = sbr.rel (%p125) target = $region24
    $region23: #{resnet_forward.19} parent=5 // pred_region
      // Predicated region
      $region25: #{resnet_forward.19} parent=23 // pred_check
        %p128 = pneg %p29
      $region26: #{resnet_forward.19} parent=23 // pred_check_branch
        %130 = sbr.rel (%p128) target = $region28
      $region27: #{resnet_forward.19} parent=23 // pred_region
        %s131 = smul.u32 16, %s9
        %p132 = scmp.lt.s32.totalorder %s131, 63
        %s133 = scalar_select %p132, %s131, 63
        %s134 = smul.addr %s133, 2
        %s135 = smul.addr %s134, 4
        %s136 = scalar_lea.vmem %s0, %s135
        %s137 = smul.u32 16, %s9
      $region28: #{resnet_forward.19} parent=23 // pred_fallthru
        _
    $region24: #{resnet_forward.19} parent=5 // pred_fallthru
      _
    %p138 = scmp.le.s32.totalorder 1, %s9
    %p139 = scmp.lt.s32.totalorder %s9, 5
    %p140 = pnand %p138, %p139
    %p141 = pneg %p140
    // Predicated region
    $region29: #{resnet_forward.19} parent=5 // pred_check
      _
    $region30: #{resnet_forward.19} parent=5 // pred_check_branch
      %143 = sbr.rel (%p140) target = $region32
    $region31: #{resnet_forward.19} parent=5 // pred_region
      %s144 = ssub.s32 %s9, 1
      %s145 = smul.u32 16, %s14
      %p146 = scmp.lt.s32.totalorder %s145, 63
      %s147 = scalar_select %p146, %s145, 63
      %s148 = smul.addr %s147, 2
      %s149 = smul.addr %s148, 4
      %s150 = scalar_lea.vmem %s0, %s149
      %p151 = pneg %p35
      %p152 = pneg %p32
      %p153 = pneg %p56
      %p154 = pneg %p53
      %p155 = pneg %p77
      %p156 = pneg %p74
      %p157 = pneg %p103
      %p158 = pneg %p100
      %s159 = smul.u32 16, %s14
      %p160 = scmp.lt.s32.totalorder %s159, 63
      %s161 = scalar_select %p160, %s159, 63
      %s162 = smul.addr %s161, 4
      %s163 = scalar_lea.vmem %s3, %s162
      %s164 = smul.u32 16, %s14
      %p165 = scmp.lt.s32.totalorder %s164, 63
      %s166 = scalar_select %p165, %s164, 63
      %s167 = smul.addr %s166, 2
      %s168 = smul.addr %s167, 4
      %s169 = scalar_lea.vmem %s0, %s168
      %s170 = smul.u32 16, %s14
      %s171 = smul.u32 16, %s14
      %p172 = scmp.lt.s32.totalorder %s171, 63
      %s173 = scalar_select %p172, %s171, 63
      %s174 = smul.addr %s173, 4
      %s175 = scalar_lea.vmem %s3, %s174
      %s176 = smul.u32 16, %s14
      %v177 = vld [vmem:[%s169] sm:$0xff]
      %v178 = vld [vmem:[%s169 + $0x8] sm:$0xff]
      %v179 = vld [vmem:[%s169 + $0x10] sm:$0xff]
      %v180 = vld [vmem:[%s169 + $0x18] sm:$0xff]
      %v181 = vld [vmem:[%s169 + $0x20] sm:$0xff]
      %v182 = vld [vmem:[%s169 + $0x28] sm:$0xff]
      %v183 = vld [vmem:[%s169 + $0x30] sm:$0xff]
      %v184 = vld [vmem:[%s169 + $0x38] sm:$0xff]
      %v185 = vld [vmem:[%s169 + $0x40] sm:$0xff]
      %v186 = vld [vmem:[%s169 + $0x48] sm:$0xff]
      %v187 = vld [vmem:[%s169 + $0x50] sm:$0xff]
      %v188 = vld [vmem:[%s169 + $0x58] sm:$0xff]
      %v189 = vld [vmem:[%s169 + $0x60] sm:$0xff]
      %v190 = vld [vmem:[%s169 + $0x68] sm:$0xff]
      %v191 = vld [vmem:[%s169 + $0x70] sm:$0xff]
      %v192 = vld [vmem:[%s169 + $0x78] sm:$0xff]
      %v193 = vld [vmem:[%s1] sm:$0xf]
      %v194 = vld [vmem:[%s1 + $0x4] sm:$0xf]
      %v195 = vld [vmem:[%s1 + $0x8] sm:$0xf]
      %v196 = vld [vmem:[%s1 + $0xc] sm:$0xf]
      %v197 = vld [vmem:[%s1 + $0x10] sm:$0xf]
      %v198 = vld [vmem:[%s1 + $0x14] sm:$0xf]
      %v199 = vld [vmem:[%s1 + $0x18] sm:$0xf]
      %v200 = vld [vmem:[%s1 + $0x1c] sm:$0xf]
      %v201 = vld [vmem:[%s1 + $0x20] sm:$0xf]
      %v202 = vld [vmem:[%s1 + $0x24] sm:$0xf]
      %v203 = vld [vmem:[%s1 + $0x28] sm:$0xf]
      %v204 = vld [vmem:[%s1 + $0x2c] sm:$0xf]
      %v205 = vld [vmem:[%s1 + $0x30] sm:$0xf]
      %v206 = vld [vmem:[%s1 + $0x34] sm:$0xf]
      %v207 = vld [vmem:[%s1 + $0x38] sm:$0xf]
      %v208 = vld [vmem:[%s1 + $0x3c] sm:$0xf]
      %v209 = vld [vmem:[%s1 + $0x40] sm:$0xf]
      %v210 = vld [vmem:[%s1 + $0x44] sm:$0xf]
      %v211 = vld [vmem:[%s1 + $0x48] sm:$0xf]
      %v212 = vld [vmem:[%s1 + $0x4c] sm:$0xf]
      %v213 = vld [vmem:[%s1 + $0x50] sm:$0xf]
      %v214 = vld [vmem:[%s1 + $0x54] sm:$0xf]
      %v215 = vld [vmem:[%s1 + $0x58] sm:$0xf]
      %v216 = vld [vmem:[%s1 + $0x5c] sm:$0xf]
      %v217 = vld [vmem:[%s1 + $0x60] sm:$0xf]
      %v218 = vld [vmem:[%s1 + $0x64] sm:$0xf]
      %v219 = vld [vmem:[%s1 + $0x68] sm:$0xf]
      %v220 = vld [vmem:[%s1 + $0x6c] sm:$0xf]
      %v221 = vld [vmem:[%s1 + $0x70] sm:$0xf]
      %v222 = vld [vmem:[%s1 + $0x74] sm:$0xf]
      %v223 = vld [vmem:[%s1 + $0x78] sm:$0xf]
      %v224 = vld [vmem:[%s1 + $0x7c] sm:$0xf]
      %v225 = vld [vmem:[%s2] sm:$0x1]
      %v227 = vperm.slane %v225, 0
      %v245 = vunpack.c.l.b16 %v177
      %v246 = vunpack.c.h.b16 %v177
      %v247 = vunpack.c.l.b16 %v178
      %v248 = vunpack.c.h.b16 %v178
      %v249 = vunpack.c.l.b16 %v179
      %v250 = vunpack.c.h.b16 %v179
      %v251 = vunpack.c.l.b16 %v180
      %v252 = vunpack.c.h.b16 %v180
      %v253 = vunpack.c.l.b16 %v181
      %v254 = vunpack.c.h.b16 %v181
      %v255 = vunpack.c.l.b16 %v182
      %v256 = vunpack.c.h.b16 %v182
      %v257 = vunpack.c.l.b16 %v183
      %v258 = vunpack.c.h.b16 %v183
      %v259 = vunpack.c.l.b16 %v184
      %v260 = vunpack.c.h.b16 %v184
      %v261 = vunpack.c.l.b16 %v185
      %v262 = vunpack.c.h.b16 %v185
      %v263 = vunpack.c.l.b16 %v186
      %v264 = vunpack.c.h.b16 %v186
      %v265 = vunpack.c.l.b16 %v187
      %v266 = vunpack.c.h.b16 %v187
      %v267 = vunpack.c.l.b16 %v188
      %v268 = vunpack.c.h.b16 %v188
      %v269 = vunpack.c.l.b16 %v189
      %v270 = vunpack.c.h.b16 %v189
      %v271 = vunpack.c.l.b16 %v190
      %v272 = vunpack.c.h.b16 %v190
      %v273 = vunpack.c.l.b16 %v191
      %v274 = vunpack.c.h.b16 %v191
      %v275 = vunpack.c.l.b16 %v192
      %v276 = vunpack.c.h.b16 %v192
      %v277 = vpack.c.b16 %v247, %v245
      %v278 = vpack.c.b16 %v248, %v246
      %v279 = vpack.c.b16 %v251, %v249
      %v280 = vpack.c.b16 %v252, %v250
      %v281 = vpack.c.b16 %v255, %v253
      %v282 = vpack.c.b16 %v256, %v254
      %v283 = vpack.c.b16 %v259, %v257
      %v284 = vpack.c.b16 %v260, %v258
      %v285 = vpack.c.b16 %v263, %v261
      %v286 = vpack.c.b16 %v264, %v262
      %v287 = vpack.c.b16 %v267, %v265
      %v288 = vpack.c.b16 %v268, %v266
      %v289 = vpack.c.b16 %v271, %v269
      %v290 = vpack.c.b16 %v272, %v270
      %v291 = vpack.c.b16 %v275, %v273
      %v292 = vpack.c.b16 %v276, %v274
      %v341 = vunpack.c.l.b16 %v193
      %v342 = vunpack.c.l.b16 %v194
      %v343 = vunpack.c.l.b16 %v195
      %v344 = vunpack.c.l.b16 %v196
      %v345 = vunpack.c.l.b16 %v197
      %v346 = vunpack.c.l.b16 %v198
      %v347 = vunpack.c.l.b16 %v199
      %v348 = vunpack.c.l.b16 %v200
      %v349 = vunpack.c.l.b16 %v201
      %v350 = vunpack.c.l.b16 %v202
      %v351 = vunpack.c.l.b16 %v203
      %v352 = vunpack.c.l.b16 %v204
      %v353 = vunpack.c.l.b16 %v205
      %v354 = vunpack.c.l.b16 %v206
      %v355 = vunpack.c.l.b16 %v207
      %v356 = vunpack.c.l.b16 %v208
      %v357 = vunpack.c.l.b16 %v209
      %v358 = vunpack.c.l.b16 %v210
      %v359 = vunpack.c.l.b16 %v211
      %v360 = vunpack.c.l.b16 %v212
      %v361 = vunpack.c.l.b16 %v213
      %v362 = vunpack.c.l.b16 %v214
      %v363 = vunpack.c.l.b16 %v215
      %v364 = vunpack.c.l.b16 %v216
      %v365 = vunpack.c.l.b16 %v217
      %v366 = vunpack.c.l.b16 %v218
      %v367 = vunpack.c.l.b16 %v219
      %v368 = vunpack.c.l.b16 %v220
      %v369 = vunpack.c.l.b16 %v221
      %v370 = vunpack.c.l.b16 %v222
      %v371 = vunpack.c.l.b16 %v223
      %v372 = vunpack.c.l.b16 %v224
      %v373 = vpack.c.b16 %v342, %v341
      %v374 = vpack.c.b16 %v344, %v343
      %v375 = vpack.c.b16 %v346, %v345
      %v376 = vpack.c.b16 %v348, %v347
      %v377 = vpack.c.b16 %v350, %v349
      %v378 = vpack.c.b16 %v352, %v351
      %v379 = vpack.c.b16 %v354, %v353
      %v380 = vpack.c.b16 %v356, %v355
      %v381 = vpack.c.b16 %v358, %v357
      %v382 = vpack.c.b16 %v360, %v359
      %v383 = vpack.c.b16 %v362, %v361
      %v384 = vpack.c.b16 %v364, %v363
      %v385 = vpack.c.b16 %v366, %v365
      %v386 = vpack.c.b16 %v368, %v367
      %v387 = vpack.c.b16 %v370, %v369
      %v388 = vpack.c.b16 %v372, %v371
      %405 = vmatpush.bf16.msra.mxu0 %v380
      %406 = vmatpush.bf16.msra.mxu0 %v379
      %407 = vmatpush.bf16.msra.mxu0 %v378
      %408 = vmatpush.bf16.msra.mxu0 %v377
      %409 = vmatpush.bf16.msra.mxu0 %v376
      %410 = vmatpush.bf16.msra.mxu0 %v375
      %411 = vmatpush.bf16.msra.mxu0 %v374
      %412 = vmatpush.bf16.msra.mxu0 %v373
      %413 = vmatmul.bf16.gmra.mxu0 %v277
      %v414 = vpop.f32.mrf.mxu0
      %v415 = vadd.f32 %v227, %v414
      %v416 = vpop.f32.mrf.mxu0
      %v417 = vadd.f32 %v227, %v416
      %418 = vmatmul.bf16.gmra.mxu0 %v279
      %v419 = vpop.f32.mrf.mxu0
      %v420 = vadd.f32 %v227, %v419
      %v421 = vpop.f32.mrf.mxu0
      %v422 = vadd.f32 %v227, %v421
      %423 = vmatmul.bf16.gmra.mxu0 %v281
      %v424 = vpop.f32.mrf.mxu0
      %v425 = vadd.f32 %v227, %v424
      %v426 = vpop.f32.mrf.mxu0
      %v427 = vadd.f32 %v227, %v426
      %428 = vmatmul.bf16.gmra.mxu0 %v283
      %v429 = vpop.f32.mrf.mxu0
      %v430 = vadd.f32 %v227, %v429
      %v431 = vpop.f32.mrf.mxu0
      %v432 = vadd.f32 %v227, %v431
      %433 = vmatmul.bf16.gmra.mxu0 %v285
      %v434 = vpop.f32.mrf.mxu0
      %v435 = vadd.f32 %v227, %v434
      %v436 = vpop.f32.mrf.mxu0
      %v437 = vadd.f32 %v227, %v436
      %438 = vmatmul.bf16.gmra.mxu0 %v287
      %v439 = vpop.f32.mrf.mxu0
      %v440 = vadd.f32 %v227, %v439
      %v441 = vpop.f32.mrf.mxu0
      %v442 = vadd.f32 %v227, %v441
      %443 = vmatmul.bf16.gmra.mxu0 %v289
      %v444 = vpop.f32.mrf.mxu0
      %v445 = vadd.f32 %v227, %v444
      %v446 = vpop.f32.mrf.mxu0
      %v447 = vadd.f32 %v227, %v446
      %448 = vmatmul.bf16.gmra.mxu0 %v291
      %v449 = vpop.f32.mrf.mxu0
      %v450 = vadd.f32 %v227, %v449
      %v451 = vpop.f32.mrf.mxu0
      %v452 = vadd.f32 %v227, %v451
      %453 = vdwg.mxu0
      %454 = vmatpush.bf16.msra.mxu0 %v388
      %455 = vmatpush.bf16.msra.mxu0 %v387
      %456 = vmatpush.bf16.msra.mxu0 %v386
      %457 = vmatpush.bf16.msra.mxu0 %v385
      %458 = vmatpush.bf16.msra.mxu0 %v384
      %459 = vmatpush.bf16.msra.mxu0 %v383
      %460 = vmatpush.bf16.msra.mxu0 %v382
      %461 = vmatpush.bf16.msra.mxu0 %v381
      %462 = vmatmul.bf16.gmra.mxu0 %v278
      %v463 = vpop.f32.mrf.mxu0
      %v464 = vadd.f32 %v415, %v463
      %v465 = vpop.f32.mrf.mxu0
      %v466 = vadd.f32 %v417, %v465
      %467 = vmatmul.bf16.gmra.mxu0 %v280
      %v468 = vpop.f32.mrf.mxu0
      %v469 = vadd.f32 %v420, %v468
      %v470 = vpop.f32.mrf.mxu0
      %v471 = vadd.f32 %v422, %v470
      %472 = vmatmul.bf16.gmra.mxu0 %v282
      %v473 = vpop.f32.mrf.mxu0
      %v474 = vadd.f32 %v425, %v473
      %v475 = vpop.f32.mrf.mxu0
      %v476 = vadd.f32 %v427, %v475
      %477 = vmatmul.bf16.gmra.mxu0 %v284
      %v478 = vpop.f32.mrf.mxu0
      %v479 = vadd.f32 %v430, %v478
      %v480 = vpop.f32.mrf.mxu0
      %v481 = vadd.f32 %v432, %v480
      %482 = vmatmul.bf16.gmra.mxu0 %v286
      %v483 = vpop.f32.mrf.mxu0
      %v484 = vadd.f32 %v435, %v483
      %v485 = vpop.f32.mrf.mxu0
      %v486 = vadd.f32 %v437, %v485
      %487 = vmatmul.bf16.gmra.mxu0 %v288
      %v488 = vpop.f32.mrf.mxu0
      %v489 = vadd.f32 %v440, %v488
      %v490 = vpop.f32.mrf.mxu0
      %v491 = vadd.f32 %v442, %v490
      %492 = vmatmul.bf16.gmra.mxu0 %v290
      %v493 = vpop.f32.mrf.mxu0
      %v494 = vadd.f32 %v445, %v493
      %v495 = vpop.f32.mrf.mxu0
      %v496 = vadd.f32 %v447, %v495
      %497 = vmatmul.bf16.gmra.mxu0 %v292
      %v498 = vpop.f32.mrf.mxu0
      %v499 = vadd.f32 %v450, %v498
      %v500 = vpop.f32.mrf.mxu0
      %v501 = vadd.f32 %v452, %v500
      %502 = vdwg.mxu0
      %v503 = vmax.f32 %v464, 0.0
      %v504 = vmax.f32 %v466, 0.0
      %v505 = vmax.f32 %v469, 0.0
      %v506 = vmax.f32 %v471, 0.0
      %v507 = vmax.f32 %v474, 0.0
      %v508 = vmax.f32 %v476, 0.0
      %v509 = vmax.f32 %v479, 0.0
      %v510 = vmax.f32 %v481, 0.0
      %v511 = vmax.f32 %v484, 0.0
      %v512 = vmax.f32 %v486, 0.0
      %v513 = vmax.f32 %v489, 0.0
      %v514 = vmax.f32 %v491, 0.0
      %v515 = vmax.f32 %v494, 0.0
      %v516 = vmax.f32 %v496, 0.0
      %v517 = vmax.f32 %v499, 0.0
      %v518 = vmax.f32 %v501, 0.0
      %v519 = vpack.c.bf16 %v503, %v503
      %v520 = vpack.c.bf16 %v504, %v504
      %v521 = vpack.c.bf16 %v505, %v505
      %v522 = vpack.c.bf16 %v506, %v506
      %v523 = vpack.c.bf16 %v507, %v507
      %v524 = vpack.c.bf16 %v508, %v508
      %v525 = vpack.c.bf16 %v509, %v509
      %v526 = vpack.c.bf16 %v510, %v510
      %v527 = vpack.c.bf16 %v511, %v511
      %v528 = vpack.c.bf16 %v512, %v512
      %v529 = vpack.c.bf16 %v513, %v513
      %v530 = vpack.c.bf16 %v514, %v514
      %v531 = vpack.c.bf16 %v515, %v515
      %v532 = vpack.c.bf16 %v516, %v516
      %v533 = vpack.c.bf16 %v517, %v517
      %v534 = vpack.c.bf16 %v518, %v518
      %535 = vst [vmem:[%s175] sm:$0xf] %v519
      %536 = vst [vmem:[%s175 + $0x4] sm:$0xf] %v520
      %537 = vst [vmem:[%s175 + $0x8] sm:$0xf] %v521
      %538 = vst [vmem:[%s175 + $0xc] sm:$0xf] %v522
      %539 = vst [vmem:[%s175 + $0x10] sm:$0xf] %v523
      %540 = vst [vmem:[%s175 + $0x14] sm:$0xf] %v524
      %541 = vst [vmem:[%s175 + $0x18] sm:$0xf] %v525
      %542 = vst [vmem:[%s175 + $0x1c] sm:$0xf] %v526
      %543 = vst [vmem:[%s175 + $0x20] sm:$0xf] %v527
      %544 = vst [vmem:[%s175 + $0x24] sm:$0xf] %v528
      %545 = vst [vmem:[%s175 + $0x28] sm:$0xf] %v529
      %546 = vst [vmem:[%s175 + $0x2c] sm:$0xf] %v530
      %547 = vst [vmem:[%s175 + $0x30] sm:$0xf] %v531
      %548 = vst [vmem:[%s175 + $0x34] sm:$0xf] %v532
      %549 = vst [vmem:[%s175 + $0x38] sm:$0xf] %v533
      %550 = vst [vmem:[%s175 + $0x3c] sm:$0xf] %v534
      %s551 = smul.u32 16, %s14
      %p552 = scmp.lt.s32.totalorder %s551, 63
      %s553 = scalar_select %p552, %s551, 63
      %s554 = smul.addr %s553, 4
      %s555 = scalar_lea.vmem %s3, %s554
      // Predicated region
      $region33: #{resnet_forward.19} parent=31 // pred_check
        %p556 = pneg %p100
      $region34: #{resnet_forward.19} parent=31 // pred_check_branch
        %558 = sbr.rel (%p556) target = $region36
      $region35: #{resnet_forward.19} parent=31 // pred_region
        %s559 = smul.u32 16, %s14
      $region36: #{resnet_forward.19} parent=31 // pred_fallthru
        _
    $region32: #{resnet_forward.19} parent=5 // pred_fallthru
      _
    %p560 = scmp.le.s32.totalorder 2, %s9
    // Predicated region
    $region37: #{resnet_forward.19} parent=5 // pred_check
      %p561 = pneg %p560
    $region38: #{resnet_forward.19} parent=5 // pred_check_branch
      %563 = sbr.rel (%p561) target = $region40
    $region39: #{resnet_forward.19} parent=5 // pred_region
      %s564 = ssub.s32 %s9, 2
      // Predicated region
      $region41: #{resnet_forward.19} parent=39 // pred_check
        %p565 = pneg %p106
      $region42: #{resnet_forward.19} parent=39 // pred_check_branch
        %567 = sbr.rel (%p565) target = $region44
      $region43: #{resnet_forward.19} parent=39 // pred_region
        %s568 = smul.u32 16, %s15
        %p569 = scmp.lt.s32.totalorder %s568, 63
        %s570 = scalar_select %p569, %s568, 63
        %s571 = smul.addr %s570, 4
        %s572 = scalar_lea.vmem %s3, %s571
      $region44: #{resnet_forward.19} parent=39 // pred_fallthru
        _
    $region40: #{resnet_forward.19} parent=5 // pred_fallthru
      _
  $region6: #{resnet_forward.19} parent=0 // loop_footer
    %s13 = sadd.s32 1, %s9
  $region7: #{resnet_forward.19} parent=0 // loop_footer_branch
    %8 = sbr.rel target = $region3
  $region8: #{resnet_forward.19} parent=0 // loop_exit
    _

// kernel: resnet_forward.21
$region0: #{resnet_forward.21}
  #allocation0 [shape = 'u32[]', space=smem, size = 0x4, offset = 0x4, fixed_abs, tag = 'smem constant byte address 0x4 - core index']
  #allocation1 [shape = 'u32[72,128]{1,0:T(1,128)}', space=vmem, size = 0x9000, scoped, tag = 'internal scratch']
  %s0 = inlined_call_operand.vmem [shape: bf16[128,128], index: 0, kind: input, shape index: {}]
  %s1 = inlined_call_operand.vmem [shape: bf16[128,128], index: 1, kind: input, shape index: {}]
  %s2 = inlined_call_operand.vmem [shape: f32[1,128], index: 2, kind: input, shape index: {}]
  %s3 = inlined_call_operand.vmem [shape: bf16[128,128], index: 3, kind: output, shape index: {}]
  %s4 = sld [smem:[#allocation0]]
  $region45: #{resnet_forward.21} parent=0
    _
  %s6 = ssub.s32 1, %s4
  %s7 = scalar_select 0, %s6, %s4
  loop: start=0, step=1, limit=4
  $region2: #{resnet_forward.21} parent=0 // loop_pre_header
    _
  $region3: #{resnet_forward.21} parent=0 // loop_header
    %s9 = sphi 0, %s13
    %p10 = scmp.ge.s32.totalorder %s9, 4
    %s19 = sphi 0, %s21
    %s22 = sphi 0, %s19
    %s23 = sphi 0, %s22
    %s39 = sphi 0, %s23
    %s43 = sphi 0, %s43
    %s45 = sphi 0, %s43
    %s46 = sphi 0, %s45
    %s60 = sphi 0, %s46
    %s64 = sphi 0, %s64
    %s66 = sphi 0, %s64
    %s67 = sphi 0, %s66
    %s81 = sphi 0, %s67
    %s87 = sphi 0, %s89
    %s90 = sphi 0, %s87
    %s91 = sphi 0, %s90
    %s107 = sphi 0, %s91
  $region4: #{resnet_forward.21} parent=0 // loop_header_branch
    %12 = sbr.rel (%p10) target = $region8
  $region5: #{resnet_forward.21} parent=0 // loop_body
    %s14 = ssub.s32 %s9, 1
    %s15 = ssub.s32 %s9, 2
    %s16 = sadd.s32 %s9, 1
    %s17 = ssub.s32 %s9, %s16
    %p18 = scmp.eq.s32.totalorder %s17, 0
    %s20 = sadd.s32 %s19, 1
    %s21 = scalar_select %p18, %s19, %s20
    %p24 = pneg %p18
    %p25 = scmp.eq.s32.totalorder %s9, 1
    %p26 = por %p24, %p25
    %p27 = scmp.ne.s32.totalorder %s19, %s22
    %p28 = scmp.eq.s32.totalorder %s9, 0
    %p29 = por %p27, %p28
    %p30 = scmp.ne.s32.totalorder %s19, %s22
    %p31 = scmp.eq.s32.totalorder %s14, 1
    %p32 = por %p30, %p31
    %p33 = scmp.ne.s32.totalorder %s22, %s23
    %p34 = scmp.eq.s32.totalorder %s14, 0
    %p35 = por %p33, %p34
    %p36 = scmp.ne.s32.totalorder %s22, %s23
    %p37 = scmp.eq.s32.totalorder %s15, 1
    %p38 = por %p36, %p37
    %p40 = scmp.ne.s32.totalorder %s23, %s39
    %p41 = scmp.eq.s32.totalorder %s15, 0
    %p42 = por %p40, %p41
    %s44 = sadd.s32 %s43, 1
    %p47 = scmp.eq.s32.totalorder %s9, 1
    %p48 = scmp.ne.s32.totalorder %s43, %s45
    %p49 = scmp.eq.s32.totalorder %s9, 0
    %p50 = por %p48, %p49
    %p51 = scmp.ne.s32.totalorder %s43, %s45
    %p52 = scmp.eq.s32.totalorder %s14, 1
    %p53 = por %p51, %p52
    %p54 = scmp.ne.s32.totalorder %s45, %s46
    %p55 = scmp.eq.s32.totalorder %s14, 0
    %p56 = por %p54, %p55
    %p57 = scmp.ne.s32.totalorder %s45, %s46
    %p58 = scmp.eq.s32.totalorder %s15, 1
    %p59 = por %p57, %p58
    %p61 = scmp.ne.s32.totalorder %s46, %s60
    %p62 = scmp.eq.s32.totalorder %s15, 0
    %p63 = por %p61, %p62
    %s65 = sadd.s32 %s64, 1
    %p68 = scmp.eq.s32.totalorder %s9, 1
    %p69 = scmp.ne.s32.totalorder %s64, %s66
    %p70 = scmp.eq.s32.totalorder %s9, 0
    %p71 = por %p69, %p70
    %p72 = scmp.ne.s32.totalorder %s64, %s66
    %p73 = scmp.eq.s32.totalorder %s14, 1
    %p74 = por %p72, %p73
    %p75 = scmp.ne.s32.totalorder %s66, %s67
    %p76 = scmp.eq.s32.totalorder %s14, 0
    %p77 = por %p75, %p76
    %p78 = scmp.ne.s32.totalorder %s66, %s67
    %p79 = scmp.eq.s32.totalorder %s15, 1
    %p80 = por %p78, %p79
    %p82 = scmp.ne.s32.totalorder %s67, %s81
    %p83 = scmp.eq.s32.totalorder %s15, 0
    %p84 = por %p82, %p83
    %s85 = ssub.s32 %s9, %s16
    %p86 = scmp.eq.s32.totalorder %s85, 0
    %s88 = sadd.s32 %s87, 1
    %s89 = scalar_select %p86, %s87, %s88
    %p92 = pneg %p86
    %p93 = scmp.eq.s32.totalorder %s9, 1
    %p94 = por %p92, %p93
    %p95 = scmp.ne.s32.totalorder %s87, %s90
    %p96 = scmp.eq.s32.totalorder %s9, 0
    %p97 = por %p95, %p96
    %p98 = scmp.ne.s32.totalorder %s87, %s90
    %p99 = scmp.eq.s32.totalorder %s14, 1
    %p100 = por %p98, %p99
    %p101 = scmp.ne.s32.totalorder %s90, %s91
    %p102 = scmp.eq.s32.totalorder %s14, 0
    %p103 = por %p101, %p102
    %p104 = scmp.ne.s32.totalorder %s90, %s91
    %p105 = scmp.eq.s32.totalorder %s15, 1
    %p106 = por %p104, %p105
    %p108 = scmp.ne.s32.totalorder %s91, %s107
    %p109 = scmp.eq.s32.totalorder %s15, 0
    %p110 = por %p108, %p109
    %p111 = scmp.le.s32.totalorder 1, %s9
    %p112 = scmp.lt.s32.totalorder %s9, 3
    %p113 = pnand %p111, %p112
    %p114 = pneg %p113
    // Predicated region
    $region9: #{resnet_forward.21} parent=5 // pred_check
      _
    $region10: #{resnet_forward.21} parent=5 // pred_check_branch
      %116 = sbr.rel (%p113) target = $region12
    $region11: #{resnet_forward.21} parent=5 // pred_region
      %s117 = ssub.s32 %s9, 1
      // Predicated region
      $region13: #{resnet_forward.21} parent=11 // pred_check
        %p118 = pneg %p56
      $region14: #{resnet_forward.21} parent=11 // pred_check_branch
        %120 = sbr.rel (%p118) target = $region16
      $region15: #{resnet_forward.21} parent=11 // pred_region
        _
      $region16: #{resnet_forward.21} parent=11 // pred_fallthru
        _
      // Predicated region
      $region17: #{resnet_forward.21} parent=11 // pred_check
        %p121 = pneg %p77
      $region18: #{resnet_forward.21} parent=11 // pred_check_branch
        %123 = sbr.rel (%p121) target = $region20
      $region19: #{resnet_forward.21} parent=11 // pred_region
        _
      $region20: #{resnet_forward.21} parent=11 // pred_fallthru
        _
    $region12: #{resnet_forward.21} parent=5 // pred_fallthru
      _
    %p124 = scmp.lt.s32.totalorder %s9, 2
    // Predicated region
    $region21: #{resnet_forward.21} parent=5 // pred_check
      %p125 = pneg %p124
    $region22: #{resnet_forward.21} parent=5 // pred_check_branch
      %127 = sbr.rel (%p125) target = $region24
    $region23: #{resnet_forward.21} parent=5 // pred_region
      // Predicated region
      $region25: #{resnet_forward.21} parent=23 // pred_check
        %p128 = pneg %p29
      $region26: #{resnet_forward.21} parent=23 // pred_check_branch
        %130 = sbr.rel (%p128) target = $region28
      $region27: #{resnet_forward.21} parent=23 // pred_region
        %s131 = smul.u32 8, %s9
        %p132 = scmp.lt.s32.totalorder %s131, 15
        %s133 = scalar_select %p132, %s131, 15
        %s134 = smul.addr %s133, 4
        %s135 = scalar_lea.vmem %s0, %s134
        %s136 = smul.u32 8, %s9
      $region28: #{resnet_forward.21} parent=23 // pred_fallthru
        _
    $region24: #{resnet_forward.21} parent=5 // pred_fallthru
      _
    %p137 = scmp.le.s32.totalorder 1, %s9
    %p138 = scmp.lt.s32.totalorder %s9, 3
    %p139 = pnand %p137, %p138
    %p140 = pneg %p139
    // Predicated region
    $region29: #{resnet_forward.21} parent=5 // pred_check
      _
    $region30: #{resnet_forward.21} parent=5 // pred_check_branch
      %142 = sbr.rel (%p139) target = $region32
    $region31: #{resnet_forward.21} parent=5 // pred_region
      %s143 = ssub.s32 %s9, 1
      %s144 = smul.u32 8, %s14
      %p145 = scmp.lt.s32.totalorder %s144, 15
      %s146 = scalar_select %p145, %s144, 15
      %s147 = smul.addr %s146, 4
      %s148 = scalar_lea.vmem %s0, %s147
      %p149 = pneg %p35
      %p150 = pneg %p32
      %p151 = pneg %p56
      %p152 = pneg %p53
      %p153 = pneg %p77
      %p154 = pneg %p74
      %p155 = pneg %p103
      %p156 = pneg %p100
      %s157 = smul.u32 8, %s14
      %p158 = scmp.lt.s32.totalorder %s157, 15
      %s159 = scalar_select %p158, %s157, 15
      %s160 = smul.addr %s159, 4
      %s161 = scalar_lea.vmem %s3, %s160
      %s162 = smul.u32 8, %s14
      %p163 = scmp.lt.s32.totalorder %s162, 15
      %s164 = scalar_select %p163, %s162, 15
      %s165 = smul.addr %s164, 4
      %s166 = scalar_lea.vmem %s0, %s165
      %s167 = smul.u32 8, %s14
      %s168 = smul.u32 8, %s14
      %p169 = scmp.lt.s32.totalorder %s168, 15
      %s170 = scalar_select %p169, %s168, 15
      %s171 = smul.addr %s170, 4
      %s172 = scalar_lea.vmem %s3, %s171
      %s173 = smul.u32 8, %s14
      %v174 = vld [vmem:[%s166] sm:$0xf]
      %v175 = vld [vmem:[%s166 + $0x4] sm:$0xf]
      %v176 = vld [vmem:[%s166 + $0x8] sm:$0xf]
      %v177 = vld [vmem:[%s166 + $0xc] sm:$0xf]
      %v178 = vld [vmem:[%s166 + $0x10] sm:$0xf]
      %v179 = vld [vmem:[%s166 + $0x14] sm:$0xf]
      %v180 = vld [vmem:[%s166 + $0x18] sm:$0xf]
      %v181 = vld [vmem:[%s166 + $0x1c] sm:$0xf]
      %v182 = vld [vmem:[%s1] sm:$0xf]
      %v183 = vld [vmem:[%s1 + $0x4] sm:$0xf]
      %v184 = vld [vmem:[%s1 + $0x8] sm:$0xf]
      %v185 = vld [vmem:[%s1 + $0xc] sm:$0xf]
      %v186 = vld [vmem:[%s1 + $0x10] sm:$0xf]
      %v187 = vld [vmem:[%s1 + $0x14] sm:$0xf]
      %v188 = vld [vmem:[%s1 + $0x18] sm:$0xf]
      %v189 = vld [vmem:[%s1 + $0x1c] sm:$0xf]
      %v190 = vld [vmem:[%s1 + $0x20] sm:$0xf]
      %v191 = vld [vmem:[%s1 + $0x24] sm:$0xf]
      %v192 = vld [vmem:[%s1 + $0x28] sm:$0xf]
      %v193 = vld [vmem:[%s1 + $0x2c] sm:$0xf]
      %v194 = vld [vmem:[%s1 + $0x30] sm:$0xf]
      %v195 = vld [vmem:[%s1 + $0x34] sm:$0xf]
      %v196 = vld [vmem:[%s1 + $0x38] sm:$0xf]
      %v197 = vld [vmem:[%s1 + $0x3c] sm:$0xf]
      %v198 = vld [vmem:[%s2] sm:$0x1]
      %v200 = vperm.slane %v198, 0
      %v210 = vunpack.c.l.b16 %v174
      %v211 = vunpack.c.l.b16 %v175
      %v212 = vunpack.c.l.b16 %v176
      %v213 = vunpack.c.l.b16 %v177
      %v214 = vunpack.c.l.b16 %v178
      %v215 = vunpack.c.l.b16 %v179
      %v216 = vunpack.c.l.b16 %v180
      %v217 = vunpack.c.l.b16 %v181
      %v218 = vpack.c.b16 %v211, %v210
      %v219 = vpack.c.b16 %v213, %v212
      %v220 = vpack.c.b16 %v215, %v214
      %v221 = vpack.c.b16 %v217, %v216
      %v242 = vunpack.c.l.b16 %v182
      %v243 = vunpack.c.l.b16 %v183
      %v244 = vunpack.c.l.b16 %v184
      %v245 = vunpack.c.l.b16 %v185
      %v246 = vunpack.c.l.b16 %v186
      %v247 = vunpack.c.l.b16 %v187
      %v248 = vunpack.c.l.b16 %v188
      %v249 = vunpack.c.l.b16 %v189
      %v250 = vunpack.c.l.b16 %v190
      %v251 = vunpack.c.l.b16 %v191
      %v252 = vunpack.c.l.b16 %v192
      %v253 = vunpack.c.l.b16 %v193
      %v254 = vunpack.c.l.b16 %v194
      %v255 = vunpack.c.l.b16 %v195
      %v256 = vunpack.c.l.b16 %v196
      %v257 = vunpack.c.l.b16 %v197
      %v258 = vpack.c.b16 %v243, %v242
      %v259 = vpack.c.b16 %v245, %v244
      %v260 = vpack.c.b16 %v247, %v246
      %v261 = vpack.c.b16 %v249, %v248
      %v262 = vpack.c.b16 %v251, %v250
      %v263 = vpack.c.b16 %v253, %v252
      %v264 = vpack.c.b16 %v255, %v254
      %v265 = vpack.c.b16 %v257, %v256
      %274 = vmatpush.bf16.msra.mxu0 %v265
      %275 = vmatpush.bf16.msra.mxu0 %v264
      %276 = vmatpush.bf16.msra.mxu0 %v263
      %277 = vmatpush.bf16.msra.mxu0 %v262
      %278 = vmatpush.bf16.msra.mxu0 %v261
      %279 = vmatpush.bf16.msra.mxu0 %v260
      %280 = vmatpush.bf16.msra.mxu0 %v259
      %281 = vmatpush.bf16.msra.mxu0 %v258
      %282 = vmatmul.bf16.gmra.mxu0 %v218
      %v283 = vpop.f32.mrf.mxu0
      %v284 = vadd.f32 %v200, %v283
      %v285 = vpop.f32.mrf.mxu0
      %v286 = vadd.f32 %v200, %v285
      %287 = vmatmul.bf16.gmra.mxu0 %v219
      %v288 = vpop.f32.mrf.mxu0
      %v289 = vadd.f32 %v200, %v288
      %v290 = vpop.f32.mrf.mxu0
      %v291 = vadd.f32 %v200, %v290
      %292 = vmatmul.bf16.gmra.mxu0 %v220
      %v293 = vpop.f32.mrf.mxu0
      %v294 = vadd.f32 %v200, %v293
      %v295 = vpop.f32.mrf.mxu0
      %v296 = vadd.f32 %v200, %v295
      %297 = vmatmul.bf16.gmra.mxu0 %v221
      %v298 = vpop.f32.mrf.mxu0
      %v299 = vadd.f32 %v200, %v298
      %v300 = vpop.f32.mrf.mxu0
      %v301 = vadd.f32 %v200, %v300
      %302 = vdwg.mxu0
      %v303 = vmax.f32 %v284, 0.0
      %v304 = vmax.f32 %v286, 0.0
      %v305 = vmax.f32 %v289, 0.0
      %v306 = vmax.f32 %v291, 0.0
      %v307 = vmax.f32 %v294, 0.0
      %v308 = vmax.f32 %v296, 0.0
      %v309 = vmax.f32 %v299, 0.0
      %v310 = vmax.f32 %v301, 0.0
      %v311 = vpack.c.bf16 %v303, %v303
      %v312 = vpack.c.bf16 %v304, %v304
      %v313 = vpack.c.bf16 %v305, %v305
      %v314 = vpack.c.bf16 %v306, %v306
      %v315 = vpack.c.bf16 %v307, %v307
      %v316 = vpack.c.bf16 %v308, %v308
      %v317 = vpack.c.bf16 %v309, %v309
      %v318 = vpack.c.bf16 %v310, %v310
      %319 = vst [vmem:[%s172] sm:$0xf] %v311
      %320 = vst [vmem:[%s172 + $0x4] sm:$0xf] %v312
      %321 = vst [vmem:[%s172 + $0x8] sm:$0xf] %v313
      %322 = vst [vmem:[%s172 + $0xc] sm:$0xf] %v314
      %323 = vst [vmem:[%s172 + $0x10] sm:$0xf] %v315
      %324 = vst [vmem:[%s172 + $0x14] sm:$0xf] %v316
      %325 = vst [vmem:[%s172 + $0x18] sm:$0xf] %v317
      %326 = vst [vmem:[%s172 + $0x1c] sm:$0xf] %v318
      %s327 = smul.u32 8, %s14
      %p328 = scmp.lt.s32.totalorder %s327, 15
      %s329 = scalar_select %p328, %s327, 15
      %s330 = smul.addr %s329, 4
      %s331 = scalar_lea.vmem %s3, %s330
      // Predicated region
      $region33: #{resnet_forward.21} parent=31 // pred_check
        %p332 = pneg %p100
      $region34: #{resnet_forward.21} parent=31 // pred_check_branch
        %334 = sbr.rel (%p332) target = $region36
      $region35: #{resnet_forward.21} parent=31 // pred_region
        %s335 = smul.u32 8, %s14
      $region36: #{resnet_forward.21} parent=31 // pred_fallthru
        _
    $region32: #{resnet_forward.21} parent=5 // pred_fallthru
      _
    %p336 = scmp.le.s32.totalorder 2, %s9
    // Predicated region
    $region37: #{resnet_forward.21} parent=5 // pred_check
      %p337 = pneg %p336
    $region38: #{resnet_forward.21} parent=5 // pred_check_branch
      %339 = sbr.rel (%p337) target = $region40
    $region39: #{resnet_forward.21} parent=5 // pred_region
      %s340 = ssub.s32 %s9, 2
      // Predicated region
      $region41: #{resnet_forward.21} parent=39 // pred_check
        %p341 = pneg %p106
      $region42: #{resnet_forward.21} parent=39 // pred_check_branch
        %343 = sbr.rel (%p341) target = $region44
      $region43: #{resnet_forward.21} parent=39 // pred_region
        %s344 = smul.u32 8, %s15
        %p345 = scmp.lt.s32.totalorder %s344, 15
        %s346 = scalar_select %p345, %s344, 15
        %s347 = smul.addr %s346, 4
        %s348 = scalar_lea.vmem %s3, %s347
      $region44: #{resnet_forward.21} parent=39 // pred_fallthru
        _
    $region40: #{resnet_forward.21} parent=5 // pred_fallthru
      _
  $region6: #{resnet_forward.21} parent=0 // loop_footer
    %s13 = sadd.s32 1, %s9
  $region7: #{resnet_forward.21} parent=0 // loop_footer_branch
    %8 = sbr.rel target = $region3
  $region8: #{resnet_forward.21} parent=0 // loop_exit
    _

// kernel: resnet_forward.20
$region0: #{resnet_forward.20}
  #allocation0 [shape = 'u32[]', space=smem, size = 0x4, offset = 0x4, fixed_abs, tag = 'smem constant byte address 0x4 - core index']
  #allocation1 [shape = 'u32[72,128]{1,0:T(1,128)}', space=vmem, size = 0x9000, scoped, tag = 'internal scratch']
  %s0 = inlined_call_operand.vmem [shape: bf16[4,9,9,2,8], index: 0, kind: input, shape index: {}]
  %s1 = inlined_call_operand.vmem [shape: bf16[8,8,2,8], index: 1, kind: output, shape index: {}]
  %s2 = sld [smem:[#allocation0]]
  $region14: #{resnet_forward.20} parent=0
    _
  %s4 = ssub.s32 1, %s2
  %s5 = scalar_select 0, %s4, %s2
  // Predicated region
  $region2: #{resnet_forward.20} parent=0 // pred_check
    _
  $region3: #{resnet_forward.20} parent=0 // pred_check_branch
    %7 = sbr.rel (0) target = $region5
  $region4: #{resnet_forward.20} parent=0 // pred_region
    _
  $region5: #{resnet_forward.20} parent=0 // pred_fallthru
    _
  %v8 = vld [vmem:[%s0] sm:$0x1]
  %v9 = vld [vmem:[%s0 + $0x1] sm:$0x1]
  %v10 = vld [vmem:[%s0 + $0x2] sm:$0x1]
  %v11 = vld [vmem:[%s0 + $0x3] sm:$0x1]
  %v12 = vld [vmem:[%s0 + $0x4] sm:$0x1]
  %v13 = vld [vmem:[%s0 + $0x5] sm:$0x1]
  %v14 = vld [vmem:[%s0 + $0x6] sm:$0x1]
  %v15 = vld [vmem:[%s0 + $0x7] sm:$0x1]
  %v16 = vld [vmem:[%s0 + $0x9] sm:$0x1]
  %v17 = vld [vmem:[%s0 + $0xa] sm:$0x1]
  %v18 = vld [vmem:[%s0 + $0xb] sm:$0x1]
  %v19 = vld [vmem:[%s0 + $0xc] sm:$0x1]
  %v20 = vld [vmem:[%s0 + $0xd] sm:$0x1]
  %v21 = vld [vmem:[%s0 + $0xe] sm:$0x1]
  %v22 = vld [vmem:[%s0 + $0xf] sm:$0x1]
  %v23 = vld [vmem:[%s0 + $0x10] sm:$0x1]
  %v24 = vld [vmem:[%s0 + $0x12] sm:$0x1]
  %v25 = vld [vmem:[%s0 + $0x13] sm:$0x1]
  %v26 = vld [vmem:[%s0 + $0x14] sm:$0x1]
  %v27 = vld [vmem:[%s0 + $0x15] sm:$0x1]
  %v28 = vld [vmem:[%s0 + $0x16] sm:$0x1]
  %v29 = vld [vmem:[%s0 + $0x17] sm:$0x1]
  %v30 = vld [vmem:[%s0 + $0x18] sm:$0x1]
  %v31 = vld [vmem:[%s0 + $0x19] sm:$0x1]
  %v32 = vld [vmem:[%s0 + $0x1b] sm:$0x1]
  %v33 = vld [vmem:[%s0 + $0x1c] sm:$0x1]
  %v34 = vld [vmem:[%s0 + $0x1d] sm:$0x1]
  %v35 = vld [vmem:[%s0 + $0x1e] sm:$0x1]
  %v36 = vld [vmem:[%s0 + $0x1f] sm:$0x1]
  %v37 = vld [vmem:[%s0 + $0x20] sm:$0x1]
  %v38 = vld [vmem:[%s0 + $0x21] sm:$0x1]
  %v39 = vld [vmem:[%s0 + $0x22] sm:$0x1]
  %v40 = vld [vmem:[%s0 + $0x24] sm:$0x1]
  %v41 = vld [vmem:[%s0 + $0x25] sm:$0x1]
  %v42 = vld [vmem:[%s0 + $0x26] sm:$0x1]
  %v43 = vld [vmem:[%s0 + $0x27] sm:$0x1]
  %v44 = vld [vmem:[%s0 + $0x28] sm:$0x1]
  %v45 = vld [vmem:[%s0 + $0x29] sm:$0x1]
  %v46 = vld [vmem:[%s0 + $0x2a] sm:$0x1]
  %v47 = vld [vmem:[%s0 + $0x2b] sm:$0x1]
  %v48 = vld [vmem:[%s0 + $0x2d] sm:$0x1]
  %v49 = vld [vmem:[%s0 + $0x2e] sm:$0x1]
  %v50 = vld [vmem:[%s0 + $0x2f] sm:$0x1]
  %v51 = vld [vmem:[%s0 + $0x30] sm:$0x1]
  %v52 = vld [vmem:[%s0 + $0x31] sm:$0x1]
  %v53 = vld [vmem:[%s0 + $0x32] sm:$0x1]
  %v54 = vld [vmem:[%s0 + $0x33] sm:$0x1]
  %v55 = vld [vmem:[%s0 + $0x34] sm:$0x1]
  %v56 = vld [vmem:[%s0 + $0x36] sm:$0x1]
  %v57 = vld [vmem:[%s0 + $0x37] sm:$0x1]
  %v58 = vld [vmem:[%s0 + $0x38] sm:$0x1]
  %v59 = vld [vmem:[%s0 + $0x39] sm:$0x1]
  %v60 = vld [vmem:[%s0 + $0x3a] sm:$0x1]
  %v61 = vld [vmem:[%s0 + $0x3b] sm:$0x1]
  %v62 = vld [vmem:[%s0 + $0x3c] sm:$0x1]
  %v63 = vld [vmem:[%s0 + $0x3d] sm:$0x1]
  %v64 = vld [vmem:[%s0 + $0x3f] sm:$0x1]
  %v65 = vld [vmem:[%s0 + $0x40] sm:$0x1]
  %v66 = vld [vmem:[%s0 + $0x41] sm:$0x1]
  %v67 = vld [vmem:[%s0 + $0x42] sm:$0x1]
  %v68 = vld [vmem:[%s0 + $0x43] sm:$0x1]
  %v69 = vld [vmem:[%s0 + $0x44] sm:$0x1]
  %v70 = vld [vmem:[%s0 + $0x45] sm:$0x1]
  %v71 = vld [vmem:[%s0 + $0x46] sm:$0x1]
  %s72 = scalar_lea.vmem %s0, 81
  %v73 = vld [vmem:[%s72] sm:$0x1]
  %v74 = vld [vmem:[%s72 + $0x1] sm:$0x1]
  %v75 = vld [vmem:[%s72 + $0x2] sm:$0x1]
  %v76 = vld [vmem:[%s72 + $0x3] sm:$0x1]
  %v77 = vld [vmem:[%s72 + $0x4] sm:$0x1]
  %v78 = vld [vmem:[%s72 + $0x5] sm:$0x1]
  %v79 = vld [vmem:[%s72 + $0x6] sm:$0x1]
  %v80 = vld [vmem:[%s72 + $0x7] sm:$0x1]
  %v81 = vld [vmem:[%s72 + $0x9] sm:$0x1]
  %v82 = vld [vmem:[%s72 + $0xa] sm:$0x1]
  %v83 = vld [vmem:[%s72 + $0xb] sm:$0x1]
  %v84 = vld [vmem:[%s72 + $0xc] sm:$0x1]
  %v85 = vld [vmem:[%s72 + $0xd] sm:$0x1]
  %v86 = vld [vmem:[%s72 + $0xe] sm:$0x1]
  %v87 = vld [vmem:[%s72 + $0xf] sm:$0x1]
  %v88 = vld [vmem:[%s72 + $0x10] sm:$0x1]
  %v89 = vld [vmem:[%s72 + $0x12] sm:$0x1]
  %v90 = vld [vmem:[%s72 + $0x13] sm:$0x1]
  %v91 = vld [vmem:[%s72 + $0x14] sm:$0x1]
  %v92 = vld [vmem:[%s72 + $0x15] sm:$0x1]
  %v93 = vld [vmem:[%s72 + $0x16] sm:$0x1]
  %v94 = vld [vmem:[%s72 + $0x17] sm:$0x1]
  %v95 = vld [vmem:[%s72 + $0x18] sm:$0x1]
  %v96 = vld [vmem:[%s72 + $0x19] sm:$0x1]
  %v97 = vld [vmem:[%s72 + $0x1b] sm:$0x1]
  %v98 = vld [vmem:[%s72 + $0x1c] sm:$0x1]
  %v99 = vld [vmem:[%s72 + $0x1d] sm:$0x1]
  %v100 = vld [vmem:[%s72 + $0x1e] sm:$0x1]
  %v101 = vld [vmem:[%s72 + $0x1f] sm:$0x1]
  %v102 = vld [vmem:[%s72 + $0x20] sm:$0x1]
  %v103 = vld [vmem:[%s72 + $0x21] sm:$0x1]
  %v104 = vld [vmem:[%s72 + $0x22] sm:$0x1]
  %v105 = vld [vmem:[%s72 + $0x24] sm:$0x1]
  %v106 = vld [vmem:[%s72 + $0x25] sm:$0x1]
  %v107 = vld [vmem:[%s72 + $0x26] sm:$0x1]
  %v108 = vld [vmem:[%s72 + $0x27] sm:$0x1]
  %v109 = vld [vmem:[%s72 + $0x28] sm:$0x1]
  %v110 = vld [vmem:[%s72 + $0x29] sm:$0x1]
  %v111 = vld [vmem:[%s72 + $0x2a] sm:$0x1]
  %v112 = vld [vmem:[%s72 + $0x2b] sm:$0x1]
  %v113 = vld [vmem:[%s72 + $0x2d] sm:$0x1]
  %v114 = vld [vmem:[%s72 + $0x2e] sm:$0x1]
  %v115 = vld [vmem:[%s72 + $0x2f] sm:$0x1]
  %v116 = vld [vmem:[%s72 + $0x30] sm:$0x1]
  %v117 = vld [vmem:[%s72 + $0x31] sm:$0x1]
  %v118 = vld [vmem:[%s72 + $0x32] sm:$0x1]
  %v119 = vld [vmem:[%s72 + $0x33] sm:$0x1]
  %v120 = vld [vmem:[%s72 + $0x34] sm:$0x1]
  %v121 = vld [vmem:[%s72 + $0x36] sm:$0x1]
  %v122 = vld [vmem:[%s72 + $0x37] sm:$0x1]
  %v123 = vld [vmem:[%s72 + $0x38] sm:$0x1]
  %v124 = vld [vmem:[%s72 + $0x39] sm:$0x1]
  %v125 = vld [vmem:[%s72 + $0x3a] sm:$0x1]
  %v126 = vld [vmem:[%s72 + $0x3b] sm:$0x1]
  %v127 = vld [vmem:[%s72 + $0x3c] sm:$0x1]
  %v128 = vld [vmem:[%s72 + $0x3d] sm:$0x1]
  %v129 = vld [vmem:[%s72 + $0x3f] sm:$0x1]
  %v130 = vld [vmem:[%s72 + $0x40] sm:$0x1]
  %v131 = vld [vmem:[%s72 + $0x41] sm:$0x1]
  %v132 = vld [vmem:[%s72 + $0x42] sm:$0x1]
  %v133 = vld [vmem:[%s72 + $0x43] sm:$0x1]
  %v134 = vld [vmem:[%s72 + $0x44] sm:$0x1]
  %v135 = vld [vmem:[%s72 + $0x45] sm:$0x1]
  %v136 = vld [vmem:[%s72 + $0x46] sm:$0x1]
  %v137 = vunpack.c.l.bf16 %v8
  %v138 = vunpack.c.l.bf16 %v9
  %v139 = vunpack.c.l.bf16 %v10
  %v140 = vunpack.c.l.bf16 %v11
  %v141 = vunpack.c.l.bf16 %v12
  %v142 = vunpack.c.l.bf16 %v13
  %v143 = vunpack.c.l.bf16 %v14
  %v144 = vunpack.c.l.bf16 %v15
  %v145 = vunpack.c.l.bf16 %v16
  %v146 = vunpack.c.l.bf16 %v17
  %v147 = vunpack.c.l.bf16 %v18
  %v148 = vunpack.c.l.bf16 %v19
  %v149 = vunpack.c.l.bf16 %v20
  %v150 = vunpack.c.l.bf16 %v21
  %v151 = vunpack.c.l.bf16 %v22
  %v152 = vunpack.c.l.bf16 %v23
  %v153 = vunpack.c.l.bf16 %v24
  %v154 = vunpack.c.l.bf16 %v25
  %v155 = vunpack.c.l.bf16 %v26
  %v156 = vunpack.c.l.bf16 %v27
  %v157 = vunpack.c.l.bf16 %v28
  %v158 = vunpack.c.l.bf16 %v29
  %v159 = vunpack.c.l.bf16 %v30
  %v160 = vunpack.c.l.bf16 %v31
  %v161 = vunpack.c.l.bf16 %v32
  %v162 = vunpack.c.l.bf16 %v33
  %v163 = vunpack.c.l.bf16 %v34
  %v164 = vunpack.c.l.bf16 %v35
  %v165 = vunpack.c.l.bf16 %v36
  %v166 = vunpack.c.l.bf16 %v37
  %v167 = vunpack.c.l.bf16 %v38
  %v168 = vunpack.c.l.bf16 %v39
  %v169 = vunpack.c.l.bf16 %v40
  %v170 = vunpack.c.l.bf16 %v41
  %v171 = vunpack.c.l.bf16 %v42
  %v172 = vunpack.c.l.bf16 %v43
  %v173 = vunpack.c.l.bf16 %v44
  %v174 = vunpack.c.l.bf16 %v45
  %v175 = vunpack.c.l.bf16 %v46
  %v176 = vunpack.c.l.bf16 %v47
  %v177 = vunpack.c.l.bf16 %v48
  %v178 = vunpack.c.l.bf16 %v49
  %v179 = vunpack.c.l.bf16 %v50
  %v180 = vunpack.c.l.bf16 %v51
  %v181 = vunpack.c.l.bf16 %v52
  %v182 = vunpack.c.l.bf16 %v53
  %v183 = vunpack.c.l.bf16 %v54
  %v184 = vunpack.c.l.bf16 %v55
  %v185 = vunpack.c.l.bf16 %v56
  %v186 = vunpack.c.l.bf16 %v57
  %v187 = vunpack.c.l.bf16 %v58
  %v188 = vunpack.c.l.bf16 %v59
  %v189 = vunpack.c.l.bf16 %v60
  %v190 = vunpack.c.l.bf16 %v61
  %v191 = vunpack.c.l.bf16 %v62
  %v192 = vunpack.c.l.bf16 %v63
  %v193 = vunpack.c.l.bf16 %v64
  %v194 = vunpack.c.l.bf16 %v65
  %v195 = vunpack.c.l.bf16 %v66
  %v196 = vunpack.c.l.bf16 %v67
  %v197 = vunpack.c.l.bf16 %v68
  %v198 = vunpack.c.l.bf16 %v69
  %v199 = vunpack.c.l.bf16 %v70
  %v200 = vunpack.c.l.bf16 %v71
  %v201 = vunpack.c.l.bf16 %v73
  %v202 = vunpack.c.l.bf16 %v74
  %v203 = vunpack.c.l.bf16 %v75
  %v204 = vunpack.c.l.bf16 %v76
  %v205 = vunpack.c.l.bf16 %v77
  %v206 = vunpack.c.l.bf16 %v78
  %v207 = vunpack.c.l.bf16 %v79
  %v208 = vunpack.c.l.bf16 %v80
  %v209 = vunpack.c.l.bf16 %v81
  %v210 = vunpack.c.l.bf16 %v82
  %v211 = vunpack.c.l.bf16 %v83
  %v212 = vunpack.c.l.bf16 %v84
  %v213 = vunpack.c.l.bf16 %v85
  %v214 = vunpack.c.l.bf16 %v86
  %v215 = vunpack.c.l.bf16 %v87
  %v216 = vunpack.c.l.bf16 %v88
  %v217 = vunpack.c.l.bf16 %v89
  %v218 = vunpack.c.l.bf16 %v90
  %v219 = vunpack.c.l.bf16 %v91
  %v220 = vunpack.c.l.bf16 %v92
  %v221 = vunpack.c.l.bf16 %v93
  %v222 = vunpack.c.l.bf16 %v94
  %v223 = vunpack.c.l.bf16 %v95
  %v224 = vunpack.c.l.bf16 %v96
  %v225 = vunpack.c.l.bf16 %v97
  %v226 = vunpack.c.l.bf16 %v98
  %v227 = vunpack.c.l.bf16 %v99
  %v228 = vunpack.c.l.bf16 %v100
  %v229 = vunpack.c.l.bf16 %v101
  %v230 = vunpack.c.l.bf16 %v102
  %v231 = vunpack.c.l.bf16 %v103
  %v232 = vunpack.c.l.bf16 %v104
  %v233 = vunpack.c.l.bf16 %v105
  %v234 = vunpack.c.l.bf16 %v106
  %v235 = vunpack.c.l.bf16 %v107
  %v236 = vunpack.c.l.bf16 %v108
  %v237 = vunpack.c.l.bf16 %v109
  %v238 = vunpack.c.l.bf16 %v110
  %v239 = vunpack.c.l.bf16 %v111
  %v240 = vunpack.c.l.bf16 %v112
  %v241 = vunpack.c.l.bf16 %v113
  %v242 = vunpack.c.l.bf16 %v114
  %v243 = vunpack.c.l.bf16 %v115
  %v244 = vunpack.c.l.bf16 %v116
  %v245 = vunpack.c.l.bf16 %v117
  %v246 = vunpack.c.l.bf16 %v118
  %v247 = vunpack.c.l.bf16 %v119
  %v248 = vunpack.c.l.bf16 %v120
  %v249 = vunpack.c.l.bf16 %v121
  %v250 = vunpack.c.l.bf16 %v122
  %v251 = vunpack.c.l.bf16 %v123
  %v252 = vunpack.c.l.bf16 %v124
  %v253 = vunpack.c.l.bf16 %v125
  %v254 = vunpack.c.l.bf16 %v126
  %v255 = vunpack.c.l.bf16 %v127
  %v256 = vunpack.c.l.bf16 %v128
  %v257 = vunpack.c.l.bf16 %v129
  %v258 = vunpack.c.l.bf16 %v130
  %v259 = vunpack.c.l.bf16 %v131
  %v260 = vunpack.c.l.bf16 %v132
  %v261 = vunpack.c.l.bf16 %v133
  %v262 = vunpack.c.l.bf16 %v134
  %v263 = vunpack.c.l.bf16 %v135
  %v264 = vunpack.c.l.bf16 %v136
  %v265 = vmax.f32 %v137, %v201
  %v266 = vmax.f32 %v138, %v202
  %v267 = vmax.f32 %v139, %v203
  %v268 = vmax.f32 %v140, %v204
  %v269 = vmax.f32 %v141, %v205
  %v270 = vmax.f32 %v142, %v206
  %v271 = vmax.f32 %v143, %v207
  %v272 = vmax.f32 %v144, %v208
  %v273 = vmax.f32 %v145, %v209
  %v274 = vmax.f32 %v146, %v210
  %v275 = vmax.f32 %v147, %v211
  %v276 = vmax.f32 %v148, %v212
  %v277 = vmax.f32 %v149, %v213
  %v278 = vmax.f32 %v150, %v214
  %v279 = vmax.f32 %v151, %v215
  %v280 = vmax.f32 %v152, %v216
  %v281 = vmax.f32 %v153, %v217
  %v282 = vmax.f32 %v154, %v218
  %v283 = vmax.f32 %v155, %v219
  %v284 = vmax.f32 %v156, %v220
  %v285 = vmax.f32 %v157, %v221
  %v286 = vmax.f32 %v158, %v222
  %v287 = vmax.f32 %v159, %v223
  %v288 = vmax.f32 %v160, %v224
  %v289 = vmax.f32 %v161, %v225
  %v290 = vmax.f32 %v162, %v226
  %v291 = vmax.f32 %v163, %v227
  %v292 = vmax.f32 %v164, %v228
  %v293 = vmax.f32 %v165, %v229
  %v294 = vmax.f32 %v166, %v230
  %v295 = vmax.f32 %v167, %v231
  %v296 = vmax.f32 %v168, %v232
  %v297 = vmax.f32 %v169, %v233
  %v298 = vmax.f32 %v170, %v234
  %v299 = vmax.f32 %v171, %v235
  %v300 = vmax.f32 %v172, %v236
  %v301 = vmax.f32 %v173, %v237
  %v302 = vmax.f32 %v174, %v238
  %v303 = vmax.f32 %v175, %v239
  %v304 = vmax.f32 %v176, %v240
  %v305 = vmax.f32 %v177, %v241
  %v306 = vmax.f32 %v178, %v242
  %v307 = vmax.f32 %v179, %v243
  %v308 = vmax.f32 %v180, %v244
  %v309 = vmax.f32 %v181, %v245
  %v310 = vmax.f32 %v182, %v246
  %v311 = vmax.f32 %v183, %v247
  %v312 = vmax.f32 %v184, %v248
  %v313 = vmax.f32 %v185, %v249
  %v314 = vmax.f32 %v186, %v250
  %v315 = vmax.f32 %v187, %v251
  %v316 = vmax.f32 %v188, %v252
  %v317 = vmax.f32 %v189, %v253
  %v318 = vmax.f32 %v190, %v254
  %v319 = vmax.f32 %v191, %v255
  %v320 = vmax.f32 %v192, %v256
  %v321 = vmax.f32 %v193, %v257
  %v322 = vmax.f32 %v194, %v258
  %v323 = vmax.f32 %v195, %v259
  %v324 = vmax.f32 %v196, %v260
  %v325 = vmax.f32 %v197, %v261
  %v326 = vmax.f32 %v198, %v262
  %v327 = vmax.f32 %v199, %v263
  %v328 = vmax.f32 %v200, %v264
  %v329 = vpack.c.bf16 %v265, %v265
  %v330 = vpack.c.bf16 %v266, %v266
  %v331 = vpack.c.bf16 %v267, %v267
  %v332 = vpack.c.bf16 %v268, %v268
  %v333 = vpack.c.bf16 %v269, %v269
  %v334 = vpack.c.bf16 %v270, %v270
  %v335 = vpack.c.bf16 %v271, %v271
  %v336 = vpack.c.bf16 %v272, %v272
  %v337 = vpack.c.bf16 %v273, %v273
  %v338 = vpack.c.bf16 %v274, %v274
  %v339 = vpack.c.bf16 %v275, %v275
  %v340 = vpack.c.bf16 %v276, %v276
  %v341 = vpack.c.bf16 %v277, %v277
  %v342 = vpack.c.bf16 %v278, %v278
  %v343 = vpack.c.bf16 %v279, %v279
  %v344 = vpack.c.bf16 %v280, %v280
  %v345 = vpack.c.bf16 %v281, %v281
  %v346 = vpack.c.bf16 %v282, %v282
  %v347 = vpack.c.bf16 %v283, %v283
  %v348 = vpack.c.bf16 %v284, %v284
  %v349 = vpack.c.bf16 %v285, %v285
  %v350 = vpack.c.bf16 %v286, %v286
  %v351 = vpack.c.bf16 %v287, %v287
  %v352 = vpack.c.bf16 %v288, %v288
  %v353 = vpack.c.bf16 %v289, %v289
  %v354 = vpack.c.bf16 %v290, %v290
  %v355 = vpack.c.bf16 %v291, %v291
  %v356 = vpack.c.bf16 %v292, %v292
  %v357 = vpack.c.bf16 %v293, %v293
  %v358 = vpack.c.bf16 %v294, %v294
  %v359 = vpack.c.bf16 %v295, %v295
  %v360 = vpack.c.bf16 %v296, %v296
  %v361 = vpack.c.bf16 %v297, %v297
  %v362 = vpack.c.bf16 %v298, %v298
  %v363 = vpack.c.bf16 %v299, %v299
  %v364 = vpack.c.bf16 %v300, %v300
  %v365 = vpack.c.bf16 %v301, %v301
  %v366 = vpack.c.bf16 %v302, %v302
  %v367 = vpack.c.bf16 %v303, %v303
  %v368 = vpack.c.bf16 %v304, %v304
  %v369 = vpack.c.bf16 %v305, %v305
  %v370 = vpack.c.bf16 %v306, %v306
  %v371 = vpack.c.bf16 %v307, %v307
  %v372 = vpack.c.bf16 %v308, %v308
  %v373 = vpack.c.bf16 %v309, %v309
  %v374 = vpack.c.bf16 %v310, %v310
  %v375 = vpack.c.bf16 %v311, %v311
  %v376 = vpack.c.bf16 %v312, %v312
  %v377 = vpack.c.bf16 %v313, %v313
  %v378 = vpack.c.bf16 %v314, %v314
  %v379 = vpack.c.bf16 %v315, %v315
  %v380 = vpack.c.bf16 %v316, %v316
  %v381 = vpack.c.bf16 %v317, %v317
  %v382 = vpack.c.bf16 %v318, %v318
  %v383 = vpack.c.bf16 %v319, %v319
  %v384 = vpack.c.bf16 %v320, %v320
  %v385 = vpack.c.bf16 %v321, %v321
  %v386 = vpack.c.bf16 %v322, %v322
  %v387 = vpack.c.bf16 %v323, %v323
  %v388 = vpack.c.bf16 %v324, %v324
  %v389 = vpack.c.bf16 %v325, %v325
  %v390 = vpack.c.bf16 %v326, %v326
  %v391 = vpack.c.bf16 %v327, %v327
  %v392 = vpack.c.bf16 %v328, %v328
  %s393 = scalar_lea.vmem %s0, 1
  %v394 = vld [vmem:[%s393] sm:$0x1]
  %v395 = vld [vmem:[%s393 + $0x1] sm:$0x1]
  %v396 = vld [vmem:[%s393 + $0x2] sm:$0x1]
  %v397 = vld [vmem:[%s393 + $0x3] sm:$0x1]
  %v398 = vld [vmem:[%s393 + $0x4] sm:$0x1]
  %v399 = vld [vmem:[%s393 + $0x5] sm:$0x1]
  %v400 = vld [vmem:[%s393 + $0x6] sm:$0x1]
  %v401 = vld [vmem:[%s393 + $0x7] sm:$0x1]
  %v402 = vld [vmem:[%s393 + $0x9] sm:$0x1]
  %v403 = vld [vmem:[%s393 + $0xa] sm:$0x1]
  %v404 = vld [vmem:[%s393 + $0xb] sm:$0x1]
  %v405 = vld [vmem:[%s393 + $0xc] sm:$0x1]
  %v406 = vld [vmem:[%s393 + $0xd] sm:$0x1]
  %v407 = vld [vmem:[%s393 + $0xe] sm:$0x1]
  %v408 = vld [vmem:[%s393 + $0xf] sm:$0x1]
  %v409 = vld [vmem:[%s393 + $0x10] sm:$0x1]
  %v410 = vld [vmem:[%s393 + $0x12] sm:$0x1]
  %v411 = vld [vmem:[%s393 + $0x13] sm:$0x1]
  %v412 = vld [vmem:[%s393 + $0x14] sm:$0x1]
  %v413 = vld [vmem:[%s393 + $0x15] sm:$0x1]
  %v414 = vld [vmem:[%s393 + $0x16] sm:$0x1]
  %v415 = vld [vmem:[%s393 + $0x17] sm:$0x1]
  %v416 = vld [vmem:[%s393 + $0x18] sm:$0x1]
  %v417 = vld [vmem:[%s393 + $0x19] sm:$0x1]
  %v418 = vld [vmem:[%s393 + $0x1b] sm:$0x1]
  %v419 = vld [vmem:[%s393 + $0x1c] sm:$0x1]
  %v420 = vld [vmem:[%s393 + $0x1d] sm:$0x1]
  %v421 = vld [vmem:[%s393 + $0x1e] sm:$0x1]
  %v422 = vld [vmem:[%s393 + $0x1f] sm:$0x1]
  %v423 = vld [vmem:[%s393 + $0x20] sm:$0x1]
  %v424 = vld [vmem:[%s393 + $0x21] sm:$0x1]
  %v425 = vld [vmem:[%s393 + $0x22] sm:$0x1]
  %v426 = vld [vmem:[%s393 + $0x24] sm:$0x1]
  %v427 = vld [vmem:[%s393 + $0x25] sm:$0x1]
  %v428 = vld [vmem:[%s393 + $0x26] sm:$0x1]
  %v429 = vld [vmem:[%s393 + $0x27] sm:$0x1]
  %v430 = vld [vmem:[%s393 + $0x28] sm:$0x1]
  %v431 = vld [vmem:[%s393 + $0x29] sm:$0x1]
  %v432 = vld [vmem:[%s393 + $0x2a] sm:$0x1]
  %v433 = vld [vmem:[%s393 + $0x2b] sm:$0x1]
  %v434 = vld [vmem:[%s393 + $0x2d] sm:$0x1]
  %v435 = vld [vmem:[%s393 + $0x2e] sm:$0x1]
  %v436 = vld [vmem:[%s393 + $0x2f] sm:$0x1]
  %v437 = vld [vmem:[%s393 + $0x30] sm:$0x1]
  %v438 = vld [vmem:[%s393 + $0x31] sm:$0x1]
  %v439 = vld [vmem:[%s393 + $0x32] sm:$0x1]
  %v440 = vld [vmem:[%s393 + $0x33] sm:$0x1]
  %v441 = vld [vmem:[%s393 + $0x34] sm:$0x1]
  %v442 = vld [vmem:[%s393 + $0x36] sm:$0x1]
  %v443 = vld [vmem:[%s393 + $0x37] sm:$0x1]
  %v444 = vld [vmem:[%s393 + $0x38] sm:$0x1]
  %v445 = vld [vmem:[%s393 + $0x39] sm:$0x1]
  %v446 = vld [vmem:[%s393 + $0x3a] sm:$0x1]
  %v447 = vld [vmem:[%s393 + $0x3b] sm:$0x1]
  %v448 = vld [vmem:[%s393 + $0x3c] sm:$0x1]
  %v449 = vld [vmem:[%s393 + $0x3d] sm:$0x1]
  %v450 = vld [vmem:[%s393 + $0x3f] sm:$0x1]
  %v451 = vld [vmem:[%s393 + $0x40] sm:$0x1]
  %v452 = vld [vmem:[%s393 + $0x41] sm:$0x1]
  %v453 = vld [vmem:[%s393 + $0x42] sm:$0x1]
  %v454 = vld [vmem:[%s393 + $0x43] sm:$0x1]
  %v455 = vld [vmem:[%s393 + $0x44] sm:$0x1]
  %v456 = vld [vmem:[%s393 + $0x45] sm:$0x1]
  %v457 = vld [vmem:[%s393 + $0x46] sm:$0x1]
  %v458 = vunpack.c.l.bf16 %v329
  %v459 = vunpack.c.l.bf16 %v330
  %v460 = vunpack.c.l.bf16 %v331
  %v461 = vunpack.c.l.bf16 %v332
  %v462 = vunpack.c.l.bf16 %v333
  %v463 = vunpack.c.l.bf16 %v334
  %v464 = vunpack.c.l.bf16 %v335
  %v465 = vunpack.c.l.bf16 %v336
  %v466 = vunpack.c.l.bf16 %v337
  %v467 = vunpack.c.l.bf16 %v338
  %v468 = vunpack.c.l.bf16 %v339
  %v469 = vunpack.c.l.bf16 %v340
  %v470 = vunpack.c.l.bf16 %v341
  %v471 = vunpack.c.l.bf16 %v342
  %v472 = vunpack.c.l.bf16 %v343
  %v473 = vunpack.c.l.bf16 %v344
  %v474 = vunpack.c.l.bf16 %v345
  %v475 = vunpack.c.l.bf16 %v346
  %v476 = vunpack.c.l.bf16 %v347
  %v477 = vunpack.c.l.bf16 %v348
  %v478 = vunpack.c.l.bf16 %v349
  %v479 = vunpack.c.l.bf16 %v350
  %v480 = vunpack.c.l.bf16 %v351
  %v481 = vunpack.c.l.bf16 %v352
  %v482 = vunpack.c.l.bf16 %v353
  %v483 = vunpack.c.l.bf16 %v354
  %v484 = vunpack.c.l.bf16 %v355
  %v485 = vunpack.c.l.bf16 %v356
  %v486 = vunpack.c.l.bf16 %v357
  %v487 = vunpack.c.l.bf16 %v358
  %v488 = vunpack.c.l.bf16 %v359
  %v489 = vunpack.c.l.bf16 %v360
  %v490 = vunpack.c.l.bf16 %v361
  %v491 = vunpack.c.l.bf16 %v362
  %v492 = vunpack.c.l.bf16 %v363
  %v493 = vunpack.c.l.bf16 %v364
  %v494 = vunpack.c.l.bf16 %v365
  %v495 = vunpack.c.l.bf16 %v366
  %v496 = vunpack.c.l.bf16 %v367
  %v497 = vunpack.c.l.bf16 %v368
  %v498 = vunpack.c.l.bf16 %v369
  %v499 = vunpack.c.l.bf16 %v370
  %v500 = vunpack.c.l.bf16 %v371
  %v501 = vunpack.c.l.bf16 %v372
  %v502 = vunpack.c.l.bf16 %v373
  %v503 = vunpack.c.l.bf16 %v374
  %v504 = vunpack.c.l.bf16 %v375
  %v505 = vunpack.c.l.bf16 %v376
  %v506 = vunpack.c.l.bf16 %v377
  %v507 = vunpack.c.l.bf16 %v378
  %v508 = vunpack.c.l.bf16 %v379
  %v509 = vunpack.c.l.bf16 %v380
  %v510 = vunpack.c.l.bf16 %v381
  %v511 = vunpack.c.l.bf16 %v382
  %v512 = vunpack.c.l.bf16 %v383
  %v513 = vunpack.c.l.bf16 %v384
  %v514 = vunpack.c.l.bf16 %v385
  %v515 = vunpack.c.l.bf16 %v386
  %v516 = vunpack.c.l.bf16 %v387
  %v517 = vunpack.c.l.bf16 %v388
  %v518 = vunpack.c.l.bf16 %v389
  %v519 = vunpack.c.l.bf16 %v390
  %v520 = vunpack.c.l.bf16 %v391
  %v521 = vunpack.c.l.bf16 %v392
  %v522 = vunpack.c.l.bf16 %v394
  %v523 = vunpack.c.l.bf16 %v395
  %v524 = vunpack.c.l.bf16 %v396
  %v525 = vunpack.c.l.bf16 %v397
  %v526 = vunpack.c.l.bf16 %v398
  %v527 = vunpack.c.l.bf16 %v399
  %v528 = vunpack.c.l.bf16 %v400
  %v529 = vunpack.c.l.bf16 %v401
  %v530 = vunpack.c.l.bf16 %v402
  %v531 = vunpack.c.l.bf16 %v403
  %v532 = vunpack.c.l.bf16 %v404
  %v533 = vunpack.c.l.bf16 %v405
  %v534 = vunpack.c.l.bf16 %v406
  %v535 = vunpack.c.l.bf16 %v407
  %v536 = vunpack.c.l.bf16 %v408
  %v537 = vunpack.c.l.bf16 %v409
  %v538 = vunpack.c.l.bf16 %v410
  %v539 = vunpack.c.l.bf16 %v411
  %v540 = vunpack.c.l.bf16 %v412
  %v541 = vunpack.c.l.bf16 %v413
  %v542 = vunpack.c.l.bf16 %v414
  %v543 = vunpack.c.l.bf16 %v415
  %v544 = vunpack.c.l.bf16 %v416
  %v545 = vunpack.c.l.bf16 %v417
  %v546 = vunpack.c.l.bf16 %v418
  %v547 = vunpack.c.l.bf16 %v419
  %v548 = vunpack.c.l.bf16 %v420
  %v549 = vunpack.c.l.bf16 %v421
  %v550 = vunpack.c.l.bf16 %v422
  %v551 = vunpack.c.l.bf16 %v423
  %v552 = vunpack.c.l.bf16 %v424
  %v553 = vunpack.c.l.bf16 %v425
  %v554 = vunpack.c.l.bf16 %v426
  %v555 = vunpack.c.l.bf16 %v427
  %v556 = vunpack.c.l.bf16 %v428
  %v557 = vunpack.c.l.bf16 %v429
  %v558 = vunpack.c.l.bf16 %v430
  %v559 = vunpack.c.l.bf16 %v431
  %v560 = vunpack.c.l.bf16 %v432
  %v561 = vunpack.c.l.bf16 %v433
  %v562 = vunpack.c.l.bf16 %v434
  %v563 = vunpack.c.l.bf16 %v435
  %v564 = vunpack.c.l.bf16 %v436
  %v565 = vunpack.c.l.bf16 %v437
  %v566 = vunpack.c.l.bf16 %v438
  %v567 = vunpack.c.l.bf16 %v439
  %v568 = vunpack.c.l.bf16 %v440
  %v569 = vunpack.c.l.bf16 %v441
  %v570 = vunpack.c.l.bf16 %v442
  %v571 = vunpack.c.l.bf16 %v443
  %v572 = vunpack.c.l.bf16 %v444
  %v573 = vunpack.c.l.bf16 %v445
  %v574 = vunpack.c.l.bf16 %v446
  %v575 = vunpack.c.l.bf16 %v447
  %v576 = vunpack.c.l.bf16 %v448
  %v577 = vunpack.c.l.bf16 %v449
  %v578 = vunpack.c.l.bf16 %v450
  %v579 = vunpack.c.l.bf16 %v451
  %v580 = vunpack.c.l.bf16 %v452
  %v581 = vunpack.c.l.bf16 %v453
  %v582 = vunpack.c.l.bf16 %v454
  %v583 = vunpack.c.l.bf16 %v455
  %v584 = vunpack.c.l.bf16 %v456
  %v585 = vunpack.c.l.bf16 %v457
  %v586 = vmax.f32 %v458, %v522
  %v587 = vmax.f32 %v459, %v523
  %v588 = vmax.f32 %v460, %v524
  %v589 = vmax.f32 %v461, %v525
  %v590 = vmax.f32 %v462, %v526
  %v591 = vmax.f32 %v463, %v527
  %v592 = vmax.f32 %v464, %v528
  %v593 = vmax.f32 %v465, %v529
  %v594 = vmax.f32 %v466, %v530
  %v595 = vmax.f32 %v467, %v531
  %v596 = vmax.f32 %v468, %v532
  %v597 = vmax.f32 %v469, %v533
  %v598 = vmax.f32 %v470, %v534
  %v599 = vmax.f32 %v471, %v535
  %v600 = vmax.f32 %v472, %v536
  %v601 = vmax.f32 %v473, %v537
  %v602 = vmax.f32 %v474, %v538
  %v603 = vmax.f32 %v475, %v539
  %v604 = vmax.f32 %v476, %v540
  %v605 = vmax.f32 %v477, %v541
  %v606 = vmax.f32 %v478, %v542
  %v607 = vmax.f32 %v479, %v543
  %v608 = vmax.f32 %v480, %v544
  %v609 = vmax.f32 %v481, %v545
  %v610 = vmax.f32 %v482, %v546
  %v611 = vmax.f32 %v483, %v547
  %v612 = vmax.f32 %v484, %v548
  %v613 = vmax.f32 %v485, %v549
  %v614 = vmax.f32 %v486, %v550
  %v615 = vmax.f32 %v487, %v551
  %v616 = vmax.f32 %v488, %v552
  %v617 = vmax.f32 %v489, %v553
  %v618 = vmax.f32 %v490, %v554
  %v619 = vmax.f32 %v491, %v555
  %v620 = vmax.f32 %v492, %v556
  %v621 = vmax.f32 %v493, %v557
  %v622 = vmax.f32 %v494, %v558
  %v623 = vmax.f32 %v495, %v559
  %v624 = vmax.f32 %v496, %v560
  %v625 = vmax.f32 %v497, %v561
  %v626 = vmax.f32 %v498, %v562
  %v627 = vmax.f32 %v499, %v563
  %v628 = vmax.f32 %v500, %v564
  %v629 = vmax.f32 %v501, %v565
  %v630 = vmax.f32 %v502, %v566
  %v631 = vmax.f32 %v503, %v567
  %v632 = vmax.f32 %v504, %v568
  %v633 = vmax.f32 %v505, %v569
  %v634 = vmax.f32 %v506, %v570
  %v635 = vmax.f32 %v507, %v571
  %v636 = vmax.f32 %v508, %v572
  %v637 = vmax.f32 %v509, %v573
  %v638 = vmax.f32 %v510, %v574
  %v639 = vmax.f32 %v511, %v575
  %v640 = vmax.f32 %v512, %v576
  %v641 = vmax.f32 %v513, %v577
  %v642 = vmax.f32 %v514, %v578
  %v643 = vmax.f32 %v515, %v579
  %v644 = vmax.f32 %v516, %v580
  %v645 = vmax.f32 %v517, %v581
  %v646 = vmax.f32 %v518, %v582
  %v647 = vmax.f32 %v519, %v583
  %v648 = vmax.f32 %v520, %v584
  %v649 = vmax.f32 %v521, %v585
  %v650 = vpack.c.bf16 %v586, %v586
  %v651 = vpack.c.bf16 %v587, %v587
  %v652 = vpack.c.bf16 %v588, %v588
  %v653 = vpack.c.bf16 %v589, %v589
  %v654 = vpack.c.bf16 %v590, %v590
  %v655 = vpack.c.bf16 %v591, %v591
  %v656 = vpack.c.bf16 %v592, %v592
  %v657 = vpack.c.bf16 %v593, %v593
  %v658 = vpack.c.bf16 %v594, %v594
  %v659 = vpack.c.bf16 %v595, %v595
  %v660 = vpack.c.bf16 %v596, %v596
  %v661 = vpack.c.bf16 %v597, %v597
  %v662 = vpack.c.bf16 %v598, %v598
  %v663 = vpack.c.bf16 %v599, %v599
  %v664 = vpack.c.bf16 %v600, %v600
  %v665 = vpack.c.bf16 %v601, %v601
  %v666 = vpack.c.bf16 %v602, %v602
  %v667 = vpack.c.bf16 %v603, %v603
  %v668 = vpack.c.bf16 %v604, %v604
  %v669 = vpack.c.bf16 %v605, %v605
  %v670 = vpack.c.bf16 %v606, %v606
  %v671 = vpack.c.bf16 %v607, %v607
  %v672 = vpack.c.bf16 %v608, %v608
  %v673 = vpack.c.bf16 %v609, %v609
  %v674 = vpack.c.bf16 %v610, %v610
  %v675 = vpack.c.bf16 %v611, %v611
  %v676 = vpack.c.bf16 %v612, %v612
  %v677 = vpack.c.bf16 %v613, %v613
  %v678 = vpack.c.bf16 %v614, %v614
  %v679 = vpack.c.bf16 %v615, %v615
  %v680 = vpack.c.bf16 %v616, %v616
  %v681 = vpack.c.bf16 %v617, %v617
  %v682 = vpack.c.bf16 %v618, %v618
  %v683 = vpack.c.bf16 %v619, %v619
  %v684 = vpack.c.bf16 %v620, %v620
  %v685 = vpack.c.bf16 %v621, %v621
  %v686 = vpack.c.bf16 %v622, %v622
  %v687 = vpack.c.bf16 %v623, %v623
  %v688 = vpack.c.bf16 %v624, %v624
  %v689 = vpack.c.bf16 %v625, %v625
  %v690 = vpack.c.bf16 %v626, %v626
  %v691 = vpack.c.bf16 %v627, %v627
  %v692 = vpack.c.bf16 %v628, %v628
  %v693 = vpack.c.bf16 %v629, %v629
  %v694 = vpack.c.bf16 %v630, %v630
  %v695 = vpack.c.bf16 %v631, %v631
  %v696 = vpack.c.bf16 %v632, %v632
  %v697 = vpack.c.bf16 %v633, %v633
  %v698 = vpack.c.bf16 %v634, %v634
  %v699 = vpack.c.bf16 %v635, %v635
  %v700 = vpack.c.bf16 %v636, %v636
  %v701 = vpack.c.bf16 %v637, %v637
  %v702 = vpack.c.bf16 %v638, %v638
  %v703 = vpack.c.bf16 %v639, %v639
  %v704 = vpack.c.bf16 %v640, %v640
  %v705 = vpack.c.bf16 %v641, %v641
  %v706 = vpack.c.bf16 %v642, %v642
  %v707 = vpack.c.bf16 %v643, %v643
  %v708 = vpack.c.bf16 %v644, %v644
  %v709 = vpack.c.bf16 %v645, %v645
  %v710 = vpack.c.bf16 %v646, %v646
  %v711 = vpack.c.bf16 %v647, %v647
  %v712 = vpack.c.bf16 %v648, %v648
  %v713 = vpack.c.bf16 %v649, %v649
  %s714 = scalar_lea.vmem %s0, 162
  %v715 = vld [vmem:[%s714] sm:$0x1]
  %v716 = vld [vmem:[%s714 + $0x1] sm:$0x1]
  %v717 = vld [vmem:[%s714 + $0x2] sm:$0x1]
  %v718 = vld [vmem:[%s714 + $0x3] sm:$0x1]
  %v719 = vld [vmem:[%s714 + $0x4] sm:$0x1]
  %v720 = vld [vmem:[%s714 + $0x5] sm:$0x1]
  %v721 = vld [vmem:[%s714 + $0x6] sm:$0x1]
  %v722 = vld [vmem:[%s714 + $0x7] sm:$0x1]
  %v723 = vld [vmem:[%s714 + $0x9] sm:$0x1]
  %v724 = vld [vmem:[%s714 + $0xa] sm:$0x1]
  %v725 = vld [vmem:[%s714 + $0xb] sm:$0x1]
  %v726 = vld [vmem:[%s714 + $0xc] sm:$0x1]
  %v727 = vld [vmem:[%s714 + $0xd] sm:$0x1]
  %v728 = vld [vmem:[%s714 + $0xe] sm:$0x1]
  %v729 = vld [vmem:[%s714 + $0xf] sm:$0x1]
  %v730 = vld [vmem:[%s714 + $0x10] sm:$0x1]
  %v731 = vld [vmem:[%s714 + $0x12] sm:$0x1]
  %v732 = vld [vmem:[%s714 + $0x13] sm:$0x1]
  %v733 = vld [vmem:[%s714 + $0x14] sm:$0x1]
  %v734 = vld [vmem:[%s714 + $0x15] sm:$0x1]
  %v735 = vld [vmem:[%s714 + $0x16] sm:$0x1]
  %v736 = vld [vmem:[%s714 + $0x17] sm:$0x1]
  %v737 = vld [vmem:[%s714 + $0x18] sm:$0x1]
  %v738 = vld [vmem:[%s714 + $0x19] sm:$0x1]
  %v739 = vld [vmem:[%s714 + $0x1b] sm:$0x1]
  %v740 = vld [vmem:[%s714 + $0x1c] sm:$0x1]
  %v741 = vld [vmem:[%s714 + $0x1d] sm:$0x1]
  %v742 = vld [vmem:[%s714 + $0x1e] sm:$0x1]
  %v743 = vld [vmem:[%s714 + $0x1f] sm:$0x1]
  %v744 = vld [vmem:[%s714 + $0x20] sm:$0x1]
  %v745 = vld [vmem:[%s714 + $0x21] sm:$0x1]
  %v746 = vld [vmem:[%s714 + $0x22] sm:$0x1]
  %v747 = vld [vmem:[%s714 + $0x24] sm:$0x1]
  %v748 = vld [vmem:[%s714 + $0x25] sm:$0x1]
  %v749 = vld [vmem:[%s714 + $0x26] sm:$0x1]
  %v750 = vld [vmem:[%s714 + $0x27] sm:$0x1]
  %v751 = vld [vmem:[%s714 + $0x28] sm:$0x1]
  %v752 = vld [vmem:[%s714 + $0x29] sm:$0x1]
  %v753 = vld [vmem:[%s714 + $0x2a] sm:$0x1]
  %v754 = vld [vmem:[%s714 + $0x2b] sm:$0x1]
  %v755 = vld [vmem:[%s714 + $0x2d] sm:$0x1]
  %v756 = vld [vmem:[%s714 + $0x2e] sm:$0x1]
  %v757 = vld [vmem:[%s714 + $0x2f] sm:$0x1]
  %v758 = vld [vmem:[%s714 + $0x30] sm:$0x1]
  %v759 = vld [vmem:[%s714 + $0x31] sm:$0x1]
  %v760 = vld [vmem:[%s714 + $0x32] sm:$0x1]
  %v761 = vld [vmem:[%s714 + $0x33] sm:$0x1]
  %v762 = vld [vmem:[%s714 + $0x34] sm:$0x1]
  %v763 = vld [vmem:[%s714 + $0x36] sm:$0x1]
  %v764 = vld [vmem:[%s714 + $0x37] sm:$0x1]
  %v765 = vld [vmem:[%s714 + $0x38] sm:$0x1]
  %v766 = vld [vmem:[%s714 + $0x39] sm:$0x1]
  %v767 = vld [vmem:[%s714 + $0x3a] sm:$0x1]
  %v768 = vld [vmem:[%s714 + $0x3b] sm:$0x1]
  %v769 = vld [vmem:[%s714 + $0x3c] sm:$0x1]
  %v770 = vld [vmem:[%s714 + $0x3d] sm:$0x1]
  %v771 = vld [vmem:[%s714 + $0x3f] sm:$0x1]
  %v772 = vld [vmem:[%s714 + $0x40] sm:$0x1]
  %v773 = vld [vmem:[%s714 + $0x41] sm:$0x1]
  %v774 = vld [vmem:[%s714 + $0x42] sm:$0x1]
  %v775 = vld [vmem:[%s714 + $0x43] sm:$0x1]
  %v776 = vld [vmem:[%s714 + $0x44] sm:$0x1]
  %v777 = vld [vmem:[%s714 + $0x45] sm:$0x1]
  %v778 = vld [vmem:[%s714 + $0x46] sm:$0x1]
  %v779 = vunpack.c.l.bf16 %v650
  %v780 = vunpack.c.l.bf16 %v651
  %v781 = vunpack.c.l.bf16 %v652
  %v782 = vunpack.c.l.bf16 %v653
  %v783 = vunpack.c.l.bf16 %v654
  %v784 = vunpack.c.l.bf16 %v655
  %v785 = vunpack.c.l.bf16 %v656
  %v786 = vunpack.c.l.bf16 %v657
  %v787 = vunpack.c.l.bf16 %v658
  %v788 = vunpack.c.l.bf16 %v659
  %v789 = vunpack.c.l.bf16 %v660
  %v790 = vunpack.c.l.bf16 %v661
  %v791 = vunpack.c.l.bf16 %v662
  %v792 = vunpack.c.l.bf16 %v663
  %v793 = vunpack.c.l.bf16 %v664
  %v794 = vunpack.c.l.bf16 %v665
  %v795 = vunpack.c.l.bf16 %v666
  %v796 = vunpack.c.l.bf16 %v667
  %v797 = vunpack.c.l.bf16 %v668
  %v798 = vunpack.c.l.bf16 %v669
  %v799 = vunpack.c.l.bf16 %v670
  %v800 = vunpack.c.l.bf16 %v671
  %v801 = vunpack.c.l.bf16 %v672
  %v802 = vunpack.c.l.bf16 %v673
  %v803 = vunpack.c.l.bf16 %v674
  %v804 = vunpack.c.l.bf16 %v675
  %v805 = vunpack.c.l.bf16 %v676
  %v806 = vunpack.c.l.bf16 %v677
  %v807 = vunpack.c.l.bf16 %v678
  %v808 = vunpack.c.l.bf16 %v679
  %v809 = vunpack.c.l.bf16 %v680
  %v810 = vunpack.c.l.bf16 %v681
  %v811 = vunpack.c.l.bf16 %v682
  %v812 = vunpack.c.l.bf16 %v683
  %v813 = vunpack.c.l.bf16 %v684
  %v814 = vunpack.c.l.bf16 %v685
  %v815 = vunpack.c.l.bf16 %v686
  %v816 = vunpack.c.l.bf16 %v687
  %v817 = vunpack.c.l.bf16 %v688
  %v818 = vunpack.c.l.bf16 %v689
  %v819 = vunpack.c.l.bf16 %v690
  %v820 = vunpack.c.l.bf16 %v691
  %v821 = vunpack.c.l.bf16 %v692
  %v822 = vunpack.c.l.bf16 %v693
  %v823 = vunpack.c.l.bf16 %v694
  %v824 = vunpack.c.l.bf16 %v695
  %v825 = vunpack.c.l.bf16 %v696
  %v826 = vunpack.c.l.bf16 %v697
  %v827 = vunpack.c.l.bf16 %v698
  %v828 = vunpack.c.l.bf16 %v699
  %v829 = vunpack.c.l.bf16 %v700
  %v830 = vunpack.c.l.bf16 %v701
  %v831 = vunpack.c.l.bf16 %v702
  %v832 = vunpack.c.l.bf16 %v703
  %v833 = vunpack.c.l.bf16 %v704
  %v834 = vunpack.c.l.bf16 %v705
  %v835 = vunpack.c.l.bf16 %v706
  %v836 = vunpack.c.l.bf16 %v707
  %v837 = vunpack.c.l.bf16 %v708
  %v838 = vunpack.c.l.bf16 %v709
  %v839 = vunpack.c.l.bf16 %v710
  %v840 = vunpack.c.l.bf16 %v711
  %v841 = vunpack.c.l.bf16 %v712
  %v842 = vunpack.c.l.bf16 %v713
  %v843 = vunpack.c.l.bf16 %v715
  %v844 = vunpack.c.l.bf16 %v716
  %v845 = vunpack.c.l.bf16 %v717
  %v846 = vunpack.c.l.bf16 %v718
  %v847 = vunpack.c.l.bf16 %v719
  %v848 = vunpack.c.l.bf16 %v720
  %v849 = vunpack.c.l.bf16 %v721
  %v850 = vunpack.c.l.bf16 %v722
  %v851 = vunpack.c.l.bf16 %v723
  %v852 = vunpack.c.l.bf16 %v724
  %v853 = vunpack.c.l.bf16 %v725
  %v854 = vunpack.c.l.bf16 %v726
  %v855 = vunpack.c.l.bf16 %v727
  %v856 = vunpack.c.l.bf16 %v728
  %v857 = vunpack.c.l.bf16 %v729
  %v858 = vunpack.c.l.bf16 %v730
  %v859 = vunpack.c.l.bf16 %v731
  %v860 = vunpack.c.l.bf16 %v732
  %v861 = vunpack.c.l.bf16 %v733
  %v862 = vunpack.c.l.bf16 %v734
  %v863 = vunpack.c.l.bf16 %v735
  %v864 = vunpack.c.l.bf16 %v736
  %v865 = vunpack.c.l.bf16 %v737
  %v866 = vunpack.c.l.bf16 %v738
  %v867 = vunpack.c.l.bf16 %v739
  %v868 = vunpack.c.l.bf16 %v740
  %v869 = vunpack.c.l.bf16 %v741
  %v870 = vunpack.c.l.bf16 %v742
  %v871 = vunpack.c.l.bf16 %v743
  %v872 = vunpack.c.l.bf16 %v744
  %v873 = vunpack.c.l.bf16 %v745
  %v874 = vunpack.c.l.bf16 %v746
  %v875 = vunpack.c.l.bf16 %v747
  %v876 = vunpack.c.l.bf16 %v748
  %v877 = vunpack.c.l.bf16 %v749
  %v878 = vunpack.c.l.bf16 %v750
  %v879 = vunpack.c.l.bf16 %v751
  %v880 = vunpack.c.l.bf16 %v752
  %v881 = vunpack.c.l.bf16 %v753
  %v882 = vunpack.c.l.bf16 %v754
  %v883 = vunpack.c.l.bf16 %v755
  %v884 = vunpack.c.l.bf16 %v756
  %v885 = vunpack.c.l.bf16 %v757
  %v886 = vunpack.c.l.bf16 %v758
  %v887 = vunpack.c.l.bf16 %v759
  %v888 = vunpack.c.l.bf16 %v760
  %v889 = vunpack.c.l.bf16 %v761
  %v890 = vunpack.c.l.bf16 %v762
  %v891 = vunpack.c.l.bf16 %v763
  %v892 = vunpack.c.l.bf16 %v764
  %v893 = vunpack.c.l.bf16 %v765
  %v894 = vunpack.c.l.bf16 %v766
  %v895 = vunpack.c.l.bf16 %v767
  %v896 = vunpack.c.l.bf16 %v768
  %v897 = vunpack.c.l.bf16 %v769
  %v898 = vunpack.c.l.bf16 %v770
  %v899 = vunpack.c.l.bf16 %v771
  %v900 = vunpack.c.l.bf16 %v772
  %v901 = vunpack.c.l.bf16 %v773
  %v902 = vunpack.c.l.bf16 %v774
  %v903 = vunpack.c.l.bf16 %v775
  %v904 = vunpack.c.l.bf16 %v776
  %v905 = vunpack.c.l.bf16 %v777
  %v906 = vunpack.c.l.bf16 %v778
  %v907 = vmax.f32 %v779, %v843
  %v908 = vmax.f32 %v780, %v844
  %v909 = vmax.f32 %v781, %v845
  %v910 = vmax.f32 %v782, %v846
  %v911 = vmax.f32 %v783, %v847
  %v912 = vmax.f32 %v784, %v848
  %v913 = vmax.f32 %v785, %v849
  %v914 = vmax.f32 %v786, %v850
  %v915 = vmax.f32 %v787, %v851
  %v916 = vmax.f32 %v788, %v852
  %v917 = vmax.f32 %v789, %v853
  %v918 = vmax.f32 %v790, %v854
  %v919 = vmax.f32 %v791, %v855
  %v920 = vmax.f32 %v792, %v856
  %v921 = vmax.f32 %v793, %v857
  %v922 = vmax.f32 %v794, %v858
  %v923 = vmax.f32 %v795, %v859
  %v924 = vmax.f32 %v796, %v860
  %v925 = vmax.f32 %v797, %v861
  %v926 = vmax.f32 %v798, %v862
  %v927 = vmax.f32 %v799, %v863
  %v928 = vmax.f32 %v800, %v864
  %v929 = vmax.f32 %v801, %v865
  %v930 = vmax.f32 %v802, %v866
  %v931 = vmax.f32 %v803, %v867
  %v932 = vmax.f32 %v804, %v868
  %v933 = vmax.f32 %v805, %v869
  %v934 = vmax.f32 %v806, %v870
  %v935 = vmax.f32 %v807, %v871
  %v936 = vmax.f32 %v808, %v872
  %v937 = vmax.f32 %v809, %v873
  %v938 = vmax.f32 %v810, %v874
  %v939 = vmax.f32 %v811, %v875
  %v940 = vmax.f32 %v812, %v876
  %v941 = vmax.f32 %v813, %v877
  %v942 = vmax.f32 %v814, %v878
  %v943 = vmax.f32 %v815, %v879
  %v944 = vmax.f32 %v816, %v880
  %v945 = vmax.f32 %v817, %v881
  %v946 = vmax.f32 %v818, %v882
  %v947 = vmax.f32 %v819, %v883
  %v948 = vmax.f32 %v820, %v884
  %v949 = vmax.f32 %v821, %v885
  %v950 = vmax.f32 %v822, %v886
  %v951 = vmax.f32 %v823, %v887
  %v952 = vmax.f32 %v824, %v888
  %v953 = vmax.f32 %v825, %v889
  %v954 = vmax.f32 %v826, %v890
  %v955 = vmax.f32 %v827, %v891
  %v956 = vmax.f32 %v828, %v892
  %v957 = vmax.f32 %v829, %v893
  %v958 = vmax.f32 %v830, %v894
  %v959 = vmax.f32 %v831, %v895
  %v960 = vmax.f32 %v832, %v896
  %v961 = vmax.f32 %v833, %v897
  %v962 = vmax.f32 %v834, %v898
  %v963 = vmax.f32 %v835, %v899
  %v964 = vmax.f32 %v836, %v900
  %v965 = vmax.f32 %v837, %v901
  %v966 = vmax.f32 %v838, %v902
  %v967 = vmax.f32 %v839, %v903
  %v968 = vmax.f32 %v840, %v904
  %v969 = vmax.f32 %v841, %v905
  %v970 = vmax.f32 %v842, %v906
  %v971 = vpack.c.bf16 %v907, %v907
  %v972 = vpack.c.bf16 %v908, %v908
  %v973 = vpack.c.bf16 %v909, %v909
  %v974 = vpack.c.bf16 %v910, %v910
  %v975 = vpack.c.bf16 %v911, %v911
  %v976 = vpack.c.bf16 %v912, %v912
  %v977 = vpack.c.bf16 %v913, %v913
  %v978 = vpack.c.bf16 %v914, %v914
  %v979 = vpack.c.bf16 %v915, %v915
  %v980 = vpack.c.bf16 %v916, %v916
  %v981 = vpack.c.bf16 %v917, %v917
  %v982 = vpack.c.bf16 %v918, %v918
  %v983 = vpack.c.bf16 %v919, %v919
  %v984 = vpack.c.bf16 %v920, %v920
  %v985 = vpack.c.bf16 %v921, %v921
  %v986 = vpack.c.bf16 %v922, %v922
  %v987 = vpack.c.bf16 %v923, %v923
  %v988 = vpack.c.bf16 %v924, %v924
  %v989 = vpack.c.bf16 %v925, %v925
  %v990 = vpack.c.bf16 %v926, %v926
  %v991 = vpack.c.bf16 %v927, %v927
  %v992 = vpack.c.bf16 %v928, %v928
  %v993 = vpack.c.bf16 %v929, %v929
  %v994 = vpack.c.bf16 %v930, %v930
  %v995 = vpack.c.bf16 %v931, %v931
  %v996 = vpack.c.bf16 %v932, %v932
  %v997 = vpack.c.bf16 %v933, %v933
  %v998 = vpack.c.bf16 %v934, %v934
  %v999 = vpack.c.bf16 %v935, %v935
  %v1000 = vpack.c.bf16 %v936, %v936
  %v1001 = vpack.c.bf16 %v937, %v937
  %v1002 = vpack.c.bf16 %v938, %v938
  %v1003 = vpack.c.bf16 %v939, %v939
  %v1004 = vpack.c.bf16 %v940, %v940
  %v1005 = vpack.c.bf16 %v941, %v941
  %v1006 = vpack.c.bf16 %v942, %v942
  %v1007 = vpack.c.bf16 %v943, %v943
  %v1008 = vpack.c.bf16 %v944, %v944
  %v1009 = vpack.c.bf16 %v945, %v945
  %v1010 = vpack.c.bf16 %v946, %v946
  %v1011 = vpack.c.bf16 %v947, %v947
  %v1012 = vpack.c.bf16 %v948, %v948
  %v1013 = vpack.c.bf16 %v949, %v949
  %v1014 = vpack.c.bf16 %v950, %v950
  %v1015 = vpack.c.bf16 %v951, %v951
  %v1016 = vpack.c.bf16 %v952, %v952
  %v1017 = vpack.c.bf16 %v953, %v953
  %v1018 = vpack.c.bf16 %v954, %v954
  %v1019 = vpack.c.bf16 %v955, %v955
  %v1020 = vpack.c.bf16 %v956, %v956
  %v1021 = vpack.c.bf16 %v957, %v957
  %v1022 = vpack.c.bf16 %v958, %v958
  %v1023 = vpack.c.bf16 %v959, %v959
  %v1024 = vpack.c.bf16 %v960, %v960
  %v1025 = vpack.c.bf16 %v961, %v961
  %v1026 = vpack.c.bf16 %v962, %v962
  %v1027 = vpack.c.bf16 %v963, %v963
  %v1028 = vpack.c.bf16 %v964, %v964
  %v1029 = vpack.c.bf16 %v965, %v965
  %v1030 = vpack.c.bf16 %v966, %v966
  %v1031 = vpack.c.bf16 %v967, %v967
  %v1032 = vpack.c.bf16 %v968, %v968
  %v1033 = vpack.c.bf16 %v969, %v969
  %v1034 = vpack.c.bf16 %v970, %v970
  %s1035 = scalar_lea.vmem %s0, 243
  %v1036 = vld [vmem:[%s1035] sm:$0x1]
  %v1037 = vld [vmem:[%s1035 + $0x1] sm:$0x1]
  %v1038 = vld [vmem:[%s1035 + $0x2] sm:$0x1]
  %v1039 = vld [vmem:[%s1035 + $0x3] sm:$0x1]
  %v1040 = vld [vmem:[%s1035 + $0x4] sm:$0x1]
  %v1041 = vld [vmem:[%s1035 + $0x5] sm:$0x1]
  %v1042 = vld [vmem:[%s1035 + $0x6] sm:$0x1]
  %v1043 = vld [vmem:[%s1035 + $0x7] sm:$0x1]
  %v1044 = vld [vmem:[%s1035 + $0x9] sm:$0x1]
  %v1045 = vld [vmem:[%s1035 + $0xa] sm:$0x1]
  %v1046 = vld [vmem:[%s1035 + $0xb] sm:$0x1]
  %v1047 = vld [vmem:[%s1035 + $0xc] sm:$0x1]
  %v1048 = vld [vmem:[%s1035 + $0xd] sm:$0x1]
  %v1049 = vld [vmem:[%s1035 + $0xe] sm:$0x1]
  %v1050 = vld [vmem:[%s1035 + $0xf] sm:$0x1]
  %v1051 = vld [vmem:[%s1035 + $0x10] sm:$0x1]
  %v1052 = vld [vmem:[%s1035 + $0x12] sm:$0x1]
  %v1053 = vld [vmem:[%s1035 + $0x13] sm:$0x1]
  %v1054 = vld [vmem:[%s1035 + $0x14] sm:$0x1]
  %v1055 = vld [vmem:[%s1035 + $0x15] sm:$0x1]
  %v1056 = vld [vmem:[%s1035 + $0x16] sm:$0x1]
  %v1057 = vld [vmem:[%s1035 + $0x17] sm:$0x1]
  %v1058 = vld [vmem:[%s1035 + $0x18] sm:$0x1]
  %v1059 = vld [vmem:[%s1035 + $0x19] sm:$0x1]
  %v1060 = vld [vmem:[%s1035 + $0x1b] sm:$0x1]
  %v1061 = vld [vmem:[%s1035 + $0x1c] sm:$0x1]
  %v1062 = vld [vmem:[%s1035 + $0x1d] sm:$0x1]
  %v1063 = vld [vmem:[%s1035 + $0x1e] sm:$0x1]
  %v1064 = vld [vmem:[%s1035 + $0x1f] sm:$0x1]
  %v1065 = vld [vmem:[%s1035 + $0x20] sm:$0x1]
  %v1066 = vld [vmem:[%s1035 + $0x21] sm:$0x1]
  %v1067 = vld [vmem:[%s1035 + $0x22] sm:$0x1]
  %v1068 = vld [vmem:[%s1035 + $0x24] sm:$0x1]
  %v1069 = vld [vmem:[%s1035 + $0x25] sm:$0x1]
  %v1070 = vld [vmem:[%s1035 + $0x26] sm:$0x1]
  %v1071 = vld [vmem:[%s1035 + $0x27] sm:$0x1]
  %v1072 = vld [vmem:[%s1035 + $0x28] sm:$0x1]
  %v1073 = vld [vmem:[%s1035 + $0x29] sm:$0x1]
  %v1074 = vld [vmem:[%s1035 + $0x2a] sm:$0x1]
  %v1075 = vld [vmem:[%s1035 + $0x2b] sm:$0x1]
  %v1076 = vld [vmem:[%s1035 + $0x2d] sm:$0x1]
  %v1077 = vld [vmem:[%s1035 + $0x2e] sm:$0x1]
  %v1078 = vld [vmem:[%s1035 + $0x2f] sm:$0x1]
  %v1079 = vld [vmem:[%s1035 + $0x30] sm:$0x1]
  %v1080 = vld [vmem:[%s1035 + $0x31] sm:$0x1]
  %v1081 = vld [vmem:[%s1035 + $0x32] sm:$0x1]
  %v1082 = vld [vmem:[%s1035 + $0x33] sm:$0x1]
  %v1083 = vld [vmem:[%s1035 + $0x34] sm:$0x1]
  %v1084 = vld [vmem:[%s1035 + $0x36] sm:$0x1]
  %v1085 = vld [vmem:[%s1035 + $0x37] sm:$0x1]
  %v1086 = vld [vmem:[%s1035 + $0x38] sm:$0x1]
  %v1087 = vld [vmem:[%s1035 + $0x39] sm:$0x1]
  %v1088 = vld [vmem:[%s1035 + $0x3a] sm:$0x1]
  %v1089 = vld [vmem:[%s1035 + $0x3b] sm:$0x1]
  %v1090 = vld [vmem:[%s1035 + $0x3c] sm:$0x1]
  %v1091 = vld [vmem:[%s1035 + $0x3d] sm:$0x1]
  %v1092 = vld [vmem:[%s1035 + $0x3f] sm:$0x1]
  %v1093 = vld [vmem:[%s1035 + $0x40] sm:$0x1]
  %v1094 = vld [vmem:[%s1035 + $0x41] sm:$0x1]
  %v1095 = vld [vmem:[%s1035 + $0x42] sm:$0x1]
  %v1096 = vld [vmem:[%s1035 + $0x43] sm:$0x1]
  %v1097 = vld [vmem:[%s1035 + $0x44] sm:$0x1]
  %v1098 = vld [vmem:[%s1035 + $0x45] sm:$0x1]
  %v1099 = vld [vmem:[%s1035 + $0x46] sm:$0x1]
  %v1100 = vunpack.c.l.bf16 %v971
  %v1101 = vunpack.c.l.bf16 %v972
  %v1102 = vunpack.c.l.bf16 %v973
  %v1103 = vunpack.c.l.bf16 %v974
  %v1104 = vunpack.c.l.bf16 %v975
  %v1105 = vunpack.c.l.bf16 %v976
  %v1106 = vunpack.c.l.bf16 %v977
  %v1107 = vunpack.c.l.bf16 %v978
  %v1108 = vunpack.c.l.bf16 %v979
  %v1109 = vunpack.c.l.bf16 %v980
  %v1110 = vunpack.c.l.bf16 %v981
  %v1111 = vunpack.c.l.bf16 %v982
  %v1112 = vunpack.c.l.bf16 %v983
  %v1113 = vunpack.c.l.bf16 %v984
  %v1114 = vunpack.c.l.bf16 %v985
  %v1115 = vunpack.c.l.bf16 %v986
  %v1116 = vunpack.c.l.bf16 %v987
  %v1117 = vunpack.c.l.bf16 %v988
  %v1118 = vunpack.c.l.bf16 %v989
  %v1119 = vunpack.c.l.bf16 %v990
  %v1120 = vunpack.c.l.bf16 %v991
  %v1121 = vunpack.c.l.bf16 %v992
  %v1122 = vunpack.c.l.bf16 %v993
  %v1123 = vunpack.c.l.bf16 %v994
  %v1124 = vunpack.c.l.bf16 %v995
  %v1125 = vunpack.c.l.bf16 %v996
  %v1126 = vunpack.c.l.bf16 %v997
  %v1127 = vunpack.c.l.bf16 %v998
  %v1128 = vunpack.c.l.bf16 %v999
  %v1129 = vunpack.c.l.bf16 %v1000
  %v1130 = vunpack.c.l.bf16 %v1001
  %v1131 = vunpack.c.l.bf16 %v1002
  %v1132 = vunpack.c.l.bf16 %v1003
  %v1133 = vunpack.c.l.bf16 %v1004
  %v1134 = vunpack.c.l.bf16 %v1005
  %v1135 = vunpack.c.l.bf16 %v1006
  %v1136 = vunpack.c.l.bf16 %v1007
  %v1137 = vunpack.c.l.bf16 %v1008
  %v1138 = vunpack.c.l.bf16 %v1009
  %v1139 = vunpack.c.l.bf16 %v1010
  %v1140 = vunpack.c.l.bf16 %v1011
  %v1141 = vunpack.c.l.bf16 %v1012
  %v1142 = vunpack.c.l.bf16 %v1013
  %v1143 = vunpack.c.l.bf16 %v1014
  %v1144 = vunpack.c.l.bf16 %v1015
  %v1145 = vunpack.c.l.bf16 %v1016
  %v1146 = vunpack.c.l.bf16 %v1017
  %v1147 = vunpack.c.l.bf16 %v1018
  %v1148 = vunpack.c.l.bf16 %v1019
  %v1149 = vunpack.c.l.bf16 %v1020
  %v1150 = vunpack.c.l.bf16 %v1021
  %v1151 = vunpack.c.l.bf16 %v1022
  %v1152 = vunpack.c.l.bf16 %v1023
  %v1153 = vunpack.c.l.bf16 %v1024
  %v1154 = vunpack.c.l.bf16 %v1025
  %v1155 = vunpack.c.l.bf16 %v1026
  %v1156 = vunpack.c.l.bf16 %v1027
  %v1157 = vunpack.c.l.bf16 %v1028
  %v1158 = vunpack.c.l.bf16 %v1029
  %v1159 = vunpack.c.l.bf16 %v1030
  %v1160 = vunpack.c.l.bf16 %v1031
  %v1161 = vunpack.c.l.bf16 %v1032
  %v1162 = vunpack.c.l.bf16 %v1033
  %v1163 = vunpack.c.l.bf16 %v1034
  %v1164 = vunpack.c.l.bf16 %v1036
  %v1165 = vunpack.c.l.bf16 %v1037
  %v1166 = vunpack.c.l.bf16 %v1038
  %v1167 = vunpack.c.l.bf16 %v1039
  %v1168 = vunpack.c.l.bf16 %v1040
  %v1169 = vunpack.c.l.bf16 %v1041
  %v1170 = vunpack.c.l.bf16 %v1042
  %v1171 = vunpack.c.l.bf16 %v1043
  %v1172 = vunpack.c.l.bf16 %v1044
  %v1173 = vunpack.c.l.bf16 %v1045
  %v1174 = vunpack.c.l.bf16 %v1046
  %v1175 = vunpack.c.l.bf16 %v1047
  %v1176 = vunpack.c.l.bf16 %v1048
  %v1177 = vunpack.c.l.bf16 %v1049
  %v1178 = vunpack.c.l.bf16 %v1050
  %v1179 = vunpack.c.l.bf16 %v1051
  %v1180 = vunpack.c.l.bf16 %v1052
  %v1181 = vunpack.c.l.bf16 %v1053
  %v1182 = vunpack.c.l.bf16 %v1054
  %v1183 = vunpack.c.l.bf16 %v1055
  %v1184 = vunpack.c.l.bf16 %v1056
  %v1185 = vunpack.c.l.bf16 %v1057
  %v1186 = vunpack.c.l.bf16 %v1058
  %v1187 = vunpack.c.l.bf16 %v1059
  %v1188 = vunpack.c.l.bf16 %v1060
  %v1189 = vunpack.c.l.bf16 %v1061
  %v1190 = vunpack.c.l.bf16 %v1062
  %v1191 = vunpack.c.l.bf16 %v1063
  %v1192 = vunpack.c.l.bf16 %v1064
  %v1193 = vunpack.c.l.bf16 %v1065
  %v1194 = vunpack.c.l.bf16 %v1066
  %v1195 = vunpack.c.l.bf16 %v1067
  %v1196 = vunpack.c.l.bf16 %v1068
  %v1197 = vunpack.c.l.bf16 %v1069
  %v1198 = vunpack.c.l.bf16 %v1070
  %v1199 = vunpack.c.l.bf16 %v1071
  %v1200 = vunpack.c.l.bf16 %v1072
  %v1201 = vunpack.c.l.bf16 %v1073
  %v1202 = vunpack.c.l.bf16 %v1074
  %v1203 = vunpack.c.l.bf16 %v1075
  %v1204 = vunpack.c.l.bf16 %v1076
  %v1205 = vunpack.c.l.bf16 %v1077
  %v1206 = vunpack.c.l.bf16 %v1078
  %v1207 = vunpack.c.l.bf16 %v1079
  %v1208 = vunpack.c.l.bf16 %v1080
  %v1209 = vunpack.c.l.bf16 %v1081
  %v1210 = vunpack.c.l.bf16 %v1082
  %v1211 = vunpack.c.l.bf16 %v1083
  %v1212 = vunpack.c.l.bf16 %v1084
  %v1213 = vunpack.c.l.bf16 %v1085
  %v1214 = vunpack.c.l.bf16 %v1086
  %v1215 = vunpack.c.l.bf16 %v1087
  %v1216 = vunpack.c.l.bf16 %v1088
  %v1217 = vunpack.c.l.bf16 %v1089
  %v1218 = vunpack.c.l.bf16 %v1090
  %v1219 = vunpack.c.l.bf16 %v1091
  %v1220 = vunpack.c.l.bf16 %v1092
  %v1221 = vunpack.c.l.bf16 %v1093
  %v1222 = vunpack.c.l.bf16 %v1094
  %v1223 = vunpack.c.l.bf16 %v1095
  %v1224 = vunpack.c.l.bf16 %v1096
  %v1225 = vunpack.c.l.bf16 %v1097
  %v1226 = vunpack.c.l.bf16 %v1098
  %v1227 = vunpack.c.l.bf16 %v1099
  %v1228 = vmax.f32 %v1100, %v1164
  %v1229 = vmax.f32 %v1101, %v1165
  %v1230 = vmax.f32 %v1102, %v1166
  %v1231 = vmax.f32 %v1103, %v1167
  %v1232 = vmax.f32 %v1104, %v1168
  %v1233 = vmax.f32 %v1105, %v1169
  %v1234 = vmax.f32 %v1106, %v1170
  %v1235 = vmax.f32 %v1107, %v1171
  %v1236 = vmax.f32 %v1108, %v1172
  %v1237 = vmax.f32 %v1109, %v1173
  %v1238 = vmax.f32 %v1110, %v1174
  %v1239 = vmax.f32 %v1111, %v1175
  %v1240 = vmax.f32 %v1112, %v1176
  %v1241 = vmax.f32 %v1113, %v1177
  %v1242 = vmax.f32 %v1114, %v1178
  %v1243 = vmax.f32 %v1115, %v1179
  %v1244 = vmax.f32 %v1116, %v1180
  %v1245 = vmax.f32 %v1117, %v1181
  %v1246 = vmax.f32 %v1118, %v1182
  %v1247 = vmax.f32 %v1119, %v1183
  %v1248 = vmax.f32 %v1120, %v1184
  %v1249 = vmax.f32 %v1121, %v1185
  %v1250 = vmax.f32 %v1122, %v1186
  %v1251 = vmax.f32 %v1123, %v1187
  %v1252 = vmax.f32 %v1124, %v1188
  %v1253 = vmax.f32 %v1125, %v1189
  %v1254 = vmax.f32 %v1126, %v1190
  %v1255 = vmax.f32 %v1127, %v1191
  %v1256 = vmax.f32 %v1128, %v1192
  %v1257 = vmax.f32 %v1129, %v1193
  %v1258 = vmax.f32 %v1130, %v1194
  %v1259 = vmax.f32 %v1131, %v1195
  %v1260 = vmax.f32 %v1132, %v1196
  %v1261 = vmax.f32 %v1133, %v1197
  %v1262 = vmax.f32 %v1134, %v1198
  %v1263 = vmax.f32 %v1135, %v1199
  %v1264 = vmax.f32 %v1136, %v1200
  %v1265 = vmax.f32 %v1137, %v1201
  %v1266 = vmax.f32 %v1138, %v1202
  %v1267 = vmax.f32 %v1139, %v1203
  %v1268 = vmax.f32 %v1140, %v1204
  %v1269 = vmax.f32 %v1141, %v1205
  %v1270 = vmax.f32 %v1142, %v1206
  %v1271 = vmax.f32 %v1143, %v1207
  %v1272 = vmax.f32 %v1144, %v1208
  %v1273 = vmax.f32 %v1145, %v1209
  %v1274 = vmax.f32 %v1146, %v1210
  %v1275 = vmax.f32 %v1147, %v1211
  %v1276 = vmax.f32 %v1148, %v1212
  %v1277 = vmax.f32 %v1149, %v1213
  %v1278 = vmax.f32 %v1150, %v1214
  %v1279 = vmax.f32 %v1151, %v1215
  %v1280 = vmax.f32 %v1152, %v1216
  %v1281 = vmax.f32 %v1153, %v1217
  %v1282 = vmax.f32 %v1154, %v1218
  %v1283 = vmax.f32 %v1155, %v1219
  %v1284 = vmax.f32 %v1156, %v1220
  %v1285 = vmax.f32 %v1157, %v1221
  %v1286 = vmax.f32 %v1158, %v1222
  %v1287 = vmax.f32 %v1159, %v1223
  %v1288 = vmax.f32 %v1160, %v1224
  %v1289 = vmax.f32 %v1161, %v1225
  %v1290 = vmax.f32 %v1162, %v1226
  %v1291 = vmax.f32 %v1163, %v1227
  %v1292 = vpack.c.bf16 %v1228, %v1228
  %v1293 = vpack.c.bf16 %v1229, %v1229
  %v1294 = vpack.c.bf16 %v1230, %v1230
  %v1295 = vpack.c.bf16 %v1231, %v1231
  %v1296 = vpack.c.bf16 %v1232, %v1232
  %v1297 = vpack.c.bf16 %v1233, %v1233
  %v1298 = vpack.c.bf16 %v1234, %v1234
  %v1299 = vpack.c.bf16 %v1235, %v1235
  %v1300 = vpack.c.bf16 %v1236, %v1236
  %v1301 = vpack.c.bf16 %v1237, %v1237
  %v1302 = vpack.c.bf16 %v1238, %v1238
  %v1303 = vpack.c.bf16 %v1239, %v1239
  %v1304 = vpack.c.bf16 %v1240, %v1240
  %v1305 = vpack.c.bf16 %v1241, %v1241
  %v1306 = vpack.c.bf16 %v1242, %v1242
  %v1307 = vpack.c.bf16 %v1243, %v1243
  %v1308 = vpack.c.bf16 %v1244, %v1244
  %v1309 = vpack.c.bf16 %v1245, %v1245
  %v1310 = vpack.c.bf16 %v1246, %v1246
  %v1311 = vpack.c.bf16 %v1247, %v1247
  %v1312 = vpack.c.bf16 %v1248, %v1248
  %v1313 = vpack.c.bf16 %v1249, %v1249
  %v1314 = vpack.c.bf16 %v1250, %v1250
  %v1315 = vpack.c.bf16 %v1251, %v1251
  %v1316 = vpack.c.bf16 %v1252, %v1252
  %v1317 = vpack.c.bf16 %v1253, %v1253
  %v1318 = vpack.c.bf16 %v1254, %v1254
  %v1319 = vpack.c.bf16 %v1255, %v1255
  %v1320 = vpack.c.bf16 %v1256, %v1256
  %v1321 = vpack.c.bf16 %v1257, %v1257
  %v1322 = vpack.c.bf16 %v1258, %v1258
  %v1323 = vpack.c.bf16 %v1259, %v1259
  %v1324 = vpack.c.bf16 %v1260, %v1260
  %v1325 = vpack.c.bf16 %v1261, %v1261
  %v1326 = vpack.c.bf16 %v1262, %v1262
  %v1327 = vpack.c.bf16 %v1263, %v1263
  %v1328 = vpack.c.bf16 %v1264, %v1264
  %v1329 = vpack.c.bf16 %v1265, %v1265
  %v1330 = vpack.c.bf16 %v1266, %v1266
  %v1331 = vpack.c.bf16 %v1267, %v1267
  %v1332 = vpack.c.bf16 %v1268, %v1268
  %v1333 = vpack.c.bf16 %v1269, %v1269
  %v1334 = vpack.c.bf16 %v1270, %v1270
  %v1335 = vpack.c.bf16 %v1271, %v1271
  %v1336 = vpack.c.bf16 %v1272, %v1272
  %v1337 = vpack.c.bf16 %v1273, %v1273
  %v1338 = vpack.c.bf16 %v1274, %v1274
  %v1339 = vpack.c.bf16 %v1275, %v1275
  %v1340 = vpack.c.bf16 %v1276, %v1276
  %v1341 = vpack.c.bf16 %v1277, %v1277
  %v1342 = vpack.c.bf16 %v1278, %v1278
  %v1343 = vpack.c.bf16 %v1279, %v1279
  %v1344 = vpack.c.bf16 %v1280, %v1280
  %v1345 = vpack.c.bf16 %v1281, %v1281
  %v1346 = vpack.c.bf16 %v1282, %v1282
  %v1347 = vpack.c.bf16 %v1283, %v1283
  %v1348 = vpack.c.bf16 %v1284, %v1284
  %v1349 = vpack.c.bf16 %v1285, %v1285
  %v1350 = vpack.c.bf16 %v1286, %v1286
  %v1351 = vpack.c.bf16 %v1287, %v1287
  %v1352 = vpack.c.bf16 %v1288, %v1288
  %v1353 = vpack.c.bf16 %v1289, %v1289
  %v1354 = vpack.c.bf16 %v1290, %v1290
  %v1355 = vpack.c.bf16 %v1291, %v1291
  %s1356 = scalar_lea.vmem %s0, 163
  %v1357 = vld [vmem:[%s1356] sm:$0x1]
  %v1358 = vld [vmem:[%s1356 + $0x1] sm:$0x1]
  %v1359 = vld [vmem:[%s1356 + $0x2] sm:$0x1]
  %v1360 = vld [vmem:[%s1356 + $0x3] sm:$0x1]
  %v1361 = vld [vmem:[%s1356 + $0x4] sm:$0x1]
  %v1362 = vld [vmem:[%s1356 + $0x5] sm:$0x1]
  %v1363 = vld [vmem:[%s1356 + $0x6] sm:$0x1]
  %v1364 = vld [vmem:[%s1356 + $0x7] sm:$0x1]
  %v1365 = vld [vmem:[%s1356 + $0x9] sm:$0x1]
  %v1366 = vld [vmem:[%s1356 + $0xa] sm:$0x1]
  %v1367 = vld [vmem:[%s1356 + $0xb] sm:$0x1]
  %v1368 = vld [vmem:[%s1356 + $0xc] sm:$0x1]
  %v1369 = vld [vmem:[%s1356 + $0xd] sm:$0x1]
  %v1370 = vld [vmem:[%s1356 + $0xe] sm:$0x1]
  %v1371 = vld [vmem:[%s1356 + $0xf] sm:$0x1]
  %v1372 = vld [vmem:[%s1356 + $0x10] sm:$0x1]
  %v1373 = vld [vmem:[%s1356 + $0x12] sm:$0x1]
  %v1374 = vld [vmem:[%s1356 + $0x13] sm:$0x1]
  %v1375 = vld [vmem:[%s1356 + $0x14] sm:$0x1]
  %v1376 = vld [vmem:[%s1356 + $0x15] sm:$0x1]
  %v1377 = vld [vmem:[%s1356 + $0x16] sm:$0x1]
  %v1378 = vld [vmem:[%s1356 + $0x17] sm:$0x1]
  %v1379 = vld [vmem:[%s1356 + $0x18] sm:$0x1]
  %v1380 = vld [vmem:[%s1356 + $0x19] sm:$0x1]
  %v1381 = vld [vmem:[%s1356 + $0x1b] sm:$0x1]
  %v1382 = vld [vmem:[%s1356 + $0x1c] sm:$0x1]
  %v1383 = vld [vmem:[%s1356 + $0x1d] sm:$0x1]
  %v1384 = vld [vmem:[%s1356 + $0x1e] sm:$0x1]
  %v1385 = vld [vmem:[%s1356 + $0x1f] sm:$0x1]
  %v1386 = vld [vmem:[%s1356 + $0x20] sm:$0x1]
  %v1387 = vld [vmem:[%s1356 + $0x21] sm:$0x1]
  %v1388 = vld [vmem:[%s1356 + $0x22] sm:$0x1]
  %v1389 = vld [vmem:[%s1356 + $0x24] sm:$0x1]
  %v1390 = vld [vmem:[%s1356 + $0x25] sm:$0x1]
  %v1391 = vld [vmem:[%s1356 + $0x26] sm:$0x1]
  %v1392 = vld [vmem:[%s1356 + $0x27] sm:$0x1]
  %v1393 = vld [vmem:[%s1356 + $0x28] sm:$0x1]
  %v1394 = vld [vmem:[%s1356 + $0x29] sm:$0x1]
  %v1395 = vld [vmem:[%s1356 + $0x2a] sm:$0x1]
  %v1396 = vld [vmem:[%s1356 + $0x2b] sm:$0x1]
  %v1397 = vld [vmem:[%s1356 + $0x2d] sm:$0x1]
  %v1398 = vld [vmem:[%s1356 + $0x2e] sm:$0x1]
  %v1399 = vld [vmem:[%s1356 + $0x2f] sm:$0x1]
  %v1400 = vld [vmem:[%s1356 + $0x30] sm:$0x1]
  %v1401 = vld [vmem:[%s1356 + $0x31] sm:$0x1]
  %v1402 = vld [vmem:[%s1356 + $0x32] sm:$0x1]
  %v1403 = vld [vmem:[%s1356 + $0x33] sm:$0x1]
  %v1404 = vld [vmem:[%s1356 + $0x34] sm:$0x1]
  %v1405 = vld [vmem:[%s1356 + $0x36] sm:$0x1]
  %v1406 = vld [vmem:[%s1356 + $0x37] sm:$0x1]
  %v1407 = vld [vmem:[%s1356 + $0x38] sm:$0x1]
  %v1408 = vld [vmem:[%s1356 + $0x39] sm:$0x1]
  %v1409 = vld [vmem:[%s1356 + $0x3a] sm:$0x1]
  %v1410 = vld [vmem:[%s1356 + $0x3b] sm:$0x1]
  %v1411 = vld [vmem:[%s1356 + $0x3c] sm:$0x1]
  %v1412 = vld [vmem:[%s1356 + $0x3d] sm:$0x1]
  %v1413 = vld [vmem:[%s1356 + $0x3f] sm:$0x1]
  %v1414 = vld [vmem:[%s1356 + $0x40] sm:$0x1]
  %v1415 = vld [vmem:[%s1356 + $0x41] sm:$0x1]
  %v1416 = vld [vmem:[%s1356 + $0x42] sm:$0x1]
  %v1417 = vld [vmem:[%s1356 + $0x43] sm:$0x1]
  %v1418 = vld [vmem:[%s1356 + $0x44] sm:$0x1]
  %v1419 = vld [vmem:[%s1356 + $0x45] sm:$0x1]
  %v1420 = vld [vmem:[%s1356 + $0x46] sm:$0x1]
  %v1421 = vunpack.c.l.bf16 %v1292
  %v1422 = vunpack.c.l.bf16 %v1293
  %v1423 = vunpack.c.l.bf16 %v1294
  %v1424 = vunpack.c.l.bf16 %v1295
  %v1425 = vunpack.c.l.bf16 %v1296
  %v1426 = vunpack.c.l.bf16 %v1297
  %v1427 = vunpack.c.l.bf16 %v1298
  %v1428 = vunpack.c.l.bf16 %v1299
  %v1429 = vunpack.c.l.bf16 %v1300
  %v1430 = vunpack.c.l.bf16 %v1301
  %v1431 = vunpack.c.l.bf16 %v1302
  %v1432 = vunpack.c.l.bf16 %v1303
  %v1433 = vunpack.c.l.bf16 %v1304
  %v1434 = vunpack.c.l.bf16 %v1305
  %v1435 = vunpack.c.l.bf16 %v1306
  %v1436 = vunpack.c.l.bf16 %v1307
  %v1437 = vunpack.c.l.bf16 %v1308
  %v1438 = vunpack.c.l.bf16 %v1309
  %v1439 = vunpack.c.l.bf16 %v1310
  %v1440 = vunpack.c.l.bf16 %v1311
  %v1441 = vunpack.c.l.bf16 %v1312
  %v1442 = vunpack.c.l.bf16 %v1313
  %v1443 = vunpack.c.l.bf16 %v1314
  %v1444 = vunpack.c.l.bf16 %v1315
  %v1445 = vunpack.c.l.bf16 %v1316
  %v1446 = vunpack.c.l.bf16 %v1317
  %v1447 = vunpack.c.l.bf16 %v1318
  %v1448 = vunpack.c.l.bf16 %v1319
  %v1449 = vunpack.c.l.bf16 %v1320
  %v1450 = vunpack.c.l.bf16 %v1321
  %v1451 = vunpack.c.l.bf16 %v1322
  %v1452 = vunpack.c.l.bf16 %v1323
  %v1453 = vunpack.c.l.bf16 %v1324
  %v1454 = vunpack.c.l.bf16 %v1325
  %v1455 = vunpack.c.l.bf16 %v1326
  %v1456 = vunpack.c.l.bf16 %v1327
  %v1457 = vunpack.c.l.bf16 %v1328
  %v1458 = vunpack.c.l.bf16 %v1329
  %v1459 = vunpack.c.l.bf16 %v1330
  %v1460 = vunpack.c.l.bf16 %v1331
  %v1461 = vunpack.c.l.bf16 %v1332
  %v1462 = vunpack.c.l.bf16 %v1333
  %v1463 = vunpack.c.l.bf16 %v1334
  %v1464 = vunpack.c.l.bf16 %v1335
  %v1465 = vunpack.c.l.bf16 %v1336
  %v1466 = vunpack.c.l.bf16 %v1337
  %v1467 = vunpack.c.l.bf16 %v1338
  %v1468 = vunpack.c.l.bf16 %v1339
  %v1469 = vunpack.c.l.bf16 %v1340
  %v1470 = vunpack.c.l.bf16 %v1341
  %v1471 = vunpack.c.l.bf16 %v1342
  %v1472 = vunpack.c.l.bf16 %v1343
  %v1473 = vunpack.c.l.bf16 %v1344
  %v1474 = vunpack.c.l.bf16 %v1345
  %v1475 = vunpack.c.l.bf16 %v1346
  %v1476 = vunpack.c.l.bf16 %v1347
  %v1477 = vunpack.c.l.bf16 %v1348
  %v1478 = vunpack.c.l.bf16 %v1349
  %v1479 = vunpack.c.l.bf16 %v1350
  %v1480 = vunpack.c.l.bf16 %v1351
  %v1481 = vunpack.c.l.bf16 %v1352
  %v1482 = vunpack.c.l.bf16 %v1353
  %v1483 = vunpack.c.l.bf16 %v1354
  %v1484 = vunpack.c.l.bf16 %v1355
  %v1485 = vunpack.c.l.bf16 %v1357
  %v1486 = vunpack.c.l.bf16 %v1358
  %v1487 = vunpack.c.l.bf16 %v1359
  %v1488 = vunpack.c.l.bf16 %v1360
  %v1489 = vunpack.c.l.bf16 %v1361
  %v1490 = vunpack.c.l.bf16 %v1362
  %v1491 = vunpack.c.l.bf16 %v1363
  %v1492 = vunpack.c.l.bf16 %v1364
  %v1493 = vunpack.c.l.bf16 %v1365
  %v1494 = vunpack.c.l.bf16 %v1366
  %v1495 = vunpack.c.l.bf16 %v1367
  %v1496 = vunpack.c.l.bf16 %v1368
  %v1497 = vunpack.c.l.bf16 %v1369
  %v1498 = vunpack.c.l.bf16 %v1370
  %v1499 = vunpack.c.l.bf16 %v1371
  %v1500 = vunpack.c.l.bf16 %v1372
  %v1501 = vunpack.c.l.bf16 %v1373
  %v1502 = vunpack.c.l.bf16 %v1374
  %v1503 = vunpack.c.l.bf16 %v1375
  %v1504 = vunpack.c.l.bf16 %v1376
  %v1505 = vunpack.c.l.bf16 %v1377
  %v1506 = vunpack.c.l.bf16 %v1378
  %v1507 = vunpack.c.l.bf16 %v1379
  %v1508 = vunpack.c.l.bf16 %v1380
  %v1509 = vunpack.c.l.bf16 %v1381
  %v1510 = vunpack.c.l.bf16 %v1382
  %v1511 = vunpack.c.l.bf16 %v1383
  %v1512 = vunpack.c.l.bf16 %v1384
  %v1513 = vunpack.c.l.bf16 %v1385
  %v1514 = vunpack.c.l.bf16 %v1386
  %v1515 = vunpack.c.l.bf16 %v1387
  %v1516 = vunpack.c.l.bf16 %v1388
  %v1517 = vunpack.c.l.bf16 %v1389
  %v1518 = vunpack.c.l.bf16 %v1390
  %v1519 = vunpack.c.l.bf16 %v1391
  %v1520 = vunpack.c.l.bf16 %v1392
  %v1521 = vunpack.c.l.bf16 %v1393
  %v1522 = vunpack.c.l.bf16 %v1394
  %v1523 = vunpack.c.l.bf16 %v1395
  %v1524 = vunpack.c.l.bf16 %v1396
  %v1525 = vunpack.c.l.bf16 %v1397
  %v1526 = vunpack.c.l.bf16 %v1398
  %v1527 = vunpack.c.l.bf16 %v1399
  %v1528 = vunpack.c.l.bf16 %v1400
  %v1529 = vunpack.c.l.bf16 %v1401
  %v1530 = vunpack.c.l.bf16 %v1402
  %v1531 = vunpack.c.l.bf16 %v1403
  %v1532 = vunpack.c.l.bf16 %v1404
  %v1533 = vunpack.c.l.bf16 %v1405
  %v1534 = vunpack.c.l.bf16 %v1406
  %v1535 = vunpack.c.l.bf16 %v1407
  %v1536 = vunpack.c.l.bf16 %v1408
  %v1537 = vunpack.c.l.bf16 %v1409
  %v1538 = vunpack.c.l.bf16 %v1410
  %v1539 = vunpack.c.l.bf16 %v1411
  %v1540 = vunpack.c.l.bf16 %v1412
  %v1541 = vunpack.c.l.bf16 %v1413
  %v1542 = vunpack.c.l.bf16 %v1414
  %v1543 = vunpack.c.l.bf16 %v1415
  %v1544 = vunpack.c.l.bf16 %v1416
  %v1545 = vunpack.c.l.bf16 %v1417
  %v1546 = vunpack.c.l.bf16 %v1418
  %v1547 = vunpack.c.l.bf16 %v1419
  %v1548 = vunpack.c.l.bf16 %v1420
  %v1549 = vmax.f32 %v1421, %v1485
  %v1550 = vmax.f32 %v1422, %v1486
  %v1551 = vmax.f32 %v1423, %v1487
  %v1552 = vmax.f32 %v1424, %v1488
  %v1553 = vmax.f32 %v1425, %v1489
  %v1554 = vmax.f32 %v1426, %v1490
  %v1555 = vmax.f32 %v1427, %v1491
  %v1556 = vmax.f32 %v1428, %v1492
  %v1557 = vmax.f32 %v1429, %v1493
  %v1558 = vmax.f32 %v1430, %v1494
  %v1559 = vmax.f32 %v1431, %v1495
  %v1560 = vmax.f32 %v1432, %v1496
  %v1561 = vmax.f32 %v1433, %v1497
  %v1562 = vmax.f32 %v1434, %v1498
  %v1563 = vmax.f32 %v1435, %v1499
  %v1564 = vmax.f32 %v1436, %v1500
  %v1565 = vmax.f32 %v1437, %v1501
  %v1566 = vmax.f32 %v1438, %v1502
  %v1567 = vmax.f32 %v1439, %v1503
  %v1568 = vmax.f32 %v1440, %v1504
  %v1569 = vmax.f32 %v1441, %v1505
  %v1570 = vmax.f32 %v1442, %v1506
  %v1571 = vmax.f32 %v1443, %v1507
  %v1572 = vmax.f32 %v1444, %v1508
  %v1573 = vmax.f32 %v1445, %v1509
  %v1574 = vmax.f32 %v1446, %v1510
  %v1575 = vmax.f32 %v1447, %v1511
  %v1576 = vmax.f32 %v1448, %v1512
  %v1577 = vmax.f32 %v1449, %v1513
  %v1578 = vmax.f32 %v1450, %v1514
  %v1579 = vmax.f32 %v1451, %v1515
  %v1580 = vmax.f32 %v1452, %v1516
  %v1581 = vmax.f32 %v1453, %v1517
  %v1582 = vmax.f32 %v1454, %v1518
  %v1583 = vmax.f32 %v1455, %v1519
  %v1584 = vmax.f32 %v1456, %v1520
  %v1585 = vmax.f32 %v1457, %v1521
  %v1586 = vmax.f32 %v1458, %v1522
  %v1587 = vmax.f32 %v1459, %v1523
  %v1588 = vmax.f32 %v1460, %v1524
  %v1589 = vmax.f32 %v1461, %v1525
  %v1590 = vmax.f32 %v1462, %v1526
  %v1591 = vmax.f32 %v1463, %v1527
  %v1592 = vmax.f32 %v1464, %v1528
  %v1593 = vmax.f32 %v1465, %v1529
  %v1594 = vmax.f32 %v1466, %v1530
  %v1595 = vmax.f32 %v1467, %v1531
  %v1596 = vmax.f32 %v1468, %v1532
  %v1597 = vmax.f32 %v1469, %v1533
  %v1598 = vmax.f32 %v1470, %v1534
  %v1599 = vmax.f32 %v1471, %v1535
  %v1600 = vmax.f32 %v1472, %v1536
  %v1601 = vmax.f32 %v1473, %v1537
  %v1602 = vmax.f32 %v1474, %v1538
  %v1603 = vmax.f32 %v1475, %v1539
  %v1604 = vmax.f32 %v1476, %v1540
  %v1605 = vmax.f32 %v1477, %v1541
  %v1606 = vmax.f32 %v1478, %v1542
  %v1607 = vmax.f32 %v1479, %v1543
  %v1608 = vmax.f32 %v1480, %v1544
  %v1609 = vmax.f32 %v1481, %v1545
  %v1610 = vmax.f32 %v1482, %v1546
  %v1611 = vmax.f32 %v1483, %v1547
  %v1612 = vmax.f32 %v1484, %v1548
  %v1613 = vpack.c.bf16 %v1549, %v1549
  %v1614 = vpack.c.bf16 %v1550, %v1550
  %v1615 = vpack.c.bf16 %v1551, %v1551
  %v1616 = vpack.c.bf16 %v1552, %v1552
  %v1617 = vpack.c.bf16 %v1553, %v1553
  %v1618 = vpack.c.bf16 %v1554, %v1554
  %v1619 = vpack.c.bf16 %v1555, %v1555
  %v1620 = vpack.c.bf16 %v1556, %v1556
  %v1621 = vpack.c.bf16 %v1557, %v1557
  %v1622 = vpack.c.bf16 %v1558, %v1558
  %v1623 = vpack.c.bf16 %v1559, %v1559
  %v1624 = vpack.c.bf16 %v1560, %v1560
  %v1625 = vpack.c.bf16 %v1561, %v1561
  %v1626 = vpack.c.bf16 %v1562, %v1562
  %v1627 = vpack.c.bf16 %v1563, %v1563
  %v1628 = vpack.c.bf16 %v1564, %v1564
  %v1629 = vpack.c.bf16 %v1565, %v1565
  %v1630 = vpack.c.bf16 %v1566, %v1566
  %v1631 = vpack.c.bf16 %v1567, %v1567
  %v1632 = vpack.c.bf16 %v1568, %v1568
  %v1633 = vpack.c.bf16 %v1569, %v1569
  %v1634 = vpack.c.bf16 %v1570, %v1570
  %v1635 = vpack.c.bf16 %v1571, %v1571
  %v1636 = vpack.c.bf16 %v1572, %v1572
  %v1637 = vpack.c.bf16 %v1573, %v1573
  %v1638 = vpack.c.bf16 %v1574, %v1574
  %v1639 = vpack.c.bf16 %v1575, %v1575
  %v1640 = vpack.c.bf16 %v1576, %v1576
  %v1641 = vpack.c.bf16 %v1577, %v1577
  %v1642 = vpack.c.bf16 %v1578, %v1578
  %v1643 = vpack.c.bf16 %v1579, %v1579
  %v1644 = vpack.c.bf16 %v1580, %v1580
  %v1645 = vpack.c.bf16 %v1581, %v1581
  %v1646 = vpack.c.bf16 %v1582, %v1582
  %v1647 = vpack.c.bf16 %v1583, %v1583
  %v1648 = vpack.c.bf16 %v1584, %v1584
  %v1649 = vpack.c.bf16 %v1585, %v1585
  %v1650 = vpack.c.bf16 %v1586, %v1586
  %v1651 = vpack.c.bf16 %v1587, %v1587
  %v1652 = vpack.c.bf16 %v1588, %v1588
  %v1653 = vpack.c.bf16 %v1589, %v1589
  %v1654 = vpack.c.bf16 %v1590, %v1590
  %v1655 = vpack.c.bf16 %v1591, %v1591
  %v1656 = vpack.c.bf16 %v1592, %v1592
  %v1657 = vpack.c.bf16 %v1593, %v1593
  %v1658 = vpack.c.bf16 %v1594, %v1594
  %v1659 = vpack.c.bf16 %v1595, %v1595
  %v1660 = vpack.c.bf16 %v1596, %v1596
  %v1661 = vpack.c.bf16 %v1597, %v1597
  %v1662 = vpack.c.bf16 %v1598, %v1598
  %v1663 = vpack.c.bf16 %v1599, %v1599
  %v1664 = vpack.c.bf16 %v1600, %v1600
  %v1665 = vpack.c.bf16 %v1601, %v1601
  %v1666 = vpack.c.bf16 %v1602, %v1602
  %v1667 = vpack.c.bf16 %v1603, %v1603
  %v1668 = vpack.c.bf16 %v1604, %v1604
  %v1669 = vpack.c.bf16 %v1605, %v1605
  %v1670 = vpack.c.bf16 %v1606, %v1606
  %v1671 = vpack.c.bf16 %v1607, %v1607
  %v1672 = vpack.c.bf16 %v1608, %v1608
  %v1673 = vpack.c.bf16 %v1609, %v1609
  %v1674 = vpack.c.bf16 %v1610, %v1610
  %v1675 = vpack.c.bf16 %v1611, %v1611
  %v1676 = vpack.c.bf16 %v1612, %v1612
  %s1677 = scalar_lea.vmem %s0, 9
  %v1678 = vld [vmem:[%s1677] sm:$0x1]
  %v1679 = vld [vmem:[%s1677 + $0x1] sm:$0x1]
  %v1680 = vld [vmem:[%s1677 + $0x2] sm:$0x1]
  %v1681 = vld [vmem:[%s1677 + $0x3] sm:$0x1]
  %v1682 = vld [vmem:[%s1677 + $0x4] sm:$0x1]
  %v1683 = vld [vmem:[%s1677 + $0x5] sm:$0x1]
  %v1684 = vld [vmem:[%s1677 + $0x6] sm:$0x1]
  %v1685 = vld [vmem:[%s1677 + $0x7] sm:$0x1]
  %v1686 = vld [vmem:[%s1677 + $0x9] sm:$0x1]
  %v1687 = vld [vmem:[%s1677 + $0xa] sm:$0x1]
  %v1688 = vld [vmem:[%s1677 + $0xb] sm:$0x1]
  %v1689 = vld [vmem:[%s1677 + $0xc] sm:$0x1]
  %v1690 = vld [vmem:[%s1677 + $0xd] sm:$0x1]
  %v1691 = vld [vmem:[%s1677 + $0xe] sm:$0x1]
  %v1692 = vld [vmem:[%s1677 + $0xf] sm:$0x1]
  %v1693 = vld [vmem:[%s1677 + $0x10] sm:$0x1]
  %v1694 = vld [vmem:[%s1677 + $0x12] sm:$0x1]
  %v1695 = vld [vmem:[%s1677 + $0x13] sm:$0x1]
  %v1696 = vld [vmem:[%s1677 + $0x14] sm:$0x1]
  %v1697 = vld [vmem:[%s1677 + $0x15] sm:$0x1]
  %v1698 = vld [vmem:[%s1677 + $0x16] sm:$0x1]
  %v1699 = vld [vmem:[%s1677 + $0x17] sm:$0x1]
  %v1700 = vld [vmem:[%s1677 + $0x18] sm:$0x1]
  %v1701 = vld [vmem:[%s1677 + $0x19] sm:$0x1]
  %v1702 = vld [vmem:[%s1677 + $0x1b] sm:$0x1]
  %v1703 = vld [vmem:[%s1677 + $0x1c] sm:$0x1]
  %v1704 = vld [vmem:[%s1677 + $0x1d] sm:$0x1]
  %v1705 = vld [vmem:[%s1677 + $0x1e] sm:$0x1]
  %v1706 = vld [vmem:[%s1677 + $0x1f] sm:$0x1]
  %v1707 = vld [vmem:[%s1677 + $0x20] sm:$0x1]
  %v1708 = vld [vmem:[%s1677 + $0x21] sm:$0x1]
  %v1709 = vld [vmem:[%s1677 + $0x22] sm:$0x1]
  %v1710 = vld [vmem:[%s1677 + $0x24] sm:$0x1]
  %v1711 = vld [vmem:[%s1677 + $0x25] sm:$0x1]
  %v1712 = vld [vmem:[%s1677 + $0x26] sm:$0x1]
  %v1713 = vld [vmem:[%s1677 + $0x27] sm:$0x1]
  %v1714 = vld [vmem:[%s1677 + $0x28] sm:$0x1]
  %v1715 = vld [vmem:[%s1677 + $0x29] sm:$0x1]
  %v1716 = vld [vmem:[%s1677 + $0x2a] sm:$0x1]
  %v1717 = vld [vmem:[%s1677 + $0x2b] sm:$0x1]
  %v1718 = vld [vmem:[%s1677 + $0x2d] sm:$0x1]
  %v1719 = vld [vmem:[%s1677 + $0x2e] sm:$0x1]
  %v1720 = vld [vmem:[%s1677 + $0x2f] sm:$0x1]
  %v1721 = vld [vmem:[%s1677 + $0x30] sm:$0x1]
  %v1722 = vld [vmem:[%s1677 + $0x31] sm:$0x1]
  %v1723 = vld [vmem:[%s1677 + $0x32] sm:$0x1]
  %v1724 = vld [vmem:[%s1677 + $0x33] sm:$0x1]
  %v1725 = vld [vmem:[%s1677 + $0x34] sm:$0x1]
  %v1726 = vld [vmem:[%s1677 + $0x36] sm:$0x1]
  %v1727 = vld [vmem:[%s1677 + $0x37] sm:$0x1]
  %v1728 = vld [vmem:[%s1677 + $0x38] sm:$0x1]
  %v1729 = vld [vmem:[%s1677 + $0x39] sm:$0x1]
  %v1730 = vld [vmem:[%s1677 + $0x3a] sm:$0x1]
  %v1731 = vld [vmem:[%s1677 + $0x3b] sm:$0x1]
  %v1732 = vld [vmem:[%s1677 + $0x3c] sm:$0x1]
  %v1733 = vld [vmem:[%s1677 + $0x3d] sm:$0x1]
  %v1734 = vld [vmem:[%s1677 + $0x3f] sm:$0x1]
  %v1735 = vld [vmem:[%s1677 + $0x40] sm:$0x1]
  %v1736 = vld [vmem:[%s1677 + $0x41] sm:$0x1]
  %v1737 = vld [vmem:[%s1677 + $0x42] sm:$0x1]
  %v1738 = vld [vmem:[%s1677 + $0x43] sm:$0x1]
  %v1739 = vld [vmem:[%s1677 + $0x44] sm:$0x1]
  %v1740 = vld [vmem:[%s1677 + $0x45] sm:$0x1]
  %v1741 = vld [vmem:[%s1677 + $0x46] sm:$0x1]
  %v1742 = vunpack.c.l.bf16 %v1613
  %v1743 = vunpack.c.l.bf16 %v1614
  %v1744 = vunpack.c.l.bf16 %v1615
  %v1745 = vunpack.c.l.bf16 %v1616
  %v1746 = vunpack.c.l.bf16 %v1617
  %v1747 = vunpack.c.l.bf16 %v1618
  %v1748 = vunpack.c.l.bf16 %v1619
  %v1749 = vunpack.c.l.bf16 %v1620
  %v1750 = vunpack.c.l.bf16 %v1621
  %v1751 = vunpack.c.l.bf16 %v1622
  %v1752 = vunpack.c.l.bf16 %v1623
  %v1753 = vunpack.c.l.bf16 %v1624
  %v1754 = vunpack.c.l.bf16 %v1625
  %v1755 = vunpack.c.l.bf16 %v1626
  %v1756 = vunpack.c.l.bf16 %v1627
  %v1757 = vunpack.c.l.bf16 %v1628
  %v1758 = vunpack.c.l.bf16 %v1629
  %v1759 = vunpack.c.l.bf16 %v1630
  %v1760 = vunpack.c.l.bf16 %v1631
  %v1761 = vunpack.c.l.bf16 %v1632
  %v1762 = vunpack.c.l.bf16 %v1633
  %v1763 = vunpack.c.l.bf16 %v1634
  %v1764 = vunpack.c.l.bf16 %v1635
  %v1765 = vunpack.c.l.bf16 %v1636
  %v1766 = vunpack.c.l.bf16 %v1637
  %v1767 = vunpack.c.l.bf16 %v1638
  %v1768 = vunpack.c.l.bf16 %v1639
  %v1769 = vunpack.c.l.bf16 %v1640
  %v1770 = vunpack.c.l.bf16 %v1641
  %v1771 = vunpack.c.l.bf16 %v1642
  %v1772 = vunpack.c.l.bf16 %v1643
  %v1773 = vunpack.c.l.bf16 %v1644
  %v1774 = vunpack.c.l.bf16 %v1645
  %v1775 = vunpack.c.l.bf16 %v1646
  %v1776 = vunpack.c.l.bf16 %v1647
  %v1777 = vunpack.c.l.bf16 %v1648
  %v1778 = vunpack.c.l.bf16 %v1649
  %v1779 = vunpack.c.l.bf16 %v1650
  %v1780 = vunpack.c.l.bf16 %v1651
  %v1781 = vunpack.c.l.bf16 %v1652
  %v1782 = vunpack.c.l.bf16 %v1653
  %v1783 = vunpack.c.l.bf16 %v1654
  %v1784 = vunpack.c.l.bf16 %v1655
  %v1785 = vunpack.c.l.bf16 %v1656
  %v1786 = vunpack.c.l.bf16 %v1657
  %v1787 = vunpack.c.l.bf16 %v1658
  %v1788 = vunpack.c.l.bf16 %v1659
  %v1789 = vunpack.c.l.bf16 %v1660
  %v1790 = vunpack.c.l.bf16 %v1661
  %v1791 = vunpack.c.l.bf16 %v1662
  %v1792 = vunpack.c.l.bf16 %v1663
  %v1793 = vunpack.c.l.bf16 %v1664
  %v1794 = vunpack.c.l.bf16 %v1665
  %v1795 = vunpack.c.l.bf16 %v1666
  %v1796 = vunpack.c.l.bf16 %v1667
  %v1797 = vunpack.c.l.bf16 %v1668
  %v1798 = vunpack.c.l.bf16 %v1669
  %v1799 = vunpack.c.l.bf16 %v1670
  %v1800 = vunpack.c.l.bf16 %v1671
  %v1801 = vunpack.c.l.bf16 %v1672
  %v1802 = vunpack.c.l.bf16 %v1673
  %v1803 = vunpack.c.l.bf16 %v1674
  %v1804 = vunpack.c.l.bf16 %v1675
  %v1805 = vunpack.c.l.bf16 %v1676
  %v1806 = vunpack.c.l.bf16 %v1678
  %v1807 = vunpack.c.l.bf16 %v1679
  %v1808 = vunpack.c.l.bf16 %v1680
  %v1809 = vunpack.c.l.bf16 %v1681
  %v1810 = vunpack.c.l.bf16 %v1682
  %v1811 = vunpack.c.l.bf16 %v1683
  %v1812 = vunpack.c.l.bf16 %v1684
  %v1813 = vunpack.c.l.bf16 %v1685
  %v1814 = vunpack.c.l.bf16 %v1686
  %v1815 = vunpack.c.l.bf16 %v1687
  %v1816 = vunpack.c.l.bf16 %v1688
  %v1817 = vunpack.c.l.bf16 %v1689
  %v1818 = vunpack.c.l.bf16 %v1690
  %v1819 = vunpack.c.l.bf16 %v1691
  %v1820 = vunpack.c.l.bf16 %v1692
  %v1821 = vunpack.c.l.bf16 %v1693
  %v1822 = vunpack.c.l.bf16 %v1694
  %v1823 = vunpack.c.l.bf16 %v1695
  %v1824 = vunpack.c.l.bf16 %v1696
  %v1825 = vunpack.c.l.bf16 %v1697
  %v1826 = vunpack.c.l.bf16 %v1698
  %v1827 = vunpack.c.l.bf16 %v1699
  %v1828 = vunpack.c.l.bf16 %v1700
  %v1829 = vunpack.c.l.bf16 %v1701
  %v1830 = vunpack.c.l.bf16 %v1702
  %v1831 = vunpack.c.l.bf16 %v1703
  %v1832 = vunpack.c.l.bf16 %v1704
  %v1833 = vunpack.c.l.bf16 %v1705
  %v1834 = vunpack.c.l.bf16 %v1706
  %v1835 = vunpack.c.l.bf16 %v1707
  %v1836 = vunpack.c.l.bf16 %v1708
  %v1837 = vunpack.c.l.bf16 %v1709
  %v1838 = vunpack.c.l.bf16 %v1710
  %v1839 = vunpack.c.l.bf16 %v1711
  %v1840 = vunpack.c.l.bf16 %v1712
  %v1841 = vunpack.c.l.bf16 %v1713
  %v1842 = vunpack.c.l.bf16 %v1714
  %v1843 = vunpack.c.l.bf16 %v1715
  %v1844 = vunpack.c.l.bf16 %v1716
  %v1845 = vunpack.c.l.bf16 %v1717
  %v1846 = vunpack.c.l.bf16 %v1718
  %v1847 = vunpack.c.l.bf16 %v1719
  %v1848 = vunpack.c.l.bf16 %v1720
  %v1849 = vunpack.c.l.bf16 %v1721
  %v1850 = vunpack.c.l.bf16 %v1722
  %v1851 = vunpack.c.l.bf16 %v1723
  %v1852 = vunpack.c.l.bf16 %v1724
  %v1853 = vunpack.c.l.bf16 %v1725
  %v1854 = vunpack.c.l.bf16 %v1726
  %v1855 = vunpack.c.l.bf16 %v1727
  %v1856 = vunpack.c.l.bf16 %v1728
  %v1857 = vunpack.c.l.bf16 %v1729
  %v1858 = vunpack.c.l.bf16 %v1730
  %v1859 = vunpack.c.l.bf16 %v1731
  %v1860 = vunpack.c.l.bf16 %v1732
  %v1861 = vunpack.c.l.bf16 %v1733
  %v1862 = vunpack.c.l.bf16 %v1734
  %v1863 = vunpack.c.l.bf16 %v1735
  %v1864 = vunpack.c.l.bf16 %v1736
  %v1865 = vunpack.c.l.bf16 %v1737
  %v1866 = vunpack.c.l.bf16 %v1738
  %v1867 = vunpack.c.l.bf16 %v1739
  %v1868 = vunpack.c.l.bf16 %v1740
  %v1869 = vunpack.c.l.bf16 %v1741
  %v1870 = vmax.f32 %v1742, %v1806
  %v1871 = vmax.f32 %v1743, %v1807
  %v1872 = vmax.f32 %v1744, %v1808
  %v1873 = vmax.f32 %v1745, %v1809
  %v1874 = vmax.f32 %v1746, %v1810
  %v1875 = vmax.f32 %v1747, %v1811
  %v1876 = vmax.f32 %v1748, %v1812
  %v1877 = vmax.f32 %v1749, %v1813
  %v1878 = vmax.f32 %v1750, %v1814
  %v1879 = vmax.f32 %v1751, %v1815
  %v1880 = vmax.f32 %v1752, %v1816
  %v1881 = vmax.f32 %v1753, %v1817
  %v1882 = vmax.f32 %v1754, %v1818
  %v1883 = vmax.f32 %v1755, %v1819
  %v1884 = vmax.f32 %v1756, %v1820
  %v1885 = vmax.f32 %v1757, %v1821
  %v1886 = vmax.f32 %v1758, %v1822
  %v1887 = vmax.f32 %v1759, %v1823
  %v1888 = vmax.f32 %v1760, %v1824
  %v1889 = vmax.f32 %v1761, %v1825
  %v1890 = vmax.f32 %v1762, %v1826
  %v1891 = vmax.f32 %v1763, %v1827
  %v1892 = vmax.f32 %v1764, %v1828
  %v1893 = vmax.f32 %v1765, %v1829
  %v1894 = vmax.f32 %v1766, %v1830
  %v1895 = vmax.f32 %v1767, %v1831
  %v1896 = vmax.f32 %v1768, %v1832
  %v1897 = vmax.f32 %v1769, %v1833
  %v1898 = vmax.f32 %v1770, %v1834
  %v1899 = vmax.f32 %v1771, %v1835
  %v1900 = vmax.f32 %v1772, %v1836
  %v1901 = vmax.f32 %v1773, %v1837
  %v1902 = vmax.f32 %v1774, %v1838
  %v1903 = vmax.f32 %v1775, %v1839
  %v1904 = vmax.f32 %v1776, %v1840
  %v1905 = vmax.f32 %v1777, %v1841
  %v1906 = vmax.f32 %v1778, %v1842
  %v1907 = vmax.f32 %v1779, %v1843
  %v1908 = vmax.f32 %v1780, %v1844
  %v1909 = vmax.f32 %v1781, %v1845
  %v1910 = vmax.f32 %v1782, %v1846
  %v1911 = vmax.f32 %v1783, %v1847
  %v1912 = vmax.f32 %v1784, %v1848
  %v1913 = vmax.f32 %v1785, %v1849
  %v1914 = vmax.f32 %v1786, %v1850
  %v1915 = vmax.f32 %v1787, %v1851
  %v1916 = vmax.f32 %v1788, %v1852
  %v1917 = vmax.f32 %v1789, %v1853
  %v1918 = vmax.f32 %v1790, %v1854
  %v1919 = vmax.f32 %v1791, %v1855
  %v1920 = vmax.f32 %v1792, %v1856
  %v1921 = vmax.f32 %v1793, %v1857
  %v1922 = vmax.f32 %v1794, %v1858
  %v1923 = vmax.f32 %v1795, %v1859
  %v1924 = vmax.f32 %v1796, %v1860
  %v1925 = vmax.f32 %v1797, %v1861
  %v1926 = vmax.f32 %v1798, %v1862
  %v1927 = vmax.f32 %v1799, %v1863
  %v1928 = vmax.f32 %v1800, %v1864
  %v1929 = vmax.f32 %v1801, %v1865
  %v1930 = vmax.f32 %v1802, %v1866
  %v1931 = vmax.f32 %v1803, %v1867
  %v1932 = vmax.f32 %v1804, %v1868
  %v1933 = vmax.f32 %v1805, %v1869
  %v1934 = vpack.c.bf16 %v1870, %v1870
  %v1935 = vpack.c.bf16 %v1871, %v1871
  %v1936 = vpack.c.bf16 %v1872, %v1872
  %v1937 = vpack.c.bf16 %v1873, %v1873
  %v1938 = vpack.c.bf16 %v1874, %v1874
  %v1939 = vpack.c.bf16 %v1875, %v1875
  %v1940 = vpack.c.bf16 %v1876, %v1876
  %v1941 = vpack.c.bf16 %v1877, %v1877
  %v1942 = vpack.c.bf16 %v1878, %v1878
  %v1943 = vpack.c.bf16 %v1879, %v1879
  %v1944 = vpack.c.bf16 %v1880, %v1880
  %v1945 = vpack.c.bf16 %v1881, %v1881
  %v1946 = vpack.c.bf16 %v1882, %v1882
  %v1947 = vpack.c.bf16 %v1883, %v1883
  %v1948 = vpack.c.bf16 %v1884, %v1884
  %v1949 = vpack.c.bf16 %v1885, %v1885
  %v1950 = vpack.c.bf16 %v1886, %v1886
  %v1951 = vpack.c.bf16 %v1887, %v1887
  %v1952 = vpack.c.bf16 %v1888, %v1888
  %v1953 = vpack.c.bf16 %v1889, %v1889
  %v1954 = vpack.c.bf16 %v1890, %v1890
  %v1955 = vpack.c.bf16 %v1891, %v1891
  %v1956 = vpack.c.bf16 %v1892, %v1892
  %v1957 = vpack.c.bf16 %v1893, %v1893
  %v1958 = vpack.c.bf16 %v1894, %v1894
  %v1959 = vpack.c.bf16 %v1895, %v1895
  %v1960 = vpack.c.bf16 %v1896, %v1896
  %v1961 = vpack.c.bf16 %v1897, %v1897
  %v1962 = vpack.c.bf16 %v1898, %v1898
  %v1963 = vpack.c.bf16 %v1899, %v1899
  %v1964 = vpack.c.bf16 %v1900, %v1900
  %v1965 = vpack.c.bf16 %v1901, %v1901
  %v1966 = vpack.c.bf16 %v1902, %v1902
  %v1967 = vpack.c.bf16 %v1903, %v1903
  %v1968 = vpack.c.bf16 %v1904, %v1904
  %v1969 = vpack.c.bf16 %v1905, %v1905
  %v1970 = vpack.c.bf16 %v1906, %v1906
  %v1971 = vpack.c.bf16 %v1907, %v1907
  %v1972 = vpack.c.bf16 %v1908, %v1908
  %v1973 = vpack.c.bf16 %v1909, %v1909
  %v1974 = vpack.c.bf16 %v1910, %v1910
  %v1975 = vpack.c.bf16 %v1911, %v1911
  %v1976 = vpack.c.bf16 %v1912, %v1912
  %v1977 = vpack.c.bf16 %v1913, %v1913
  %v1978 = vpack.c.bf16 %v1914, %v1914
  %v1979 = vpack.c.bf16 %v1915, %v1915
  %v1980 = vpack.c.bf16 %v1916, %v1916
  %v1981 = vpack.c.bf16 %v1917, %v1917
  %v1982 = vpack.c.bf16 %v1918, %v1918
  %v1983 = vpack.c.bf16 %v1919, %v1919
  %v1984 = vpack.c.bf16 %v1920, %v1920
  %v1985 = vpack.c.bf16 %v1921, %v1921
  %v1986 = vpack.c.bf16 %v1922, %v1922
  %v1987 = vpack.c.bf16 %v1923, %v1923
  %v1988 = vpack.c.bf16 %v1924, %v1924
  %v1989 = vpack.c.bf16 %v1925, %v1925
  %v1990 = vpack.c.bf16 %v1926, %v1926
  %v1991 = vpack.c.bf16 %v1927, %v1927
  %v1992 = vpack.c.bf16 %v1928, %v1928
  %v1993 = vpack.c.bf16 %v1929, %v1929
  %v1994 = vpack.c.bf16 %v1930, %v1930
  %v1995 = vpack.c.bf16 %v1931, %v1931
  %v1996 = vpack.c.bf16 %v1932, %v1932
  %v1997 = vpack.c.bf16 %v1933, %v1933
  %s1998 = scalar_lea.vmem %s0, 90
  %v1999 = vld [vmem:[%s1998] sm:$0x1]
  %v2000 = vld [vmem:[%s1998 + $0x1] sm:$0x1]
  %v2001 = vld [vmem:[%s1998 + $0x2] sm:$0x1]
  %v2002 = vld [vmem:[%s1998 + $0x3] sm:$0x1]
  %v2003 = vld [vmem:[%s1998 + $0x4] sm:$0x1]
  %v2004 = vld [vmem:[%s1998 + $0x5] sm:$0x1]
  %v2005 = vld [vmem:[%s1998 + $0x6] sm:$0x1]
  %v2006 = vld [vmem:[%s1998 + $0x7] sm:$0x1]
  %v2007 = vld [vmem:[%s1998 + $0x9] sm:$0x1]
  %v2008 = vld [vmem:[%s1998 + $0xa] sm:$0x1]
  %v2009 = vld [vmem:[%s1998 + $0xb] sm:$0x1]
  %v2010 = vld [vmem:[%s1998 + $0xc] sm:$0x1]
  %v2011 = vld [vmem:[%s1998 + $0xd] sm:$0x1]
  %v2012 = vld [vmem:[%s1998 + $0xe] sm:$0x1]
  %v2013 = vld [vmem:[%s1998 + $0xf] sm:$0x1]
  %v2014 = vld [vmem:[%s1998 + $0x10] sm:$0x1]
  %v2015 = vld [vmem:[%s1998 + $0x12] sm:$0x1]
  %v2016 = vld [vmem:[%s1998 + $0x13] sm:$0x1]
  %v2017 = vld [vmem:[%s1998 + $0x14] sm:$0x1]
  %v2018 = vld [vmem:[%s1998 + $0x15] sm:$0x1]
  %v2019 = vld [vmem:[%s1998 + $0x16] sm:$0x1]
  %v2020 = vld [vmem:[%s1998 + $0x17] sm:$0x1]
  %v2021 = vld [vmem:[%s1998 + $0x18] sm:$0x1]
  %v2022 = vld [vmem:[%s1998 + $0x19] sm:$0x1]
  %v2023 = vld [vmem:[%s1998 + $0x1b] sm:$0x1]
  %v2024 = vld [vmem:[%s1998 + $0x1c] sm:$0x1]
  %v2025 = vld [vmem:[%s1998 + $0x1d] sm:$0x1]
  %v2026 = vld [vmem:[%s1998 + $0x1e] sm:$0x1]
  %v2027 = vld [vmem:[%s1998 + $0x1f] sm:$0x1]
  %v2028 = vld [vmem:[%s1998 + $0x20] sm:$0x1]
  %v2029 = vld [vmem:[%s1998 + $0x21] sm:$0x1]
  %v2030 = vld [vmem:[%s1998 + $0x22] sm:$0x1]
  %v2031 = vld [vmem:[%s1998 + $0x24] sm:$0x1]
  %v2032 = vld [vmem:[%s1998 + $0x25] sm:$0x1]
  %v2033 = vld [vmem:[%s1998 + $0x26] sm:$0x1]
  %v2034 = vld [vmem:[%s1998 + $0x27] sm:$0x1]
  %v2035 = vld [vmem:[%s1998 + $0x28] sm:$0x1]
  %v2036 = vld [vmem:[%s1998 + $0x29] sm:$0x1]
  %v2037 = vld [vmem:[%s1998 + $0x2a] sm:$0x1]
  %v2038 = vld [vmem:[%s1998 + $0x2b] sm:$0x1]
  %v2039 = vld [vmem:[%s1998 + $0x2d] sm:$0x1]
  %v2040 = vld [vmem:[%s1998 + $0x2e] sm:$0x1]
  %v2041 = vld [vmem:[%s1998 + $0x2f] sm:$0x1]
  %v2042 = vld [vmem:[%s1998 + $0x30] sm:$0x1]
  %v2043 = vld [vmem:[%s1998 + $0x31] sm:$0x1]
  %v2044 = vld [vmem:[%s1998 + $0x32] sm:$0x1]
  %v2045 = vld [vmem:[%s1998 + $0x33] sm:$0x1]
  %v2046 = vld [vmem:[%s1998 + $0x34] sm:$0x1]
  %v2047 = vld [vmem:[%s1998 + $0x36] sm:$0x1]
  %v2048 = vld [vmem:[%s1998 + $0x37] sm:$0x1]
  %v2049 = vld [vmem:[%s1998 + $0x38] sm:$0x1]
  %v2050 = vld [vmem:[%s1998 + $0x39] sm:$0x1]
  %v2051 = vld [vmem:[%s1998 + $0x3a] sm:$0x1]
  %v2052 = vld [vmem:[%s1998 + $0x3b] sm:$0x1]
  %v2053 = vld [vmem:[%s1998 + $0x3c] sm:$0x1]
  %v2054 = vld [vmem:[%s1998 + $0x3d] sm:$0x1]
  %v2055 = vld [vmem:[%s1998 + $0x3f] sm:$0x1]
  %v2056 = vld [vmem:[%s1998 + $0x40] sm:$0x1]
  %v2057 = vld [vmem:[%s1998 + $0x41] sm:$0x1]
  %v2058 = vld [vmem:[%s1998 + $0x42] sm:$0x1]
  %v2059 = vld [vmem:[%s1998 + $0x43] sm:$0x1]
  %v2060 = vld [vmem:[%s1998 + $0x44] sm:$0x1]
  %v2061 = vld [vmem:[%s1998 + $0x45] sm:$0x1]
  %v2062 = vld [vmem:[%s1998 + $0x46] sm:$0x1]
  %v2063 = vunpack.c.l.bf16 %v1934
  %v2064 = vunpack.c.l.bf16 %v1935
  %v2065 = vunpack.c.l.bf16 %v1936
  %v2066 = vunpack.c.l.bf16 %v1937
  %v2067 = vunpack.c.l.bf16 %v1938
  %v2068 = vunpack.c.l.bf16 %v1939
  %v2069 = vunpack.c.l.bf16 %v1940
  %v2070 = vunpack.c.l.bf16 %v1941
  %v2071 = vunpack.c.l.bf16 %v1942
  %v2072 = vunpack.c.l.bf16 %v1943
  %v2073 = vunpack.c.l.bf16 %v1944
  %v2074 = vunpack.c.l.bf16 %v1945
  %v2075 = vunpack.c.l.bf16 %v1946
  %v2076 = vunpack.c.l.bf16 %v1947
  %v2077 = vunpack.c.l.bf16 %v1948
  %v2078 = vunpack.c.l.bf16 %v1949
  %v2079 = vunpack.c.l.bf16 %v1950
  %v2080 = vunpack.c.l.bf16 %v1951
  %v2081 = vunpack.c.l.bf16 %v1952
  %v2082 = vunpack.c.l.bf16 %v1953
  %v2083 = vunpack.c.l.bf16 %v1954
  %v2084 = vunpack.c.l.bf16 %v1955
  %v2085 = vunpack.c.l.bf16 %v1956
  %v2086 = vunpack.c.l.bf16 %v1957
  %v2087 = vunpack.c.l.bf16 %v1958
  %v2088 = vunpack.c.l.bf16 %v1959
  %v2089 = vunpack.c.l.bf16 %v1960
  %v2090 = vunpack.c.l.bf16 %v1961
  %v2091 = vunpack.c.l.bf16 %v1962
  %v2092 = vunpack.c.l.bf16 %v1963
  %v2093 = vunpack.c.l.bf16 %v1964
  %v2094 = vunpack.c.l.bf16 %v1965
  %v2095 = vunpack.c.l.bf16 %v1966
  %v2096 = vunpack.c.l.bf16 %v1967
  %v2097 = vunpack.c.l.bf16 %v1968
  %v2098 = vunpack.c.l.bf16 %v1969
  %v2099 = vunpack.c.l.bf16 %v1970
  %v2100 = vunpack.c.l.bf16 %v1971
  %v2101 = vunpack.c.l.bf16 %v1972
  %v2102 = vunpack.c.l.bf16 %v1973
  %v2103 = vunpack.c.l.bf16 %v1974
  %v2104 = vunpack.c.l.bf16 %v1975
  %v2105 = vunpack.c.l.bf16 %v1976
  %v2106 = vunpack.c.l.bf16 %v1977
  %v2107 = vunpack.c.l.bf16 %v1978
  %v2108 = vunpack.c.l.bf16 %v1979
  %v2109 = vunpack.c.l.bf16 %v1980
  %v2110 = vunpack.c.l.bf16 %v1981
  %v2111 = vunpack.c.l.bf16 %v1982
  %v2112 = vunpack.c.l.bf16 %v1983
  %v2113 = vunpack.c.l.bf16 %v1984
  %v2114 = vunpack.c.l.bf16 %v1985
  %v2115 = vunpack.c.l.bf16 %v1986
  %v2116 = vunpack.c.l.bf16 %v1987
  %v2117 = vunpack.c.l.bf16 %v1988
  %v2118 = vunpack.c.l.bf16 %v1989
  %v2119 = vunpack.c.l.bf16 %v1990
  %v2120 = vunpack.c.l.bf16 %v1991
  %v2121 = vunpack.c.l.bf16 %v1992
  %v2122 = vunpack.c.l.bf16 %v1993
  %v2123 = vunpack.c.l.bf16 %v1994
  %v2124 = vunpack.c.l.bf16 %v1995
  %v2125 = vunpack.c.l.bf16 %v1996
  %v2126 = vunpack.c.l.bf16 %v1997
  %v2127 = vunpack.c.l.bf16 %v1999
  %v2128 = vunpack.c.l.bf16 %v2000
  %v2129 = vunpack.c.l.bf16 %v2001
  %v2130 = vunpack.c.l.bf16 %v2002
  %v2131 = vunpack.c.l.bf16 %v2003
  %v2132 = vunpack.c.l.bf16 %v2004
  %v2133 = vunpack.c.l.bf16 %v2005
  %v2134 = vunpack.c.l.bf16 %v2006
  %v2135 = vunpack.c.l.bf16 %v2007
  %v2136 = vunpack.c.l.bf16 %v2008
  %v2137 = vunpack.c.l.bf16 %v2009
  %v2138 = vunpack.c.l.bf16 %v2010
  %v2139 = vunpack.c.l.bf16 %v2011
  %v2140 = vunpack.c.l.bf16 %v2012
  %v2141 = vunpack.c.l.bf16 %v2013
  %v2142 = vunpack.c.l.bf16 %v2014
  %v2143 = vunpack.c.l.bf16 %v2015
  %v2144 = vunpack.c.l.bf16 %v2016
  %v2145 = vunpack.c.l.bf16 %v2017
  %v2146 = vunpack.c.l.bf16 %v2018
  %v2147 = vunpack.c.l.bf16 %v2019
  %v2148 = vunpack.c.l.bf16 %v2020
  %v2149 = vunpack.c.l.bf16 %v2021
  %v2150 = vunpack.c.l.bf16 %v2022
  %v2151 = vunpack.c.l.bf16 %v2023
  %v2152 = vunpack.c.l.bf16 %v2024
  %v2153 = vunpack.c.l.bf16 %v2025
  %v2154 = vunpack.c.l.bf16 %v2026
  %v2155 = vunpack.c.l.bf16 %v2027
  %v2156 = vunpack.c.l.bf16 %v2028
  %v2157 = vunpack.c.l.bf16 %v2029
  %v2158 = vunpack.c.l.bf16 %v2030
  %v2159 = vunpack.c.l.bf16 %v2031
  %v2160 = vunpack.c.l.bf16 %v2032
  %v2161 = vunpack.c.l.bf16 %v2033
  %v2162 = vunpack.c.l.bf16 %v2034
  %v2163 = vunpack.c.l.bf16 %v2035
  %v2164 = vunpack.c.l.bf16 %v2036
  %v2165 = vunpack.c.l.bf16 %v2037
  %v2166 = vunpack.c.l.bf16 %v2038
  %v2167 = vunpack.c.l.bf16 %v2039
  %v2168 = vunpack.c.l.bf16 %v2040
  %v2169 = vunpack.c.l.bf16 %v2041
  %v2170 = vunpack.c.l.bf16 %v2042
  %v2171 = vunpack.c.l.bf16 %v2043
  %v2172 = vunpack.c.l.bf16 %v2044
  %v2173 = vunpack.c.l.bf16 %v2045
  %v2174 = vunpack.c.l.bf16 %v2046
  %v2175 = vunpack.c.l.bf16 %v2047
  %v2176 = vunpack.c.l.bf16 %v2048
  %v2177 = vunpack.c.l.bf16 %v2049
  %v2178 = vunpack.c.l.bf16 %v2050
  %v2179 = vunpack.c.l.bf16 %v2051
  %v2180 = vunpack.c.l.bf16 %v2052
  %v2181 = vunpack.c.l.bf16 %v2053
  %v2182 = vunpack.c.l.bf16 %v2054
  %v2183 = vunpack.c.l.bf16 %v2055
  %v2184 = vunpack.c.l.bf16 %v2056
  %v2185 = vunpack.c.l.bf16 %v2057
  %v2186 = vunpack.c.l.bf16 %v2058
  %v2187 = vunpack.c.l.bf16 %v2059
  %v2188 = vunpack.c.l.bf16 %v2060
  %v2189 = vunpack.c.l.bf16 %v2061
  %v2190 = vunpack.c.l.bf16 %v2062
  %v2191 = vmax.f32 %v2063, %v2127
  %v2192 = vmax.f32 %v2064, %v2128
  %v2193 = vmax.f32 %v2065, %v2129
  %v2194 = vmax.f32 %v2066, %v2130
  %v2195 = vmax.f32 %v2067, %v2131
  %v2196 = vmax.f32 %v2068, %v2132
  %v2197 = vmax.f32 %v2069, %v2133
  %v2198 = vmax.f32 %v2070, %v2134
  %v2199 = vmax.f32 %v2071, %v2135
  %v2200 = vmax.f32 %v2072, %v2136
  %v2201 = vmax.f32 %v2073, %v2137
  %v2202 = vmax.f32 %v2074, %v2138
  %v2203 = vmax.f32 %v2075, %v2139
  %v2204 = vmax.f32 %v2076, %v2140
  %v2205 = vmax.f32 %v2077, %v2141
  %v2206 = vmax.f32 %v2078, %v2142
  %v2207 = vmax.f32 %v2079, %v2143
  %v2208 = vmax.f32 %v2080, %v2144
  %v2209 = vmax.f32 %v2081, %v2145
  %v2210 = vmax.f32 %v2082, %v2146
  %v2211 = vmax.f32 %v2083, %v2147
  %v2212 = vmax.f32 %v2084, %v2148
  %v2213 = vmax.f32 %v2085, %v2149
  %v2214 = vmax.f32 %v2086, %v2150
  %v2215 = vmax.f32 %v2087, %v2151
  %v2216 = vmax.f32 %v2088, %v2152
  %v2217 = vmax.f32 %v2089, %v2153
  %v2218 = vmax.f32 %v2090, %v2154
  %v2219 = vmax.f32 %v2091, %v2155
  %v2220 = vmax.f32 %v2092, %v2156
  %v2221 = vmax.f32 %v2093, %v2157
  %v2222 = vmax.f32 %v2094, %v2158
  %v2223 = vmax.f32 %v2095, %v2159
  %v2224 = vmax.f32 %v2096, %v2160
  %v2225 = vmax.f32 %v2097, %v2161
  %v2226 = vmax.f32 %v2098, %v2162
  %v2227 = vmax.f32 %v2099, %v2163
  %v2228 = vmax.f32 %v2100, %v2164
  %v2229 = vmax.f32 %v2101, %v2165
  %v2230 = vmax.f32 %v2102, %v2166
  %v2231 = vmax.f32 %v2103, %v2167
  %v2232 = vmax.f32 %v2104, %v2168
  %v2233 = vmax.f32 %v2105, %v2169
  %v2234 = vmax.f32 %v2106, %v2170
  %v2235 = vmax.f32 %v2107, %v2171
  %v2236 = vmax.f32 %v2108, %v2172
  %v2237 = vmax.f32 %v2109, %v2173
  %v2238 = vmax.f32 %v2110, %v2174
  %v2239 = vmax.f32 %v2111, %v2175
  %v2240 = vmax.f32 %v2112, %v2176
  %v2241 = vmax.f32 %v2113, %v2177
  %v2242 = vmax.f32 %v2114, %v2178
  %v2243 = vmax.f32 %v2115, %v2179
  %v2244 = vmax.f32 %v2116, %v2180
  %v2245 = vmax.f32 %v2117, %v2181
  %v2246 = vmax.f32 %v2118, %v2182
  %v2247 = vmax.f32 %v2119, %v2183
  %v2248 = vmax.f32 %v2120, %v2184
  %v2249 = vmax.f32 %v2121, %v2185
  %v2250 = vmax.f32 %v2122, %v2186
  %v2251 = vmax.f32 %v2123, %v2187
  %v2252 = vmax.f32 %v2124, %v2188
  %v2253 = vmax.f32 %v2125, %v2189
  %v2254 = vmax.f32 %v2126, %v2190
  %v2255 = vpack.c.bf16 %v2191, %v2191
  %v2256 = vpack.c.bf16 %v2192, %v2192
  %v2257 = vpack.c.bf16 %v2193, %v2193
  %v2258 = vpack.c.bf16 %v2194, %v2194
  %v2259 = vpack.c.bf16 %v2195, %v2195
  %v2260 = vpack.c.bf16 %v2196, %v2196
  %v2261 = vpack.c.bf16 %v2197, %v2197
  %v2262 = vpack.c.bf16 %v2198, %v2198
  %v2263 = vpack.c.bf16 %v2199, %v2199
  %v2264 = vpack.c.bf16 %v2200, %v2200
  %v2265 = vpack.c.bf16 %v2201, %v2201
  %v2266 = vpack.c.bf16 %v2202, %v2202
  %v2267 = vpack.c.bf16 %v2203, %v2203
  %v2268 = vpack.c.bf16 %v2204, %v2204
  %v2269 = vpack.c.bf16 %v2205, %v2205
  %v2270 = vpack.c.bf16 %v2206, %v2206
  %v2271 = vpack.c.bf16 %v2207, %v2207
  %v2272 = vpack.c.bf16 %v2208, %v2208
  %v2273 = vpack.c.bf16 %v2209, %v2209
  %v2274 = vpack.c.bf16 %v2210, %v2210
  %v2275 = vpack.c.bf16 %v2211, %v2211
  %v2276 = vpack.c.bf16 %v2212, %v2212
  %v2277 = vpack.c.bf16 %v2213, %v2213
  %v2278 = vpack.c.bf16 %v2214, %v2214
  %v2279 = vpack.c.bf16 %v2215, %v2215
  %v2280 = vpack.c.bf16 %v2216, %v2216
  %v2281 = vpack.c.bf16 %v2217, %v2217
  %v2282 = vpack.c.bf16 %v2218, %v2218
  %v2283 = vpack.c.bf16 %v2219, %v2219
  %v2284 = vpack.c.bf16 %v2220, %v2220
  %v2285 = vpack.c.bf16 %v2221, %v2221
  %v2286 = vpack.c.bf16 %v2222, %v2222
  %v2287 = vpack.c.bf16 %v2223, %v2223
  %v2288 = vpack.c.bf16 %v2224, %v2224
  %v2289 = vpack.c.bf16 %v2225, %v2225
  %v2290 = vpack.c.bf16 %v2226, %v2226
  %v2291 = vpack.c.bf16 %v2227, %v2227
  %v2292 = vpack.c.bf16 %v2228, %v2228
  %v2293 = vpack.c.bf16 %v2229, %v2229
  %v2294 = vpack.c.bf16 %v2230, %v2230
  %v2295 = vpack.c.bf16 %v2231, %v2231
  %v2296 = vpack.c.bf16 %v2232, %v2232
  %v2297 = vpack.c.bf16 %v2233, %v2233
  %v2298 = vpack.c.bf16 %v2234, %v2234
  %v2299 = vpack.c.bf16 %v2235, %v2235
  %v2300 = vpack.c.bf16 %v2236, %v2236
  %v2301 = vpack.c.bf16 %v2237, %v2237
  %v2302 = vpack.c.bf16 %v2238, %v2238
  %v2303 = vpack.c.bf16 %v2239, %v2239
  %v2304 = vpack.c.bf16 %v2240, %v2240
  %v2305 = vpack.c.bf16 %v2241, %v2241
  %v2306 = vpack.c.bf16 %v2242, %v2242
  %v2307 = vpack.c.bf16 %v2243, %v2243
  %v2308 = vpack.c.bf16 %v2244, %v2244
  %v2309 = vpack.c.bf16 %v2245, %v2245
  %v2310 = vpack.c.bf16 %v2246, %v2246
  %v2311 = vpack.c.bf16 %v2247, %v2247
  %v2312 = vpack.c.bf16 %v2248, %v2248
  %v2313 = vpack.c.bf16 %v2249, %v2249
  %v2314 = vpack.c.bf16 %v2250, %v2250
  %v2315 = vpack.c.bf16 %v2251, %v2251
  %v2316 = vpack.c.bf16 %v2252, %v2252
  %v2317 = vpack.c.bf16 %v2253, %v2253
  %v2318 = vpack.c.bf16 %v2254, %v2254
  %s2319 = scalar_lea.vmem %s0, 10
  %v2320 = vld [vmem:[%s2319] sm:$0x1]
  %v2321 = vld [vmem:[%s2319 + $0x1] sm:$0x1]
  %v2322 = vld [vmem:[%s2319 + $0x2] sm:$0x1]
  %v2323 = vld [vmem:[%s2319 + $0x3] sm:$0x1]
  %v2324 = vld [vmem:[%s2319 + $0x4] sm:$0x1]
  %v2325 = vld [vmem:[%s2319 + $0x5] sm:$0x1]
  %v2326 = vld [vmem:[%s2319 + $0x6] sm:$0x1]
  %v2327 = vld [vmem:[%s2319 + $0x7] sm:$0x1]
  %v2328 = vld [vmem:[%s2319 + $0x9] sm:$0x1]
  %v2329 = vld [vmem:[%s2319 + $0xa] sm:$0x1]
  %v2330 = vld [vmem:[%s2319 + $0xb] sm:$0x1]
  %v2331 = vld [vmem:[%s2319 + $0xc] sm:$0x1]
  %v2332 = vld [vmem:[%s2319 + $0xd] sm:$0x1]
  %v2333 = vld [vmem:[%s2319 + $0xe] sm:$0x1]
  %v2334 = vld [vmem:[%s2319 + $0xf] sm:$0x1]
  %v2335 = vld [vmem:[%s2319 + $0x10] sm:$0x1]
  %v2336 = vld [vmem:[%s2319 + $0x12] sm:$0x1]
  %v2337 = vld [vmem:[%s2319 + $0x13] sm:$0x1]
  %v2338 = vld [vmem:[%s2319 + $0x14] sm:$0x1]
  %v2339 = vld [vmem:[%s2319 + $0x15] sm:$0x1]
  %v2340 = vld [vmem:[%s2319 + $0x16] sm:$0x1]
  %v2341 = vld [vmem:[%s2319 + $0x17] sm:$0x1]
  %v2342 = vld [vmem:[%s2319 + $0x18] sm:$0x1]
  %v2343 = vld [vmem:[%s2319 + $0x19] sm:$0x1]
  %v2344 = vld [vmem:[%s2319 + $0x1b] sm:$0x1]
  %v2345 = vld [vmem:[%s2319 + $0x1c] sm:$0x1]
  %v2346 = vld [vmem:[%s2319 + $0x1d] sm:$0x1]
  %v2347 = vld [vmem:[%s2319 + $0x1e] sm:$0x1]
  %v2348 = vld [vmem:[%s2319 + $0x1f] sm:$0x1]
  %v2349 = vld [vmem:[%s2319 + $0x20] sm:$0x1]
  %v2350 = vld [vmem:[%s2319 + $0x21] sm:$0x1]
  %v2351 = vld [vmem:[%s2319 + $0x22] sm:$0x1]
  %v2352 = vld [vmem:[%s2319 + $0x24] sm:$0x1]
  %v2353 = vld [vmem:[%s2319 + $0x25] sm:$0x1]
  %v2354 = vld [vmem:[%s2319 + $0x26] sm:$0x1]
  %v2355 = vld [vmem:[%s2319 + $0x27] sm:$0x1]
  %v2356 = vld [vmem:[%s2319 + $0x28] sm:$0x1]
  %v2357 = vld [vmem:[%s2319 + $0x29] sm:$0x1]
  %v2358 = vld [vmem:[%s2319 + $0x2a] sm:$0x1]
  %v2359 = vld [vmem:[%s2319 + $0x2b] sm:$0x1]
  %v2360 = vld [vmem:[%s2319 + $0x2d] sm:$0x1]
  %v2361 = vld [vmem:[%s2319 + $0x2e] sm:$0x1]
  %v2362 = vld [vmem:[%s2319 + $0x2f] sm:$0x1]
  %v2363 = vld [vmem:[%s2319 + $0x30] sm:$0x1]
  %v2364 = vld [vmem:[%s2319 + $0x31] sm:$0x1]
  %v2365 = vld [vmem:[%s2319 + $0x32] sm:$0x1]
  %v2366 = vld [vmem:[%s2319 + $0x33] sm:$0x1]
  %v2367 = vld [vmem:[%s2319 + $0x34] sm:$0x1]
  %v2368 = vld [vmem:[%s2319 + $0x36] sm:$0x1]
  %v2369 = vld [vmem:[%s2319 + $0x37] sm:$0x1]
  %v2370 = vld [vmem:[%s2319 + $0x38] sm:$0x1]
  %v2371 = vld [vmem:[%s2319 + $0x39] sm:$0x1]
  %v2372 = vld [vmem:[%s2319 + $0x3a] sm:$0x1]
  %v2373 = vld [vmem:[%s2319 + $0x3b] sm:$0x1]
  %v2374 = vld [vmem:[%s2319 + $0x3c] sm:$0x1]
  %v2375 = vld [vmem:[%s2319 + $0x3d] sm:$0x1]
  %v2376 = vld [vmem:[%s2319 + $0x3f] sm:$0x1]
  %v2377 = vld [vmem:[%s2319 + $0x40] sm:$0x1]
  %v2378 = vld [vmem:[%s2319 + $0x41] sm:$0x1]
  %v2379 = vld [vmem:[%s2319 + $0x42] sm:$0x1]
  %v2380 = vld [vmem:[%s2319 + $0x43] sm:$0x1]
  %v2381 = vld [vmem:[%s2319 + $0x44] sm:$0x1]
  %v2382 = vld [vmem:[%s2319 + $0x45] sm:$0x1]
  %v2383 = vld [vmem:[%s2319 + $0x46] sm:$0x1]
  %v2384 = vunpack.c.l.bf16 %v2255
  %v2385 = vunpack.c.l.bf16 %v2256
  %v2386 = vunpack.c.l.bf16 %v2257
  %v2387 = vunpack.c.l.bf16 %v2258
  %v2388 = vunpack.c.l.bf16 %v2259
  %v2389 = vunpack.c.l.bf16 %v2260
  %v2390 = vunpack.c.l.bf16 %v2261
  %v2391 = vunpack.c.l.bf16 %v2262
  %v2392 = vunpack.c.l.bf16 %v2263
  %v2393 = vunpack.c.l.bf16 %v2264
  %v2394 = vunpack.c.l.bf16 %v2265
  %v2395 = vunpack.c.l.bf16 %v2266
  %v2396 = vunpack.c.l.bf16 %v2267
  %v2397 = vunpack.c.l.bf16 %v2268
  %v2398 = vunpack.c.l.bf16 %v2269
  %v2399 = vunpack.c.l.bf16 %v2270
  %v2400 = vunpack.c.l.bf16 %v2271
  %v2401 = vunpack.c.l.bf16 %v2272
  %v2402 = vunpack.c.l.bf16 %v2273
  %v2403 = vunpack.c.l.bf16 %v2274
  %v2404 = vunpack.c.l.bf16 %v2275
  %v2405 = vunpack.c.l.bf16 %v2276
  %v2406 = vunpack.c.l.bf16 %v2277
  %v2407 = vunpack.c.l.bf16 %v2278
  %v2408 = vunpack.c.l.bf16 %v2279
  %v2409 = vunpack.c.l.bf16 %v2280
  %v2410 = vunpack.c.l.bf16 %v2281
  %v2411 = vunpack.c.l.bf16 %v2282
  %v2412 = vunpack.c.l.bf16 %v2283
  %v2413 = vunpack.c.l.bf16 %v2284
  %v2414 = vunpack.c.l.bf16 %v2285
  %v2415 = vunpack.c.l.bf16 %v2286
  %v2416 = vunpack.c.l.bf16 %v2287
  %v2417 = vunpack.c.l.bf16 %v2288
  %v2418 = vunpack.c.l.bf16 %v2289
  %v2419 = vunpack.c.l.bf16 %v2290
  %v2420 = vunpack.c.l.bf16 %v2291
  %v2421 = vunpack.c.l.bf16 %v2292
  %v2422 = vunpack.c.l.bf16 %v2293
  %v2423 = vunpack.c.l.bf16 %v2294
  %v2424 = vunpack.c.l.bf16 %v2295
  %v2425 = vunpack.c.l.bf16 %v2296
  %v2426 = vunpack.c.l.bf16 %v2297
  %v2427 = vunpack.c.l.bf16 %v2298
  %v2428 = vunpack.c.l.bf16 %v2299
  %v2429 = vunpack.c.l.bf16 %v2300
  %v2430 = vunpack.c.l.bf16 %v2301
  %v2431 = vunpack.c.l.bf16 %v2302
  %v2432 = vunpack.c.l.bf16 %v2303
  %v2433 = vunpack.c.l.bf16 %v2304
  %v2434 = vunpack.c.l.bf16 %v2305
  %v2435 = vunpack.c.l.bf16 %v2306
  %v2436 = vunpack.c.l.bf16 %v2307
  %v2437 = vunpack.c.l.bf16 %v2308
  %v2438 = vunpack.c.l.bf16 %v2309
  %v2439 = vunpack.c.l.bf16 %v2310
  %v2440 = vunpack.c.l.bf16 %v2311
  %v2441 = vunpack.c.l.bf16 %v2312
  %v2442 = vunpack.c.l.bf16 %v2313
  %v2443 = vunpack.c.l.bf16 %v2314
  %v2444 = vunpack.c.l.bf16 %v2315
  %v2445 = vunpack.c.l.bf16 %v2316
  %v2446 = vunpack.c.l.bf16 %v2317
  %v2447 = vunpack.c.l.bf16 %v2318
  %v2448 = vunpack.c.l.bf16 %v2320
  %v2449 = vunpack.c.l.bf16 %v2321
  %v2450 = vunpack.c.l.bf16 %v2322
  %v2451 = vunpack.c.l.bf16 %v2323
  %v2452 = vunpack.c.l.bf16 %v2324
  %v2453 = vunpack.c.l.bf16 %v2325
  %v2454 = vunpack.c.l.bf16 %v2326
  %v2455 = vunpack.c.l.bf16 %v2327
  %v2456 = vunpack.c.l.bf16 %v2328
  %v2457 = vunpack.c.l.bf16 %v2329
  %v2458 = vunpack.c.l.bf16 %v2330
  %v2459 = vunpack.c.l.bf16 %v2331
  %v2460 = vunpack.c.l.bf16 %v2332
  %v2461 = vunpack.c.l.bf16 %v2333
  %v2462 = vunpack.c.l.bf16 %v2334
  %v2463 = vunpack.c.l.bf16 %v2335
  %v2464 = vunpack.c.l.bf16 %v2336
  %v2465 = vunpack.c.l.bf16 %v2337
  %v2466 = vunpack.c.l.bf16 %v2338
  %v2467 = vunpack.c.l.bf16 %v2339
  %v2468 = vunpack.c.l.bf16 %v2340
  %v2469 = vunpack.c.l.bf16 %v2341
  %v2470 = vunpack.c.l.bf16 %v2342
  %v2471 = vunpack.c.l.bf16 %v2343
  %v2472 = vunpack.c.l.bf16 %v2344
  %v2473 = vunpack.c.l.bf16 %v2345
  %v2474 = vunpack.c.l.bf16 %v2346
  %v2475 = vunpack.c.l.bf16 %v2347
  %v2476 = vunpack.c.l.bf16 %v2348
  %v2477 = vunpack.c.l.bf16 %v2349
  %v2478 = vunpack.c.l.bf16 %v2350
  %v2479 = vunpack.c.l.bf16 %v2351
  %v2480 = vunpack.c.l.bf16 %v2352
  %v2481 = vunpack.c.l.bf16 %v2353
  %v2482 = vunpack.c.l.bf16 %v2354
  %v2483 = vunpack.c.l.bf16 %v2355
  %v2484 = vunpack.c.l.bf16 %v2356
  %v2485 = vunpack.c.l.bf16 %v2357
  %v2486 = vunpack.c.l.bf16 %v2358
  %v2487 = vunpack.c.l.bf16 %v2359
  %v2488 = vunpack.c.l.bf16 %v2360
  %v2489 = vunpack.c.l.bf16 %v2361
  %v2490 = vunpack.c.l.bf16 %v2362
  %v2491 = vunpack.c.l.bf16 %v2363
  %v2492 = vunpack.c.l.bf16 %v2364
  %v2493 = vunpack.c.l.bf16 %v2365
  %v2494 = vunpack.c.l.bf16 %v2366
  %v2495 = vunpack.c.l.bf16 %v2367
  %v2496 = vunpack.c.l.bf16 %v2368
  %v2497 = vunpack.c.l.bf16 %v2369
  %v2498 = vunpack.c.l.bf16 %v2370
  %v2499 = vunpack.c.l.bf16 %v2371
  %v2500 = vunpack.c.l.bf16 %v2372
  %v2501 = vunpack.c.l.bf16 %v2373
  %v2502 = vunpack.c.l.bf16 %v2374
  %v2503 = vunpack.c.l.bf16 %v2375
  %v2504 = vunpack.c.l.bf16 %v2376
  %v2505 = vunpack.c.l.bf16 %v2377
  %v2506 = vunpack.c.l.bf16 %v2378
  %v2507 = vunpack.c.l.bf16 %v2379
  %v2508 = vunpack.c.l.bf16 %v2380
  %v2509 = vunpack.c.l.bf16 %v2381
  %v2510 = vunpack.c.l.bf16 %v2382
  %v2511 = vunpack.c.l.bf16 %v2383
  %v2512 = vmax.f32 %v2384, %v2448
  %v2513 = vmax.f32 %v2385, %v2449
  %v2514 = vmax.f32 %v2386, %v2450
  %v2515 = vmax.f32 %v2387, %v2451
  %v2516 = vmax.f32 %v2388, %v2452
  %v2517 = vmax.f32 %v2389, %v2453
  %v2518 = vmax.f32 %v2390, %v2454
  %v2519 = vmax.f32 %v2391, %v2455
  %v2520 = vmax.f32 %v2392, %v2456
  %v2521 = vmax.f32 %v2393, %v2457
  %v2522 = vmax.f32 %v2394, %v2458
  %v2523 = vmax.f32 %v2395, %v2459
  %v2524 = vmax.f32 %v2396, %v2460
  %v2525 = vmax.f32 %v2397, %v2461
  %v2526 = vmax.f32 %v2398, %v2462
  %v2527 = vmax.f32 %v2399, %v2463
  %v2528 = vmax.f32 %v2400, %v2464
  %v2529 = vmax.f32 %v2401, %v2465
  %v2530 = vmax.f32 %v2402, %v2466
  %v2531 = vmax.f32 %v2403, %v2467
  %v2532 = vmax.f32 %v2404, %v2468
  %v2533 = vmax.f32 %v2405, %v2469
  %v2534 = vmax.f32 %v2406, %v2470
  %v2535 = vmax.f32 %v2407, %v2471
  %v2536 = vmax.f32 %v2408, %v2472
  %v2537 = vmax.f32 %v2409, %v2473
  %v2538 = vmax.f32 %v2410, %v2474
  %v2539 = vmax.f32 %v2411, %v2475
  %v2540 = vmax.f32 %v2412, %v2476
  %v2541 = vmax.f32 %v2413, %v2477
  %v2542 = vmax.f32 %v2414, %v2478
  %v2543 = vmax.f32 %v2415, %v2479
  %v2544 = vmax.f32 %v2416, %v2480
  %v2545 = vmax.f32 %v2417, %v2481
  %v2546 = vmax.f32 %v2418, %v2482
  %v2547 = vmax.f32 %v2419, %v2483
  %v2548 = vmax.f32 %v2420, %v2484
  %v2549 = vmax.f32 %v2421, %v2485
  %v2550 = vmax.f32 %v2422, %v2486
  %v2551 = vmax.f32 %v2423, %v2487
  %v2552 = vmax.f32 %v2424, %v2488
  %v2553 = vmax.f32 %v2425, %v2489
  %v2554 = vmax.f32 %v2426, %v2490
  %v2555 = vmax.f32 %v2427, %v2491
  %v2556 = vmax.f32 %v2428, %v2492
  %v2557 = vmax.f32 %v2429, %v2493
  %v2558 = vmax.f32 %v2430, %v2494
  %v2559 = vmax.f32 %v2431, %v2495
  %v2560 = vmax.f32 %v2432, %v2496
  %v2561 = vmax.f32 %v2433, %v2497
  %v2562 = vmax.f32 %v2434, %v2498
  %v2563 = vmax.f32 %v2435, %v2499
  %v2564 = vmax.f32 %v2436, %v2500
  %v2565 = vmax.f32 %v2437, %v2501
  %v2566 = vmax.f32 %v2438, %v2502
  %v2567 = vmax.f32 %v2439, %v2503
  %v2568 = vmax.f32 %v2440, %v2504
  %v2569 = vmax.f32 %v2441, %v2505
  %v2570 = vmax.f32 %v2442, %v2506
  %v2571 = vmax.f32 %v2443, %v2507
  %v2572 = vmax.f32 %v2444, %v2508
  %v2573 = vmax.f32 %v2445, %v2509
  %v2574 = vmax.f32 %v2446, %v2510
  %v2575 = vmax.f32 %v2447, %v2511
  %v2576 = vpack.c.bf16 %v2512, %v2512
  %v2577 = vpack.c.bf16 %v2513, %v2513
  %v2578 = vpack.c.bf16 %v2514, %v2514
  %v2579 = vpack.c.bf16 %v2515, %v2515
  %v2580 = vpack.c.bf16 %v2516, %v2516
  %v2581 = vpack.c.bf16 %v2517, %v2517
  %v2582 = vpack.c.bf16 %v2518, %v2518
  %v2583 = vpack.c.bf16 %v2519, %v2519
  %v2584 = vpack.c.bf16 %v2520, %v2520
  %v2585 = vpack.c.bf16 %v2521, %v2521
  %v2586 = vpack.c.bf16 %v2522, %v2522
  %v2587 = vpack.c.bf16 %v2523, %v2523
  %v2588 = vpack.c.bf16 %v2524, %v2524
  %v2589 = vpack.c.bf16 %v2525, %v2525
  %v2590 = vpack.c.bf16 %v2526, %v2526
  %v2591 = vpack.c.bf16 %v2527, %v2527
  %v2592 = vpack.c.bf16 %v2528, %v2528
  %v2593 = vpack.c.bf16 %v2529, %v2529
  %v2594 = vpack.c.bf16 %v2530, %v2530
  %v2595 = vpack.c.bf16 %v2531, %v2531
  %v2596 = vpack.c.bf16 %v2532, %v2532
  %v2597 = vpack.c.bf16 %v2533, %v2533
  %v2598 = vpack.c.bf16 %v2534, %v2534
  %v2599 = vpack.c.bf16 %v2535, %v2535
  %v2600 = vpack.c.bf16 %v2536, %v2536
  %v2601 = vpack.c.bf16 %v2537, %v2537
  %v2602 = vpack.c.bf16 %v2538, %v2538
  %v2603 = vpack.c.bf16 %v2539, %v2539
  %v2604 = vpack.c.bf16 %v2540, %v2540
  %v2605 = vpack.c.bf16 %v2541, %v2541
  %v2606 = vpack.c.bf16 %v2542, %v2542
  %v2607 = vpack.c.bf16 %v2543, %v2543
  %v2608 = vpack.c.bf16 %v2544, %v2544
  %v2609 = vpack.c.bf16 %v2545, %v2545
  %v2610 = vpack.c.bf16 %v2546, %v2546
  %v2611 = vpack.c.bf16 %v2547, %v2547
  %v2612 = vpack.c.bf16 %v2548, %v2548
  %v2613 = vpack.c.bf16 %v2549, %v2549
  %v2614 = vpack.c.bf16 %v2550, %v2550
  %v2615 = vpack.c.bf16 %v2551, %v2551
  %v2616 = vpack.c.bf16 %v2552, %v2552
  %v2617 = vpack.c.bf16 %v2553, %v2553
  %v2618 = vpack.c.bf16 %v2554, %v2554
  %v2619 = vpack.c.bf16 %v2555, %v2555
  %v2620 = vpack.c.bf16 %v2556, %v2556
  %v2621 = vpack.c.bf16 %v2557, %v2557
  %v2622 = vpack.c.bf16 %v2558, %v2558
  %v2623 = vpack.c.bf16 %v2559, %v2559
  %v2624 = vpack.c.bf16 %v2560, %v2560
  %v2625 = vpack.c.bf16 %v2561, %v2561
  %v2626 = vpack.c.bf16 %v2562, %v2562
  %v2627 = vpack.c.bf16 %v2563, %v2563
  %v2628 = vpack.c.bf16 %v2564, %v2564
  %v2629 = vpack.c.bf16 %v2565, %v2565
  %v2630 = vpack.c.bf16 %v2566, %v2566
  %v2631 = vpack.c.bf16 %v2567, %v2567
  %v2632 = vpack.c.bf16 %v2568, %v2568
  %v2633 = vpack.c.bf16 %v2569, %v2569
  %v2634 = vpack.c.bf16 %v2570, %v2570
  %v2635 = vpack.c.bf16 %v2571, %v2571
  %v2636 = vpack.c.bf16 %v2572, %v2572
  %v2637 = vpack.c.bf16 %v2573, %v2573
  %v2638 = vpack.c.bf16 %v2574, %v2574
  %v2639 = vpack.c.bf16 %v2575, %v2575
  %vm2640 = vcmask 57344
  %2641 = vst.msk [vmem:[%s1] sm:$0x1] %vm2640, %v2576
  %2642 = vst.msk [vmem:[%s1 + $0x1] sm:$0x1] %vm2640, %v2577
  %2643 = vst.msk [vmem:[%s1 + $0x2] sm:$0x1] %vm2640, %v2578
  %2644 = vst.msk [vmem:[%s1 + $0x3] sm:$0x1] %vm2640, %v2579
  %2645 = vst.msk [vmem:[%s1 + $0x4] sm:$0x1] %vm2640, %v2580
  %2646 = vst.msk [vmem:[%s1 + $0x5] sm:$0x1] %vm2640, %v2581
  %2647 = vst.msk [vmem:[%s1 + $0x6] sm:$0x1] %vm2640, %v2582
  %2648 = vst.msk [vmem:[%s1 + $0x7] sm:$0x1] %vm2640, %v2583
  %2649 = vst.msk [vmem:[%s1 + $0x8] sm:$0x1] %vm2640, %v2584
  %2650 = vst.msk [vmem:[%s1 + $0x9] sm:$0x1] %vm2640, %v2585
  %2651 = vst.msk [vmem:[%s1 + $0xa] sm:$0x1] %vm2640, %v2586
  %2652 = vst.msk [vmem:[%s1 + $0xb] sm:$0x1] %vm2640, %v2587
  %2653 = vst.msk [vmem:[%s1 + $0xc] sm:$0x1] %vm2640, %v2588
  %2654 = vst.msk [vmem:[%s1 + $0xd] sm:$0x1] %vm2640, %v2589
  %2655 = vst.msk [vmem:[%s1 + $0xe] sm:$0x1] %vm2640, %v2590
  %2656 = vst.msk [vmem:[%s1 + $0xf] sm:$0x1] %vm2640, %v2591
  %2657 = vst.msk [vmem:[%s1 + $0x10] sm:$0x1] %vm2640, %v2592
  %2658 = vst.msk [vmem:[%s1 + $0x11] sm:$0x1] %vm2640, %v2593
  %2659 = vst.msk [vmem:[%s1 + $0x12] sm:$0x1] %vm2640, %v2594
  %2660 = vst.msk [vmem:[%s1 + $0x13] sm:$0x1] %vm2640, %v2595
  %2661 = vst.msk [vmem:[%s1 + $0x14] sm:$0x1] %vm2640, %v2596
  %2662 = vst.msk [vmem:[%s1 + $0x15] sm:$0x1] %vm2640, %v2597
  %2663 = vst.msk [vmem:[%s1 + $0x16] sm:$0x1] %vm2640, %v2598
  %2664 = vst.msk [vmem:[%s1 + $0x17] sm:$0x1] %vm2640, %v2599
  %2665 = vst.msk [vmem:[%s1 + $0x18] sm:$0x1] %vm2640, %v2600
  %2666 = vst.msk [vmem:[%s1 + $0x19] sm:$0x1] %vm2640, %v2601
  %2667 = vst.msk [vmem:[%s1 + $0x1a] sm:$0x1] %vm2640, %v2602
  %2668 = vst.msk [vmem:[%s1 + $0x1b] sm:$0x1] %vm2640, %v2603
  %2669 = vst.msk [vmem:[%s1 + $0x1c] sm:$0x1] %vm2640, %v2604
  %2670 = vst.msk [vmem:[%s1 + $0x1d] sm:$0x1] %vm2640, %v2605
  %2671 = vst.msk [vmem:[%s1 + $0x1e] sm:$0x1] %vm2640, %v2606
  %2672 = vst.msk [vmem:[%s1 + $0x1f] sm:$0x1] %vm2640, %v2607
  %2673 = vst.msk [vmem:[%s1 + $0x20] sm:$0x1] %vm2640, %v2608
  %2674 = vst.msk [vmem:[%s1 + $0x21] sm:$0x1] %vm2640, %v2609
  %2675 = vst.msk [vmem:[%s1 + $0x22] sm:$0x1] %vm2640, %v2610
  %2676 = vst.msk [vmem:[%s1 + $0x23] sm:$0x1] %vm2640, %v2611
  %2677 = vst.msk [vmem:[%s1 + $0x24] sm:$0x1] %vm2640, %v2612
  %2678 = vst.msk [vmem:[%s1 + $0x25] sm:$0x1] %vm2640, %v2613
  %2679 = vst.msk [vmem:[%s1 + $0x26] sm:$0x1] %vm2640, %v2614
  %2680 = vst.msk [vmem:[%s1 + $0x27] sm:$0x1] %vm2640, %v2615
  %2681 = vst.msk [vmem:[%s1 + $0x28] sm:$0x1] %vm2640, %v2616
  %2682 = vst.msk [vmem:[%s1 + $0x29] sm:$0x1] %vm2640, %v2617
  %2683 = vst.msk [vmem:[%s1 + $0x2a] sm:$0x1] %vm2640, %v2618
  %2684 = vst.msk [vmem:[%s1 + $0x2b] sm:$0x1] %vm2640, %v2619
  %2685 = vst.msk [vmem:[%s1 + $0x2c] sm:$0x1] %vm2640, %v2620
  %2686 = vst.msk [vmem:[%s1 + $0x2d] sm:$0x1] %vm2640, %v2621
  %2687 = vst.msk [vmem:[%s1 + $0x2e] sm:$0x1] %vm2640, %v2622
  %2688 = vst.msk [vmem:[%s1 + $0x2f] sm:$0x1] %vm2640, %v2623
  %2689 = vst.msk [vmem:[%s1 + $0x30] sm:$0x1] %vm2640, %v2624
  %2690 = vst.msk [vmem:[%s1 + $0x31] sm:$0x1] %vm2640, %v2625
  %2691 = vst.msk [vmem:[%s1 + $0x32] sm:$0x1] %vm2640, %v2626
  %2692 = vst.msk [vmem:[%s1 + $0x33] sm:$0x1] %vm2640, %v2627
  %2693 = vst.msk [vmem:[%s1 + $0x34] sm:$0x1] %vm2640, %v2628
  %2694 = vst.msk [vmem:[%s1 + $0x35] sm:$0x1] %vm2640, %v2629
  %2695 = vst.msk [vmem:[%s1 + $0x36] sm:$0x1] %vm2640, %v2630
  %2696 = vst.msk [vmem:[%s1 + $0x37] sm:$0x1] %vm2640, %v2631
  %2697 = vst.msk [vmem:[%s1 + $0x38] sm:$0x1] %vm2640, %v2632
  %2698 = vst.msk [vmem:[%s1 + $0x39] sm:$0x1] %vm2640, %v2633
  %2699 = vst.msk [vmem:[%s1 + $0x3a] sm:$0x1] %vm2640, %v2634
  %2700 = vst.msk [vmem:[%s1 + $0x3b] sm:$0x1] %vm2640, %v2635
  %2701 = vst.msk [vmem:[%s1 + $0x3c] sm:$0x1] %vm2640, %v2636
  %2702 = vst.msk [vmem:[%s1 + $0x3d] sm:$0x1] %vm2640, %v2637
  %2703 = vst.msk [vmem:[%s1 + $0x3e] sm:$0x1] %vm2640, %v2638
  %2704 = vst.msk [vmem:[%s1 + $0x3f] sm:$0x1] %vm2640, %v2639
  // Predicated region
  $region6: #{resnet_forward.20} parent=0 // pred_check
    _
  $region7: #{resnet_forward.20} parent=0 // pred_check_branch
    %2706 = sbr.rel (0) target = $region9
  $region8: #{resnet_forward.20} parent=0 // pred_region
    _
  $region9: #{resnet_forward.20} parent=0 // pred_fallthru
    _
  // Predicated region
  $region10: #{resnet_forward.20} parent=0 // pred_check
    _
  $region11: #{resnet_forward.20} parent=0 // pred_check_branch
    %2708 = sbr.rel (0) target = $region13
  $region12: #{resnet_forward.20} parent=0 // pred_region
    _
  $region13: #{resnet_forward.20} parent=0 // pred_fallthru
    _

// kernel: resnet_forward.22
$region0: #{resnet_forward.22}
  #allocation0 [shape = 'u32[]', space=smem, size = 0x4, offset = 0x4, fixed_abs, tag = 'smem constant byte address 0x4 - core index']
  #allocation1 [shape = 'u32[72,128]{1,0:T(1,128)}', space=vmem, size = 0x9000, scoped, tag = 'internal scratch']
  %s0 = inlined_call_operand.vmem [shape: bf16[128,128], index: 0, kind: input, shape index: {}]
  %s1 = inlined_call_operand.vmem [shape: bf16[128,128], index: 1, kind: input, shape index: {}]
  %s2 = inlined_call_operand.vmem [shape: f32[1,128], index: 2, kind: input, shape index: {}]
  %s3 = inlined_call_operand.vmem [shape: bf16[128,128], index: 3, kind: input, shape index: {}]
  %s4 = inlined_call_operand.vmem [shape: bf16[128,128], index: 4, kind: output, shape index: {}]
  %s5 = sld [smem:[#allocation0]]
  $region49: #{resnet_forward.22} parent=0
    _
  %s7 = ssub.s32 1, %s5
  %s8 = scalar_select 0, %s7, %s5
  loop: start=0, step=1, limit=4
  $region2: #{resnet_forward.22} parent=0 // loop_pre_header
    _
  $region3: #{resnet_forward.22} parent=0 // loop_header
    %s10 = sphi 0, %s14
    %p11 = scmp.ge.s32.totalorder %s10, 4
    %s20 = sphi 0, %s22
    %s23 = sphi 0, %s20
    %s24 = sphi 0, %s23
    %s40 = sphi 0, %s24
    %s44 = sphi 0, %s44
    %s46 = sphi 0, %s44
    %s47 = sphi 0, %s46
    %s61 = sphi 0, %s47
    %s65 = sphi 0, %s65
    %s67 = sphi 0, %s65
    %s68 = sphi 0, %s67
    %s82 = sphi 0, %s68
    %s88 = sphi 0, %s90
    %s91 = sphi 0, %s88
    %s92 = sphi 0, %s91
    %s108 = sphi 0, %s92
    %s114 = sphi 0, %s116
    %s117 = sphi 0, %s114
    %s118 = sphi 0, %s117
    %s134 = sphi 0, %s118
  $region4: #{resnet_forward.22} parent=0 // loop_header_branch
    %13 = sbr.rel (%p11) target = $region8
  $region5: #{resnet_forward.22} parent=0 // loop_body
    %s15 = ssub.s32 %s10, 1
    %s16 = ssub.s32 %s10, 2
    %s17 = sadd.s32 %s10, 1
    %s18 = ssub.s32 %s10, %s17
    %p19 = scmp.eq.s32.totalorder %s18, 0
    %s21 = sadd.s32 %s20, 1
    %s22 = scalar_select %p19, %s20, %s21
    %p25 = pneg %p19
    %p26 = scmp.eq.s32.totalorder %s10, 1
    %p27 = por %p25, %p26
    %p28 = scmp.ne.s32.totalorder %s20, %s23
    %p29 = scmp.eq.s32.totalorder %s10, 0
    %p30 = por %p28, %p29
    %p31 = scmp.ne.s32.totalorder %s20, %s23
    %p32 = scmp.eq.s32.totalorder %s15, 1
    %p33 = por %p31, %p32
    %p34 = scmp.ne.s32.totalorder %s23, %s24
    %p35 = scmp.eq.s32.totalorder %s15, 0
    %p36 = por %p34, %p35
    %p37 = scmp.ne.s32.totalorder %s23, %s24
    %p38 = scmp.eq.s32.totalorder %s16, 1
    %p39 = por %p37, %p38
    %p41 = scmp.ne.s32.totalorder %s24, %s40
    %p42 = scmp.eq.s32.totalorder %s16, 0
    %p43 = por %p41, %p42
    %s45 = sadd.s32 %s44, 1
    %p48 = scmp.eq.s32.totalorder %s10, 1
    %p49 = scmp.ne.s32.totalorder %s44, %s46
    %p50 = scmp.eq.s32.totalorder %s10, 0
    %p51 = por %p49, %p50
    %p52 = scmp.ne.s32.totalorder %s44, %s46
    %p53 = scmp.eq.s32.totalorder %s15, 1
    %p54 = por %p52, %p53
    %p55 = scmp.ne.s32.totalorder %s46, %s47
    %p56 = scmp.eq.s32.totalorder %s15, 0
    %p57 = por %p55, %p56
    %p58 = scmp.ne.s32.totalorder %s46, %s47
    %p59 = scmp.eq.s32.totalorder %s16, 1
    %p60 = por %p58, %p59
    %p62 = scmp.ne.s32.totalorder %s47, %s61
    %p63 = scmp.eq.s32.totalorder %s16, 0
    %p64 = por %p62, %p63
    %s66 = sadd.s32 %s65, 1
    %p69 = scmp.eq.s32.totalorder %s10, 1
    %p70 = scmp.ne.s32.totalorder %s65, %s67
    %p71 = scmp.eq.s32.totalorder %s10, 0
    %p72 = por %p70, %p71
    %p73 = scmp.ne.s32.totalorder %s65, %s67
    %p74 = scmp.eq.s32.totalorder %s15, 1
    %p75 = por %p73, %p74
    %p76 = scmp.ne.s32.totalorder %s67, %s68
    %p77 = scmp.eq.s32.totalorder %s15, 0
    %p78 = por %p76, %p77
    %p79 = scmp.ne.s32.totalorder %s67, %s68
    %p80 = scmp.eq.s32.totalorder %s16, 1
    %p81 = por %p79, %p80
    %p83 = scmp.ne.s32.totalorder %s68, %s82
    %p84 = scmp.eq.s32.totalorder %s16, 0
    %p85 = por %p83, %p84
    %s86 = ssub.s32 %s10, %s17
    %p87 = scmp.eq.s32.totalorder %s86, 0
    %s89 = sadd.s32 %s88, 1
    %s90 = scalar_select %p87, %s88, %s89
    %p93 = pneg %p87
    %p94 = scmp.eq.s32.totalorder %s10, 1
    %p95 = por %p93, %p94
    %p96 = scmp.ne.s32.totalorder %s88, %s91
    %p97 = scmp.eq.s32.totalorder %s10, 0
    %p98 = por %p96, %p97
    %p99 = scmp.ne.s32.totalorder %s88, %s91
    %p100 = scmp.eq.s32.totalorder %s15, 1
    %p101 = por %p99, %p100
    %p102 = scmp.ne.s32.totalorder %s91, %s92
    %p103 = scmp.eq.s32.totalorder %s15, 0
    %p104 = por %p102, %p103
    %p105 = scmp.ne.s32.totalorder %s91, %s92
    %p106 = scmp.eq.s32.totalorder %s16, 1
    %p107 = por %p105, %p106
    %p109 = scmp.ne.s32.totalorder %s92, %s108
    %p110 = scmp.eq.s32.totalorder %s16, 0
    %p111 = por %p109, %p110
    %s112 = ssub.s32 %s10, %s17
    %p113 = scmp.eq.s32.totalorder %s112, 0
    %s115 = sadd.s32 %s114, 1
    %s116 = scalar_select %p113, %s114, %s115
    %p119 = pneg %p113
    %p120 = scmp.eq.s32.totalorder %s10, 1
    %p121 = por %p119, %p120
    %p122 = scmp.ne.s32.totalorder %s114, %s117
    %p123 = scmp.eq.s32.totalorder %s10, 0
    %p124 = por %p122, %p123
    %p125 = scmp.ne.s32.totalorder %s114, %s117
    %p126 = scmp.eq.s32.totalorder %s15, 1
    %p127 = por %p125, %p126
    %p128 = scmp.ne.s32.totalorder %s117, %s118
    %p129 = scmp.eq.s32.totalorder %s15, 0
    %p130 = por %p128, %p129
    %p131 = scmp.ne.s32.totalorder %s117, %s118
    %p132 = scmp.eq.s32.totalorder %s16, 1
    %p133 = por %p131, %p132
    %p135 = scmp.ne.s32.totalorder %s118, %s134
    %p136 = scmp.eq.s32.totalorder %s16, 0
    %p137 = por %p135, %p136
    %p138 = scmp.le.s32.totalorder 1, %s10
    %p139 = scmp.lt.s32.totalorder %s10, 3
    %p140 = pnand %p138, %p139
    %p141 = pneg %p140
    // Predicated region
    $region9: #{resnet_forward.22} parent=5 // pred_check
      _
    $region10: #{resnet_forward.22} parent=5 // pred_check_branch
      %143 = sbr.rel (%p140) target = $region12
    $region11: #{resnet_forward.22} parent=5 // pred_region
      %s144 = ssub.s32 %s10, 1
      // Predicated region
      $region13: #{resnet_forward.22} parent=11 // pred_check
        %p145 = pneg %p57
      $region14: #{resnet_forward.22} parent=11 // pred_check_branch
        %147 = sbr.rel (%p145) target = $region16
      $region15: #{resnet_forward.22} parent=11 // pred_region
        _
      $region16: #{resnet_forward.22} parent=11 // pred_fallthru
        _
      // Predicated region
      $region17: #{resnet_forward.22} parent=11 // pred_check
        %p148 = pneg %p78
      $region18: #{resnet_forward.22} parent=11 // pred_check_branch
        %150 = sbr.rel (%p148) target = $region20
      $region19: #{resnet_forward.22} parent=11 // pred_region
        _
      $region20: #{resnet_forward.22} parent=11 // pred_fallthru
        _
    $region12: #{resnet_forward.22} parent=5 // pred_fallthru
      _
    %p151 = scmp.lt.s32.totalorder %s10, 2
    // Predicated region
    $region21: #{resnet_forward.22} parent=5 // pred_check
      %p152 = pneg %p151
    $region22: #{resnet_forward.22} parent=5 // pred_check_branch
      %154 = sbr.rel (%p152) target = $region24
    $region23: #{resnet_forward.22} parent=5 // pred_region
      // Predicated region
      $region25: #{resnet_forward.22} parent=23 // pred_check
        %p155 = pneg %p30
      $region26: #{resnet_forward.22} parent=23 // pred_check_branch
        %157 = sbr.rel (%p155) target = $region28
      $region27: #{resnet_forward.22} parent=23 // pred_region
        %s158 = smul.u32 8, %s10
        %p159 = scmp.lt.s32.totalorder %s158, 15
        %s160 = scalar_select %p159, %s158, 15
        %s161 = smul.addr %s160, 4
        %s162 = scalar_lea.vmem %s0, %s161
        %s163 = smul.u32 8, %s10
      $region28: #{resnet_forward.22} parent=23 // pred_fallthru
        _
      // Predicated region
      $region29: #{resnet_forward.22} parent=23 // pred_check
        %p164 = pneg %p98
      $region30: #{resnet_forward.22} parent=23 // pred_check_branch
        %166 = sbr.rel (%p164) target = $region32
      $region31: #{resnet_forward.22} parent=23 // pred_region
        %s167 = smul.u32 8, %s10
        %p168 = scmp.lt.s32.totalorder %s167, 15
        %s169 = scalar_select %p168, %s167, 15
        %s170 = smul.addr %s169, 4
        %s171 = scalar_lea.vmem %s3, %s170
        %s172 = smul.u32 8, %s10
      $region32: #{resnet_forward.22} parent=23 // pred_fallthru
        _
    $region24: #{resnet_forward.22} parent=5 // pred_fallthru
      _
    %p173 = scmp.le.s32.totalorder 1, %s10
    %p174 = scmp.lt.s32.totalorder %s10, 3
    %p175 = pnand %p173, %p174
    %p176 = pneg %p175
    // Predicated region
    $region33: #{resnet_forward.22} parent=5 // pred_check
      _
    $region34: #{resnet_forward.22} parent=5 // pred_check_branch
      %178 = sbr.rel (%p175) target = $region36
    $region35: #{resnet_forward.22} parent=5 // pred_region
      %s179 = ssub.s32 %s10, 1
      %s180 = smul.u32 8, %s15
      %p181 = scmp.lt.s32.totalorder %s180, 15
      %s182 = scalar_select %p181, %s180, 15
      %s183 = smul.addr %s182, 4
      %s184 = scalar_lea.vmem %s0, %s183
      %p185 = pneg %p36
      %p186 = pneg %p33
      %p187 = pneg %p57
      %p188 = pneg %p54
      %p189 = pneg %p78
      %p190 = pneg %p75
      %s191 = smul.u32 8, %s15
      %p192 = scmp.lt.s32.totalorder %s191, 15
      %s193 = scalar_select %p192, %s191, 15
      %s194 = smul.addr %s193, 4
      %s195 = scalar_lea.vmem %s3, %s194
      %p196 = pneg %p104
      %p197 = pneg %p101
      %p198 = pneg %p130
      %p199 = pneg %p127
      %s200 = smul.u32 8, %s15
      %p201 = scmp.lt.s32.totalorder %s200, 15
      %s202 = scalar_select %p201, %s200, 15
      %s203 = smul.addr %s202, 4
      %s204 = scalar_lea.vmem %s4, %s203
      %s205 = smul.u32 8, %s15
      %p206 = scmp.lt.s32.totalorder %s205, 15
      %s207 = scalar_select %p206, %s205, 15
      %s208 = smul.addr %s207, 4
      %s209 = scalar_lea.vmem %s0, %s208
      %s210 = smul.u32 8, %s15
      %s211 = smul.u32 8, %s15
      %p212 = scmp.lt.s32.totalorder %s211, 15
      %s213 = scalar_select %p212, %s211, 15
      %s214 = smul.addr %s213, 4
      %s215 = scalar_lea.vmem %s3, %s214
      %s216 = smul.u32 8, %s15
      %s217 = smul.u32 8, %s15
      %p218 = scmp.lt.s32.totalorder %s217, 15
      %s219 = scalar_select %p218, %s217, 15
      %s220 = smul.addr %s219, 4
      %s221 = scalar_lea.vmem %s4, %s220
      %s222 = smul.u32 8, %s15
      %v223 = vld [vmem:[%s209] sm:$0xf]
      %v224 = vld [vmem:[%s209 + $0x4] sm:$0xf]
      %v225 = vld [vmem:[%s209 + $0x8] sm:$0xf]
      %v226 = vld [vmem:[%s209 + $0xc] sm:$0xf]
      %v227 = vld [vmem:[%s209 + $0x10] sm:$0xf]
      %v228 = vld [vmem:[%s209 + $0x14] sm:$0xf]
      %v229 = vld [vmem:[%s209 + $0x18] sm:$0xf]
      %v230 = vld [vmem:[%s209 + $0x1c] sm:$0xf]
      %v231 = vld [vmem:[%s1] sm:$0xf]
      %v232 = vld [vmem:[%s1 + $0x4] sm:$0xf]
      %v233 = vld [vmem:[%s1 + $0x8] sm:$0xf]
      %v234 = vld [vmem:[%s1 + $0xc] sm:$0xf]
      %v235 = vld [vmem:[%s1 + $0x10] sm:$0xf]
      %v236 = vld [vmem:[%s1 + $0x14] sm:$0xf]
      %v237 = vld [vmem:[%s1 + $0x18] sm:$0xf]
      %v238 = vld [vmem:[%s1 + $0x1c] sm:$0xf]
      %v239 = vld [vmem:[%s1 + $0x20] sm:$0xf]
      %v240 = vld [vmem:[%s1 + $0x24] sm:$0xf]
      %v241 = vld [vmem:[%s1 + $0x28] sm:$0xf]
      %v242 = vld [vmem:[%s1 + $0x2c] sm:$0xf]
      %v243 = vld [vmem:[%s1 + $0x30] sm:$0xf]
      %v244 = vld [vmem:[%s1 + $0x34] sm:$0xf]
      %v245 = vld [vmem:[%s1 + $0x38] sm:$0xf]
      %v246 = vld [vmem:[%s1 + $0x3c] sm:$0xf]
      %v247 = vld [vmem:[%s2] sm:$0x1]
      %v249 = vperm.slane %v247, 0
      %v259 = vunpack.c.l.b16 %v223
      %v260 = vunpack.c.l.b16 %v224
      %v261 = vunpack.c.l.b16 %v225
      %v262 = vunpack.c.l.b16 %v226
      %v263 = vunpack.c.l.b16 %v227
      %v264 = vunpack.c.l.b16 %v228
      %v265 = vunpack.c.l.b16 %v229
      %v266 = vunpack.c.l.b16 %v230
      %v267 = vpack.c.b16 %v260, %v259
      %v268 = vpack.c.b16 %v262, %v261
      %v269 = vpack.c.b16 %v264, %v263
      %v270 = vpack.c.b16 %v266, %v265
      %v291 = vunpack.c.l.b16 %v231
      %v292 = vunpack.c.l.b16 %v232
      %v293 = vunpack.c.l.b16 %v233
      %v294 = vunpack.c.l.b16 %v234
      %v295 = vunpack.c.l.b16 %v235
      %v296 = vunpack.c.l.b16 %v236
      %v297 = vunpack.c.l.b16 %v237
      %v298 = vunpack.c.l.b16 %v238
      %v299 = vunpack.c.l.b16 %v239
      %v300 = vunpack.c.l.b16 %v240
      %v301 = vunpack.c.l.b16 %v241
      %v302 = vunpack.c.l.b16 %v242
      %v303 = vunpack.c.l.b16 %v243
      %v304 = vunpack.c.l.b16 %v244
      %v305 = vunpack.c.l.b16 %v245
      %v306 = vunpack.c.l.b16 %v246
      %v307 = vpack.c.b16 %v292, %v291
      %v308 = vpack.c.b16 %v294, %v293
      %v309 = vpack.c.b16 %v296, %v295
      %v310 = vpack.c.b16 %v298, %v297
      %v311 = vpack.c.b16 %v300, %v299
      %v312 = vpack.c.b16 %v302, %v301
      %v313 = vpack.c.b16 %v304, %v303
      %v314 = vpack.c.b16 %v306, %v305
      %323 = vmatpush.bf16.msra.mxu0 %v314
      %324 = vmatpush.bf16.msra.mxu0 %v313
      %325 = vmatpush.bf16.msra.mxu0 %v312
      %326 = vmatpush.bf16.msra.mxu0 %v311
      %327 = vmatpush.bf16.msra.mxu0 %v310
      %328 = vmatpush.bf16.msra.mxu0 %v309
      %329 = vmatpush.bf16.msra.mxu0 %v308
      %330 = vmatpush.bf16.msra.mxu0 %v307
      %331 = vmatmul.bf16.gmra.mxu0 %v267
      %v332 = vpop.f32.mrf.mxu0
      %v333 = vadd.f32 %v249, %v332
      %v334 = vpop.f32.mrf.mxu0
      %v335 = vadd.f32 %v249, %v334
      %336 = vmatmul.bf16.gmra.mxu0 %v268
      %v337 = vpop.f32.mrf.mxu0
      %v338 = vadd.f32 %v249, %v337
      %v339 = vpop.f32.mrf.mxu0
      %v340 = vadd.f32 %v249, %v339
      %341 = vmatmul.bf16.gmra.mxu0 %v269
      %v342 = vpop.f32.mrf.mxu0
      %v343 = vadd.f32 %v249, %v342
      %v344 = vpop.f32.mrf.mxu0
      %v345 = vadd.f32 %v249, %v344
      %346 = vmatmul.bf16.gmra.mxu0 %v270
      %v347 = vpop.f32.mrf.mxu0
      %v348 = vadd.f32 %v249, %v347
      %v349 = vpop.f32.mrf.mxu0
      %v350 = vadd.f32 %v249, %v349
      %351 = vdwg.mxu0
      %v352 = vld [vmem:[%s215] sm:$0xf]
      %v353 = vld [vmem:[%s215 + $0x4] sm:$0xf]
      %v354 = vld [vmem:[%s215 + $0x8] sm:$0xf]
      %v355 = vld [vmem:[%s215 + $0xc] sm:$0xf]
      %v356 = vld [vmem:[%s215 + $0x10] sm:$0xf]
      %v357 = vld [vmem:[%s215 + $0x14] sm:$0xf]
      %v358 = vld [vmem:[%s215 + $0x18] sm:$0xf]
      %v359 = vld [vmem:[%s215 + $0x1c] sm:$0xf]
      %v360 = vunpack.c.l.bf16 %v352
      %v361 = vunpack.c.l.bf16 %v353
      %v362 = vunpack.c.l.bf16 %v354
      %v363 = vunpack.c.l.bf16 %v355
      %v364 = vunpack.c.l.bf16 %v356
      %v365 = vunpack.c.l.bf16 %v357
      %v366 = vunpack.c.l.bf16 %v358
      %v367 = vunpack.c.l.bf16 %v359
      %v368 = vadd.f32 %v333, %v360
      %v369 = vadd.f32 %v335, %v361
      %v370 = vadd.f32 %v338, %v362
      %v371 = vadd.f32 %v340, %v363
      %v372 = vadd.f32 %v343, %v364
      %v373 = vadd.f32 %v345, %v365
      %v374 = vadd.f32 %v348, %v366
      %v375 = vadd.f32 %v350, %v367
      %v376 = vmax.f32 %v368, 0.0
      %v377 = vmax.f32 %v369, 0.0
      %v378 = vmax.f32 %v370, 0.0
      %v379 = vmax.f32 %v371, 0.0
      %v380 = vmax.f32 %v372, 0.0
      %v381 = vmax.f32 %v373, 0.0
      %v382 = vmax.f32 %v374, 0.0
      %v383 = vmax.f32 %v375, 0.0
      %v384 = vpack.c.bf16 %v376, %v376
      %v385 = vpack.c.bf16 %v377, %v377
      %v386 = vpack.c.bf16 %v378, %v378
      %v387 = vpack.c.bf16 %v379, %v379
      %v388 = vpack.c.bf16 %v380, %v380
      %v389 = vpack.c.bf16 %v381, %v381
      %v390 = vpack.c.bf16 %v382, %v382
      %v391 = vpack.c.bf16 %v383, %v383
      %392 = vst [vmem:[%s221] sm:$0xf] %v384
      %393 = vst [vmem:[%s221 + $0x4] sm:$0xf] %v385
      %394 = vst [vmem:[%s221 + $0x8] sm:$0xf] %v386
      %395 = vst [vmem:[%s221 + $0xc] sm:$0xf] %v387
      %396 = vst [vmem:[%s221 + $0x10] sm:$0xf] %v388
      %397 = vst [vmem:[%s221 + $0x14] sm:$0xf] %v389
      %398 = vst [vmem:[%s221 + $0x18] sm:$0xf] %v390
      %399 = vst [vmem:[%s221 + $0x1c] sm:$0xf] %v391
      %s400 = smul.u32 8, %s15
      %p401 = scmp.lt.s32.totalorder %s400, 15
      %s402 = scalar_select %p401, %s400, 15
      %s403 = smul.addr %s402, 4
      %s404 = scalar_lea.vmem %s4, %s403
      // Predicated region
      $region37: #{resnet_forward.22} parent=35 // pred_check
        %p405 = pneg %p127
      $region38: #{resnet_forward.22} parent=35 // pred_check_branch
        %407 = sbr.rel (%p405) target = $region40
      $region39: #{resnet_forward.22} parent=35 // pred_region
        %s408 = smul.u32 8, %s15
      $region40: #{resnet_forward.22} parent=35 // pred_fallthru
        _
    $region36: #{resnet_forward.22} parent=5 // pred_fallthru
      _
    %p409 = scmp.le.s32.totalorder 2, %s10
    // Predicated region
    $region41: #{resnet_forward.22} parent=5 // pred_check
      %p410 = pneg %p409
    $region42: #{resnet_forward.22} parent=5 // pred_check_branch
      %412 = sbr.rel (%p410) target = $region44
    $region43: #{resnet_forward.22} parent=5 // pred_region
      %s413 = ssub.s32 %s10, 2
      // Predicated region
      $region45: #{resnet_forward.22} parent=43 // pred_check
        %p414 = pneg %p133
      $region46: #{resnet_forward.22} parent=43 // pred_check_branch
        %416 = sbr.rel (%p414) target = $region48
      $region47: #{resnet_forward.22} parent=43 // pred_region
        %s417 = smul.u32 8, %s16
        %p418 = scmp.lt.s32.totalorder %s417, 15
        %s419 = scalar_select %p418, %s417, 15
        %s420 = smul.addr %s419, 4
        %s421 = scalar_lea.vmem %s4, %s420
      $region48: #{resnet_forward.22} parent=43 // pred_fallthru
        _
    $region44: #{resnet_forward.22} parent=5 // pred_fallthru
      _
  $region6: #{resnet_forward.22} parent=0 // loop_footer
    %s14 = sadd.s32 1, %s10
  $region7: #{resnet_forward.22} parent=0 // loop_footer_branch
    %9 = sbr.rel target = $region3
  $region8: #{resnet_forward.22} parent=0 // loop_exit
    _

// kernel: resnet_forward.25
$region0: #{resnet_forward.25}
  #allocation0 [shape = 'u32[]', space=smem, size = 0x4, offset = 0x4, fixed_abs, tag = 'smem constant byte address 0x4 - core index']
  #allocation1 [shape = 'u32[72,128]{1,0:T(1,128)}', space=vmem, size = 0x9000, scoped, tag = 'internal scratch']
  %s0 = inlined_call_operand.vmem [shape: bf16[32,128], index: 0, kind: input, shape index: {}]
  %s1 = inlined_call_operand.vmem [shape: bf16[128,128], index: 1, kind: input, shape index: {}]
  %s2 = inlined_call_operand.vmem [shape: f32[1,128], index: 2, kind: input, shape index: {}]
  %s3 = inlined_call_operand.vmem [shape: bf16[32,128], index: 3, kind: output, shape index: {}]
  %s4 = sld [smem:[#allocation0]]
  $region45: #{resnet_forward.25} parent=0
    _
  %s6 = ssub.s32 1, %s4
  %s7 = scalar_select 0, %s6, %s4
  loop: start=0, step=1, limit=4
  $region2: #{resnet_forward.25} parent=0 // loop_pre_header
    _
  $region3: #{resnet_forward.25} parent=0 // loop_header
    %s9 = sphi 0, %s13
    %p10 = scmp.ge.s32.totalorder %s9, 4
    %s19 = sphi 0, %s21
    %s22 = sphi 0, %s19
    %s23 = sphi 0, %s22
    %s39 = sphi 0, %s23
    %s43 = sphi 0, %s43
    %s45 = sphi 0, %s43
    %s46 = sphi 0, %s45
    %s60 = sphi 0, %s46
    %s64 = sphi 0, %s64
    %s66 = sphi 0, %s64
    %s67 = sphi 0, %s66
    %s81 = sphi 0, %s67
    %s87 = sphi 0, %s89
    %s90 = sphi 0, %s87
    %s91 = sphi 0, %s90
    %s107 = sphi 0, %s91
  $region4: #{resnet_forward.25} parent=0 // loop_header_branch
    %12 = sbr.rel (%p10) target = $region8
  $region5: #{resnet_forward.25} parent=0 // loop_body
    %s14 = ssub.s32 %s9, 1
    %s15 = ssub.s32 %s9, 2
    %s16 = sadd.s32 %s9, 1
    %s17 = ssub.s32 %s9, %s16
    %p18 = scmp.eq.s32.totalorder %s17, 0
    %s20 = sadd.s32 %s19, 1
    %s21 = scalar_select %p18, %s19, %s20
    %p24 = pneg %p18
    %p25 = scmp.eq.s32.totalorder %s9, 1
    %p26 = por %p24, %p25
    %p27 = scmp.ne.s32.totalorder %s19, %s22
    %p28 = scmp.eq.s32.totalorder %s9, 0
    %p29 = por %p27, %p28
    %p30 = scmp.ne.s32.totalorder %s19, %s22
    %p31 = scmp.eq.s32.totalorder %s14, 1
    %p32 = por %p30, %p31
    %p33 = scmp.ne.s32.totalorder %s22, %s23
    %p34 = scmp.eq.s32.totalorder %s14, 0
    %p35 = por %p33, %p34
    %p36 = scmp.ne.s32.totalorder %s22, %s23
    %p37 = scmp.eq.s32.totalorder %s15, 1
    %p38 = por %p36, %p37
    %p40 = scmp.ne.s32.totalorder %s23, %s39
    %p41 = scmp.eq.s32.totalorder %s15, 0
    %p42 = por %p40, %p41
    %s44 = sadd.s32 %s43, 1
    %p47 = scmp.eq.s32.totalorder %s9, 1
    %p48 = scmp.ne.s32.totalorder %s43, %s45
    %p49 = scmp.eq.s32.totalorder %s9, 0
    %p50 = por %p48, %p49
    %p51 = scmp.ne.s32.totalorder %s43, %s45
    %p52 = scmp.eq.s32.totalorder %s14, 1
    %p53 = por %p51, %p52
    %p54 = scmp.ne.s32.totalorder %s45, %s46
    %p55 = scmp.eq.s32.totalorder %s14, 0
    %p56 = por %p54, %p55
    %p57 = scmp.ne.s32.totalorder %s45, %s46
    %p58 = scmp.eq.s32.totalorder %s15, 1
    %p59 = por %p57, %p58
    %p61 = scmp.ne.s32.totalorder %s46, %s60
    %p62 = scmp.eq.s32.totalorder %s15, 0
    %p63 = por %p61, %p62
    %s65 = sadd.s32 %s64, 1
    %p68 = scmp.eq.s32.totalorder %s9, 1
    %p69 = scmp.ne.s32.totalorder %s64, %s66
    %p70 = scmp.eq.s32.totalorder %s9, 0
    %p71 = por %p69, %p70
    %p72 = scmp.ne.s32.totalorder %s64, %s66
    %p73 = scmp.eq.s32.totalorder %s14, 1
    %p74 = por %p72, %p73
    %p75 = scmp.ne.s32.totalorder %s66, %s67
    %p76 = scmp.eq.s32.totalorder %s14, 0
    %p77 = por %p75, %p76
    %p78 = scmp.ne.s32.totalorder %s66, %s67
    %p79 = scmp.eq.s32.totalorder %s15, 1
    %p80 = por %p78, %p79
    %p82 = scmp.ne.s32.totalorder %s67, %s81
    %p83 = scmp.eq.s32.totalorder %s15, 0
    %p84 = por %p82, %p83
    %s85 = ssub.s32 %s9, %s16
    %p86 = scmp.eq.s32.totalorder %s85, 0
    %s88 = sadd.s32 %s87, 1
    %s89 = scalar_select %p86, %s87, %s88
    %p92 = pneg %p86
    %p93 = scmp.eq.s32.totalorder %s9, 1
    %p94 = por %p92, %p93
    %p95 = scmp.ne.s32.totalorder %s87, %s90
    %p96 = scmp.eq.s32.totalorder %s9, 0
    %p97 = por %p95, %p96
    %p98 = scmp.ne.s32.totalorder %s87, %s90
    %p99 = scmp.eq.s32.totalorder %s14, 1
    %p100 = por %p98, %p99
    %p101 = scmp.ne.s32.totalorder %s90, %s91
    %p102 = scmp.eq.s32.totalorder %s14, 0
    %p103 = por %p101, %p102
    %p104 = scmp.ne.s32.totalorder %s90, %s91
    %p105 = scmp.eq.s32.totalorder %s15, 1
    %p106 = por %p104, %p105
    %p108 = scmp.ne.s32.totalorder %s91, %s107
    %p109 = scmp.eq.s32.totalorder %s15, 0
    %p110 = por %p108, %p109
    %p111 = scmp.le.s32.totalorder 1, %s9
    %p112 = scmp.lt.s32.totalorder %s9, 3
    %p113 = pnand %p111, %p112
    %p114 = pneg %p113
    // Predicated region
    $region9: #{resnet_forward.25} parent=5 // pred_check
      _
    $region10: #{resnet_forward.25} parent=5 // pred_check_branch
      %116 = sbr.rel (%p113) target = $region12
    $region11: #{resnet_forward.25} parent=5 // pred_region
      %s117 = ssub.s32 %s9, 1
      // Predicated region
      $region13: #{resnet_forward.25} parent=11 // pred_check
        %p118 = pneg %p56
      $region14: #{resnet_forward.25} parent=11 // pred_check_branch
        %120 = sbr.rel (%p118) target = $region16
      $region15: #{resnet_forward.25} parent=11 // pred_region
        _
      $region16: #{resnet_forward.25} parent=11 // pred_fallthru
        _
      // Predicated region
      $region17: #{resnet_forward.25} parent=11 // pred_check
        %p121 = pneg %p77
      $region18: #{resnet_forward.25} parent=11 // pred_check_branch
        %123 = sbr.rel (%p121) target = $region20
      $region19: #{resnet_forward.25} parent=11 // pred_region
        _
      $region20: #{resnet_forward.25} parent=11 // pred_fallthru
        _
    $region12: #{resnet_forward.25} parent=5 // pred_fallthru
      _
    %p124 = scmp.lt.s32.totalorder %s9, 2
    // Predicated region
    $region21: #{resnet_forward.25} parent=5 // pred_check
      %p125 = pneg %p124
    $region22: #{resnet_forward.25} parent=5 // pred_check_branch
      %127 = sbr.rel (%p125) target = $region24
    $region23: #{resnet_forward.25} parent=5 // pred_region
      // Predicated region
      $region25: #{resnet_forward.25} parent=23 // pred_check
        %p128 = pneg %p29
      $region26: #{resnet_forward.25} parent=23 // pred_check_branch
        %130 = sbr.rel (%p128) target = $region28
      $region27: #{resnet_forward.25} parent=23 // pred_region
        %s131 = smul.u32 2, %s9
        %p132 = scmp.lt.s32.totalorder %s131, 3
        %s133 = scalar_select %p132, %s131, 3
        %s134 = smul.addr %s133, 4
        %s135 = scalar_lea.vmem %s0, %s134
        %s136 = smul.u32 2, %s9
      $region28: #{resnet_forward.25} parent=23 // pred_fallthru
        _
    $region24: #{resnet_forward.25} parent=5 // pred_fallthru
      _
    %p137 = scmp.le.s32.totalorder 1, %s9
    %p138 = scmp.lt.s32.totalorder %s9, 3
    %p139 = pnand %p137, %p138
    %p140 = pneg %p139
    // Predicated region
    $region29: #{resnet_forward.25} parent=5 // pred_check
      _
    $region30: #{resnet_forward.25} parent=5 // pred_check_branch
      %142 = sbr.rel (%p139) target = $region32
    $region31: #{resnet_forward.25} parent=5 // pred_region
      %s143 = ssub.s32 %s9, 1
      %s144 = smul.u32 2, %s14
      %p145 = scmp.lt.s32.totalorder %s144, 3
      %s146 = scalar_select %p145, %s144, 3
      %s147 = smul.addr %s146, 4
      %s148 = scalar_lea.vmem %s0, %s147
      %p149 = pneg %p35
      %p150 = pneg %p32
      %p151 = pneg %p56
      %p152 = pneg %p53
      %p153 = pneg %p77
      %p154 = pneg %p74
      %p155 = pneg %p103
      %p156 = pneg %p100
      %s157 = smul.u32 2, %s14
      %p158 = scmp.lt.s32.totalorder %s157, 3
      %s159 = scalar_select %p158, %s157, 3
      %s160 = smul.addr %s159, 4
      %s161 = scalar_lea.vmem %s3, %s160
      %s162 = smul.u32 2, %s14
      %p163 = scmp.lt.s32.totalorder %s162, 3
      %s164 = scalar_select %p163, %s162, 3
      %s165 = smul.addr %s164, 4
      %s166 = scalar_lea.vmem %s0, %s165
      %s167 = smul.u32 2, %s14
      %s168 = smul.u32 2, %s14
      %p169 = scmp.lt.s32.totalorder %s168, 3
      %s170 = scalar_select %p169, %s168, 3
      %s171 = smul.addr %s170, 4
      %s172 = scalar_lea.vmem %s3, %s171
      %s173 = smul.u32 2, %s14
      %v174 = vld [vmem:[%s166] sm:$0xf]
      %v175 = vld [vmem:[%s166 + $0x4] sm:$0xf]
      %v176 = vld [vmem:[%s1] sm:$0xf]
      %v177 = vld [vmem:[%s1 + $0x4] sm:$0xf]
      %v178 = vld [vmem:[%s1 + $0x8] sm:$0xf]
      %v179 = vld [vmem:[%s1 + $0xc] sm:$0xf]
      %v180 = vld [vmem:[%s1 + $0x10] sm:$0xf]
      %v181 = vld [vmem:[%s1 + $0x14] sm:$0xf]
      %v182 = vld [vmem:[%s1 + $0x18] sm:$0xf]
      %v183 = vld [vmem:[%s1 + $0x1c] sm:$0xf]
      %v184 = vld [vmem:[%s1 + $0x20] sm:$0xf]
      %v185 = vld [vmem:[%s1 + $0x24] sm:$0xf]
      %v186 = vld [vmem:[%s1 + $0x28] sm:$0xf]
      %v187 = vld [vmem:[%s1 + $0x2c] sm:$0xf]
      %v188 = vld [vmem:[%s1 + $0x30] sm:$0xf]
      %v189 = vld [vmem:[%s1 + $0x34] sm:$0xf]
      %v190 = vld [vmem:[%s1 + $0x38] sm:$0xf]
      %v191 = vld [vmem:[%s1 + $0x3c] sm:$0xf]
      %v192 = vld [vmem:[%s2] sm:$0x1]
      %v194 = vperm.slane %v192, 0
      %v198 = vunpack.c.l.b16 %v174
      %v199 = vunpack.c.l.b16 %v175
      %v200 = vpack.c.b16 %v199, %v198
      %v218 = vunpack.c.l.b16 %v176
      %v219 = vunpack.c.l.b16 %v177
      %v220 = vunpack.c.l.b16 %v178
      %v221 = vunpack.c.l.b16 %v179
      %v222 = vunpack.c.l.b16 %v180
      %v223 = vunpack.c.l.b16 %v181
      %v224 = vunpack.c.l.b16 %v182
      %v225 = vunpack.c.l.b16 %v183
      %v226 = vunpack.c.l.b16 %v184
      %v227 = vunpack.c.l.b16 %v185
      %v228 = vunpack.c.l.b16 %v186
      %v229 = vunpack.c.l.b16 %v187
      %v230 = vunpack.c.l.b16 %v188
      %v231 = vunpack.c.l.b16 %v189
      %v232 = vunpack.c.l.b16 %v190
      %v233 = vunpack.c.l.b16 %v191
      %v234 = vpack.c.b16 %v219, %v218
      %v235 = vpack.c.b16 %v221, %v220
      %v236 = vpack.c.b16 %v223, %v222
      %v237 = vpack.c.b16 %v225, %v224
      %v238 = vpack.c.b16 %v227, %v226
      %v239 = vpack.c.b16 %v229, %v228
      %v240 = vpack.c.b16 %v231, %v230
      %v241 = vpack.c.b16 %v233, %v232
      %250 = vmatpush.bf16.msra.mxu0 %v241
      %251 = vmatpush.bf16.msra.mxu0 %v240
      %252 = vmatpush.bf16.msra.mxu0 %v239
      %253 = vmatpush.bf16.msra.mxu0 %v238
      %254 = vmatpush.bf16.msra.mxu0 %v237
      %255 = vmatpush.bf16.msra.mxu0 %v236
      %256 = vmatpush.bf16.msra.mxu0 %v235
      %257 = vmatpush.bf16.msra.mxu0 %v234
      %258 = vmatmul.bf16.gmra.mxu0 %v200
      %v259 = vpop.f32.mrf.mxu0
      %v260 = vadd.f32 %v194, %v259
      %v261 = vpop.f32.mrf.mxu0
      %v262 = vadd.f32 %v194, %v261
      %263 = vdwg.mxu0
      %v264 = vmax.f32 %v260, 0.0
      %v265 = vmax.f32 %v262, 0.0
      %v266 = vpack.c.bf16 %v264, %v264
      %v267 = vpack.c.bf16 %v265, %v265
      %268 = vst [vmem:[%s172] sm:$0xf] %v266
      %269 = vst [vmem:[%s172 + $0x4] sm:$0xf] %v267
      %s270 = smul.u32 2, %s14
      %p271 = scmp.lt.s32.totalorder %s270, 3
      %s272 = scalar_select %p271, %s270, 3
      %s273 = smul.addr %s272, 4
      %s274 = scalar_lea.vmem %s3, %s273
      // Predicated region
      $region33: #{resnet_forward.25} parent=31 // pred_check
        %p275 = pneg %p100
      $region34: #{resnet_forward.25} parent=31 // pred_check_branch
        %277 = sbr.rel (%p275) target = $region36
      $region35: #{resnet_forward.25} parent=31 // pred_region
        %s278 = smul.u32 2, %s14
      $region36: #{resnet_forward.25} parent=31 // pred_fallthru
        _
    $region32: #{resnet_forward.25} parent=5 // pred_fallthru
      _
    %p279 = scmp.le.s32.totalorder 2, %s9
    // Predicated region
    $region37: #{resnet_forward.25} parent=5 // pred_check
      %p280 = pneg %p279
    $region38: #{resnet_forward.25} parent=5 // pred_check_branch
      %282 = sbr.rel (%p280) target = $region40
    $region39: #{resnet_forward.25} parent=5 // pred_region
      %s283 = ssub.s32 %s9, 2
      // Predicated region
      $region41: #{resnet_forward.25} parent=39 // pred_check
        %p284 = pneg %p106
      $region42: #{resnet_forward.25} parent=39 // pred_check_branch
        %286 = sbr.rel (%p284) target = $region44
      $region43: #{resnet_forward.25} parent=39 // pred_region
        %s287 = smul.u32 2, %s15
        %p288 = scmp.lt.s32.totalorder %s287, 3
        %s289 = scalar_select %p288, %s287, 3
        %s290 = smul.addr %s289, 4
        %s291 = scalar_lea.vmem %s3, %s290
      $region44: #{resnet_forward.25} parent=39 // pred_fallthru
        _
    $region40: #{resnet_forward.25} parent=5 // pred_fallthru
      _
  $region6: #{resnet_forward.25} parent=0 // loop_footer
    %s13 = sadd.s32 1, %s9
  $region7: #{resnet_forward.25} parent=0 // loop_footer_branch
    %8 = sbr.rel target = $region3
  $region8: #{resnet_forward.25} parent=0 // loop_exit
    _

// kernel: resnet_forward.28
$region0: #{resnet_forward.28}
  #allocation0 [shape = 'u32[]', space=smem, size = 0x4, offset = 0x4, fixed_abs, tag = 'smem constant byte address 0x4 - core index']
  #allocation1 [shape = 'u32[72,128]{1,0:T(1,128)}', space=vmem, size = 0x9000, scoped, tag = 'internal scratch']
  %s0 = inlined_call_operand.vmem [shape: bf16[32,256], index: 0, kind: input, shape index: {}]
  %s1 = inlined_call_operand.vmem [shape: bf16[256,128], index: 1, kind: input, shape index: {}]
  %s2 = inlined_call_operand.vmem [shape: f32[1,128], index: 2, kind: input, shape index: {}]
  %s3 = inlined_call_operand.vmem [shape: bf16[32,128], index: 3, kind: input, shape index: {}]
  %s4 = inlined_call_operand.vmem [shape: bf16[32,128], index: 4, kind: output, shape index: {}]
  %s5 = sld [smem:[#allocation0]]
  $region49: #{resnet_forward.28} parent=0
    _
  %s7 = ssub.s32 1, %s5
  %s8 = scalar_select 0, %s7, %s5
  loop: start=0, step=1, limit=4
  $region2: #{resnet_forward.28} parent=0 // loop_pre_header
    _
  $region3: #{resnet_forward.28} parent=0 // loop_header
    %s10 = sphi 0, %s14
    %p11 = scmp.ge.s32.totalorder %s10, 4
    %s20 = sphi 0, %s22
    %s23 = sphi 0, %s20
    %s24 = sphi 0, %s23
    %s40 = sphi 0, %s24
    %s44 = sphi 0, %s44
    %s46 = sphi 0, %s44
    %s47 = sphi 0, %s46
    %s61 = sphi 0, %s47
    %s65 = sphi 0, %s65
    %s67 = sphi 0, %s65
    %s68 = sphi 0, %s67
    %s82 = sphi 0, %s68
    %s88 = sphi 0, %s90
    %s91 = sphi 0, %s88
    %s92 = sphi 0, %s91
    %s108 = sphi 0, %s92
    %s114 = sphi 0, %s116
    %s117 = sphi 0, %s114
    %s118 = sphi 0, %s117
    %s134 = sphi 0, %s118
  $region4: #{resnet_forward.28} parent=0 // loop_header_branch
    %13 = sbr.rel (%p11) target = $region8
  $region5: #{resnet_forward.28} parent=0 // loop_body
    %s15 = ssub.s32 %s10, 1
    %s16 = ssub.s32 %s10, 2
    %s17 = sadd.s32 %s10, 1
    %s18 = ssub.s32 %s10, %s17
    %p19 = scmp.eq.s32.totalorder %s18, 0
    %s21 = sadd.s32 %s20, 1
    %s22 = scalar_select %p19, %s20, %s21
    %p25 = pneg %p19
    %p26 = scmp.eq.s32.totalorder %s10, 1
    %p27 = por %p25, %p26
    %p28 = scmp.ne.s32.totalorder %s20, %s23
    %p29 = scmp.eq.s32.totalorder %s10, 0
    %p30 = por %p28, %p29
    %p31 = scmp.ne.s32.totalorder %s20, %s23
    %p32 = scmp.eq.s32.totalorder %s15, 1
    %p33 = por %p31, %p32
    %p34 = scmp.ne.s32.totalorder %s23, %s24
    %p35 = scmp.eq.s32.totalorder %s15, 0
    %p36 = por %p34, %p35
    %p37 = scmp.ne.s32.totalorder %s23, %s24
    %p38 = scmp.eq.s32.totalorder %s16, 1
    %p39 = por %p37, %p38
    %p41 = scmp.ne.s32.totalorder %s24, %s40
    %p42 = scmp.eq.s32.totalorder %s16, 0
    %p43 = por %p41, %p42
    %s45 = sadd.s32 %s44, 1
    %p48 = scmp.eq.s32.totalorder %s10, 1
    %p49 = scmp.ne.s32.totalorder %s44, %s46
    %p50 = scmp.eq.s32.totalorder %s10, 0
    %p51 = por %p49, %p50
    %p52 = scmp.ne.s32.totalorder %s44, %s46
    %p53 = scmp.eq.s32.totalorder %s15, 1
    %p54 = por %p52, %p53
    %p55 = scmp.ne.s32.totalorder %s46, %s47
    %p56 = scmp.eq.s32.totalorder %s15, 0
    %p57 = por %p55, %p56
    %p58 = scmp.ne.s32.totalorder %s46, %s47
    %p59 = scmp.eq.s32.totalorder %s16, 1
    %p60 = por %p58, %p59
    %p62 = scmp.ne.s32.totalorder %s47, %s61
    %p63 = scmp.eq.s32.totalorder %s16, 0
    %p64 = por %p62, %p63
    %s66 = sadd.s32 %s65, 1
    %p69 = scmp.eq.s32.totalorder %s10, 1
    %p70 = scmp.ne.s32.totalorder %s65, %s67
    %p71 = scmp.eq.s32.totalorder %s10, 0
    %p72 = por %p70, %p71
    %p73 = scmp.ne.s32.totalorder %s65, %s67
    %p74 = scmp.eq.s32.totalorder %s15, 1
    %p75 = por %p73, %p74
    %p76 = scmp.ne.s32.totalorder %s67, %s68
    %p77 = scmp.eq.s32.totalorder %s15, 0
    %p78 = por %p76, %p77
    %p79 = scmp.ne.s32.totalorder %s67, %s68
    %p80 = scmp.eq.s32.totalorder %s16, 1
    %p81 = por %p79, %p80
    %p83 = scmp.ne.s32.totalorder %s68, %s82
    %p84 = scmp.eq.s32.totalorder %s16, 0
    %p85 = por %p83, %p84
    %s86 = ssub.s32 %s10, %s17
    %p87 = scmp.eq.s32.totalorder %s86, 0
    %s89 = sadd.s32 %s88, 1
    %s90 = scalar_select %p87, %s88, %s89
    %p93 = pneg %p87
    %p94 = scmp.eq.s32.totalorder %s10, 1
    %p95 = por %p93, %p94
    %p96 = scmp.ne.s32.totalorder %s88, %s91
    %p97 = scmp.eq.s32.totalorder %s10, 0
    %p98 = por %p96, %p97
    %p99 = scmp.ne.s32.totalorder %s88, %s91
    %p100 = scmp.eq.s32.totalorder %s15, 1
    %p101 = por %p99, %p100
    %p102 = scmp.ne.s32.totalorder %s91, %s92
    %p103 = scmp.eq.s32.totalorder %s15, 0
    %p104 = por %p102, %p103
    %p105 = scmp.ne.s32.totalorder %s91, %s92
    %p106 = scmp.eq.s32.totalorder %s16, 1
    %p107 = por %p105, %p106
    %p109 = scmp.ne.s32.totalorder %s92, %s108
    %p110 = scmp.eq.s32.totalorder %s16, 0
    %p111 = por %p109, %p110
    %s112 = ssub.s32 %s10, %s17
    %p113 = scmp.eq.s32.totalorder %s112, 0
    %s115 = sadd.s32 %s114, 1
    %s116 = scalar_select %p113, %s114, %s115
    %p119 = pneg %p113
    %p120 = scmp.eq.s32.totalorder %s10, 1
    %p121 = por %p119, %p120
    %p122 = scmp.ne.s32.totalorder %s114, %s117
    %p123 = scmp.eq.s32.totalorder %s10, 0
    %p124 = por %p122, %p123
    %p125 = scmp.ne.s32.totalorder %s114, %s117
    %p126 = scmp.eq.s32.totalorder %s15, 1
    %p127 = por %p125, %p126
    %p128 = scmp.ne.s32.totalorder %s117, %s118
    %p129 = scmp.eq.s32.totalorder %s15, 0
    %p130 = por %p128, %p129
    %p131 = scmp.ne.s32.totalorder %s117, %s118
    %p132 = scmp.eq.s32.totalorder %s16, 1
    %p133 = por %p131, %p132
    %p135 = scmp.ne.s32.totalorder %s118, %s134
    %p136 = scmp.eq.s32.totalorder %s16, 0
    %p137 = por %p135, %p136
    %p138 = scmp.le.s32.totalorder 1, %s10
    %p139 = scmp.lt.s32.totalorder %s10, 3
    %p140 = pnand %p138, %p139
    %p141 = pneg %p140
    // Predicated region
    $region9: #{resnet_forward.28} parent=5 // pred_check
      _
    $region10: #{resnet_forward.28} parent=5 // pred_check_branch
      %143 = sbr.rel (%p140) target = $region12
    $region11: #{resnet_forward.28} parent=5 // pred_region
      %s144 = ssub.s32 %s10, 1
      // Predicated region
      $region13: #{resnet_forward.28} parent=11 // pred_check
        %p145 = pneg %p57
      $region14: #{resnet_forward.28} parent=11 // pred_check_branch
        %147 = sbr.rel (%p145) target = $region16
      $region15: #{resnet_forward.28} parent=11 // pred_region
        _
      $region16: #{resnet_forward.28} parent=11 // pred_fallthru
        _
      // Predicated region
      $region17: #{resnet_forward.28} parent=11 // pred_check
        %p148 = pneg %p78
      $region18: #{resnet_forward.28} parent=11 // pred_check_branch
        %150 = sbr.rel (%p148) target = $region20
      $region19: #{resnet_forward.28} parent=11 // pred_region
        _
      $region20: #{resnet_forward.28} parent=11 // pred_fallthru
        _
    $region12: #{resnet_forward.28} parent=5 // pred_fallthru
      _
    %p151 = scmp.lt.s32.totalorder %s10, 2
    // Predicated region
    $region21: #{resnet_forward.28} parent=5 // pred_check
      %p152 = pneg %p151
    $region22: #{resnet_forward.28} parent=5 // pred_check_branch
      %154 = sbr.rel (%p152) target = $region24
    $region23: #{resnet_forward.28} parent=5 // pred_region
      // Predicated region
      $region25: #{resnet_forward.28} parent=23 // pred_check
        %p155 = pneg %p30
      $region26: #{resnet_forward.28} parent=23 // pred_check_branch
        %157 = sbr.rel (%p155) target = $region28
      $region27: #{resnet_forward.28} parent=23 // pred_region
        %s158 = smul.u32 2, %s10
        %p159 = scmp.lt.s32.totalorder %s158, 3
        %s160 = scalar_select %p159, %s158, 3
        %s161 = smul.addr %s160, 2
        %s162 = smul.addr %s161, 4
        %s163 = scalar_lea.vmem %s0, %s162
        %s164 = smul.u32 2, %s10
      $region28: #{resnet_forward.28} parent=23 // pred_fallthru
        _
      // Predicated region
      $region29: #{resnet_forward.28} parent=23 // pred_check
        %p165 = pneg %p98
      $region30: #{resnet_forward.28} parent=23 // pred_check_branch
        %167 = sbr.rel (%p165) target = $region32
      $region31: #{resnet_forward.28} parent=23 // pred_region
        %s168 = smul.u32 2, %s10
        %p169 = scmp.lt.s32.totalorder %s168, 3
        %s170 = scalar_select %p169, %s168, 3
        %s171 = smul.addr %s170, 4
        %s172 = scalar_lea.vmem %s3, %s171
        %s173 = smul.u32 2, %s10
      $region32: #{resnet_forward.28} parent=23 // pred_fallthru
        _
    $region24: #{resnet_forward.28} parent=5 // pred_fallthru
      _
    %p174 = scmp.le.s32.totalorder 1, %s10
    %p175 = scmp.lt.s32.totalorder %s10, 3
    %p176 = pnand %p174, %p175
    %p177 = pneg %p176
    // Predicated region
    $region33: #{resnet_forward.28} parent=5 // pred_check
      _
    $region34: #{resnet_forward.28} parent=5 // pred_check_branch
      %179 = sbr.rel (%p176) target = $region36
    $region35: #{resnet_forward.28} parent=5 // pred_region
      %s180 = ssub.s32 %s10, 1
      %s181 = smul.u32 2, %s15
      %p182 = scmp.lt.s32.totalorder %s181, 3
      %s183 = scalar_select %p182, %s181, 3
      %s184 = smul.addr %s183, 2
      %s185 = smul.addr %s184, 4
      %s186 = scalar_lea.vmem %s0, %s185
      %p187 = pneg %p36
      %p188 = pneg %p33
      %p189 = pneg %p57
      %p190 = pneg %p54
      %p191 = pneg %p78
      %p192 = pneg %p75
      %s193 = smul.u32 2, %s15
      %p194 = scmp.lt.s32.totalorder %s193, 3
      %s195 = scalar_select %p194, %s193, 3
      %s196 = smul.addr %s195, 4
      %s197 = scalar_lea.vmem %s3, %s196
      %p198 = pneg %p104
      %p199 = pneg %p101
      %p200 = pneg %p130
      %p201 = pneg %p127
      %s202 = smul.u32 2, %s15
      %p203 = scmp.lt.s32.totalorder %s202, 3
      %s204 = scalar_select %p203, %s202, 3
      %s205 = smul.addr %s204, 4
      %s206 = scalar_lea.vmem %s4, %s205
      %s207 = smul.u32 2, %s15
      %p208 = scmp.lt.s32.totalorder %s207, 3
      %s209 = scalar_select %p208, %s207, 3
      %s210 = smul.addr %s209, 2
      %s211 = smul.addr %s210, 4
      %s212 = scalar_lea.vmem %s0, %s211
      %s213 = smul.u32 2, %s15
      %s214 = smul.u32 2, %s15
      %p215 = scmp.lt.s32.totalorder %s214, 3
      %s216 = scalar_select %p215, %s214, 3
      %s217 = smul.addr %s216, 4
      %s218 = scalar_lea.vmem %s3, %s217
      %s219 = smul.u32 2, %s15
      %s220 = smul.u32 2, %s15
      %p221 = scmp.lt.s32.totalorder %s220, 3
      %s222 = scalar_select %p221, %s220, 3
      %s223 = smul.addr %s222, 4
      %s224 = scalar_lea.vmem %s4, %s223
      %s225 = smul.u32 2, %s15
      %v226 = vld [vmem:[%s212] sm:$0xff]
      %v227 = vld [vmem:[%s212 + $0x8] sm:$0xff]
      %v228 = vld [vmem:[%s1] sm:$0xf]
      %v229 = vld [vmem:[%s1 + $0x4] sm:$0xf]
      %v230 = vld [vmem:[%s1 + $0x8] sm:$0xf]
      %v231 = vld [vmem:[%s1 + $0xc] sm:$0xf]
      %v232 = vld [vmem:[%s1 + $0x10] sm:$0xf]
      %v233 = vld [vmem:[%s1 + $0x14] sm:$0xf]
      %v234 = vld [vmem:[%s1 + $0x18] sm:$0xf]
      %v235 = vld [vmem:[%s1 + $0x1c] sm:$0xf]
      %v236 = vld [vmem:[%s1 + $0x20] sm:$0xf]
      %v237 = vld [vmem:[%s1 + $0x24] sm:$0xf]
      %v238 = vld [vmem:[%s1 + $0x28] sm:$0xf]
      %v239 = vld [vmem:[%s1 + $0x2c] sm:$0xf]
      %v240 = vld [vmem:[%s1 + $0x30] sm:$0xf]
      %v241 = vld [vmem:[%s1 + $0x34] sm:$0xf]
      %v242 = vld [vmem:[%s1 + $0x38] sm:$0xf]
      %v243 = vld [vmem:[%s1 + $0x3c] sm:$0xf]
      %v244 = vld [vmem:[%s1 + $0x40] sm:$0xf]
      %v245 = vld [vmem:[%s1 + $0x44] sm:$0xf]
      %v246 = vld [vmem:[%s1 + $0x48] sm:$0xf]
      %v247 = vld [vmem:[%s1 + $0x4c] sm:$0xf]
      %v248 = vld [vmem:[%s1 + $0x50] sm:$0xf]
      %v249 = vld [vmem:[%s1 + $0x54] sm:$0xf]
      %v250 = vld [vmem:[%s1 + $0x58] sm:$0xf]
      %v251 = vld [vmem:[%s1 + $0x5c] sm:$0xf]
      %v252 = vld [vmem:[%s1 + $0x60] sm:$0xf]
      %v253 = vld [vmem:[%s1 + $0x64] sm:$0xf]
      %v254 = vld [vmem:[%s1 + $0x68] sm:$0xf]
      %v255 = vld [vmem:[%s1 + $0x6c] sm:$0xf]
      %v256 = vld [vmem:[%s1 + $0x70] sm:$0xf]
      %v257 = vld [vmem:[%s1 + $0x74] sm:$0xf]
      %v258 = vld [vmem:[%s1 + $0x78] sm:$0xf]
      %v259 = vld [vmem:[%s1 + $0x7c] sm:$0xf]
      %v260 = vld [vmem:[%s2] sm:$0x1]
      %v262 = vperm.slane %v260, 0
      %v266 = vunpack.c.l.b16 %v226
      %v267 = vunpack.c.h.b16 %v226
      %v268 = vunpack.c.l.b16 %v227
      %v269 = vunpack.c.h.b16 %v227
      %v270 = vpack.c.b16 %v268, %v266
      %v271 = vpack.c.b16 %v269, %v267
      %v306 = vunpack.c.l.b16 %v228
      %v307 = vunpack.c.l.b16 %v229
      %v308 = vunpack.c.l.b16 %v230
      %v309 = vunpack.c.l.b16 %v231
      %v310 = vunpack.c.l.b16 %v232
      %v311 = vunpack.c.l.b16 %v233
      %v312 = vunpack.c.l.b16 %v234
      %v313 = vunpack.c.l.b16 %v235
      %v314 = vunpack.c.l.b16 %v236
      %v315 = vunpack.c.l.b16 %v237
      %v316 = vunpack.c.l.b16 %v238
      %v317 = vunpack.c.l.b16 %v239
      %v318 = vunpack.c.l.b16 %v240
      %v319 = vunpack.c.l.b16 %v241
      %v320 = vunpack.c.l.b16 %v242
      %v321 = vunpack.c.l.b16 %v243
      %v322 = vunpack.c.l.b16 %v244
      %v323 = vunpack.c.l.b16 %v245
      %v324 = vunpack.c.l.b16 %v246
      %v325 = vunpack.c.l.b16 %v247
      %v326 = vunpack.c.l.b16 %v248
      %v327 = vunpack.c.l.b16 %v249
      %v328 = vunpack.c.l.b16 %v250
      %v329 = vunpack.c.l.b16 %v251
      %v330 = vunpack.c.l.b16 %v252
      %v331 = vunpack.c.l.b16 %v253
      %v332 = vunpack.c.l.b16 %v254
      %v333 = vunpack.c.l.b16 %v255
      %v334 = vunpack.c.l.b16 %v256
      %v335 = vunpack.c.l.b16 %v257
      %v336 = vunpack.c.l.b16 %v258
      %v337 = vunpack.c.l.b16 %v259
      %v338 = vpack.c.b16 %v307, %v306
      %v339 = vpack.c.b16 %v309, %v308
      %v340 = vpack.c.b16 %v311, %v310
      %v341 = vpack.c.b16 %v313, %v312
      %v342 = vpack.c.b16 %v315, %v314
      %v343 = vpack.c.b16 %v317, %v316
      %v344 = vpack.c.b16 %v319, %v318
      %v345 = vpack.c.b16 %v321, %v320
      %v346 = vpack.c.b16 %v323, %v322
      %v347 = vpack.c.b16 %v325, %v324
      %v348 = vpack.c.b16 %v327, %v326
      %v349 = vpack.c.b16 %v329, %v328
      %v350 = vpack.c.b16 %v331, %v330
      %v351 = vpack.c.b16 %v333, %v332
      %v352 = vpack.c.b16 %v335, %v334
      %v353 = vpack.c.b16 %v337, %v336
      %370 = vmatpush.bf16.msra.mxu0 %v345
      %371 = vmatpush.bf16.msra.mxu0 %v344
      %372 = vmatpush.bf16.msra.mxu0 %v343
      %373 = vmatpush.bf16.msra.mxu0 %v342
      %374 = vmatpush.bf16.msra.mxu0 %v341
      %375 = vmatpush.bf16.msra.mxu0 %v340
      %376 = vmatpush.bf16.msra.mxu0 %v339
      %377 = vmatpush.bf16.msra.mxu0 %v338
      %378 = vmatmul.bf16.gmra.mxu0 %v270
      %v379 = vpop.f32.mrf.mxu0
      %v380 = vadd.f32 %v262, %v379
      %v381 = vpop.f32.mrf.mxu0
      %v382 = vadd.f32 %v262, %v381
      %383 = vdwg.mxu0
      %384 = vmatpush.bf16.msra.mxu0 %v353
      %385 = vmatpush.bf16.msra.mxu0 %v352
      %386 = vmatpush.bf16.msra.mxu0 %v351
      %387 = vmatpush.bf16.msra.mxu0 %v350
      %388 = vmatpush.bf16.msra.mxu0 %v349
      %389 = vmatpush.bf16.msra.mxu0 %v348
      %390 = vmatpush.bf16.msra.mxu0 %v347
      %391 = vmatpush.bf16.msra.mxu0 %v346
      %392 = vmatmul.bf16.gmra.mxu0 %v271
      %v393 = vpop.f32.mrf.mxu0
      %v394 = vadd.f32 %v380, %v393
      %v395 = vpop.f32.mrf.mxu0
      %v396 = vadd.f32 %v382, %v395
      %397 = vdwg.mxu0
      %v398 = vld [vmem:[%s218] sm:$0xf]
      %v399 = vld [vmem:[%s218 + $0x4] sm:$0xf]
      %v400 = vunpack.c.l.bf16 %v398
      %v401 = vunpack.c.l.bf16 %v399
      %v402 = vadd.f32 %v394, %v400
      %v403 = vadd.f32 %v396, %v401
      %v404 = vmax.f32 %v402, 0.0
      %v405 = vmax.f32 %v403, 0.0
      %v406 = vpack.c.bf16 %v404, %v404
      %v407 = vpack.c.bf16 %v405, %v405
      %408 = vst [vmem:[%s224] sm:$0xf] %v406
      %409 = vst [vmem:[%s224 + $0x4] sm:$0xf] %v407
      %s410 = smul.u32 2, %s15
      %p411 = scmp.lt.s32.totalorder %s410, 3
      %s412 = scalar_select %p411, %s410, 3
      %s413 = smul.addr %s412, 4
      %s414 = scalar_lea.vmem %s4, %s413
      // Predicated region
      $region37: #{resnet_forward.28} parent=35 // pred_check
        %p415 = pneg %p127
      $region38: #{resnet_forward.28} parent=35 // pred_check_branch
        %417 = sbr.rel (%p415) target = $region40
      $region39: #{resnet_forward.28} parent=35 // pred_region
        %s418 = smul.u32 2, %s15
      $region40: #{resnet_forward.28} parent=35 // pred_fallthru
        _
    $region36: #{resnet_forward.28} parent=5 // pred_fallthru
      _
    %p419 = scmp.le.s32.totalorder 2, %s10
    // Predicated region
    $region41: #{resnet_forward.28} parent=5 // pred_check
      %p420 = pneg %p419
    $region42: #{resnet_forward.28} parent=5 // pred_check_branch
      %422 = sbr.rel (%p420) target = $region44
    $region43: #{resnet_forward.28} parent=5 // pred_region
      %s423 = ssub.s32 %s10, 2
      // Predicated region
      $region45: #{resnet_forward.28} parent=43 // pred_check
        %p424 = pneg %p133
      $region46: #{resnet_forward.28} parent=43 // pred_check_branch
        %426 = sbr.rel (%p424) target = $region48
      $region47: #{resnet_forward.28} parent=43 // pred_region
        %s427 = smul.u32 2, %s16
        %p428 = scmp.lt.s32.totalorder %s427, 3
        %s429 = scalar_select %p428, %s427, 3
        %s430 = smul.addr %s429, 4
        %s431 = scalar_lea.vmem %s4, %s430
      $region48: #{resnet_forward.28} parent=43 // pred_fallthru
        _
    $region44: #{resnet_forward.28} parent=5 // pred_fallthru
      _
  $region6: #{resnet_forward.28} parent=0 // loop_footer
    %s14 = sadd.s32 1, %s10
  $region7: #{resnet_forward.28} parent=0 // loop_footer_branch
    %9 = sbr.rel target = $region3
  $region8: #{resnet_forward.28} parent=0 // loop_exit
    _

// kernel: resnet_forward.26
$region0: #{resnet_forward.26}
  #allocation0 [shape = 'u32[]', space=smem, size = 0x4, offset = 0x4, fixed_abs, tag = 'smem constant byte address 0x4 - core index']
  #allocation1 [shape = 'u32[72,128]{1,0:T(1,128)}', space=vmem, size = 0x9000, scoped, tag = 'internal scratch']
  %s0 = inlined_call_operand.vmem [shape: bf16[32,256], index: 0, kind: input, shape index: {}]
  %s1 = inlined_call_operand.vmem [shape: bf16[256,128], index: 1, kind: input, shape index: {}]
  %s2 = inlined_call_operand.vmem [shape: f32[1,128], index: 2, kind: input, shape index: {}]
  %s3 = inlined_call_operand.vmem [shape: bf16[32,128], index: 3, kind: input, shape index: {}]
  %s4 = inlined_call_operand.vmem [shape: bf16[128,128], index: 4, kind: input, shape index: {}]
  %s5 = inlined_call_operand.vmem [shape: f32[1,128], index: 5, kind: input, shape index: {}]
  %s6 = inlined_call_operand.vmem [shape: bf16[32,128], index: 6, kind: output, shape index: {}]
  %s7 = sld [smem:[#allocation0]]
  $region57: #{resnet_forward.26} parent=0
    _
  %s9 = ssub.s32 1, %s7
  %s10 = scalar_select 0, %s9, %s7
  loop: start=0, step=1, limit=4
  $region2: #{resnet_forward.26} parent=0 // loop_pre_header
    _
  $region3: #{resnet_forward.26} parent=0 // loop_header
    %s12 = sphi 0, %s16
    %p13 = scmp.ge.s32.totalorder %s12, 4
    %s22 = sphi 0, %s24
    %s25 = sphi 0, %s22
    %s26 = sphi 0, %s25
    %s42 = sphi 0, %s26
    %s46 = sphi 0, %s46
    %s48 = sphi 0, %s46
    %s49 = sphi 0, %s48
    %s63 = sphi 0, %s49
    %s67 = sphi 0, %s67
    %s69 = sphi 0, %s67
    %s70 = sphi 0, %s69
    %s84 = sphi 0, %s70
    %s90 = sphi 0, %s92
    %s93 = sphi 0, %s90
    %s94 = sphi 0, %s93
    %s110 = sphi 0, %s94
    %s114 = sphi 0, %s114
    %s116 = sphi 0, %s114
    %s117 = sphi 0, %s116
    %s131 = sphi 0, %s117
    %s135 = sphi 0, %s135
    %s137 = sphi 0, %s135
    %s138 = sphi 0, %s137
    %s152 = sphi 0, %s138
    %s158 = sphi 0, %s160
    %s161 = sphi 0, %s158
    %s162 = sphi 0, %s161
    %s178 = sphi 0, %s162
  $region4: #{resnet_forward.26} parent=0 // loop_header_branch
    %15 = sbr.rel (%p13) target = $region8
  $region5: #{resnet_forward.26} parent=0 // loop_body
    %s17 = ssub.s32 %s12, 1
    %s18 = ssub.s32 %s12, 2
    %s19 = sadd.s32 %s12, 1
    %s20 = ssub.s32 %s12, %s19
    %p21 = scmp.eq.s32.totalorder %s20, 0
    %s23 = sadd.s32 %s22, 1
    %s24 = scalar_select %p21, %s22, %s23
    %p27 = pneg %p21
    %p28 = scmp.eq.s32.totalorder %s12, 1
    %p29 = por %p27, %p28
    %p30 = scmp.ne.s32.totalorder %s22, %s25
    %p31 = scmp.eq.s32.totalorder %s12, 0
    %p32 = por %p30, %p31
    %p33 = scmp.ne.s32.totalorder %s22, %s25
    %p34 = scmp.eq.s32.totalorder %s17, 1
    %p35 = por %p33, %p34
    %p36 = scmp.ne.s32.totalorder %s25, %s26
    %p37 = scmp.eq.s32.totalorder %s17, 0
    %p38 = por %p36, %p37
    %p39 = scmp.ne.s32.totalorder %s25, %s26
    %p40 = scmp.eq.s32.totalorder %s18, 1
    %p41 = por %p39, %p40
    %p43 = scmp.ne.s32.totalorder %s26, %s42
    %p44 = scmp.eq.s32.totalorder %s18, 0
    %p45 = por %p43, %p44
    %s47 = sadd.s32 %s46, 1
    %p50 = scmp.eq.s32.totalorder %s12, 1
    %p51 = scmp.ne.s32.totalorder %s46, %s48
    %p52 = scmp.eq.s32.totalorder %s12, 0
    %p53 = por %p51, %p52
    %p54 = scmp.ne.s32.totalorder %s46, %s48
    %p55 = scmp.eq.s32.totalorder %s17, 1
    %p56 = por %p54, %p55
    %p57 = scmp.ne.s32.totalorder %s48, %s49
    %p58 = scmp.eq.s32.totalorder %s17, 0
    %p59 = por %p57, %p58
    %p60 = scmp.ne.s32.totalorder %s48, %s49
    %p61 = scmp.eq.s32.totalorder %s18, 1
    %p62 = por %p60, %p61
    %p64 = scmp.ne.s32.totalorder %s49, %s63
    %p65 = scmp.eq.s32.totalorder %s18, 0
    %p66 = por %p64, %p65
    %s68 = sadd.s32 %s67, 1
    %p71 = scmp.eq.s32.totalorder %s12, 1
    %p72 = scmp.ne.s32.totalorder %s67, %s69
    %p73 = scmp.eq.s32.totalorder %s12, 0
    %p74 = por %p72, %p73
    %p75 = scmp.ne.s32.totalorder %s67, %s69
    %p76 = scmp.eq.s32.totalorder %s17, 1
    %p77 = por %p75, %p76
    %p78 = scmp.ne.s32.totalorder %s69, %s70
    %p79 = scmp.eq.s32.totalorder %s17, 0
    %p80 = por %p78, %p79
    %p81 = scmp.ne.s32.totalorder %s69, %s70
    %p82 = scmp.eq.s32.totalorder %s18, 1
    %p83 = por %p81, %p82
    %p85 = scmp.ne.s32.totalorder %s70, %s84
    %p86 = scmp.eq.s32.totalorder %s18, 0
    %p87 = por %p85, %p86
    %s88 = ssub.s32 %s12, %s19
    %p89 = scmp.eq.s32.totalorder %s88, 0
    %s91 = sadd.s32 %s90, 1
    %s92 = scalar_select %p89, %s90, %s91
    %p95 = pneg %p89
    %p96 = scmp.eq.s32.totalorder %s12, 1
    %p97 = por %p95, %p96
    %p98 = scmp.ne.s32.totalorder %s90, %s93
    %p99 = scmp.eq.s32.totalorder %s12, 0
    %p100 = por %p98, %p99
    %p101 = scmp.ne.s32.totalorder %s90, %s93
    %p102 = scmp.eq.s32.totalorder %s17, 1
    %p103 = por %p101, %p102
    %p104 = scmp.ne.s32.totalorder %s93, %s94
    %p105 = scmp.eq.s32.totalorder %s17, 0
    %p106 = por %p104, %p105
    %p107 = scmp.ne.s32.totalorder %s93, %s94
    %p108 = scmp.eq.s32.totalorder %s18, 1
    %p109 = por %p107, %p108
    %p111 = scmp.ne.s32.totalorder %s94, %s110
    %p112 = scmp.eq.s32.totalorder %s18, 0
    %p113 = por %p111, %p112
    %s115 = sadd.s32 %s114, 1
    %p118 = scmp.eq.s32.totalorder %s12, 1
    %p119 = scmp.ne.s32.totalorder %s114, %s116
    %p120 = scmp.eq.s32.totalorder %s12, 0
    %p121 = por %p119, %p120
    %p122 = scmp.ne.s32.totalorder %s114, %s116
    %p123 = scmp.eq.s32.totalorder %s17, 1
    %p124 = por %p122, %p123
    %p125 = scmp.ne.s32.totalorder %s116, %s117
    %p126 = scmp.eq.s32.totalorder %s17, 0
    %p127 = por %p125, %p126
    %p128 = scmp.ne.s32.totalorder %s116, %s117
    %p129 = scmp.eq.s32.totalorder %s18, 1
    %p130 = por %p128, %p129
    %p132 = scmp.ne.s32.totalorder %s117, %s131
    %p133 = scmp.eq.s32.totalorder %s18, 0
    %p134 = por %p132, %p133
    %s136 = sadd.s32 %s135, 1
    %p139 = scmp.eq.s32.totalorder %s12, 1
    %p140 = scmp.ne.s32.totalorder %s135, %s137
    %p141 = scmp.eq.s32.totalorder %s12, 0
    %p142 = por %p140, %p141
    %p143 = scmp.ne.s32.totalorder %s135, %s137
    %p144 = scmp.eq.s32.totalorder %s17, 1
    %p145 = por %p143, %p144
    %p146 = scmp.ne.s32.totalorder %s137, %s138
    %p147 = scmp.eq.s32.totalorder %s17, 0
    %p148 = por %p146, %p147
    %p149 = scmp.ne.s32.totalorder %s137, %s138
    %p150 = scmp.eq.s32.totalorder %s18, 1
    %p151 = por %p149, %p150
    %p153 = scmp.ne.s32.totalorder %s138, %s152
    %p154 = scmp.eq.s32.totalorder %s18, 0
    %p155 = por %p153, %p154
    %s156 = ssub.s32 %s12, %s19
    %p157 = scmp.eq.s32.totalorder %s156, 0
    %s159 = sadd.s32 %s158, 1
    %s160 = scalar_select %p157, %s158, %s159
    %p163 = pneg %p157
    %p164 = scmp.eq.s32.totalorder %s12, 1
    %p165 = por %p163, %p164
    %p166 = scmp.ne.s32.totalorder %s158, %s161
    %p167 = scmp.eq.s32.totalorder %s12, 0
    %p168 = por %p166, %p167
    %p169 = scmp.ne.s32.totalorder %s158, %s161
    %p170 = scmp.eq.s32.totalorder %s17, 1
    %p171 = por %p169, %p170
    %p172 = scmp.ne.s32.totalorder %s161, %s162
    %p173 = scmp.eq.s32.totalorder %s17, 0
    %p174 = por %p172, %p173
    %p175 = scmp.ne.s32.totalorder %s161, %s162
    %p176 = scmp.eq.s32.totalorder %s18, 1
    %p177 = por %p175, %p176
    %p179 = scmp.ne.s32.totalorder %s162, %s178
    %p180 = scmp.eq.s32.totalorder %s18, 0
    %p181 = por %p179, %p180
    %p182 = scmp.le.s32.totalorder 1, %s12
    %p183 = scmp.lt.s32.totalorder %s12, 3
    %p184 = pnand %p182, %p183
    %p185 = pneg %p184
    // Predicated region
    $region9: #{resnet_forward.26} parent=5 // pred_check
      _
    $region10: #{resnet_forward.26} parent=5 // pred_check_branch
      %187 = sbr.rel (%p184) target = $region12
    $region11: #{resnet_forward.26} parent=5 // pred_region
      %s188 = ssub.s32 %s12, 1
      // Predicated region
      $region13: #{resnet_forward.26} parent=11 // pred_check
        %p189 = pneg %p59
      $region14: #{resnet_forward.26} parent=11 // pred_check_branch
        %191 = sbr.rel (%p189) target = $region16
      $region15: #{resnet_forward.26} parent=11 // pred_region
        _
      $region16: #{resnet_forward.26} parent=11 // pred_fallthru
        _
      // Predicated region
      $region17: #{resnet_forward.26} parent=11 // pred_check
        %p192 = pneg %p80
      $region18: #{resnet_forward.26} parent=11 // pred_check_branch
        %194 = sbr.rel (%p192) target = $region20
      $region19: #{resnet_forward.26} parent=11 // pred_region
        _
      $region20: #{resnet_forward.26} parent=11 // pred_fallthru
        _
      // Predicated region
      $region21: #{resnet_forward.26} parent=11 // pred_check
        %p195 = pneg %p127
      $region22: #{resnet_forward.26} parent=11 // pred_check_branch
        %197 = sbr.rel (%p195) target = $region24
      $region23: #{resnet_forward.26} parent=11 // pred_region
        _
      $region24: #{resnet_forward.26} parent=11 // pred_fallthru
        _
      // Predicated region
      $region25: #{resnet_forward.26} parent=11 // pred_check
        %p198 = pneg %p148
      $region26: #{resnet_forward.26} parent=11 // pred_check_branch
        %200 = sbr.rel (%p198) target = $region28
      $region27: #{resnet_forward.26} parent=11 // pred_region
        _
      $region28: #{resnet_forward.26} parent=11 // pred_fallthru
        _
    $region12: #{resnet_forward.26} parent=5 // pred_fallthru
      _
    %p201 = scmp.lt.s32.totalorder %s12, 2
    // Predicated region
    $region29: #{resnet_forward.26} parent=5 // pred_check
      %p202 = pneg %p201
    $region30: #{resnet_forward.26} parent=5 // pred_check_branch
      %204 = sbr.rel (%p202) target = $region32
    $region31: #{resnet_forward.26} parent=5 // pred_region
      // Predicated region
      $region33: #{resnet_forward.26} parent=31 // pred_check
        %p205 = pneg %p32
      $region34: #{resnet_forward.26} parent=31 // pred_check_branch
        %207 = sbr.rel (%p205) target = $region36
      $region35: #{resnet_forward.26} parent=31 // pred_region
        %s208 = smul.u32 2, %s12
        %p209 = scmp.lt.s32.totalorder %s208, 3
        %s210 = scalar_select %p209, %s208, 3
        %s211 = smul.addr %s210, 2
        %s212 = smul.addr %s211, 4
        %s213 = scalar_lea.vmem %s0, %s212
        %s214 = smul.u32 2, %s12
      $region36: #{resnet_forward.26} parent=31 // pred_fallthru
        _
      // Predicated region
      $region37: #{resnet_forward.26} parent=31 // pred_check
        %p215 = pneg %p100
      $region38: #{resnet_forward.26} parent=31 // pred_check_branch
        %217 = sbr.rel (%p215) target = $region40
      $region39: #{resnet_forward.26} parent=31 // pred_region
        %s218 = smul.u32 2, %s12
        %p219 = scmp.lt.s32.totalorder %s218, 3
        %s220 = scalar_select %p219, %s218, 3
        %s221 = smul.addr %s220, 4
        %s222 = scalar_lea.vmem %s3, %s221
        %s223 = smul.u32 2, %s12
      $region40: #{resnet_forward.26} parent=31 // pred_fallthru
        _
    $region32: #{resnet_forward.26} parent=5 // pred_fallthru
      _
    %p224 = scmp.le.s32.totalorder 1, %s12
    %p225 = scmp.lt.s32.totalorder %s12, 3
    %p226 = pnand %p224, %p225
    %p227 = pneg %p226
    // Predicated region
    $region41: #{resnet_forward.26} parent=5 // pred_check
      _
    $region42: #{resnet_forward.26} parent=5 // pred_check_branch
      %229 = sbr.rel (%p226) target = $region44
    $region43: #{resnet_forward.26} parent=5 // pred_region
      %s230 = ssub.s32 %s12, 1
      %s231 = smul.u32 2, %s17
      %p232 = scmp.lt.s32.totalorder %s231, 3
      %s233 = scalar_select %p232, %s231, 3
      %s234 = smul.addr %s233, 2
      %s235 = smul.addr %s234, 4
      %s236 = scalar_lea.vmem %s0, %s235
      %p237 = pneg %p38
      %p238 = pneg %p35
      %p239 = pneg %p59
      %p240 = pneg %p56
      %p241 = pneg %p80
      %p242 = pneg %p77
      %s243 = smul.u32 2, %s17
      %p244 = scmp.lt.s32.totalorder %s243, 3
      %s245 = scalar_select %p244, %s243, 3
      %s246 = smul.addr %s245, 4
      %s247 = scalar_lea.vmem %s3, %s246
      %p248 = pneg %p106
      %p249 = pneg %p103
      %p250 = pneg %p127
      %p251 = pneg %p124
      %p252 = pneg %p148
      %p253 = pneg %p145
      %p254 = pneg %p174
      %p255 = pneg %p171
      %s256 = smul.u32 2, %s17
      %p257 = scmp.lt.s32.totalorder %s256, 3
      %s258 = scalar_select %p257, %s256, 3
      %s259 = smul.addr %s258, 4
      %s260 = scalar_lea.vmem %s6, %s259
      %s261 = smul.u32 2, %s17
      %p262 = scmp.lt.s32.totalorder %s261, 3
      %s263 = scalar_select %p262, %s261, 3
      %s264 = smul.addr %s263, 2
      %s265 = smul.addr %s264, 4
      %s266 = scalar_lea.vmem %s0, %s265
      %s267 = smul.u32 2, %s17
      %s268 = smul.u32 2, %s17
      %p269 = scmp.lt.s32.totalorder %s268, 3
      %s270 = scalar_select %p269, %s268, 3
      %s271 = smul.addr %s270, 4
      %s272 = scalar_lea.vmem %s3, %s271
      %s273 = smul.u32 2, %s17
      %s274 = smul.u32 2, %s17
      %p275 = scmp.lt.s32.totalorder %s274, 3
      %s276 = scalar_select %p275, %s274, 3
      %s277 = smul.addr %s276, 4
      %s278 = scalar_lea.vmem %s6, %s277
      %s279 = smul.u32 2, %s17
      %v280 = vld [vmem:[%s266] sm:$0xff]
      %v281 = vld [vmem:[%s266 + $0x8] sm:$0xff]
      %v282 = vld [vmem:[%s1] sm:$0xf]
      %v283 = vld [vmem:[%s1 + $0x4] sm:$0xf]
      %v284 = vld [vmem:[%s1 + $0x8] sm:$0xf]
      %v285 = vld [vmem:[%s1 + $0xc] sm:$0xf]
      %v286 = vld [vmem:[%s1 + $0x10] sm:$0xf]
      %v287 = vld [vmem:[%s1 + $0x14] sm:$0xf]
      %v288 = vld [vmem:[%s1 + $0x18] sm:$0xf]
      %v289 = vld [vmem:[%s1 + $0x1c] sm:$0xf]
      %v290 = vld [vmem:[%s1 + $0x20] sm:$0xf]
      %v291 = vld [vmem:[%s1 + $0x24] sm:$0xf]
      %v292 = vld [vmem:[%s1 + $0x28] sm:$0xf]
      %v293 = vld [vmem:[%s1 + $0x2c] sm:$0xf]
      %v294 = vld [vmem:[%s1 + $0x30] sm:$0xf]
      %v295 = vld [vmem:[%s1 + $0x34] sm:$0xf]
      %v296 = vld [vmem:[%s1 + $0x38] sm:$0xf]
      %v297 = vld [vmem:[%s1 + $0x3c] sm:$0xf]
      %v298 = vld [vmem:[%s1 + $0x40] sm:$0xf]
      %v299 = vld [vmem:[%s1 + $0x44] sm:$0xf]
      %v300 = vld [vmem:[%s1 + $0x48] sm:$0xf]
      %v301 = vld [vmem:[%s1 + $0x4c] sm:$0xf]
      %v302 = vld [vmem:[%s1 + $0x50] sm:$0xf]
      %v303 = vld [vmem:[%s1 + $0x54] sm:$0xf]
      %v304 = vld [vmem:[%s1 + $0x58] sm:$0xf]
      %v305 = vld [vmem:[%s1 + $0x5c] sm:$0xf]
      %v306 = vld [vmem:[%s1 + $0x60] sm:$0xf]
      %v307 = vld [vmem:[%s1 + $0x64] sm:$0xf]
      %v308 = vld [vmem:[%s1 + $0x68] sm:$0xf]
      %v309 = vld [vmem:[%s1 + $0x6c] sm:$0xf]
      %v310 = vld [vmem:[%s1 + $0x70] sm:$0xf]
      %v311 = vld [vmem:[%s1 + $0x74] sm:$0xf]
      %v312 = vld [vmem:[%s1 + $0x78] sm:$0xf]
      %v313 = vld [vmem:[%s1 + $0x7c] sm:$0xf]
      %v314 = vld [vmem:[%s272] sm:$0xf]
      %v315 = vld [vmem:[%s272 + $0x4] sm:$0xf]
      %v316 = vld [vmem:[%s4] sm:$0xf]
      %v317 = vld [vmem:[%s4 + $0x4] sm:$0xf]
      %v318 = vld [vmem:[%s4 + $0x8] sm:$0xf]
      %v319 = vld [vmem:[%s4 + $0xc] sm:$0xf]
      %v320 = vld [vmem:[%s4 + $0x10] sm:$0xf]
      %v321 = vld [vmem:[%s4 + $0x14] sm:$0xf]
      %v322 = vld [vmem:[%s4 + $0x18] sm:$0xf]
      %v323 = vld [vmem:[%s4 + $0x1c] sm:$0xf]
      %v324 = vld [vmem:[%s4 + $0x20] sm:$0xf]
      %v325 = vld [vmem:[%s4 + $0x24] sm:$0xf]
      %v326 = vld [vmem:[%s4 + $0x28] sm:$0xf]
      %v327 = vld [vmem:[%s4 + $0x2c] sm:$0xf]
      %v328 = vld [vmem:[%s4 + $0x30] sm:$0xf]
      %v329 = vld [vmem:[%s4 + $0x34] sm:$0xf]
      %v330 = vld [vmem:[%s4 + $0x38] sm:$0xf]
      %v331 = vld [vmem:[%s4 + $0x3c] sm:$0xf]
      %v334 = vunpack.c.l.b16 %v314
      %v335 = vunpack.c.l.b16 %v315
      %v336 = vpack.c.b16 %v335, %v334
      %v354 = vunpack.c.l.b16 %v316
      %v355 = vunpack.c.l.b16 %v317
      %v356 = vunpack.c.l.b16 %v318
      %v357 = vunpack.c.l.b16 %v319
      %v358 = vunpack.c.l.b16 %v320
      %v359 = vunpack.c.l.b16 %v321
      %v360 = vunpack.c.l.b16 %v322
      %v361 = vunpack.c.l.b16 %v323
      %v362 = vunpack.c.l.b16 %v324
      %v363 = vunpack.c.l.b16 %v325
      %v364 = vunpack.c.l.b16 %v326
      %v365 = vunpack.c.l.b16 %v327
      %v366 = vunpack.c.l.b16 %v328
      %v367 = vunpack.c.l.b16 %v329
      %v368 = vunpack.c.l.b16 %v330
      %v369 = vunpack.c.l.b16 %v331
      %v370 = vpack.c.b16 %v355, %v354
      %v371 = vpack.c.b16 %v357, %v356
      %v372 = vpack.c.b16 %v359, %v358
      %v373 = vpack.c.b16 %v361, %v360
      %v374 = vpack.c.b16 %v363, %v362
      %v375 = vpack.c.b16 %v365, %v364
      %v376 = vpack.c.b16 %v367, %v366
      %v377 = vpack.c.b16 %v369, %v368
      %386 = vmatpush.bf16.msra.mxu0 %v377
      %387 = vmatpush.bf16.msra.mxu0 %v376
      %388 = vmatpush.bf16.msra.mxu0 %v375
      %389 = vmatpush.bf16.msra.mxu0 %v374
      %390 = vmatpush.bf16.msra.mxu0 %v373
      %391 = vmatpush.bf16.msra.mxu0 %v372
      %392 = vmatpush.bf16.msra.mxu0 %v371
      %393 = vmatpush.bf16.msra.mxu0 %v370
      %394 = vmatmul.bf16.gmra.mxu0 %v336
      %v395 = vpop.f32.mrf.mxu0
      %v396 = vadd.f32 0.0, %v395
      %v397 = vpop.f32.mrf.mxu0
      %v398 = vadd.f32 0.0, %v397
      %399 = vdwg.mxu0
      %v402 = vunpack.c.l.b16 %v280
      %v403 = vunpack.c.h.b16 %v280
      %v404 = vunpack.c.l.b16 %v281
      %v405 = vunpack.c.h.b16 %v281
      %v406 = vpack.c.b16 %v404, %v402
      %v407 = vpack.c.b16 %v405, %v403
      %v442 = vunpack.c.l.b16 %v282
      %v443 = vunpack.c.l.b16 %v283
      %v444 = vunpack.c.l.b16 %v284
      %v445 = vunpack.c.l.b16 %v285
      %v446 = vunpack.c.l.b16 %v286
      %v447 = vunpack.c.l.b16 %v287
      %v448 = vunpack.c.l.b16 %v288
      %v449 = vunpack.c.l.b16 %v289
      %v450 = vunpack.c.l.b16 %v290
      %v451 = vunpack.c.l.b16 %v291
      %v452 = vunpack.c.l.b16 %v292
      %v453 = vunpack.c.l.b16 %v293
      %v454 = vunpack.c.l.b16 %v294
      %v455 = vunpack.c.l.b16 %v295
      %v456 = vunpack.c.l.b16 %v296
      %v457 = vunpack.c.l.b16 %v297
      %v458 = vunpack.c.l.b16 %v298
      %v459 = vunpack.c.l.b16 %v299
      %v460 = vunpack.c.l.b16 %v300
      %v461 = vunpack.c.l.b16 %v301
      %v462 = vunpack.c.l.b16 %v302
      %v463 = vunpack.c.l.b16 %v303
      %v464 = vunpack.c.l.b16 %v304
      %v465 = vunpack.c.l.b16 %v305
      %v466 = vunpack.c.l.b16 %v306
      %v467 = vunpack.c.l.b16 %v307
      %v468 = vunpack.c.l.b16 %v308
      %v469 = vunpack.c.l.b16 %v309
      %v470 = vunpack.c.l.b16 %v310
      %v471 = vunpack.c.l.b16 %v311
      %v472 = vunpack.c.l.b16 %v312
      %v473 = vunpack.c.l.b16 %v313
      %v474 = vpack.c.b16 %v443, %v442
      %v475 = vpack.c.b16 %v445, %v444
      %v476 = vpack.c.b16 %v447, %v446
      %v477 = vpack.c.b16 %v449, %v448
      %v478 = vpack.c.b16 %v451, %v450
      %v479 = vpack.c.b16 %v453, %v452
      %v480 = vpack.c.b16 %v455, %v454
      %v481 = vpack.c.b16 %v457, %v456
      %v482 = vpack.c.b16 %v459, %v458
      %v483 = vpack.c.b16 %v461, %v460
      %v484 = vpack.c.b16 %v463, %v462
      %v485 = vpack.c.b16 %v465, %v464
      %v486 = vpack.c.b16 %v467, %v466
      %v487 = vpack.c.b16 %v469, %v468
      %v488 = vpack.c.b16 %v471, %v470
      %v489 = vpack.c.b16 %v473, %v472
      %506 = vmatpush.bf16.msra.mxu0 %v481
      %507 = vmatpush.bf16.msra.mxu0 %v480
      %508 = vmatpush.bf16.msra.mxu0 %v479
      %509 = vmatpush.bf16.msra.mxu0 %v478
      %510 = vmatpush.bf16.msra.mxu0 %v477
      %511 = vmatpush.bf16.msra.mxu0 %v476
      %512 = vmatpush.bf16.msra.mxu0 %v475
      %513 = vmatpush.bf16.msra.mxu0 %v474
      %514 = vmatmul.bf16.gmra.mxu0 %v406
      %v515 = vpop.f32.mrf.mxu0
      %v516 = vadd.f32 %v396, %v515
      %v517 = vpop.f32.mrf.mxu0
      %v518 = vadd.f32 %v398, %v517
      %519 = vdwg.mxu0
      %520 = vmatpush.bf16.msra.mxu0 %v489
      %521 = vmatpush.bf16.msra.mxu0 %v488
      %522 = vmatpush.bf16.msra.mxu0 %v487
      %523 = vmatpush.bf16.msra.mxu0 %v486
      %524 = vmatpush.bf16.msra.mxu0 %v485
      %525 = vmatpush.bf16.msra.mxu0 %v484
      %526 = vmatpush.bf16.msra.mxu0 %v483
      %527 = vmatpush.bf16.msra.mxu0 %v482
      %528 = vmatmul.bf16.gmra.mxu0 %v407
      %v529 = vpop.f32.mrf.mxu0
      %v530 = vadd.f32 %v516, %v529
      %v531 = vpop.f32.mrf.mxu0
      %v532 = vadd.f32 %v518, %v531
      %533 = vdwg.mxu0
      %v534 = vld [vmem:[%s2] sm:$0x1]
      %v536 = vperm.slane %v534, 0
      %v538 = vadd.f32 %v530, %v536
      %v539 = vadd.f32 %v532, %v536
      %v540 = vld [vmem:[%s5] sm:$0x1]
      %v542 = vperm.slane %v540, 0
      %v544 = vadd.f32 %v538, %v542
      %v545 = vadd.f32 %v539, %v542
      %v546 = vmax.f32 %v544, 0.0
      %v547 = vmax.f32 %v545, 0.0
      %v548 = vpack.c.bf16 %v546, %v546
      %v549 = vpack.c.bf16 %v547, %v547
      %550 = vst [vmem:[%s278] sm:$0xf] %v548
      %551 = vst [vmem:[%s278 + $0x4] sm:$0xf] %v549
      %s552 = smul.u32 2, %s17
      %p553 = scmp.lt.s32.totalorder %s552, 3
      %s554 = scalar_select %p553, %s552, 3
      %s555 = smul.addr %s554, 4
      %s556 = scalar_lea.vmem %s6, %s555
      // Predicated region
      $region45: #{resnet_forward.26} parent=43 // pred_check
        %p557 = pneg %p171
      $region46: #{resnet_forward.26} parent=43 // pred_check_branch
        %559 = sbr.rel (%p557) target = $region48
      $region47: #{resnet_forward.26} parent=43 // pred_region
        %s560 = smul.u32 2, %s17
      $region48: #{resnet_forward.26} parent=43 // pred_fallthru
        _
    $region44: #{resnet_forward.26} parent=5 // pred_fallthru
      _
    %p561 = scmp.le.s32.totalorder 2, %s12
    // Predicated region
    $region49: #{resnet_forward.26} parent=5 // pred_check
      %p562 = pneg %p561
    $region50: #{resnet_forward.26} parent=5 // pred_check_branch
      %564 = sbr.rel (%p562) target = $region52
    $region51: #{resnet_forward.26} parent=5 // pred_region
      %s565 = ssub.s32 %s12, 2
      // Predicated region
      $region53: #{resnet_forward.26} parent=51 // pred_check
        %p566 = pneg %p177
      $region54: #{resnet_forward.26} parent=51 // pred_check_branch
        %568 = sbr.rel (%p566) target = $region56
      $region55: #{resnet_forward.26} parent=51 // pred_region
        %s569 = smul.u32 2, %s18
        %p570 = scmp.lt.s32.totalorder %s569, 3
        %s571 = scalar_select %p570, %s569, 3
        %s572 = smul.addr %s571, 4
        %s573 = scalar_lea.vmem %s6, %s572
      $region56: #{resnet_forward.26} parent=51 // pred_fallthru
        _
    $region52: #{resnet_forward.26} parent=5 // pred_fallthru
      _
  $region6: #{resnet_forward.26} parent=0 // loop_footer
    %s16 = sadd.s32 1, %s12
  $region7: #{resnet_forward.26} parent=0 // loop_footer_branch
    %11 = sbr.rel target = $region3
  $region8: #{resnet_forward.26} parent=0 // loop_exit
    _

// kernel: resnet_forward.27
$region0: #{resnet_forward.27}
  #allocation0 [shape = 'u32[]', space=smem, size = 0x4, offset = 0x4, fixed_abs, tag = 'smem constant byte address 0x4 - core index']
  #allocation1 [shape = 'u32[72,128]{1,0:T(1,128)}', space=vmem, size = 0x9000, scoped, tag = 'internal scratch']
  %s0 = inlined_call_operand.vmem [shape: bf16[32,256], index: 0, kind: input, shape index: {}]
  %s1 = inlined_call_operand.vmem [shape: bf16[256,128], index: 1, kind: input, shape index: {}]
  %s2 = inlined_call_operand.vmem [shape: f32[1,128], index: 2, kind: input, shape index: {}]
  %s3 = inlined_call_operand.vmem [shape: bf16[32,128], index: 3, kind: output, shape index: {}]
  %s4 = sld [smem:[#allocation0]]
  $region45: #{resnet_forward.27} parent=0
    _
  %s6 = ssub.s32 1, %s4
  %s7 = scalar_select 0, %s6, %s4
  loop: start=0, step=1, limit=4
  $region2: #{resnet_forward.27} parent=0 // loop_pre_header
    _
  $region3: #{resnet_forward.27} parent=0 // loop_header
    %s9 = sphi 0, %s13
    %p10 = scmp.ge.s32.totalorder %s9, 4
    %s19 = sphi 0, %s21
    %s22 = sphi 0, %s19
    %s23 = sphi 0, %s22
    %s39 = sphi 0, %s23
    %s43 = sphi 0, %s43
    %s45 = sphi 0, %s43
    %s46 = sphi 0, %s45
    %s60 = sphi 0, %s46
    %s64 = sphi 0, %s64
    %s66 = sphi 0, %s64
    %s67 = sphi 0, %s66
    %s81 = sphi 0, %s67
    %s87 = sphi 0, %s89
    %s90 = sphi 0, %s87
    %s91 = sphi 0, %s90
    %s107 = sphi 0, %s91
  $region4: #{resnet_forward.27} parent=0 // loop_header_branch
    %12 = sbr.rel (%p10) target = $region8
  $region5: #{resnet_forward.27} parent=0 // loop_body
    %s14 = ssub.s32 %s9, 1
    %s15 = ssub.s32 %s9, 2
    %s16 = sadd.s32 %s9, 1
    %s17 = ssub.s32 %s9, %s16
    %p18 = scmp.eq.s32.totalorder %s17, 0
    %s20 = sadd.s32 %s19, 1
    %s21 = scalar_select %p18, %s19, %s20
    %p24 = pneg %p18
    %p25 = scmp.eq.s32.totalorder %s9, 1
    %p26 = por %p24, %p25
    %p27 = scmp.ne.s32.totalorder %s19, %s22
    %p28 = scmp.eq.s32.totalorder %s9, 0
    %p29 = por %p27, %p28
    %p30 = scmp.ne.s32.totalorder %s19, %s22
    %p31 = scmp.eq.s32.totalorder %s14, 1
    %p32 = por %p30, %p31
    %p33 = scmp.ne.s32.totalorder %s22, %s23
    %p34 = scmp.eq.s32.totalorder %s14, 0
    %p35 = por %p33, %p34
    %p36 = scmp.ne.s32.totalorder %s22, %s23
    %p37 = scmp.eq.s32.totalorder %s15, 1
    %p38 = por %p36, %p37
    %p40 = scmp.ne.s32.totalorder %s23, %s39
    %p41 = scmp.eq.s32.totalorder %s15, 0
    %p42 = por %p40, %p41
    %s44 = sadd.s32 %s43, 1
    %p47 = scmp.eq.s32.totalorder %s9, 1
    %p48 = scmp.ne.s32.totalorder %s43, %s45
    %p49 = scmp.eq.s32.totalorder %s9, 0
    %p50 = por %p48, %p49
    %p51 = scmp.ne.s32.totalorder %s43, %s45
    %p52 = scmp.eq.s32.totalorder %s14, 1
    %p53 = por %p51, %p52
    %p54 = scmp.ne.s32.totalorder %s45, %s46
    %p55 = scmp.eq.s32.totalorder %s14, 0
    %p56 = por %p54, %p55
    %p57 = scmp.ne.s32.totalorder %s45, %s46
    %p58 = scmp.eq.s32.totalorder %s15, 1
    %p59 = por %p57, %p58
    %p61 = scmp.ne.s32.totalorder %s46, %s60
    %p62 = scmp.eq.s32.totalorder %s15, 0
    %p63 = por %p61, %p62
    %s65 = sadd.s32 %s64, 1
    %p68 = scmp.eq.s32.totalorder %s9, 1
    %p69 = scmp.ne.s32.totalorder %s64, %s66
    %p70 = scmp.eq.s32.totalorder %s9, 0
    %p71 = por %p69, %p70
    %p72 = scmp.ne.s32.totalorder %s64, %s66
    %p73 = scmp.eq.s32.totalorder %s14, 1
    %p74 = por %p72, %p73
    %p75 = scmp.ne.s32.totalorder %s66, %s67
    %p76 = scmp.eq.s32.totalorder %s14, 0
    %p77 = por %p75, %p76
    %p78 = scmp.ne.s32.totalorder %s66, %s67
    %p79 = scmp.eq.s32.totalorder %s15, 1
    %p80 = por %p78, %p79
    %p82 = scmp.ne.s32.totalorder %s67, %s81
    %p83 = scmp.eq.s32.totalorder %s15, 0
    %p84 = por %p82, %p83
    %s85 = ssub.s32 %s9, %s16
    %p86 = scmp.eq.s32.totalorder %s85, 0
    %s88 = sadd.s32 %s87, 1
    %s89 = scalar_select %p86, %s87, %s88
    %p92 = pneg %p86
    %p93 = scmp.eq.s32.totalorder %s9, 1
    %p94 = por %p92, %p93
    %p95 = scmp.ne.s32.totalorder %s87, %s90
    %p96 = scmp.eq.s32.totalorder %s9, 0
    %p97 = por %p95, %p96
    %p98 = scmp.ne.s32.totalorder %s87, %s90
    %p99 = scmp.eq.s32.totalorder %s14, 1
    %p100 = por %p98, %p99
    %p101 = scmp.ne.s32.totalorder %s90, %s91
    %p102 = scmp.eq.s32.totalorder %s14, 0
    %p103 = por %p101, %p102
    %p104 = scmp.ne.s32.totalorder %s90, %s91
    %p105 = scmp.eq.s32.totalorder %s15, 1
    %p106 = por %p104, %p105
    %p108 = scmp.ne.s32.totalorder %s91, %s107
    %p109 = scmp.eq.s32.totalorder %s15, 0
    %p110 = por %p108, %p109
    %p111 = scmp.le.s32.totalorder 1, %s9
    %p112 = scmp.lt.s32.totalorder %s9, 3
    %p113 = pnand %p111, %p112
    %p114 = pneg %p113
    // Predicated region
    $region9: #{resnet_forward.27} parent=5 // pred_check
      _
    $region10: #{resnet_forward.27} parent=5 // pred_check_branch
      %116 = sbr.rel (%p113) target = $region12
    $region11: #{resnet_forward.27} parent=5 // pred_region
      %s117 = ssub.s32 %s9, 1
      // Predicated region
      $region13: #{resnet_forward.27} parent=11 // pred_check
        %p118 = pneg %p56
      $region14: #{resnet_forward.27} parent=11 // pred_check_branch
        %120 = sbr.rel (%p118) target = $region16
      $region15: #{resnet_forward.27} parent=11 // pred_region
        _
      $region16: #{resnet_forward.27} parent=11 // pred_fallthru
        _
      // Predicated region
      $region17: #{resnet_forward.27} parent=11 // pred_check
        %p121 = pneg %p77
      $region18: #{resnet_forward.27} parent=11 // pred_check_branch
        %123 = sbr.rel (%p121) target = $region20
      $region19: #{resnet_forward.27} parent=11 // pred_region
        _
      $region20: #{resnet_forward.27} parent=11 // pred_fallthru
        _
    $region12: #{resnet_forward.27} parent=5 // pred_fallthru
      _
    %p124 = scmp.lt.s32.totalorder %s9, 2
    // Predicated region
    $region21: #{resnet_forward.27} parent=5 // pred_check
      %p125 = pneg %p124
    $region22: #{resnet_forward.27} parent=5 // pred_check_branch
      %127 = sbr.rel (%p125) target = $region24
    $region23: #{resnet_forward.27} parent=5 // pred_region
      // Predicated region
      $region25: #{resnet_forward.27} parent=23 // pred_check
        %p128 = pneg %p29
      $region26: #{resnet_forward.27} parent=23 // pred_check_branch
        %130 = sbr.rel (%p128) target = $region28
      $region27: #{resnet_forward.27} parent=23 // pred_region
        %s131 = smul.u32 2, %s9
        %p132 = scmp.lt.s32.totalorder %s131, 3
        %s133 = scalar_select %p132, %s131, 3
        %s134 = smul.addr %s133, 2
        %s135 = smul.addr %s134, 4
        %s136 = scalar_lea.vmem %s0, %s135
        %s137 = smul.u32 2, %s9
      $region28: #{resnet_forward.27} parent=23 // pred_fallthru
        _
    $region24: #{resnet_forward.27} parent=5 // pred_fallthru
      _
    %p138 = scmp.le.s32.totalorder 1, %s9
    %p139 = scmp.lt.s32.totalorder %s9, 3
    %p140 = pnand %p138, %p139
    %p141 = pneg %p140
    // Predicated region
    $region29: #{resnet_forward.27} parent=5 // pred_check
      _
    $region30: #{resnet_forward.27} parent=5 // pred_check_branch
      %143 = sbr.rel (%p140) target = $region32
    $region31: #{resnet_forward.27} parent=5 // pred_region
      %s144 = ssub.s32 %s9, 1
      %s145 = smul.u32 2, %s14
      %p146 = scmp.lt.s32.totalorder %s145, 3
      %s147 = scalar_select %p146, %s145, 3
      %s148 = smul.addr %s147, 2
      %s149 = smul.addr %s148, 4
      %s150 = scalar_lea.vmem %s0, %s149
      %p151 = pneg %p35
      %p152 = pneg %p32
      %p153 = pneg %p56
      %p154 = pneg %p53
      %p155 = pneg %p77
      %p156 = pneg %p74
      %p157 = pneg %p103
      %p158 = pneg %p100
      %s159 = smul.u32 2, %s14
      %p160 = scmp.lt.s32.totalorder %s159, 3
      %s161 = scalar_select %p160, %s159, 3
      %s162 = smul.addr %s161, 4
      %s163 = scalar_lea.vmem %s3, %s162
      %s164 = smul.u32 2, %s14
      %p165 = scmp.lt.s32.totalorder %s164, 3
      %s166 = scalar_select %p165, %s164, 3
      %s167 = smul.addr %s166, 2
      %s168 = smul.addr %s167, 4
      %s169 = scalar_lea.vmem %s0, %s168
      %s170 = smul.u32 2, %s14
      %s171 = smul.u32 2, %s14
      %p172 = scmp.lt.s32.totalorder %s171, 3
      %s173 = scalar_select %p172, %s171, 3
      %s174 = smul.addr %s173, 4
      %s175 = scalar_lea.vmem %s3, %s174
      %s176 = smul.u32 2, %s14
      %v177 = vld [vmem:[%s169] sm:$0xff]
      %v178 = vld [vmem:[%s169 + $0x8] sm:$0xff]
      %v179 = vld [vmem:[%s1] sm:$0xf]
      %v180 = vld [vmem:[%s1 + $0x4] sm:$0xf]
      %v181 = vld [vmem:[%s1 + $0x8] sm:$0xf]
      %v182 = vld [vmem:[%s1 + $0xc] sm:$0xf]
      %v183 = vld [vmem:[%s1 + $0x10] sm:$0xf]
      %v184 = vld [vmem:[%s1 + $0x14] sm:$0xf]
      %v185 = vld [vmem:[%s1 + $0x18] sm:$0xf]
      %v186 = vld [vmem:[%s1 + $0x1c] sm:$0xf]
      %v187 = vld [vmem:[%s1 + $0x20] sm:$0xf]
      %v188 = vld [vmem:[%s1 + $0x24] sm:$0xf]
      %v189 = vld [vmem:[%s1 + $0x28] sm:$0xf]
      %v190 = vld [vmem:[%s1 + $0x2c] sm:$0xf]
      %v191 = vld [vmem:[%s1 + $0x30] sm:$0xf]
      %v192 = vld [vmem:[%s1 + $0x34] sm:$0xf]
      %v193 = vld [vmem:[%s1 + $0x38] sm:$0xf]
      %v194 = vld [vmem:[%s1 + $0x3c] sm:$0xf]
      %v195 = vld [vmem:[%s1 + $0x40] sm:$0xf]
      %v196 = vld [vmem:[%s1 + $0x44] sm:$0xf]
      %v197 = vld [vmem:[%s1 + $0x48] sm:$0xf]
      %v198 = vld [vmem:[%s1 + $0x4c] sm:$0xf]
      %v199 = vld [vmem:[%s1 + $0x50] sm:$0xf]
      %v200 = vld [vmem:[%s1 + $0x54] sm:$0xf]
      %v201 = vld [vmem:[%s1 + $0x58] sm:$0xf]
      %v202 = vld [vmem:[%s1 + $0x5c] sm:$0xf]
      %v203 = vld [vmem:[%s1 + $0x60] sm:$0xf]
      %v204 = vld [vmem:[%s1 + $0x64] sm:$0xf]
      %v205 = vld [vmem:[%s1 + $0x68] sm:$0xf]
      %v206 = vld [vmem:[%s1 + $0x6c] sm:$0xf]
      %v207 = vld [vmem:[%s1 + $0x70] sm:$0xf]
      %v208 = vld [vmem:[%s1 + $0x74] sm:$0xf]
      %v209 = vld [vmem:[%s1 + $0x78] sm:$0xf]
      %v210 = vld [vmem:[%s1 + $0x7c] sm:$0xf]
      %v211 = vld [vmem:[%s2] sm:$0x1]
      %v213 = vperm.slane %v211, 0
      %v217 = vunpack.c.l.b16 %v177
      %v218 = vunpack.c.h.b16 %v177
      %v219 = vunpack.c.l.b16 %v178
      %v220 = vunpack.c.h.b16 %v178
      %v221 = vpack.c.b16 %v219, %v217
      %v222 = vpack.c.b16 %v220, %v218
      %v257 = vunpack.c.l.b16 %v179
      %v258 = vunpack.c.l.b16 %v180
      %v259 = vunpack.c.l.b16 %v181
      %v260 = vunpack.c.l.b16 %v182
      %v261 = vunpack.c.l.b16 %v183
      %v262 = vunpack.c.l.b16 %v184
      %v263 = vunpack.c.l.b16 %v185
      %v264 = vunpack.c.l.b16 %v186
      %v265 = vunpack.c.l.b16 %v187
      %v266 = vunpack.c.l.b16 %v188
      %v267 = vunpack.c.l.b16 %v189
      %v268 = vunpack.c.l.b16 %v190
      %v269 = vunpack.c.l.b16 %v191
      %v270 = vunpack.c.l.b16 %v192
      %v271 = vunpack.c.l.b16 %v193
      %v272 = vunpack.c.l.b16 %v194
      %v273 = vunpack.c.l.b16 %v195
      %v274 = vunpack.c.l.b16 %v196
      %v275 = vunpack.c.l.b16 %v197
      %v276 = vunpack.c.l.b16 %v198
      %v277 = vunpack.c.l.b16 %v199
      %v278 = vunpack.c.l.b16 %v200
      %v279 = vunpack.c.l.b16 %v201
      %v280 = vunpack.c.l.b16 %v202
      %v281 = vunpack.c.l.b16 %v203
      %v282 = vunpack.c.l.b16 %v204
      %v283 = vunpack.c.l.b16 %v205
      %v284 = vunpack.c.l.b16 %v206
      %v285 = vunpack.c.l.b16 %v207
      %v286 = vunpack.c.l.b16 %v208
      %v287 = vunpack.c.l.b16 %v209
      %v288 = vunpack.c.l.b16 %v210
      %v289 = vpack.c.b16 %v258, %v257
      %v290 = vpack.c.b16 %v260, %v259
      %v291 = vpack.c.b16 %v262, %v261
      %v292 = vpack.c.b16 %v264, %v263
      %v293 = vpack.c.b16 %v266, %v265
      %v294 = vpack.c.b16 %v268, %v267
      %v295 = vpack.c.b16 %v270, %v269
      %v296 = vpack.c.b16 %v272, %v271
      %v297 = vpack.c.b16 %v274, %v273
      %v298 = vpack.c.b16 %v276, %v275
      %v299 = vpack.c.b16 %v278, %v277
      %v300 = vpack.c.b16 %v280, %v279
      %v301 = vpack.c.b16 %v282, %v281
      %v302 = vpack.c.b16 %v284, %v283
      %v303 = vpack.c.b16 %v286, %v285
      %v304 = vpack.c.b16 %v288, %v287
      %321 = vmatpush.bf16.msra.mxu0 %v296
      %322 = vmatpush.bf16.msra.mxu0 %v295
      %323 = vmatpush.bf16.msra.mxu0 %v294
      %324 = vmatpush.bf16.msra.mxu0 %v293
      %325 = vmatpush.bf16.msra.mxu0 %v292
      %326 = vmatpush.bf16.msra.mxu0 %v291
      %327 = vmatpush.bf16.msra.mxu0 %v290
      %328 = vmatpush.bf16.msra.mxu0 %v289
      %329 = vmatmul.bf16.gmra.mxu0 %v221
      %v330 = vpop.f32.mrf.mxu0
      %v331 = vadd.f32 %v213, %v330
      %v332 = vpop.f32.mrf.mxu0
      %v333 = vadd.f32 %v213, %v332
      %334 = vdwg.mxu0
      %335 = vmatpush.bf16.msra.mxu0 %v304
      %336 = vmatpush.bf16.msra.mxu0 %v303
      %337 = vmatpush.bf16.msra.mxu0 %v302
      %338 = vmatpush.bf16.msra.mxu0 %v301
      %339 = vmatpush.bf16.msra.mxu0 %v300
      %340 = vmatpush.bf16.msra.mxu0 %v299
      %341 = vmatpush.bf16.msra.mxu0 %v298
      %342 = vmatpush.bf16.msra.mxu0 %v297
      %343 = vmatmul.bf16.gmra.mxu0 %v222
      %v344 = vpop.f32.mrf.mxu0
      %v345 = vadd.f32 %v331, %v344
      %v346 = vpop.f32.mrf.mxu0
      %v347 = vadd.f32 %v333, %v346
      %348 = vdwg.mxu0
      %v349 = vmax.f32 %v345, 0.0
      %v350 = vmax.f32 %v347, 0.0
      %v351 = vpack.c.bf16 %v349, %v349
      %v352 = vpack.c.bf16 %v350, %v350
      %353 = vst [vmem:[%s175] sm:$0xf] %v351
      %354 = vst [vmem:[%s175 + $0x4] sm:$0xf] %v352
      %s355 = smul.u32 2, %s14
      %p356 = scmp.lt.s32.totalorder %s355, 3
      %s357 = scalar_select %p356, %s355, 3
      %s358 = smul.addr %s357, 4
      %s359 = scalar_lea.vmem %s3, %s358
      // Predicated region
      $region33: #{resnet_forward.27} parent=31 // pred_check
        %p360 = pneg %p100
      $region34: #{resnet_forward.27} parent=31 // pred_check_branch
        %362 = sbr.rel (%p360) target = $region36
      $region35: #{resnet_forward.27} parent=31 // pred_region
        %s363 = smul.u32 2, %s14
      $region36: #{resnet_forward.27} parent=31 // pred_fallthru
        _
    $region32: #{resnet_forward.27} parent=5 // pred_fallthru
      _
    %p364 = scmp.le.s32.totalorder 2, %s9
    // Predicated region
    $region37: #{resnet_forward.27} parent=5 // pred_check
      %p365 = pneg %p364
    $region38: #{resnet_forward.27} parent=5 // pred_check_branch
      %367 = sbr.rel (%p365) target = $region40
    $region39: #{resnet_forward.27} parent=5 // pred_region
      %s368 = ssub.s32 %s9, 2
      // Predicated region
      $region41: #{resnet_forward.27} parent=39 // pred_check
        %p369 = pneg %p106
      $region42: #{resnet_forward.27} parent=39 // pred_check_branch
        %371 = sbr.rel (%p369) target = $region44
      $region43: #{resnet_forward.27} parent=39 // pred_region
        %s372 = smul.u32 2, %s15
        %p373 = scmp.lt.s32.totalorder %s372, 3
        %s374 = scalar_select %p373, %s372, 3
        %s375 = smul.addr %s374, 4
        %s376 = scalar_lea.vmem %s3, %s375
      $region44: #{resnet_forward.27} parent=39 // pred_fallthru
        _
    $region40: #{resnet_forward.27} parent=5 // pred_fallthru
      _
  $region6: #{resnet_forward.27} parent=0 // loop_footer
    %s13 = sadd.s32 1, %s9
  $region7: #{resnet_forward.27} parent=0 // loop_footer_branch
    %8 = sbr.rel target = $region3
  $region8: #{resnet_forward.27} parent=0 // loop_exit
    _

// kernel: resnet_forward.29
$region0: #{resnet_forward.29}
  #allocation0 [shape = 'u32[]', space=smem, size = 0x4, offset = 0x4, fixed_abs, tag = 'smem constant byte address 0x4 - core index']
  #allocation1 [shape = 'u32[72,128]{1,0:T(1,128)}', space=vmem, size = 0x9000, scoped, tag = 'internal scratch']
  %s0 = inlined_call_operand.vmem [shape: bf16[8,256], index: 0, kind: input, shape index: {}]
  %s1 = inlined_call_operand.vmem [shape: bf16[256,128], index: 1, kind: input, shape index: {}]
  %s2 = inlined_call_operand.vmem [shape: f32[1,128], index: 2, kind: input, shape index: {}]
  %s3 = inlined_call_operand.vmem [shape: bf16[8,128], index: 3, kind: output, shape index: {}]
  %s4 = sld [smem:[#allocation0]]
  $region22: #{resnet_forward.29} parent=0
    _
  %s6 = ssub.s32 1, %s4
  %s7 = scalar_select 0, %s6, %s4
  // Predicated region
  $region2: #{resnet_forward.29} parent=0 // pred_check
    _
  $region3: #{resnet_forward.29} parent=0 // pred_check_branch
    %9 = sbr.rel (0) target = $region5
  $region4: #{resnet_forward.29} parent=0 // pred_region
    _
  $region5: #{resnet_forward.29} parent=0 // pred_fallthru
    _
  // Predicated region
  $region6: #{resnet_forward.29} parent=0 // pred_check
    _
  $region7: #{resnet_forward.29} parent=0 // pred_check_branch
    %11 = sbr.rel (0) target = $region9
  $region8: #{resnet_forward.29} parent=0 // pred_region
    _
  $region9: #{resnet_forward.29} parent=0 // pred_fallthru
    _
  // Predicated region
  $region10: #{resnet_forward.29} parent=0 // pred_check
    _
  $region11: #{resnet_forward.29} parent=0 // pred_check_branch
    %13 = sbr.rel (0) target = $region13
  $region12: #{resnet_forward.29} parent=0 // pred_region
    _
  $region13: #{resnet_forward.29} parent=0 // pred_fallthru
    _
  %v14 = vld [vmem:[%s0] sm:$0xff]
  %v15 = vld [vmem:[%s1] sm:$0xf]
  %v16 = vld [vmem:[%s1 + $0x4] sm:$0xf]
  %v17 = vld [vmem:[%s1 + $0x8] sm:$0xf]
  %v18 = vld [vmem:[%s1 + $0xc] sm:$0xf]
  %v19 = vld [vmem:[%s1 + $0x10] sm:$0xf]
  %v20 = vld [vmem:[%s1 + $0x14] sm:$0xf]
  %v21 = vld [vmem:[%s1 + $0x18] sm:$0xf]
  %v22 = vld [vmem:[%s1 + $0x1c] sm:$0xf]
  %v23 = vld [vmem:[%s1 + $0x20] sm:$0xf]
  %v24 = vld [vmem:[%s1 + $0x24] sm:$0xf]
  %v25 = vld [vmem:[%s1 + $0x28] sm:$0xf]
  %v26 = vld [vmem:[%s1 + $0x2c] sm:$0xf]
  %v27 = vld [vmem:[%s1 + $0x30] sm:$0xf]
  %v28 = vld [vmem:[%s1 + $0x34] sm:$0xf]
  %v29 = vld [vmem:[%s1 + $0x38] sm:$0xf]
  %v30 = vld [vmem:[%s1 + $0x3c] sm:$0xf]
  %v31 = vld [vmem:[%s1 + $0x40] sm:$0xf]
  %v32 = vld [vmem:[%s1 + $0x44] sm:$0xf]
  %v33 = vld [vmem:[%s1 + $0x48] sm:$0xf]
  %v34 = vld [vmem:[%s1 + $0x4c] sm:$0xf]
  %v35 = vld [vmem:[%s1 + $0x50] sm:$0xf]
  %v36 = vld [vmem:[%s1 + $0x54] sm:$0xf]
  %v37 = vld [vmem:[%s1 + $0x58] sm:$0xf]
  %v38 = vld [vmem:[%s1 + $0x5c] sm:$0xf]
  %v39 = vld [vmem:[%s1 + $0x60] sm:$0xf]
  %v40 = vld [vmem:[%s1 + $0x64] sm:$0xf]
  %v41 = vld [vmem:[%s1 + $0x68] sm:$0xf]
  %v42 = vld [vmem:[%s1 + $0x6c] sm:$0xf]
  %v43 = vld [vmem:[%s1 + $0x70] sm:$0xf]
  %v44 = vld [vmem:[%s1 + $0x74] sm:$0xf]
  %v45 = vld [vmem:[%s1 + $0x78] sm:$0xf]
  %v46 = vld [vmem:[%s1 + $0x7c] sm:$0xf]
  %v47 = vld [vmem:[%s2] sm:$0x1]
  %v49 = vperm.slane %v47, 0
  %v52 = vunpack.c.l.b16 %v14
  %v53 = vunpack.c.h.b16 %v14
  %v54 = vpack.c.b16 %v52, %v52
  %v55 = vpack.c.b16 %v53, %v53
  %v90 = vunpack.c.l.b16 %v15
  %v91 = vunpack.c.l.b16 %v16
  %v92 = vunpack.c.l.b16 %v17
  %v93 = vunpack.c.l.b16 %v18
  %v94 = vunpack.c.l.b16 %v19
  %v95 = vunpack.c.l.b16 %v20
  %v96 = vunpack.c.l.b16 %v21
  %v97 = vunpack.c.l.b16 %v22
  %v98 = vunpack.c.l.b16 %v23
  %v99 = vunpack.c.l.b16 %v24
  %v100 = vunpack.c.l.b16 %v25
  %v101 = vunpack.c.l.b16 %v26
  %v102 = vunpack.c.l.b16 %v27
  %v103 = vunpack.c.l.b16 %v28
  %v104 = vunpack.c.l.b16 %v29
  %v105 = vunpack.c.l.b16 %v30
  %v106 = vunpack.c.l.b16 %v31
  %v107 = vunpack.c.l.b16 %v32
  %v108 = vunpack.c.l.b16 %v33
  %v109 = vunpack.c.l.b16 %v34
  %v110 = vunpack.c.l.b16 %v35
  %v111 = vunpack.c.l.b16 %v36
  %v112 = vunpack.c.l.b16 %v37
  %v113 = vunpack.c.l.b16 %v38
  %v114 = vunpack.c.l.b16 %v39
  %v115 = vunpack.c.l.b16 %v40
  %v116 = vunpack.c.l.b16 %v41
  %v117 = vunpack.c.l.b16 %v42
  %v118 = vunpack.c.l.b16 %v43
  %v119 = vunpack.c.l.b16 %v44
  %v120 = vunpack.c.l.b16 %v45
  %v121 = vunpack.c.l.b16 %v46
  %v122 = vpack.c.b16 %v91, %v90
  %v123 = vpack.c.b16 %v93, %v92
  %v124 = vpack.c.b16 %v95, %v94
  %v125 = vpack.c.b16 %v97, %v96
  %v126 = vpack.c.b16 %v99, %v98
  %v127 = vpack.c.b16 %v101, %v100
  %v128 = vpack.c.b16 %v103, %v102
  %v129 = vpack.c.b16 %v105, %v104
  %v130 = vpack.c.b16 %v107, %v106
  %v131 = vpack.c.b16 %v109, %v108
  %v132 = vpack.c.b16 %v111, %v110
  %v133 = vpack.c.b16 %v113, %v112
  %v134 = vpack.c.b16 %v115, %v114
  %v135 = vpack.c.b16 %v117, %v116
  %v136 = vpack.c.b16 %v119, %v118
  %v137 = vpack.c.b16 %v121, %v120
  %154 = vmatpush.bf16.msra.mxu0 %v129
  %155 = vmatpush.bf16.msra.mxu0 %v128
  %156 = vmatpush.bf16.msra.mxu0 %v127
  %157 = vmatpush.bf16.msra.mxu0 %v126
  %158 = vmatpush.bf16.msra.mxu0 %v125
  %159 = vmatpush.bf16.msra.mxu0 %v124
  %160 = vmatpush.bf16.msra.mxu0 %v123
  %161 = vmatpush.bf16.msra.mxu0 %v122
  %162 = vmatmul.bf16.gmra.mxu0 %v54
  %v163 = vpop.f32.mrf.mxu0
  %v164 = vadd.f32 %v49, %v163
  %v165 = vpop.f32.mrf.mxu0
  %166 = vdwg.mxu0
  %167 = vmatpush.bf16.msra.mxu0 %v137
  %168 = vmatpush.bf16.msra.mxu0 %v136
  %169 = vmatpush.bf16.msra.mxu0 %v135
  %170 = vmatpush.bf16.msra.mxu0 %v134
  %171 = vmatpush.bf16.msra.mxu0 %v133
  %172 = vmatpush.bf16.msra.mxu0 %v132
  %173 = vmatpush.bf16.msra.mxu0 %v131
  %174 = vmatpush.bf16.msra.mxu0 %v130
  %175 = vmatmul.bf16.gmra.mxu0 %v55
  %v176 = vpop.f32.mrf.mxu0
  %v177 = vadd.f32 %v164, %v176
  %v178 = vpop.f32.mrf.mxu0
  %179 = vdwg.mxu0
  %v180 = vmax.f32 %v177, 0.0
  %v181 = vpack.c.bf16 %v180, %v180
  %182 = vst [vmem:[%s3] sm:$0xf] %v181
  // Predicated region
  $region14: #{resnet_forward.29} parent=0 // pred_check
    _
  $region15: #{resnet_forward.29} parent=0 // pred_check_branch
    %184 = sbr.rel (0) target = $region17
  $region16: #{resnet_forward.29} parent=0 // pred_region
    _
  $region17: #{resnet_forward.29} parent=0 // pred_fallthru
    _
  // Predicated region
  $region18: #{resnet_forward.29} parent=0 // pred_check
    _
  $region19: #{resnet_forward.29} parent=0 // pred_check_branch
    %186 = sbr.rel (0) target = $region21
  $region20: #{resnet_forward.29} parent=0 // pred_region
    _
  $region21: #{resnet_forward.29} parent=0 // pred_fallthru
    _

// kernel: resnet_forward.30
$region0: #{resnet_forward.30}
  #allocation0 [shape = 'u32[]', space=smem, size = 0x4, offset = 0x4, fixed_abs, tag = 'smem constant byte address 0x4 - core index']
  #allocation1 [shape = 'u32[72,128]{1,0:T(1,128)}', space=vmem, size = 0x9000, scoped, tag = 'internal scratch']
  %s0 = inlined_call_operand.vmem [shape: bf16[8,384], index: 0, kind: input, shape index: {}]
  %s1 = inlined_call_operand.vmem [shape: bf16[384,128], index: 1, kind: input, shape index: {}]
  %s2 = inlined_call_operand.vmem [shape: f32[1,128], index: 2, kind: input, shape index: {}]
  %s3 = inlined_call_operand.vmem [shape: bf16[8,128], index: 3, kind: input, shape index: {}]
  %s4 = inlined_call_operand.vmem [shape: bf16[128,128], index: 4, kind: input, shape index: {}]
  %s5 = inlined_call_operand.vmem [shape: f32[1,128], index: 5, kind: input, shape index: {}]
  %s6 = inlined_call_operand.vmem [shape: bf16[8,128], index: 6, kind: output, shape index: {}]
  %s7 = sld [smem:[#allocation0]]
  $region34: #{resnet_forward.30} parent=0
    _
  %s9 = ssub.s32 1, %s7
  %s10 = scalar_select 0, %s9, %s7
  // Predicated region
  $region2: #{resnet_forward.30} parent=0 // pred_check
    _
  $region3: #{resnet_forward.30} parent=0 // pred_check_branch
    %12 = sbr.rel (0) target = $region5
  $region4: #{resnet_forward.30} parent=0 // pred_region
    _
  $region5: #{resnet_forward.30} parent=0 // pred_fallthru
    _
  // Predicated region
  $region6: #{resnet_forward.30} parent=0 // pred_check
    _
  $region7: #{resnet_forward.30} parent=0 // pred_check_branch
    %14 = sbr.rel (0) target = $region9
  $region8: #{resnet_forward.30} parent=0 // pred_region
    _
  $region9: #{resnet_forward.30} parent=0 // pred_fallthru
    _
  // Predicated region
  $region10: #{resnet_forward.30} parent=0 // pred_check
    _
  $region11: #{resnet_forward.30} parent=0 // pred_check_branch
    %16 = sbr.rel (0) target = $region13
  $region12: #{resnet_forward.30} parent=0 // pred_region
    _
  $region13: #{resnet_forward.30} parent=0 // pred_fallthru
    _
  // Predicated region
  $region14: #{resnet_forward.30} parent=0 // pred_check
    _
  $region15: #{resnet_forward.30} parent=0 // pred_check_branch
    %18 = sbr.rel (0) target = $region17
  $region16: #{resnet_forward.30} parent=0 // pred_region
    _
  $region17: #{resnet_forward.30} parent=0 // pred_fallthru
    _
  // Predicated region
  $region18: #{resnet_forward.30} parent=0 // pred_check
    _
  $region19: #{resnet_forward.30} parent=0 // pred_check_branch
    %20 = sbr.rel (0) target = $region21
  $region20: #{resnet_forward.30} parent=0 // pred_region
    _
  $region21: #{resnet_forward.30} parent=0 // pred_fallthru
    _
  // Predicated region
  $region22: #{resnet_forward.30} parent=0 // pred_check
    _
  $region23: #{resnet_forward.30} parent=0 // pred_check_branch
    %22 = sbr.rel (0) target = $region25
  $region24: #{resnet_forward.30} parent=0 // pred_region
    _
  $region25: #{resnet_forward.30} parent=0 // pred_fallthru
    _
  %v23 = vld [vmem:[%s0] sm:$0xff]
  %v24 = vld [vmem:[%s0 + $0x8] sm:$0xf]
  %v25 = vld [vmem:[%s1] sm:$0xf]
  %v26 = vld [vmem:[%s1 + $0x4] sm:$0xf]
  %v27 = vld [vmem:[%s1 + $0x8] sm:$0xf]
  %v28 = vld [vmem:[%s1 + $0xc] sm:$0xf]
  %v29 = vld [vmem:[%s1 + $0x10] sm:$0xf]
  %v30 = vld [vmem:[%s1 + $0x14] sm:$0xf]
  %v31 = vld [vmem:[%s1 + $0x18] sm:$0xf]
  %v32 = vld [vmem:[%s1 + $0x1c] sm:$0xf]
  %v33 = vld [vmem:[%s1 + $0x20] sm:$0xf]
  %v34 = vld [vmem:[%s1 + $0x24] sm:$0xf]
  %v35 = vld [vmem:[%s1 + $0x28] sm:$0xf]
  %v36 = vld [vmem:[%s1 + $0x2c] sm:$0xf]
  %v37 = vld [vmem:[%s1 + $0x30] sm:$0xf]
  %v38 = vld [vmem:[%s1 + $0x34] sm:$0xf]
  %v39 = vld [vmem:[%s1 + $0x38] sm:$0xf]
  %v40 = vld [vmem:[%s1 + $0x3c] sm:$0xf]
  %v41 = vld [vmem:[%s1 + $0x40] sm:$0xf]
  %v42 = vld [vmem:[%s1 + $0x44] sm:$0xf]
  %v43 = vld [vmem:[%s1 + $0x48] sm:$0xf]
  %v44 = vld [vmem:[%s1 + $0x4c] sm:$0xf]
  %v45 = vld [vmem:[%s1 + $0x50] sm:$0xf]
  %v46 = vld [vmem:[%s1 + $0x54] sm:$0xf]
  %v47 = vld [vmem:[%s1 + $0x58] sm:$0xf]
  %v48 = vld [vmem:[%s1 + $0x5c] sm:$0xf]
  %v49 = vld [vmem:[%s1 + $0x60] sm:$0xf]
  %v50 = vld [vmem:[%s1 + $0x64] sm:$0xf]
  %v51 = vld [vmem:[%s1 + $0x68] sm:$0xf]
  %v52 = vld [vmem:[%s1 + $0x6c] sm:$0xf]
  %v53 = vld [vmem:[%s1 + $0x70] sm:$0xf]
  %v54 = vld [vmem:[%s1 + $0x74] sm:$0xf]
  %v55 = vld [vmem:[%s1 + $0x78] sm:$0xf]
  %v56 = vld [vmem:[%s1 + $0x7c] sm:$0xf]
  %v57 = vld [vmem:[%s1 + $0x80] sm:$0xf]
  %v58 = vld [vmem:[%s1 + $0x84] sm:$0xf]
  %v59 = vld [vmem:[%s1 + $0x88] sm:$0xf]
  %v60 = vld [vmem:[%s1 + $0x8c] sm:$0xf]
  %v61 = vld [vmem:[%s1 + $0x90] sm:$0xf]
  %v62 = vld [vmem:[%s1 + $0x94] sm:$0xf]
  %v63 = vld [vmem:[%s1 + $0x98] sm:$0xf]
  %v64 = vld [vmem:[%s1 + $0x9c] sm:$0xf]
  %v65 = vld [vmem:[%s1 + $0xa0] sm:$0xf]
  %v66 = vld [vmem:[%s1 + $0xa4] sm:$0xf]
  %v67 = vld [vmem:[%s1 + $0xa8] sm:$0xf]
  %v68 = vld [vmem:[%s1 + $0xac] sm:$0xf]
  %v69 = vld [vmem:[%s1 + $0xb0] sm:$0xf]
  %v70 = vld [vmem:[%s1 + $0xb4] sm:$0xf]
  %v71 = vld [vmem:[%s1 + $0xb8] sm:$0xf]
  %v72 = vld [vmem:[%s1 + $0xbc] sm:$0xf]
  %v73 = vld [vmem:[%s3] sm:$0xf]
  %v74 = vld [vmem:[%s4] sm:$0xf]
  %v75 = vld [vmem:[%s4 + $0x4] sm:$0xf]
  %v76 = vld [vmem:[%s4 + $0x8] sm:$0xf]
  %v77 = vld [vmem:[%s4 + $0xc] sm:$0xf]
  %v78 = vld [vmem:[%s4 + $0x10] sm:$0xf]
  %v79 = vld [vmem:[%s4 + $0x14] sm:$0xf]
  %v80 = vld [vmem:[%s4 + $0x18] sm:$0xf]
  %v81 = vld [vmem:[%s4 + $0x1c] sm:$0xf]
  %v82 = vld [vmem:[%s4 + $0x20] sm:$0xf]
  %v83 = vld [vmem:[%s4 + $0x24] sm:$0xf]
  %v84 = vld [vmem:[%s4 + $0x28] sm:$0xf]
  %v85 = vld [vmem:[%s4 + $0x2c] sm:$0xf]
  %v86 = vld [vmem:[%s4 + $0x30] sm:$0xf]
  %v87 = vld [vmem:[%s4 + $0x34] sm:$0xf]
  %v88 = vld [vmem:[%s4 + $0x38] sm:$0xf]
  %v89 = vld [vmem:[%s4 + $0x3c] sm:$0xf]
  %v106 = vunpack.c.l.b16 %v74
  %v107 = vunpack.c.l.b16 %v75
  %v108 = vunpack.c.l.b16 %v76
  %v109 = vunpack.c.l.b16 %v77
  %v110 = vunpack.c.l.b16 %v78
  %v111 = vunpack.c.l.b16 %v79
  %v112 = vunpack.c.l.b16 %v80
  %v113 = vunpack.c.l.b16 %v81
  %v114 = vunpack.c.l.b16 %v82
  %v115 = vunpack.c.l.b16 %v83
  %v116 = vunpack.c.l.b16 %v84
  %v117 = vunpack.c.l.b16 %v85
  %v118 = vunpack.c.l.b16 %v86
  %v119 = vunpack.c.l.b16 %v87
  %v120 = vunpack.c.l.b16 %v88
  %v121 = vunpack.c.l.b16 %v89
  %v122 = vpack.c.b16 %v107, %v106
  %v123 = vpack.c.b16 %v109, %v108
  %v124 = vpack.c.b16 %v111, %v110
  %v125 = vpack.c.b16 %v113, %v112
  %v126 = vpack.c.b16 %v115, %v114
  %v127 = vpack.c.b16 %v117, %v116
  %v128 = vpack.c.b16 %v119, %v118
  %v129 = vpack.c.b16 %v121, %v120
  %138 = vmatpush.bf16.msra.mxu0 %v129
  %139 = vmatpush.bf16.msra.mxu0 %v128
  %140 = vmatpush.bf16.msra.mxu0 %v127
  %141 = vmatpush.bf16.msra.mxu0 %v126
  %142 = vmatpush.bf16.msra.mxu0 %v125
  %143 = vmatpush.bf16.msra.mxu0 %v124
  %144 = vmatpush.bf16.msra.mxu0 %v123
  %145 = vmatpush.bf16.msra.mxu0 %v122
  %146 = vmatmul.bf16.gmra.mxu0 %v73
  %v147 = vpop.f32.mrf.mxu0
  %v148 = vadd.f32 0.0, %v147
  %v149 = vpop.f32.mrf.mxu0
  %150 = vdwg.mxu0
  %v153 = vunpack.c.l.b16 %v23
  %v154 = vunpack.c.h.b16 %v23
  %v155 = vunpack.c.l.b16 %v24
  %v156 = vpack.c.b16 %v153, %v153
  %v157 = vpack.c.b16 %v154, %v154
  %v158 = vpack.c.b16 %v155, %v155
  %v210 = vunpack.c.l.b16 %v25
  %v211 = vunpack.c.l.b16 %v26
  %v212 = vunpack.c.l.b16 %v27
  %v213 = vunpack.c.l.b16 %v28
  %v214 = vunpack.c.l.b16 %v29
  %v215 = vunpack.c.l.b16 %v30
  %v216 = vunpack.c.l.b16 %v31
  %v217 = vunpack.c.l.b16 %v32
  %v218 = vunpack.c.l.b16 %v33
  %v219 = vunpack.c.l.b16 %v34
  %v220 = vunpack.c.l.b16 %v35
  %v221 = vunpack.c.l.b16 %v36
  %v222 = vunpack.c.l.b16 %v37
  %v223 = vunpack.c.l.b16 %v38
  %v224 = vunpack.c.l.b16 %v39
  %v225 = vunpack.c.l.b16 %v40
  %v226 = vunpack.c.l.b16 %v41
  %v227 = vunpack.c.l.b16 %v42
  %v228 = vunpack.c.l.b16 %v43
  %v229 = vunpack.c.l.b16 %v44
  %v230 = vunpack.c.l.b16 %v45
  %v231 = vunpack.c.l.b16 %v46
  %v232 = vunpack.c.l.b16 %v47
  %v233 = vunpack.c.l.b16 %v48
  %v234 = vunpack.c.l.b16 %v49
  %v235 = vunpack.c.l.b16 %v50
  %v236 = vunpack.c.l.b16 %v51
  %v237 = vunpack.c.l.b16 %v52
  %v238 = vunpack.c.l.b16 %v53
  %v239 = vunpack.c.l.b16 %v54
  %v240 = vunpack.c.l.b16 %v55
  %v241 = vunpack.c.l.b16 %v56
  %v242 = vunpack.c.l.b16 %v57
  %v243 = vunpack.c.l.b16 %v58
  %v244 = vunpack.c.l.b16 %v59
  %v245 = vunpack.c.l.b16 %v60
  %v246 = vunpack.c.l.b16 %v61
  %v247 = vunpack.c.l.b16 %v62
  %v248 = vunpack.c.l.b16 %v63
  %v249 = vunpack.c.l.b16 %v64
  %v250 = vunpack.c.l.b16 %v65
  %v251 = vunpack.c.l.b16 %v66
  %v252 = vunpack.c.l.b16 %v67
  %v253 = vunpack.c.l.b16 %v68
  %v254 = vunpack.c.l.b16 %v69
  %v255 = vunpack.c.l.b16 %v70
  %v256 = vunpack.c.l.b16 %v71
  %v257 = vunpack.c.l.b16 %v72
  %v258 = vpack.c.b16 %v211, %v210
  %v259 = vpack.c.b16 %v213, %v212
  %v260 = vpack.c.b16 %v215, %v214
  %v261 = vpack.c.b16 %v217, %v216
  %v262 = vpack.c.b16 %v219, %v218
  %v263 = vpack.c.b16 %v221, %v220
  %v264 = vpack.c.b16 %v223, %v222
  %v265 = vpack.c.b16 %v225, %v224
  %v266 = vpack.c.b16 %v227, %v226
  %v267 = vpack.c.b16 %v229, %v228
  %v268 = vpack.c.b16 %v231, %v230
  %v269 = vpack.c.b16 %v233, %v232
  %v270 = vpack.c.b16 %v235, %v234
  %v271 = vpack.c.b16 %v237, %v236
  %v272 = vpack.c.b16 %v239, %v238
  %v273 = vpack.c.b16 %v241, %v240
  %v274 = vpack.c.b16 %v243, %v242
  %v275 = vpack.c.b16 %v245, %v244
  %v276 = vpack.c.b16 %v247, %v246
  %v277 = vpack.c.b16 %v249, %v248
  %v278 = vpack.c.b16 %v251, %v250
  %v279 = vpack.c.b16 %v253, %v252
  %v280 = vpack.c.b16 %v255, %v254
  %v281 = vpack.c.b16 %v257, %v256
  %306 = vmatpush.bf16.msra.mxu0 %v265
  %307 = vmatpush.bf16.msra.mxu0 %v264
  %308 = vmatpush.bf16.msra.mxu0 %v263
  %309 = vmatpush.bf16.msra.mxu0 %v262
  %310 = vmatpush.bf16.msra.mxu0 %v261
  %311 = vmatpush.bf16.msra.mxu0 %v260
  %312 = vmatpush.bf16.msra.mxu0 %v259
  %313 = vmatpush.bf16.msra.mxu0 %v258
  %314 = vmatmul.bf16.gmra.mxu0 %v156
  %v315 = vpop.f32.mrf.mxu0
  %v316 = vadd.f32 %v148, %v315
  %v317 = vpop.f32.mrf.mxu0
  %318 = vdwg.mxu0
  %319 = vmatpush.bf16.msra.mxu0 %v273
  %320 = vmatpush.bf16.msra.mxu0 %v272
  %321 = vmatpush.bf16.msra.mxu0 %v271
  %322 = vmatpush.bf16.msra.mxu0 %v270
  %323 = vmatpush.bf16.msra.mxu0 %v269
  %324 = vmatpush.bf16.msra.mxu0 %v268
  %325 = vmatpush.bf16.msra.mxu0 %v267
  %326 = vmatpush.bf16.msra.mxu0 %v266
  %327 = vmatmul.bf16.gmra.mxu0 %v157
  %v328 = vpop.f32.mrf.mxu0
  %v329 = vadd.f32 %v316, %v328
  %v330 = vpop.f32.mrf.mxu0
  %331 = vdwg.mxu0
  %332 = vmatpush.bf16.msra.mxu0 %v281
  %333 = vmatpush.bf16.msra.mxu0 %v280
  %334 = vmatpush.bf16.msra.mxu0 %v279
  %335 = vmatpush.bf16.msra.mxu0 %v278
  %336 = vmatpush.bf16.msra.mxu0 %v277
  %337 = vmatpush.bf16.msra.mxu0 %v276
  %338 = vmatpush.bf16.msra.mxu0 %v275
  %339 = vmatpush.bf16.msra.mxu0 %v274
  %340 = vmatmul.bf16.gmra.mxu0 %v158
  %v341 = vpop.f32.mrf.mxu0
  %v342 = vadd.f32 %v329, %v341
  %v343 = vpop.f32.mrf.mxu0
  %344 = vdwg.mxu0
  %v345 = vld [vmem:[%s2] sm:$0x1]
  %v347 = vperm.slane %v345, 0
  %v349 = vadd.f32 %v342, %v347
  %v350 = vld [vmem:[%s5] sm:$0x1]
  %v352 = vperm.slane %v350, 0
  %v354 = vadd.f32 %v349, %v352
  %v355 = vmax.f32 %v354, 0.0
  %v356 = vpack.c.bf16 %v355, %v355
  %357 = vst [vmem:[%s6] sm:$0xf] %v356
  // Predicated region
  $region26: #{resnet_forward.30} parent=0 // pred_check
    _
  $region27: #{resnet_forward.30} parent=0 // pred_check_branch
    %359 = sbr.rel (0) target = $region29
  $region28: #{resnet_forward.30} parent=0 // pred_region
    _
  $region29: #{resnet_forward.30} parent=0 // pred_fallthru
    _
  // Predicated region
  $region30: #{resnet_forward.30} parent=0 // pred_check
    _
  $region31: #{resnet_forward.30} parent=0 // pred_check_branch
    %361 = sbr.rel (0) target = $region33
  $region32: #{resnet_forward.30} parent=0 // pred_region
    _
  $region33: #{resnet_forward.30} parent=0 // pred_fallthru
    _

// kernel: resnet_forward.31
$region0: #{resnet_forward.31}
  #allocation0 [shape = 'u32[]', space=smem, size = 0x4, offset = 0x4, fixed_abs, tag = 'smem constant byte address 0x4 - core index']
  #allocation1 [shape = 'u32[72,128]{1,0:T(1,128)}', space=vmem, size = 0x9000, scoped, tag = 'internal scratch']
  %s0 = inlined_call_operand.vmem [shape: bf16[8,384], index: 0, kind: input, shape index: {}]
  %s1 = inlined_call_operand.vmem [shape: bf16[384,128], index: 1, kind: input, shape index: {}]
  %s2 = inlined_call_operand.vmem [shape: f32[1,128], index: 2, kind: input, shape index: {}]
  %s3 = inlined_call_operand.vmem [shape: bf16[8,128], index: 3, kind: output, shape index: {}]
  %s4 = sld [smem:[#allocation0]]
  $region22: #{resnet_forward.31} parent=0
    _
  %s6 = ssub.s32 1, %s4
  %s7 = scalar_select 0, %s6, %s4
  // Predicated region
  $region2: #{resnet_forward.31} parent=0 // pred_check
    _
  $region3: #{resnet_forward.31} parent=0 // pred_check_branch
    %9 = sbr.rel (0) target = $region5
  $region4: #{resnet_forward.31} parent=0 // pred_region
    _
  $region5: #{resnet_forward.31} parent=0 // pred_fallthru
    _
  // Predicated region
  $region6: #{resnet_forward.31} parent=0 // pred_check
    _
  $region7: #{resnet_forward.31} parent=0 // pred_check_branch
    %11 = sbr.rel (0) target = $region9
  $region8: #{resnet_forward.31} parent=0 // pred_region
    _
  $region9: #{resnet_forward.31} parent=0 // pred_fallthru
    _
  // Predicated region
  $region10: #{resnet_forward.31} parent=0 // pred_check
    _
  $region11: #{resnet_forward.31} parent=0 // pred_check_branch
    %13 = sbr.rel (0) target = $region13
  $region12: #{resnet_forward.31} parent=0 // pred_region
    _
  $region13: #{resnet_forward.31} parent=0 // pred_fallthru
    _
  %v14 = vld [vmem:[%s0] sm:$0xff]
  %v15 = vld [vmem:[%s0 + $0x8] sm:$0xf]
  %v16 = vld [vmem:[%s1] sm:$0xf]
  %v17 = vld [vmem:[%s1 + $0x4] sm:$0xf]
  %v18 = vld [vmem:[%s1 + $0x8] sm:$0xf]
  %v19 = vld [vmem:[%s1 + $0xc] sm:$0xf]
  %v20 = vld [vmem:[%s1 + $0x10] sm:$0xf]
  %v21 = vld [vmem:[%s1 + $0x14] sm:$0xf]
  %v22 = vld [vmem:[%s1 + $0x18] sm:$0xf]
  %v23 = vld [vmem:[%s1 + $0x1c] sm:$0xf]
  %v24 = vld [vmem:[%s1 + $0x20] sm:$0xf]
  %v25 = vld [vmem:[%s1 + $0x24] sm:$0xf]
  %v26 = vld [vmem:[%s1 + $0x28] sm:$0xf]
  %v27 = vld [vmem:[%s1 + $0x2c] sm:$0xf]
  %v28 = vld [vmem:[%s1 + $0x30] sm:$0xf]
  %v29 = vld [vmem:[%s1 + $0x34] sm:$0xf]
  %v30 = vld [vmem:[%s1 + $0x38] sm:$0xf]
  %v31 = vld [vmem:[%s1 + $0x3c] sm:$0xf]
  %v32 = vld [vmem:[%s1 + $0x40] sm:$0xf]
  %v33 = vld [vmem:[%s1 + $0x44] sm:$0xf]
  %v34 = vld [vmem:[%s1 + $0x48] sm:$0xf]
  %v35 = vld [vmem:[%s1 + $0x4c] sm:$0xf]
  %v36 = vld [vmem:[%s1 + $0x50] sm:$0xf]
  %v37 = vld [vmem:[%s1 + $0x54] sm:$0xf]
  %v38 = vld [vmem:[%s1 + $0x58] sm:$0xf]
  %v39 = vld [vmem:[%s1 + $0x5c] sm:$0xf]
  %v40 = vld [vmem:[%s1 + $0x60] sm:$0xf]
  %v41 = vld [vmem:[%s1 + $0x64] sm:$0xf]
  %v42 = vld [vmem:[%s1 + $0x68] sm:$0xf]
  %v43 = vld [vmem:[%s1 + $0x6c] sm:$0xf]
  %v44 = vld [vmem:[%s1 + $0x70] sm:$0xf]
  %v45 = vld [vmem:[%s1 + $0x74] sm:$0xf]
  %v46 = vld [vmem:[%s1 + $0x78] sm:$0xf]
  %v47 = vld [vmem:[%s1 + $0x7c] sm:$0xf]
  %v48 = vld [vmem:[%s1 + $0x80] sm:$0xf]
  %v49 = vld [vmem:[%s1 + $0x84] sm:$0xf]
  %v50 = vld [vmem:[%s1 + $0x88] sm:$0xf]
  %v51 = vld [vmem:[%s1 + $0x8c] sm:$0xf]
  %v52 = vld [vmem:[%s1 + $0x90] sm:$0xf]
  %v53 = vld [vmem:[%s1 + $0x94] sm:$0xf]
  %v54 = vld [vmem:[%s1 + $0x98] sm:$0xf]
  %v55 = vld [vmem:[%s1 + $0x9c] sm:$0xf]
  %v56 = vld [vmem:[%s1 + $0xa0] sm:$0xf]
  %v57 = vld [vmem:[%s1 + $0xa4] sm:$0xf]
  %v58 = vld [vmem:[%s1 + $0xa8] sm:$0xf]
  %v59 = vld [vmem:[%s1 + $0xac] sm:$0xf]
  %v60 = vld [vmem:[%s1 + $0xb0] sm:$0xf]
  %v61 = vld [vmem:[%s1 + $0xb4] sm:$0xf]
  %v62 = vld [vmem:[%s1 + $0xb8] sm:$0xf]
  %v63 = vld [vmem:[%s1 + $0xbc] sm:$0xf]
  %v64 = vld [vmem:[%s2] sm:$0x1]
  %v66 = vperm.slane %v64, 0
  %v70 = vunpack.c.l.b16 %v14
  %v71 = vunpack.c.h.b16 %v14
  %v72 = vunpack.c.l.b16 %v15
  %v73 = vpack.c.b16 %v70, %v70
  %v74 = vpack.c.b16 %v71, %v71
  %v75 = vpack.c.b16 %v72, %v72
  %v127 = vunpack.c.l.b16 %v16
  %v128 = vunpack.c.l.b16 %v17
  %v129 = vunpack.c.l.b16 %v18
  %v130 = vunpack.c.l.b16 %v19
  %v131 = vunpack.c.l.b16 %v20
  %v132 = vunpack.c.l.b16 %v21
  %v133 = vunpack.c.l.b16 %v22
  %v134 = vunpack.c.l.b16 %v23
  %v135 = vunpack.c.l.b16 %v24
  %v136 = vunpack.c.l.b16 %v25
  %v137 = vunpack.c.l.b16 %v26
  %v138 = vunpack.c.l.b16 %v27
  %v139 = vunpack.c.l.b16 %v28
  %v140 = vunpack.c.l.b16 %v29
  %v141 = vunpack.c.l.b16 %v30
  %v142 = vunpack.c.l.b16 %v31
  %v143 = vunpack.c.l.b16 %v32
  %v144 = vunpack.c.l.b16 %v33
  %v145 = vunpack.c.l.b16 %v34
  %v146 = vunpack.c.l.b16 %v35
  %v147 = vunpack.c.l.b16 %v36
  %v148 = vunpack.c.l.b16 %v37
  %v149 = vunpack.c.l.b16 %v38
  %v150 = vunpack.c.l.b16 %v39
  %v151 = vunpack.c.l.b16 %v40
  %v152 = vunpack.c.l.b16 %v41
  %v153 = vunpack.c.l.b16 %v42
  %v154 = vunpack.c.l.b16 %v43
  %v155 = vunpack.c.l.b16 %v44
  %v156 = vunpack.c.l.b16 %v45
  %v157 = vunpack.c.l.b16 %v46
  %v158 = vunpack.c.l.b16 %v47
  %v159 = vunpack.c.l.b16 %v48
  %v160 = vunpack.c.l.b16 %v49
  %v161 = vunpack.c.l.b16 %v50
  %v162 = vunpack.c.l.b16 %v51
  %v163 = vunpack.c.l.b16 %v52
  %v164 = vunpack.c.l.b16 %v53
  %v165 = vunpack.c.l.b16 %v54
  %v166 = vunpack.c.l.b16 %v55
  %v167 = vunpack.c.l.b16 %v56
  %v168 = vunpack.c.l.b16 %v57
  %v169 = vunpack.c.l.b16 %v58
  %v170 = vunpack.c.l.b16 %v59
  %v171 = vunpack.c.l.b16 %v60
  %v172 = vunpack.c.l.b16 %v61
  %v173 = vunpack.c.l.b16 %v62
  %v174 = vunpack.c.l.b16 %v63
  %v175 = vpack.c.b16 %v128, %v127
  %v176 = vpack.c.b16 %v130, %v129
  %v177 = vpack.c.b16 %v132, %v131
  %v178 = vpack.c.b16 %v134, %v133
  %v179 = vpack.c.b16 %v136, %v135
  %v180 = vpack.c.b16 %v138, %v137
  %v181 = vpack.c.b16 %v140, %v139
  %v182 = vpack.c.b16 %v142, %v141
  %v183 = vpack.c.b16 %v144, %v143
  %v184 = vpack.c.b16 %v146, %v145
  %v185 = vpack.c.b16 %v148, %v147
  %v186 = vpack.c.b16 %v150, %v149
  %v187 = vpack.c.b16 %v152, %v151
  %v188 = vpack.c.b16 %v154, %v153
  %v189 = vpack.c.b16 %v156, %v155
  %v190 = vpack.c.b16 %v158, %v157
  %v191 = vpack.c.b16 %v160, %v159
  %v192 = vpack.c.b16 %v162, %v161
  %v193 = vpack.c.b16 %v164, %v163
  %v194 = vpack.c.b16 %v166, %v165
  %v195 = vpack.c.b16 %v168, %v167
  %v196 = vpack.c.b16 %v170, %v169
  %v197 = vpack.c.b16 %v172, %v171
  %v198 = vpack.c.b16 %v174, %v173
  %223 = vmatpush.bf16.msra.mxu0 %v182
  %224 = vmatpush.bf16.msra.mxu0 %v181
  %225 = vmatpush.bf16.msra.mxu0 %v180
  %226 = vmatpush.bf16.msra.mxu0 %v179
  %227 = vmatpush.bf16.msra.mxu0 %v178
  %228 = vmatpush.bf16.msra.mxu0 %v177
  %229 = vmatpush.bf16.msra.mxu0 %v176
  %230 = vmatpush.bf16.msra.mxu0 %v175
  %231 = vmatmul.bf16.gmra.mxu0 %v73
  %v232 = vpop.f32.mrf.mxu0
  %v233 = vadd.f32 %v66, %v232
  %v234 = vpop.f32.mrf.mxu0
  %235 = vdwg.mxu0
  %236 = vmatpush.bf16.msra.mxu0 %v190
  %237 = vmatpush.bf16.msra.mxu0 %v189
  %238 = vmatpush.bf16.msra.mxu0 %v188
  %239 = vmatpush.bf16.msra.mxu0 %v187
  %240 = vmatpush.bf16.msra.mxu0 %v186
  %241 = vmatpush.bf16.msra.mxu0 %v185
  %242 = vmatpush.bf16.msra.mxu0 %v184
  %243 = vmatpush.bf16.msra.mxu0 %v183
  %244 = vmatmul.bf16.gmra.mxu0 %v74
  %v245 = vpop.f32.mrf.mxu0
  %v246 = vadd.f32 %v233, %v245
  %v247 = vpop.f32.mrf.mxu0
  %248 = vdwg.mxu0
  %249 = vmatpush.bf16.msra.mxu0 %v198
  %250 = vmatpush.bf16.msra.mxu0 %v197
  %251 = vmatpush.bf16.msra.mxu0 %v196
  %252 = vmatpush.bf16.msra.mxu0 %v195
  %253 = vmatpush.bf16.msra.mxu0 %v194
  %254 = vmatpush.bf16.msra.mxu0 %v193
  %255 = vmatpush.bf16.msra.mxu0 %v192
  %256 = vmatpush.bf16.msra.mxu0 %v191
  %257 = vmatmul.bf16.gmra.mxu0 %v75
  %v258 = vpop.f32.mrf.mxu0
  %v259 = vadd.f32 %v246, %v258
  %v260 = vpop.f32.mrf.mxu0
  %261 = vdwg.mxu0
  %v262 = vmax.f32 %v259, 0.0
  %v263 = vpack.c.bf16 %v262, %v262
  %264 = vst [vmem:[%s3] sm:$0xf] %v263
  // Predicated region
  $region14: #{resnet_forward.31} parent=0 // pred_check
    _
  $region15: #{resnet_forward.31} parent=0 // pred_check_branch
    %266 = sbr.rel (0) target = $region17
  $region16: #{resnet_forward.31} parent=0 // pred_region
    _
  $region17: #{resnet_forward.31} parent=0 // pred_fallthru
    _
  // Predicated region
  $region18: #{resnet_forward.31} parent=0 // pred_check
    _
  $region19: #{resnet_forward.31} parent=0 // pred_check_branch
    %268 = sbr.rel (0) target = $region21
  $region20: #{resnet_forward.31} parent=0 // pred_region
    _
  $region21: #{resnet_forward.31} parent=0 // pred_fallthru
    _

// kernel: resnet_forward.32
$region0: #{resnet_forward.32}
  #allocation0 [shape = 'u32[]', space=smem, size = 0x4, offset = 0x4, fixed_abs, tag = 'smem constant byte address 0x4 - core index']
  #allocation1 [shape = 'u32[72,128]{1,0:T(1,128)}', space=vmem, size = 0x9000, scoped, tag = 'internal scratch']
  %s0 = inlined_call_operand.vmem [shape: bf16[8,384], index: 0, kind: input, shape index: {}]
  %s1 = inlined_call_operand.vmem [shape: bf16[384,128], index: 1, kind: input, shape index: {}]
  %s2 = inlined_call_operand.vmem [shape: f32[1,128], index: 2, kind: input, shape index: {}]
  %s3 = inlined_call_operand.vmem [shape: bf16[8,128], index: 3, kind: input, shape index: {}]
  %s4 = inlined_call_operand.vmem [shape: bf16[8,128], index: 4, kind: output, shape index: {}]
  %s5 = sld [smem:[#allocation0]]
  $region26: #{resnet_forward.32} parent=0
    _
  %s7 = ssub.s32 1, %s5
  %s8 = scalar_select 0, %s7, %s5
  // Predicated region
  $region2: #{resnet_forward.32} parent=0 // pred_check
    _
  $region3: #{resnet_forward.32} parent=0 // pred_check_branch
    %10 = sbr.rel (0) target = $region5
  $region4: #{resnet_forward.32} parent=0 // pred_region
    _
  $region5: #{resnet_forward.32} parent=0 // pred_fallthru
    _
  // Predicated region
  $region6: #{resnet_forward.32} parent=0 // pred_check
    _
  $region7: #{resnet_forward.32} parent=0 // pred_check_branch
    %12 = sbr.rel (0) target = $region9
  $region8: #{resnet_forward.32} parent=0 // pred_region
    _
  $region9: #{resnet_forward.32} parent=0 // pred_fallthru
    _
  // Predicated region
  $region10: #{resnet_forward.32} parent=0 // pred_check
    _
  $region11: #{resnet_forward.32} parent=0 // pred_check_branch
    %14 = sbr.rel (0) target = $region13
  $region12: #{resnet_forward.32} parent=0 // pred_region
    _
  $region13: #{resnet_forward.32} parent=0 // pred_fallthru
    _
  // Predicated region
  $region14: #{resnet_forward.32} parent=0 // pred_check
    _
  $region15: #{resnet_forward.32} parent=0 // pred_check_branch
    %16 = sbr.rel (0) target = $region17
  $region16: #{resnet_forward.32} parent=0 // pred_region
    _
  $region17: #{resnet_forward.32} parent=0 // pred_fallthru
    _
  %v17 = vld [vmem:[%s0] sm:$0xff]
  %v18 = vld [vmem:[%s0 + $0x8] sm:$0xf]
  %v19 = vld [vmem:[%s1] sm:$0xf]
  %v20 = vld [vmem:[%s1 + $0x4] sm:$0xf]
  %v21 = vld [vmem:[%s1 + $0x8] sm:$0xf]
  %v22 = vld [vmem:[%s1 + $0xc] sm:$0xf]
  %v23 = vld [vmem:[%s1 + $0x10] sm:$0xf]
  %v24 = vld [vmem:[%s1 + $0x14] sm:$0xf]
  %v25 = vld [vmem:[%s1 + $0x18] sm:$0xf]
  %v26 = vld [vmem:[%s1 + $0x1c] sm:$0xf]
  %v27 = vld [vmem:[%s1 + $0x20] sm:$0xf]
  %v28 = vld [vmem:[%s1 + $0x24] sm:$0xf]
  %v29 = vld [vmem:[%s1 + $0x28] sm:$0xf]
  %v30 = vld [vmem:[%s1 + $0x2c] sm:$0xf]
  %v31 = vld [vmem:[%s1 + $0x30] sm:$0xf]
  %v32 = vld [vmem:[%s1 + $0x34] sm:$0xf]
  %v33 = vld [vmem:[%s1 + $0x38] sm:$0xf]
  %v34 = vld [vmem:[%s1 + $0x3c] sm:$0xf]
  %v35 = vld [vmem:[%s1 + $0x40] sm:$0xf]
  %v36 = vld [vmem:[%s1 + $0x44] sm:$0xf]
  %v37 = vld [vmem:[%s1 + $0x48] sm:$0xf]
  %v38 = vld [vmem:[%s1 + $0x4c] sm:$0xf]
  %v39 = vld [vmem:[%s1 + $0x50] sm:$0xf]
  %v40 = vld [vmem:[%s1 + $0x54] sm:$0xf]
  %v41 = vld [vmem:[%s1 + $0x58] sm:$0xf]
  %v42 = vld [vmem:[%s1 + $0x5c] sm:$0xf]
  %v43 = vld [vmem:[%s1 + $0x60] sm:$0xf]
  %v44 = vld [vmem:[%s1 + $0x64] sm:$0xf]
  %v45 = vld [vmem:[%s1 + $0x68] sm:$0xf]
  %v46 = vld [vmem:[%s1 + $0x6c] sm:$0xf]
  %v47 = vld [vmem:[%s1 + $0x70] sm:$0xf]
  %v48 = vld [vmem:[%s1 + $0x74] sm:$0xf]
  %v49 = vld [vmem:[%s1 + $0x78] sm:$0xf]
  %v50 = vld [vmem:[%s1 + $0x7c] sm:$0xf]
  %v51 = vld [vmem:[%s1 + $0x80] sm:$0xf]
  %v52 = vld [vmem:[%s1 + $0x84] sm:$0xf]
  %v53 = vld [vmem:[%s1 + $0x88] sm:$0xf]
  %v54 = vld [vmem:[%s1 + $0x8c] sm:$0xf]
  %v55 = vld [vmem:[%s1 + $0x90] sm:$0xf]
  %v56 = vld [vmem:[%s1 + $0x94] sm:$0xf]
  %v57 = vld [vmem:[%s1 + $0x98] sm:$0xf]
  %v58 = vld [vmem:[%s1 + $0x9c] sm:$0xf]
  %v59 = vld [vmem:[%s1 + $0xa0] sm:$0xf]
  %v60 = vld [vmem:[%s1 + $0xa4] sm:$0xf]
  %v61 = vld [vmem:[%s1 + $0xa8] sm:$0xf]
  %v62 = vld [vmem:[%s1 + $0xac] sm:$0xf]
  %v63 = vld [vmem:[%s1 + $0xb0] sm:$0xf]
  %v64 = vld [vmem:[%s1 + $0xb4] sm:$0xf]
  %v65 = vld [vmem:[%s1 + $0xb8] sm:$0xf]
  %v66 = vld [vmem:[%s1 + $0xbc] sm:$0xf]
  %v67 = vld [vmem:[%s2] sm:$0x1]
  %v69 = vperm.slane %v67, 0
  %v73 = vunpack.c.l.b16 %v17
  %v74 = vunpack.c.h.b16 %v17
  %v75 = vunpack.c.l.b16 %v18
  %v76 = vpack.c.b16 %v73, %v73
  %v77 = vpack.c.b16 %v74, %v74
  %v78 = vpack.c.b16 %v75, %v75
  %v130 = vunpack.c.l.b16 %v19
  %v131 = vunpack.c.l.b16 %v20
  %v132 = vunpack.c.l.b16 %v21
  %v133 = vunpack.c.l.b16 %v22
  %v134 = vunpack.c.l.b16 %v23
  %v135 = vunpack.c.l.b16 %v24
  %v136 = vunpack.c.l.b16 %v25
  %v137 = vunpack.c.l.b16 %v26
  %v138 = vunpack.c.l.b16 %v27
  %v139 = vunpack.c.l.b16 %v28
  %v140 = vunpack.c.l.b16 %v29
  %v141 = vunpack.c.l.b16 %v30
  %v142 = vunpack.c.l.b16 %v31
  %v143 = vunpack.c.l.b16 %v32
  %v144 = vunpack.c.l.b16 %v33
  %v145 = vunpack.c.l.b16 %v34
  %v146 = vunpack.c.l.b16 %v35
  %v147 = vunpack.c.l.b16 %v36
  %v148 = vunpack.c.l.b16 %v37
  %v149 = vunpack.c.l.b16 %v38
  %v150 = vunpack.c.l.b16 %v39
  %v151 = vunpack.c.l.b16 %v40
  %v152 = vunpack.c.l.b16 %v41
  %v153 = vunpack.c.l.b16 %v42
  %v154 = vunpack.c.l.b16 %v43
  %v155 = vunpack.c.l.b16 %v44
  %v156 = vunpack.c.l.b16 %v45
  %v157 = vunpack.c.l.b16 %v46
  %v158 = vunpack.c.l.b16 %v47
  %v159 = vunpack.c.l.b16 %v48
  %v160 = vunpack.c.l.b16 %v49
  %v161 = vunpack.c.l.b16 %v50
  %v162 = vunpack.c.l.b16 %v51
  %v163 = vunpack.c.l.b16 %v52
  %v164 = vunpack.c.l.b16 %v53
  %v165 = vunpack.c.l.b16 %v54
  %v166 = vunpack.c.l.b16 %v55
  %v167 = vunpack.c.l.b16 %v56
  %v168 = vunpack.c.l.b16 %v57
  %v169 = vunpack.c.l.b16 %v58
  %v170 = vunpack.c.l.b16 %v59
  %v171 = vunpack.c.l.b16 %v60
  %v172 = vunpack.c.l.b16 %v61
  %v173 = vunpack.c.l.b16 %v62
  %v174 = vunpack.c.l.b16 %v63
  %v175 = vunpack.c.l.b16 %v64
  %v176 = vunpack.c.l.b16 %v65
  %v177 = vunpack.c.l.b16 %v66
  %v178 = vpack.c.b16 %v131, %v130
  %v179 = vpack.c.b16 %v133, %v132
  %v180 = vpack.c.b16 %v135, %v134
  %v181 = vpack.c.b16 %v137, %v136
  %v182 = vpack.c.b16 %v139, %v138
  %v183 = vpack.c.b16 %v141, %v140
  %v184 = vpack.c.b16 %v143, %v142
  %v185 = vpack.c.b16 %v145, %v144
  %v186 = vpack.c.b16 %v147, %v146
  %v187 = vpack.c.b16 %v149, %v148
  %v188 = vpack.c.b16 %v151, %v150
  %v189 = vpack.c.b16 %v153, %v152
  %v190 = vpack.c.b16 %v155, %v154
  %v191 = vpack.c.b16 %v157, %v156
  %v192 = vpack.c.b16 %v159, %v158
  %v193 = vpack.c.b16 %v161, %v160
  %v194 = vpack.c.b16 %v163, %v162
  %v195 = vpack.c.b16 %v165, %v164
  %v196 = vpack.c.b16 %v167, %v166
  %v197 = vpack.c.b16 %v169, %v168
  %v198 = vpack.c.b16 %v171, %v170
  %v199 = vpack.c.b16 %v173, %v172
  %v200 = vpack.c.b16 %v175, %v174
  %v201 = vpack.c.b16 %v177, %v176
  %226 = vmatpush.bf16.msra.mxu0 %v185
  %227 = vmatpush.bf16.msra.mxu0 %v184
  %228 = vmatpush.bf16.msra.mxu0 %v183
  %229 = vmatpush.bf16.msra.mxu0 %v182
  %230 = vmatpush.bf16.msra.mxu0 %v181
  %231 = vmatpush.bf16.msra.mxu0 %v180
  %232 = vmatpush.bf16.msra.mxu0 %v179
  %233 = vmatpush.bf16.msra.mxu0 %v178
  %234 = vmatmul.bf16.gmra.mxu0 %v76
  %v235 = vpop.f32.mrf.mxu0
  %v236 = vadd.f32 %v69, %v235
  %v237 = vpop.f32.mrf.mxu0
  %238 = vdwg.mxu0
  %239 = vmatpush.bf16.msra.mxu0 %v193
  %240 = vmatpush.bf16.msra.mxu0 %v192
  %241 = vmatpush.bf16.msra.mxu0 %v191
  %242 = vmatpush.bf16.msra.mxu0 %v190
  %243 = vmatpush.bf16.msra.mxu0 %v189
  %244 = vmatpush.bf16.msra.mxu0 %v188
  %245 = vmatpush.bf16.msra.mxu0 %v187
  %246 = vmatpush.bf16.msra.mxu0 %v186
  %247 = vmatmul.bf16.gmra.mxu0 %v77
  %v248 = vpop.f32.mrf.mxu0
  %v249 = vadd.f32 %v236, %v248
  %v250 = vpop.f32.mrf.mxu0
  %251 = vdwg.mxu0
  %252 = vmatpush.bf16.msra.mxu0 %v201
  %253 = vmatpush.bf16.msra.mxu0 %v200
  %254 = vmatpush.bf16.msra.mxu0 %v199
  %255 = vmatpush.bf16.msra.mxu0 %v198
  %256 = vmatpush.bf16.msra.mxu0 %v197
  %257 = vmatpush.bf16.msra.mxu0 %v196
  %258 = vmatpush.bf16.msra.mxu0 %v195
  %259 = vmatpush.bf16.msra.mxu0 %v194
  %260 = vmatmul.bf16.gmra.mxu0 %v78
  %v261 = vpop.f32.mrf.mxu0
  %v262 = vadd.f32 %v249, %v261
  %v263 = vpop.f32.mrf.mxu0
  %264 = vdwg.mxu0
  %v265 = vld [vmem:[%s3] sm:$0xf]
  %v266 = vunpack.c.l.bf16 %v265
  %v267 = vadd.f32 %v262, %v266
  %v268 = vmax.f32 %v267, 0.0
  %v269 = vpack.c.bf16 %v268, %v268
  %270 = vst [vmem:[%s4] sm:$0xf] %v269
  // Predicated region
  $region18: #{resnet_forward.32} parent=0 // pred_check
    _
  $region19: #{resnet_forward.32} parent=0 // pred_check_branch
    %272 = sbr.rel (0) target = $region21
  $region20: #{resnet_forward.32} parent=0 // pred_region
    _
  $region21: #{resnet_forward.32} parent=0 // pred_fallthru
    _
  // Predicated region
  $region22: #{resnet_forward.32} parent=0 // pred_check
    _
  $region23: #{resnet_forward.32} parent=0 // pred_check_branch
    %274 = sbr.rel (0) target = $region25
  $region24: #{resnet_forward.32} parent=0 // pred_region
    _
  $region25: #{resnet_forward.32} parent=0 // pred_fallthru
    _

// kernel: resnet_forward.36
$region0: #{resnet_forward.36}
  #allocation0 [shape = 'u32[]', space=smem, size = 0x4, offset = 0x4, fixed_abs, tag = 'smem constant byte address 0x4 - core index']
  #allocation1 [shape = 'u32[72,128]{1,0:T(1,128)}', space=vmem, size = 0x9000, scoped, tag = 'internal scratch']
  %s0 = inlined_call_operand.vmem [shape: bf16[8,640], index: 0, kind: input, shape index: {}]
  %s1 = inlined_call_operand.vmem [shape: bf16[640,128], index: 1, kind: input, shape index: {}]
  %s2 = inlined_call_operand.vmem [shape: f32[1,128], index: 2, kind: input, shape index: {}]
  %s3 = inlined_call_operand.vmem [shape: bf16[8,128], index: 3, kind: input, shape index: {}]
  %s4 = inlined_call_operand.vmem [shape: bf16[8,128], index: 4, kind: output, shape index: {}]
  %s5 = sld [smem:[#allocation0]]
  $region26: #{resnet_forward.36} parent=0
    _
  %s7 = ssub.s32 1, %s5
  %s8 = scalar_select 0, %s7, %s5
  // Predicated region
  $region2: #{resnet_forward.36} parent=0 // pred_check
    _
  $region3: #{resnet_forward.36} parent=0 // pred_check_branch
    %10 = sbr.rel (0) target = $region5
  $region4: #{resnet_forward.36} parent=0 // pred_region
    _
  $region5: #{resnet_forward.36} parent=0 // pred_fallthru
    _
  // Predicated region
  $region6: #{resnet_forward.36} parent=0 // pred_check
    _
  $region7: #{resnet_forward.36} parent=0 // pred_check_branch
    %12 = sbr.rel (0) target = $region9
  $region8: #{resnet_forward.36} parent=0 // pred_region
    _
  $region9: #{resnet_forward.36} parent=0 // pred_fallthru
    _
  // Predicated region
  $region10: #{resnet_forward.36} parent=0 // pred_check
    _
  $region11: #{resnet_forward.36} parent=0 // pred_check_branch
    %14 = sbr.rel (0) target = $region13
  $region12: #{resnet_forward.36} parent=0 // pred_region
    _
  $region13: #{resnet_forward.36} parent=0 // pred_fallthru
    _
  // Predicated region
  $region14: #{resnet_forward.36} parent=0 // pred_check
    _
  $region15: #{resnet_forward.36} parent=0 // pred_check_branch
    %16 = sbr.rel (0) target = $region17
  $region16: #{resnet_forward.36} parent=0 // pred_region
    _
  $region17: #{resnet_forward.36} parent=0 // pred_fallthru
    _
  %v17 = vld [vmem:[%s0] sm:$0xff]
  %v18 = vld [vmem:[%s0 + $0x8] sm:$0xff]
  %v19 = vld [vmem:[%s0 + $0x10] sm:$0xf]
  %v20 = vld [vmem:[%s1] sm:$0xf]
  %v21 = vld [vmem:[%s1 + $0x4] sm:$0xf]
  %v22 = vld [vmem:[%s1 + $0x8] sm:$0xf]
  %v23 = vld [vmem:[%s1 + $0xc] sm:$0xf]
  %v24 = vld [vmem:[%s1 + $0x10] sm:$0xf]
  %v25 = vld [vmem:[%s1 + $0x14] sm:$0xf]
  %v26 = vld [vmem:[%s1 + $0x18] sm:$0xf]
  %v27 = vld [vmem:[%s1 + $0x1c] sm:$0xf]
  %v28 = vld [vmem:[%s1 + $0x20] sm:$0xf]
  %v29 = vld [vmem:[%s1 + $0x24] sm:$0xf]
  %v30 = vld [vmem:[%s1 + $0x28] sm:$0xf]
  %v31 = vld [vmem:[%s1 + $0x2c] sm:$0xf]
  %v32 = vld [vmem:[%s1 + $0x30] sm:$0xf]
  %v33 = vld [vmem:[%s1 + $0x34] sm:$0xf]
  %v34 = vld [vmem:[%s1 + $0x38] sm:$0xf]
  %v35 = vld [vmem:[%s1 + $0x3c] sm:$0xf]
  %v36 = vld [vmem:[%s1 + $0x40] sm:$0xf]
  %v37 = vld [vmem:[%s1 + $0x44] sm:$0xf]
  %v38 = vld [vmem:[%s1 + $0x48] sm:$0xf]
  %v39 = vld [vmem:[%s1 + $0x4c] sm:$0xf]
  %v40 = vld [vmem:[%s1 + $0x50] sm:$0xf]
  %v41 = vld [vmem:[%s1 + $0x54] sm:$0xf]
  %v42 = vld [vmem:[%s1 + $0x58] sm:$0xf]
  %v43 = vld [vmem:[%s1 + $0x5c] sm:$0xf]
  %v44 = vld [vmem:[%s1 + $0x60] sm:$0xf]
  %v45 = vld [vmem:[%s1 + $0x64] sm:$0xf]
  %v46 = vld [vmem:[%s1 + $0x68] sm:$0xf]
  %v47 = vld [vmem:[%s1 + $0x6c] sm:$0xf]
  %v48 = vld [vmem:[%s1 + $0x70] sm:$0xf]
  %v49 = vld [vmem:[%s1 + $0x74] sm:$0xf]
  %v50 = vld [vmem:[%s1 + $0x78] sm:$0xf]
  %v51 = vld [vmem:[%s1 + $0x7c] sm:$0xf]
  %v52 = vld [vmem:[%s1 + $0x80] sm:$0xf]
  %v53 = vld [vmem:[%s1 + $0x84] sm:$0xf]
  %v54 = vld [vmem:[%s1 + $0x88] sm:$0xf]
  %v55 = vld [vmem:[%s1 + $0x8c] sm:$0xf]
  %v56 = vld [vmem:[%s1 + $0x90] sm:$0xf]
  %v57 = vld [vmem:[%s1 + $0x94] sm:$0xf]
  %v58 = vld [vmem:[%s1 + $0x98] sm:$0xf]
  %v59 = vld [vmem:[%s1 + $0x9c] sm:$0xf]
  %v60 = vld [vmem:[%s1 + $0xa0] sm:$0xf]
  %v61 = vld [vmem:[%s1 + $0xa4] sm:$0xf]
  %v62 = vld [vmem:[%s1 + $0xa8] sm:$0xf]
  %v63 = vld [vmem:[%s1 + $0xac] sm:$0xf]
  %v64 = vld [vmem:[%s1 + $0xb0] sm:$0xf]
  %v65 = vld [vmem:[%s1 + $0xb4] sm:$0xf]
  %v66 = vld [vmem:[%s1 + $0xb8] sm:$0xf]
  %v67 = vld [vmem:[%s1 + $0xbc] sm:$0xf]
  %v68 = vld [vmem:[%s1 + $0xc0] sm:$0xf]
  %v69 = vld [vmem:[%s1 + $0xc4] sm:$0xf]
  %v70 = vld [vmem:[%s1 + $0xc8] sm:$0xf]
  %v71 = vld [vmem:[%s1 + $0xcc] sm:$0xf]
  %v72 = vld [vmem:[%s1 + $0xd0] sm:$0xf]
  %v73 = vld [vmem:[%s1 + $0xd4] sm:$0xf]
  %v74 = vld [vmem:[%s1 + $0xd8] sm:$0xf]
  %v75 = vld [vmem:[%s1 + $0xdc] sm:$0xf]
  %v76 = vld [vmem:[%s1 + $0xe0] sm:$0xf]
  %v77 = vld [vmem:[%s1 + $0xe4] sm:$0xf]
  %v78 = vld [vmem:[%s1 + $0xe8] sm:$0xf]
  %v79 = vld [vmem:[%s1 + $0xec] sm:$0xf]
  %v80 = vld [vmem:[%s1 + $0xf0] sm:$0xf]
  %v81 = vld [vmem:[%s1 + $0xf4] sm:$0xf]
  %v82 = vld [vmem:[%s1 + $0xf8] sm:$0xf]
  %v83 = vld [vmem:[%s1 + $0xfc] sm:$0xf]
  %v84 = vld [vmem:[%s1 + $0x100] sm:$0xf]
  %v85 = vld [vmem:[%s1 + $0x104] sm:$0xf]
  %v86 = vld [vmem:[%s1 + $0x108] sm:$0xf]
  %v87 = vld [vmem:[%s1 + $0x10c] sm:$0xf]
  %v88 = vld [vmem:[%s1 + $0x110] sm:$0xf]
  %v89 = vld [vmem:[%s1 + $0x114] sm:$0xf]
  %v90 = vld [vmem:[%s1 + $0x118] sm:$0xf]
  %v91 = vld [vmem:[%s1 + $0x11c] sm:$0xf]
  %v92 = vld [vmem:[%s1 + $0x120] sm:$0xf]
  %v93 = vld [vmem:[%s1 + $0x124] sm:$0xf]
  %v94 = vld [vmem:[%s1 + $0x128] sm:$0xf]
  %v95 = vld [vmem:[%s1 + $0x12c] sm:$0xf]
  %v96 = vld [vmem:[%s1 + $0x130] sm:$0xf]
  %v97 = vld [vmem:[%s1 + $0x134] sm:$0xf]
  %v98 = vld [vmem:[%s1 + $0x138] sm:$0xf]
  %v99 = vld [vmem:[%s1 + $0x13c] sm:$0xf]
  %v100 = vld [vmem:[%s2] sm:$0x1]
  %v102 = vperm.slane %v100, 0
  %v107 = vunpack.c.l.b16 %v17
  %v108 = vunpack.c.h.b16 %v17
  %v109 = vunpack.c.l.b16 %v18
  %v110 = vunpack.c.h.b16 %v18
  %v111 = vunpack.c.l.b16 %v19
  %v112 = vpack.c.b16 %v107, %v107
  %v113 = vpack.c.b16 %v108, %v108
  %v114 = vpack.c.b16 %v109, %v109
  %v115 = vpack.c.b16 %v110, %v110
  %v116 = vpack.c.b16 %v111, %v111
  %v202 = vunpack.c.l.b16 %v20
  %v203 = vunpack.c.l.b16 %v21
  %v204 = vunpack.c.l.b16 %v22
  %v205 = vunpack.c.l.b16 %v23
  %v206 = vunpack.c.l.b16 %v24
  %v207 = vunpack.c.l.b16 %v25
  %v208 = vunpack.c.l.b16 %v26
  %v209 = vunpack.c.l.b16 %v27
  %v210 = vunpack.c.l.b16 %v28
  %v211 = vunpack.c.l.b16 %v29
  %v212 = vunpack.c.l.b16 %v30
  %v213 = vunpack.c.l.b16 %v31
  %v214 = vunpack.c.l.b16 %v32
  %v215 = vunpack.c.l.b16 %v33
  %v216 = vunpack.c.l.b16 %v34
  %v217 = vunpack.c.l.b16 %v35
  %v218 = vunpack.c.l.b16 %v36
  %v219 = vunpack.c.l.b16 %v37
  %v220 = vunpack.c.l.b16 %v38
  %v221 = vunpack.c.l.b16 %v39
  %v222 = vunpack.c.l.b16 %v40
  %v223 = vunpack.c.l.b16 %v41
  %v224 = vunpack.c.l.b16 %v42
  %v225 = vunpack.c.l.b16 %v43
  %v226 = vunpack.c.l.b16 %v44
  %v227 = vunpack.c.l.b16 %v45
  %v228 = vunpack.c.l.b16 %v46
  %v229 = vunpack.c.l.b16 %v47
  %v230 = vunpack.c.l.b16 %v48
  %v231 = vunpack.c.l.b16 %v49
  %v232 = vunpack.c.l.b16 %v50
  %v233 = vunpack.c.l.b16 %v51
  %v234 = vunpack.c.l.b16 %v52
  %v235 = vunpack.c.l.b16 %v53
  %v236 = vunpack.c.l.b16 %v54
  %v237 = vunpack.c.l.b16 %v55
  %v238 = vunpack.c.l.b16 %v56
  %v239 = vunpack.c.l.b16 %v57
  %v240 = vunpack.c.l.b16 %v58
  %v241 = vunpack.c.l.b16 %v59
  %v242 = vunpack.c.l.b16 %v60
  %v243 = vunpack.c.l.b16 %v61
  %v244 = vunpack.c.l.b16 %v62
  %v245 = vunpack.c.l.b16 %v63
  %v246 = vunpack.c.l.b16 %v64
  %v247 = vunpack.c.l.b16 %v65
  %v248 = vunpack.c.l.b16 %v66
  %v249 = vunpack.c.l.b16 %v67
  %v250 = vunpack.c.l.b16 %v68
  %v251 = vunpack.c.l.b16 %v69
  %v252 = vunpack.c.l.b16 %v70
  %v253 = vunpack.c.l.b16 %v71
  %v254 = vunpack.c.l.b16 %v72
  %v255 = vunpack.c.l.b16 %v73
  %v256 = vunpack.c.l.b16 %v74
  %v257 = vunpack.c.l.b16 %v75
  %v258 = vunpack.c.l.b16 %v76
  %v259 = vunpack.c.l.b16 %v77
  %v260 = vunpack.c.l.b16 %v78
  %v261 = vunpack.c.l.b16 %v79
  %v262 = vunpack.c.l.b16 %v80
  %v263 = vunpack.c.l.b16 %v81
  %v264 = vunpack.c.l.b16 %v82
  %v265 = vunpack.c.l.b16 %v83
  %v266 = vunpack.c.l.b16 %v84
  %v267 = vunpack.c.l.b16 %v85
  %v268 = vunpack.c.l.b16 %v86
  %v269 = vunpack.c.l.b16 %v87
  %v270 = vunpack.c.l.b16 %v88
  %v271 = vunpack.c.l.b16 %v89
  %v272 = vunpack.c.l.b16 %v90
  %v273 = vunpack.c.l.b16 %v91
  %v274 = vunpack.c.l.b16 %v92
  %v275 = vunpack.c.l.b16 %v93
  %v276 = vunpack.c.l.b16 %v94
  %v277 = vunpack.c.l.b16 %v95
  %v278 = vunpack.c.l.b16 %v96
  %v279 = vunpack.c.l.b16 %v97
  %v280 = vunpack.c.l.b16 %v98
  %v281 = vunpack.c.l.b16 %v99
  %v282 = vpack.c.b16 %v203, %v202
  %v283 = vpack.c.b16 %v205, %v204
  %v284 = vpack.c.b16 %v207, %v206
  %v285 = vpack.c.b16 %v209, %v208
  %v286 = vpack.c.b16 %v211, %v210
  %v287 = vpack.c.b16 %v213, %v212
  %v288 = vpack.c.b16 %v215, %v214
  %v289 = vpack.c.b16 %v217, %v216
  %v290 = vpack.c.b16 %v219, %v218
  %v291 = vpack.c.b16 %v221, %v220
  %v292 = vpack.c.b16 %v223, %v222
  %v293 = vpack.c.b16 %v225, %v224
  %v294 = vpack.c.b16 %v227, %v226
  %v295 = vpack.c.b16 %v229, %v228
  %v296 = vpack.c.b16 %v231, %v230
  %v297 = vpack.c.b16 %v233, %v232
  %v298 = vpack.c.b16 %v235, %v234
  %v299 = vpack.c.b16 %v237, %v236
  %v300 = vpack.c.b16 %v239, %v238
  %v301 = vpack.c.b16 %v241, %v240
  %v302 = vpack.c.b16 %v243, %v242
  %v303 = vpack.c.b16 %v245, %v244
  %v304 = vpack.c.b16 %v247, %v246
  %v305 = vpack.c.b16 %v249, %v248
  %v306 = vpack.c.b16 %v251, %v250
  %v307 = vpack.c.b16 %v253, %v252
  %v308 = vpack.c.b16 %v255, %v254
  %v309 = vpack.c.b16 %v257, %v256
  %v310 = vpack.c.b16 %v259, %v258
  %v311 = vpack.c.b16 %v261, %v260
  %v312 = vpack.c.b16 %v263, %v262
  %v313 = vpack.c.b16 %v265, %v264
  %v314 = vpack.c.b16 %v267, %v266
  %v315 = vpack.c.b16 %v269, %v268
  %v316 = vpack.c.b16 %v271, %v270
  %v317 = vpack.c.b16 %v273, %v272
  %v318 = vpack.c.b16 %v275, %v274
  %v319 = vpack.c.b16 %v277, %v276
  %v320 = vpack.c.b16 %v279, %v278
  %v321 = vpack.c.b16 %v281, %v280
  %362 = vmatpush.bf16.msra.mxu0 %v289
  %363 = vmatpush.bf16.msra.mxu0 %v288
  %364 = vmatpush.bf16.msra.mxu0 %v287
  %365 = vmatpush.bf16.msra.mxu0 %v286
  %366 = vmatpush.bf16.msra.mxu0 %v285
  %367 = vmatpush.bf16.msra.mxu0 %v284
  %368 = vmatpush.bf16.msra.mxu0 %v283
  %369 = vmatpush.bf16.msra.mxu0 %v282
  %370 = vmatmul.bf16.gmra.mxu0 %v112
  %v371 = vpop.f32.mrf.mxu0
  %v372 = vadd.f32 %v102, %v371
  %v373 = vpop.f32.mrf.mxu0
  %374 = vdwg.mxu0
  %375 = vmatpush.bf16.msra.mxu0 %v297
  %376 = vmatpush.bf16.msra.mxu0 %v296
  %377 = vmatpush.bf16.msra.mxu0 %v295
  %378 = vmatpush.bf16.msra.mxu0 %v294
  %379 = vmatpush.bf16.msra.mxu0 %v293
  %380 = vmatpush.bf16.msra.mxu0 %v292
  %381 = vmatpush.bf16.msra.mxu0 %v291
  %382 = vmatpush.bf16.msra.mxu0 %v290
  %383 = vmatmul.bf16.gmra.mxu0 %v113
  %v384 = vpop.f32.mrf.mxu0
  %v385 = vadd.f32 %v372, %v384
  %v386 = vpop.f32.mrf.mxu0
  %387 = vdwg.mxu0
  %388 = vmatpush.bf16.msra.mxu0 %v305
  %389 = vmatpush.bf16.msra.mxu0 %v304
  %390 = vmatpush.bf16.msra.mxu0 %v303
  %391 = vmatpush.bf16.msra.mxu0 %v302
  %392 = vmatpush.bf16.msra.mxu0 %v301
  %393 = vmatpush.bf16.msra.mxu0 %v300
  %394 = vmatpush.bf16.msra.mxu0 %v299
  %395 = vmatpush.bf16.msra.mxu0 %v298
  %396 = vmatmul.bf16.gmra.mxu0 %v114
  %v397 = vpop.f32.mrf.mxu0
  %v398 = vadd.f32 %v385, %v397
  %v399 = vpop.f32.mrf.mxu0
  %400 = vdwg.mxu0
  %401 = vmatpush.bf16.msra.mxu0 %v313
  %402 = vmatpush.bf16.msra.mxu0 %v312
  %403 = vmatpush.bf16.msra.mxu0 %v311
  %404 = vmatpush.bf16.msra.mxu0 %v310
  %405 = vmatpush.bf16.msra.mxu0 %v309
  %406 = vmatpush.bf16.msra.mxu0 %v308
  %407 = vmatpush.bf16.msra.mxu0 %v307
  %408 = vmatpush.bf16.msra.mxu0 %v306
  %409 = vmatmul.bf16.gmra.mxu0 %v115
  %v410 = vpop.f32.mrf.mxu0
  %v411 = vadd.f32 %v398, %v410
  %v412 = vpop.f32.mrf.mxu0
  %413 = vdwg.mxu0
  %414 = vmatpush.bf16.msra.mxu0 %v321
  %415 = vmatpush.bf16.msra.mxu0 %v320
  %416 = vmatpush.bf16.msra.mxu0 %v319
  %417 = vmatpush.bf16.msra.mxu0 %v318
  %418 = vmatpush.bf16.msra.mxu0 %v317
  %419 = vmatpush.bf16.msra.mxu0 %v316
  %420 = vmatpush.bf16.msra.mxu0 %v315
  %421 = vmatpush.bf16.msra.mxu0 %v314
  %422 = vmatmul.bf16.gmra.mxu0 %v116
  %v423 = vpop.f32.mrf.mxu0
  %v424 = vadd.f32 %v411, %v423
  %v425 = vpop.f32.mrf.mxu0
  %426 = vdwg.mxu0
  %v427 = vld [vmem:[%s3] sm:$0xf]
  %v428 = vunpack.c.l.bf16 %v427
  %v429 = vadd.f32 %v424, %v428
  %v430 = vmax.f32 %v429, 0.0
  %v431 = vpack.c.bf16 %v430, %v430
  %432 = vst [vmem:[%s4] sm:$0xf] %v431
  // Predicated region
  $region18: #{resnet_forward.36} parent=0 // pred_check
    _
  $region19: #{resnet_forward.36} parent=0 // pred_check_branch
    %434 = sbr.rel (0) target = $region21
  $region20: #{resnet_forward.36} parent=0 // pred_region
    _
  $region21: #{resnet_forward.36} parent=0 // pred_fallthru
    _
  // Predicated region
  $region22: #{resnet_forward.36} parent=0 // pred_check
    _
  $region23: #{resnet_forward.36} parent=0 // pred_check_branch
    %436 = sbr.rel (0) target = $region25
  $region24: #{resnet_forward.36} parent=0 // pred_region
    _
  $region25: #{resnet_forward.36} parent=0 // pred_fallthru
    _

// kernel: resnet_forward.35
$region0: #{resnet_forward.35}
  #allocation0 [shape = 'u32[]', space=smem, size = 0x4, offset = 0x4, fixed_abs, tag = 'smem constant byte address 0x4 - core index']
  #allocation1 [shape = 'u32[72,128]{1,0:T(1,128)}', space=vmem, size = 0x9000, scoped, tag = 'internal scratch']
  %s0 = inlined_call_operand.vmem [shape: bf16[8,640], index: 0, kind: input, shape index: {}]
  %s1 = inlined_call_operand.vmem [shape: bf16[640,128], index: 1, kind: input, shape index: {}]
  %s2 = inlined_call_operand.vmem [shape: f32[1,128], index: 2, kind: input, shape index: {}]
  %s3 = inlined_call_operand.vmem [shape: bf16[8,128], index: 3, kind: output, shape index: {}]
  %s4 = sld [smem:[#allocation0]]
  $region22: #{resnet_forward.35} parent=0
    _
  %s6 = ssub.s32 1, %s4
  %s7 = scalar_select 0, %s6, %s4
  // Predicated region
  $region2: #{resnet_forward.35} parent=0 // pred_check
    _
  $region3: #{resnet_forward.35} parent=0 // pred_check_branch
    %9 = sbr.rel (0) target = $region5
  $region4: #{resnet_forward.35} parent=0 // pred_region
    _
  $region5: #{resnet_forward.35} parent=0 // pred_fallthru
    _
  // Predicated region
  $region6: #{resnet_forward.35} parent=0 // pred_check
    _
  $region7: #{resnet_forward.35} parent=0 // pred_check_branch
    %11 = sbr.rel (0) target = $region9
  $region8: #{resnet_forward.35} parent=0 // pred_region
    _
  $region9: #{resnet_forward.35} parent=0 // pred_fallthru
    _
  // Predicated region
  $region10: #{resnet_forward.35} parent=0 // pred_check
    _
  $region11: #{resnet_forward.35} parent=0 // pred_check_branch
    %13 = sbr.rel (0) target = $region13
  $region12: #{resnet_forward.35} parent=0 // pred_region
    _
  $region13: #{resnet_forward.35} parent=0 // pred_fallthru
    _
  %v14 = vld [vmem:[%s0] sm:$0xff]
  %v15 = vld [vmem:[%s0 + $0x8] sm:$0xff]
  %v16 = vld [vmem:[%s0 + $0x10] sm:$0xf]
  %v17 = vld [vmem:[%s1] sm:$0xf]
  %v18 = vld [vmem:[%s1 + $0x4] sm:$0xf]
  %v19 = vld [vmem:[%s1 + $0x8] sm:$0xf]
  %v20 = vld [vmem:[%s1 + $0xc] sm:$0xf]
  %v21 = vld [vmem:[%s1 + $0x10] sm:$0xf]
  %v22 = vld [vmem:[%s1 + $0x14] sm:$0xf]
  %v23 = vld [vmem:[%s1 + $0x18] sm:$0xf]
  %v24 = vld [vmem:[%s1 + $0x1c] sm:$0xf]
  %v25 = vld [vmem:[%s1 + $0x20] sm:$0xf]
  %v26 = vld [vmem:[%s1 + $0x24] sm:$0xf]
  %v27 = vld [vmem:[%s1 + $0x28] sm:$0xf]
  %v28 = vld [vmem:[%s1 + $0x2c] sm:$0xf]
  %v29 = vld [vmem:[%s1 + $0x30] sm:$0xf]
  %v30 = vld [vmem:[%s1 + $0x34] sm:$0xf]
  %v31 = vld [vmem:[%s1 + $0x38] sm:$0xf]
  %v32 = vld [vmem:[%s1 + $0x3c] sm:$0xf]
  %v33 = vld [vmem:[%s1 + $0x40] sm:$0xf]
  %v34 = vld [vmem:[%s1 + $0x44] sm:$0xf]
  %v35 = vld [vmem:[%s1 + $0x48] sm:$0xf]
  %v36 = vld [vmem:[%s1 + $0x4c] sm:$0xf]
  %v37 = vld [vmem:[%s1 + $0x50] sm:$0xf]
  %v38 = vld [vmem:[%s1 + $0x54] sm:$0xf]
  %v39 = vld [vmem:[%s1 + $0x58] sm:$0xf]
  %v40 = vld [vmem:[%s1 + $0x5c] sm:$0xf]
  %v41 = vld [vmem:[%s1 + $0x60] sm:$0xf]
  %v42 = vld [vmem:[%s1 + $0x64] sm:$0xf]
  %v43 = vld [vmem:[%s1 + $0x68] sm:$0xf]
  %v44 = vld [vmem:[%s1 + $0x6c] sm:$0xf]
  %v45 = vld [vmem:[%s1 + $0x70] sm:$0xf]
  %v46 = vld [vmem:[%s1 + $0x74] sm:$0xf]
  %v47 = vld [vmem:[%s1 + $0x78] sm:$0xf]
  %v48 = vld [vmem:[%s1 + $0x7c] sm:$0xf]
  %v49 = vld [vmem:[%s1 + $0x80] sm:$0xf]
  %v50 = vld [vmem:[%s1 + $0x84] sm:$0xf]
  %v51 = vld [vmem:[%s1 + $0x88] sm:$0xf]
  %v52 = vld [vmem:[%s1 + $0x8c] sm:$0xf]
  %v53 = vld [vmem:[%s1 + $0x90] sm:$0xf]
  %v54 = vld [vmem:[%s1 + $0x94] sm:$0xf]
  %v55 = vld [vmem:[%s1 + $0x98] sm:$0xf]
  %v56 = vld [vmem:[%s1 + $0x9c] sm:$0xf]
  %v57 = vld [vmem:[%s1 + $0xa0] sm:$0xf]
  %v58 = vld [vmem:[%s1 + $0xa4] sm:$0xf]
  %v59 = vld [vmem:[%s1 + $0xa8] sm:$0xf]
  %v60 = vld [vmem:[%s1 + $0xac] sm:$0xf]
  %v61 = vld [vmem:[%s1 + $0xb0] sm:$0xf]
  %v62 = vld [vmem:[%s1 + $0xb4] sm:$0xf]
  %v63 = vld [vmem:[%s1 + $0xb8] sm:$0xf]
  %v64 = vld [vmem:[%s1 + $0xbc] sm:$0xf]
  %v65 = vld [vmem:[%s1 + $0xc0] sm:$0xf]
  %v66 = vld [vmem:[%s1 + $0xc4] sm:$0xf]
  %v67 = vld [vmem:[%s1 + $0xc8] sm:$0xf]
  %v68 = vld [vmem:[%s1 + $0xcc] sm:$0xf]
  %v69 = vld [vmem:[%s1 + $0xd0] sm:$0xf]
  %v70 = vld [vmem:[%s1 + $0xd4] sm:$0xf]
  %v71 = vld [vmem:[%s1 + $0xd8] sm:$0xf]
  %v72 = vld [vmem:[%s1 + $0xdc] sm:$0xf]
  %v73 = vld [vmem:[%s1 + $0xe0] sm:$0xf]
  %v74 = vld [vmem:[%s1 + $0xe4] sm:$0xf]
  %v75 = vld [vmem:[%s1 + $0xe8] sm:$0xf]
  %v76 = vld [vmem:[%s1 + $0xec] sm:$0xf]
  %v77 = vld [vmem:[%s1 + $0xf0] sm:$0xf]
  %v78 = vld [vmem:[%s1 + $0xf4] sm:$0xf]
  %v79 = vld [vmem:[%s1 + $0xf8] sm:$0xf]
  %v80 = vld [vmem:[%s1 + $0xfc] sm:$0xf]
  %v81 = vld [vmem:[%s1 + $0x100] sm:$0xf]
  %v82 = vld [vmem:[%s1 + $0x104] sm:$0xf]
  %v83 = vld [vmem:[%s1 + $0x108] sm:$0xf]
  %v84 = vld [vmem:[%s1 + $0x10c] sm:$0xf]
  %v85 = vld [vmem:[%s1 + $0x110] sm:$0xf]
  %v86 = vld [vmem:[%s1 + $0x114] sm:$0xf]
  %v87 = vld [vmem:[%s1 + $0x118] sm:$0xf]
  %v88 = vld [vmem:[%s1 + $0x11c] sm:$0xf]
  %v89 = vld [vmem:[%s1 + $0x120] sm:$0xf]
  %v90 = vld [vmem:[%s1 + $0x124] sm:$0xf]
  %v91 = vld [vmem:[%s1 + $0x128] sm:$0xf]
  %v92 = vld [vmem:[%s1 + $0x12c] sm:$0xf]
  %v93 = vld [vmem:[%s1 + $0x130] sm:$0xf]
  %v94 = vld [vmem:[%s1 + $0x134] sm:$0xf]
  %v95 = vld [vmem:[%s1 + $0x138] sm:$0xf]
  %v96 = vld [vmem:[%s1 + $0x13c] sm:$0xf]
  %v97 = vld [vmem:[%s2] sm:$0x1]
  %v99 = vperm.slane %v97, 0
  %v104 = vunpack.c.l.b16 %v14
  %v105 = vunpack.c.h.b16 %v14
  %v106 = vunpack.c.l.b16 %v15
  %v107 = vunpack.c.h.b16 %v15
  %v108 = vunpack.c.l.b16 %v16
  %v109 = vpack.c.b16 %v104, %v104
  %v110 = vpack.c.b16 %v105, %v105
  %v111 = vpack.c.b16 %v106, %v106
  %v112 = vpack.c.b16 %v107, %v107
  %v113 = vpack.c.b16 %v108, %v108
  %v199 = vunpack.c.l.b16 %v17
  %v200 = vunpack.c.l.b16 %v18
  %v201 = vunpack.c.l.b16 %v19
  %v202 = vunpack.c.l.b16 %v20
  %v203 = vunpack.c.l.b16 %v21
  %v204 = vunpack.c.l.b16 %v22
  %v205 = vunpack.c.l.b16 %v23
  %v206 = vunpack.c.l.b16 %v24
  %v207 = vunpack.c.l.b16 %v25
  %v208 = vunpack.c.l.b16 %v26
  %v209 = vunpack.c.l.b16 %v27
  %v210 = vunpack.c.l.b16 %v28
  %v211 = vunpack.c.l.b16 %v29
  %v212 = vunpack.c.l.b16 %v30
  %v213 = vunpack.c.l.b16 %v31
  %v214 = vunpack.c.l.b16 %v32
  %v215 = vunpack.c.l.b16 %v33
  %v216 = vunpack.c.l.b16 %v34
  %v217 = vunpack.c.l.b16 %v35
  %v218 = vunpack.c.l.b16 %v36
  %v219 = vunpack.c.l.b16 %v37
  %v220 = vunpack.c.l.b16 %v38
  %v221 = vunpack.c.l.b16 %v39
  %v222 = vunpack.c.l.b16 %v40
  %v223 = vunpack.c.l.b16 %v41
  %v224 = vunpack.c.l.b16 %v42
  %v225 = vunpack.c.l.b16 %v43
  %v226 = vunpack.c.l.b16 %v44
  %v227 = vunpack.c.l.b16 %v45
  %v228 = vunpack.c.l.b16 %v46
  %v229 = vunpack.c.l.b16 %v47
  %v230 = vunpack.c.l.b16 %v48
  %v231 = vunpack.c.l.b16 %v49
  %v232 = vunpack.c.l.b16 %v50
  %v233 = vunpack.c.l.b16 %v51
  %v234 = vunpack.c.l.b16 %v52
  %v235 = vunpack.c.l.b16 %v53
  %v236 = vunpack.c.l.b16 %v54
  %v237 = vunpack.c.l.b16 %v55
  %v238 = vunpack.c.l.b16 %v56
  %v239 = vunpack.c.l.b16 %v57
  %v240 = vunpack.c.l.b16 %v58
  %v241 = vunpack.c.l.b16 %v59
  %v242 = vunpack.c.l.b16 %v60
  %v243 = vunpack.c.l.b16 %v61
  %v244 = vunpack.c.l.b16 %v62
  %v245 = vunpack.c.l.b16 %v63
  %v246 = vunpack.c.l.b16 %v64
  %v247 = vunpack.c.l.b16 %v65
  %v248 = vunpack.c.l.b16 %v66
  %v249 = vunpack.c.l.b16 %v67
  %v250 = vunpack.c.l.b16 %v68
  %v251 = vunpack.c.l.b16 %v69
  %v252 = vunpack.c.l.b16 %v70
  %v253 = vunpack.c.l.b16 %v71
  %v254 = vunpack.c.l.b16 %v72
  %v255 = vunpack.c.l.b16 %v73
  %v256 = vunpack.c.l.b16 %v74
  %v257 = vunpack.c.l.b16 %v75
  %v258 = vunpack.c.l.b16 %v76
  %v259 = vunpack.c.l.b16 %v77
  %v260 = vunpack.c.l.b16 %v78
  %v261 = vunpack.c.l.b16 %v79
  %v262 = vunpack.c.l.b16 %v80
  %v263 = vunpack.c.l.b16 %v81
  %v264 = vunpack.c.l.b16 %v82
  %v265 = vunpack.c.l.b16 %v83
  %v266 = vunpack.c.l.b16 %v84
  %v267 = vunpack.c.l.b16 %v85
  %v268 = vunpack.c.l.b16 %v86
  %v269 = vunpack.c.l.b16 %v87
  %v270 = vunpack.c.l.b16 %v88
  %v271 = vunpack.c.l.b16 %v89
  %v272 = vunpack.c.l.b16 %v90
  %v273 = vunpack.c.l.b16 %v91
  %v274 = vunpack.c.l.b16 %v92
  %v275 = vunpack.c.l.b16 %v93
  %v276 = vunpack.c.l.b16 %v94
  %v277 = vunpack.c.l.b16 %v95
  %v278 = vunpack.c.l.b16 %v96
  %v279 = vpack.c.b16 %v200, %v199
  %v280 = vpack.c.b16 %v202, %v201
  %v281 = vpack.c.b16 %v204, %v203
  %v282 = vpack.c.b16 %v206, %v205
  %v283 = vpack.c.b16 %v208, %v207
  %v284 = vpack.c.b16 %v210, %v209
  %v285 = vpack.c.b16 %v212, %v211
  %v286 = vpack.c.b16 %v214, %v213
  %v287 = vpack.c.b16 %v216, %v215
  %v288 = vpack.c.b16 %v218, %v217
  %v289 = vpack.c.b16 %v220, %v219
  %v290 = vpack.c.b16 %v222, %v221
  %v291 = vpack.c.b16 %v224, %v223
  %v292 = vpack.c.b16 %v226, %v225
  %v293 = vpack.c.b16 %v228, %v227
  %v294 = vpack.c.b16 %v230, %v229
  %v295 = vpack.c.b16 %v232, %v231
  %v296 = vpack.c.b16 %v234, %v233
  %v297 = vpack.c.b16 %v236, %v235
  %v298 = vpack.c.b16 %v238, %v237
  %v299 = vpack.c.b16 %v240, %v239
  %v300 = vpack.c.b16 %v242, %v241
  %v301 = vpack.c.b16 %v244, %v243
  %v302 = vpack.c.b16 %v246, %v245
  %v303 = vpack.c.b16 %v248, %v247
  %v304 = vpack.c.b16 %v250, %v249
  %v305 = vpack.c.b16 %v252, %v251
  %v306 = vpack.c.b16 %v254, %v253
  %v307 = vpack.c.b16 %v256, %v255
  %v308 = vpack.c.b16 %v258, %v257
  %v309 = vpack.c.b16 %v260, %v259
  %v310 = vpack.c.b16 %v262, %v261
  %v311 = vpack.c.b16 %v264, %v263
  %v312 = vpack.c.b16 %v266, %v265
  %v313 = vpack.c.b16 %v268, %v267
  %v314 = vpack.c.b16 %v270, %v269
  %v315 = vpack.c.b16 %v272, %v271
  %v316 = vpack.c.b16 %v274, %v273
  %v317 = vpack.c.b16 %v276, %v275
  %v318 = vpack.c.b16 %v278, %v277
  %359 = vmatpush.bf16.msra.mxu0 %v286
  %360 = vmatpush.bf16.msra.mxu0 %v285
  %361 = vmatpush.bf16.msra.mxu0 %v284
  %362 = vmatpush.bf16.msra.mxu0 %v283
  %363 = vmatpush.bf16.msra.mxu0 %v282
  %364 = vmatpush.bf16.msra.mxu0 %v281
  %365 = vmatpush.bf16.msra.mxu0 %v280
  %366 = vmatpush.bf16.msra.mxu0 %v279
  %367 = vmatmul.bf16.gmra.mxu0 %v109
  %v368 = vpop.f32.mrf.mxu0
  %v369 = vadd.f32 %v99, %v368
  %v370 = vpop.f32.mrf.mxu0
  %371 = vdwg.mxu0
  %372 = vmatpush.bf16.msra.mxu0 %v294
  %373 = vmatpush.bf16.msra.mxu0 %v293
  %374 = vmatpush.bf16.msra.mxu0 %v292
  %375 = vmatpush.bf16.msra.mxu0 %v291
  %376 = vmatpush.bf16.msra.mxu0 %v290
  %377 = vmatpush.bf16.msra.mxu0 %v289
  %378 = vmatpush.bf16.msra.mxu0 %v288
  %379 = vmatpush.bf16.msra.mxu0 %v287
  %380 = vmatmul.bf16.gmra.mxu0 %v110
  %v381 = vpop.f32.mrf.mxu0
  %v382 = vadd.f32 %v369, %v381
  %v383 = vpop.f32.mrf.mxu0
  %384 = vdwg.mxu0
  %385 = vmatpush.bf16.msra.mxu0 %v302
  %386 = vmatpush.bf16.msra.mxu0 %v301
  %387 = vmatpush.bf16.msra.mxu0 %v300
  %388 = vmatpush.bf16.msra.mxu0 %v299
  %389 = vmatpush.bf16.msra.mxu0 %v298
  %390 = vmatpush.bf16.msra.mxu0 %v297
  %391 = vmatpush.bf16.msra.mxu0 %v296
  %392 = vmatpush.bf16.msra.mxu0 %v295
  %393 = vmatmul.bf16.gmra.mxu0 %v111
  %v394 = vpop.f32.mrf.mxu0
  %v395 = vadd.f32 %v382, %v394
  %v396 = vpop.f32.mrf.mxu0
  %397 = vdwg.mxu0
  %398 = vmatpush.bf16.msra.mxu0 %v310
  %399 = vmatpush.bf16.msra.mxu0 %v309
  %400 = vmatpush.bf16.msra.mxu0 %v308
  %401 = vmatpush.bf16.msra.mxu0 %v307
  %402 = vmatpush.bf16.msra.mxu0 %v306
  %403 = vmatpush.bf16.msra.mxu0 %v305
  %404 = vmatpush.bf16.msra.mxu0 %v304
  %405 = vmatpush.bf16.msra.mxu0 %v303
  %406 = vmatmul.bf16.gmra.mxu0 %v112
  %v407 = vpop.f32.mrf.mxu0
  %v408 = vadd.f32 %v395, %v407
  %v409 = vpop.f32.mrf.mxu0
  %410 = vdwg.mxu0
  %411 = vmatpush.bf16.msra.mxu0 %v318
  %412 = vmatpush.bf16.msra.mxu0 %v317
  %413 = vmatpush.bf16.msra.mxu0 %v316
  %414 = vmatpush.bf16.msra.mxu0 %v315
  %415 = vmatpush.bf16.msra.mxu0 %v314
  %416 = vmatpush.bf16.msra.mxu0 %v313
  %417 = vmatpush.bf16.msra.mxu0 %v312
  %418 = vmatpush.bf16.msra.mxu0 %v311
  %419 = vmatmul.bf16.gmra.mxu0 %v113
  %v420 = vpop.f32.mrf.mxu0
  %v421 = vadd.f32 %v408, %v420
  %v422 = vpop.f32.mrf.mxu0
  %423 = vdwg.mxu0
  %v424 = vmax.f32 %v421, 0.0
  %v425 = vpack.c.bf16 %v424, %v424
  %426 = vst [vmem:[%s3] sm:$0xf] %v425
  // Predicated region
  $region14: #{resnet_forward.35} parent=0 // pred_check
    _
  $region15: #{resnet_forward.35} parent=0 // pred_check_branch
    %428 = sbr.rel (0) target = $region17
  $region16: #{resnet_forward.35} parent=0 // pred_region
    _
  $region17: #{resnet_forward.35} parent=0 // pred_fallthru
    _
  // Predicated region
  $region18: #{resnet_forward.35} parent=0 // pred_check
    _
  $region19: #{resnet_forward.35} parent=0 // pred_check_branch
    %430 = sbr.rel (0) target = $region21
  $region20: #{resnet_forward.35} parent=0 // pred_region
    _
  $region21: #{resnet_forward.35} parent=0 // pred_fallthru
    _

// kernel: resnet_forward.37
$region0: #{resnet_forward.37}
  #allocation0 [shape = 'u32[]', space=smem, size = 0x4, offset = 0x4, fixed_abs, tag = 'smem constant byte address 0x4 - core index']
  #allocation1 [shape = 'u32[72,128]{1,0:T(1,128)}', space=vmem, size = 0x9000, scoped, tag = 'internal scratch']
  %s0 = inlined_call_operand.vmem [shape: bf16[8,1,64], index: 0, kind: input, shape index: {}]
  %s1 = inlined_call_operand.vmem [shape: bf16[64,128], index: 1, kind: input, shape index: {}]
  %s2 = inlined_call_operand.vmem [shape: f32[1,128], index: 2, kind: input, shape index: {}]
  %s3 = inlined_call_operand.vmem [shape: f32[8,128], index: 3, kind: output, shape index: {}]
  %s4 = sld [smem:[#allocation0]]
  $region22: #{resnet_forward.37} parent=0
    _
  %s6 = ssub.s32 1, %s4
  %s7 = scalar_select 0, %s6, %s4
  // Predicated region
  $region2: #{resnet_forward.37} parent=0 // pred_check
    _
  $region3: #{resnet_forward.37} parent=0 // pred_check_branch
    %9 = sbr.rel (0) target = $region5
  $region4: #{resnet_forward.37} parent=0 // pred_region
    _
  $region5: #{resnet_forward.37} parent=0 // pred_fallthru
    _
  // Predicated region
  $region6: #{resnet_forward.37} parent=0 // pred_check
    _
  $region7: #{resnet_forward.37} parent=0 // pred_check_branch
    %11 = sbr.rel (0) target = $region9
  $region8: #{resnet_forward.37} parent=0 // pred_region
    _
  $region9: #{resnet_forward.37} parent=0 // pred_fallthru
    _
  // Predicated region
  $region10: #{resnet_forward.37} parent=0 // pred_check
    _
  $region11: #{resnet_forward.37} parent=0 // pred_check_branch
    %13 = sbr.rel (0) target = $region13
  $region12: #{resnet_forward.37} parent=0 // pred_region
    _
  $region13: #{resnet_forward.37} parent=0 // pred_fallthru
    _
  %v15 = vld [vmem:[%s0] sm:$0x1]
  %v16 = vld [vmem:[%s0 + $0x1] sm:$0x1]
  %v17 = vld [vmem:[%s0 + $0x2] sm:$0x1]
  %v18 = vld [vmem:[%s0 + $0x3] sm:$0x1]
  %v19 = vld [vmem:[%s0 + $0x4] sm:$0x1]
  %v20 = vld [vmem:[%s0 + $0x5] sm:$0x1]
  %v21 = vld [vmem:[%s0 + $0x6] sm:$0x1]
  %v22 = vld [vmem:[%s0 + $0x7] sm:$0x1]
  %v23 = vunpack.c.l.bf16 %v15
  %v24 = vunpack.c.l.bf16 %v16
  %v25 = vunpack.c.l.bf16 %v17
  %v26 = vunpack.c.l.bf16 %v18
  %v27 = vunpack.c.l.bf16 %v19
  %v28 = vunpack.c.l.bf16 %v20
  %v29 = vunpack.c.l.bf16 %v21
  %v30 = vunpack.c.l.bf16 %v22
  %v31 = vadd.f32 %v23, 0.0
  %v32 = vadd.f32 %v24, 0.0
  %v33 = vadd.f32 %v25, 0.0
  %v34 = vadd.f32 %v26, 0.0
  %v35 = vadd.f32 %v27, 0.0
  %v36 = vadd.f32 %v28, 0.0
  %v37 = vadd.f32 %v29, 0.0
  %v38 = vadd.f32 %v30, 0.0
  %v39 = vpack.c.bf16 %v31, %v31
  %v40 = vpack.c.bf16 %v32, %v32
  %v41 = vpack.c.bf16 %v33, %v33
  %v42 = vpack.c.bf16 %v34, %v34
  %v43 = vpack.c.bf16 %v35, %v35
  %v44 = vpack.c.bf16 %v36, %v36
  %v45 = vpack.c.bf16 %v37, %v37
  %v46 = vpack.c.bf16 %v38, %v38
  %v47 = vld [vmem:[%s1] sm:$0xf]
  %v48 = vld [vmem:[%s1 + $0x4] sm:$0xf]
  %v49 = vld [vmem:[%s1 + $0x8] sm:$0xf]
  %v50 = vld [vmem:[%s1 + $0xc] sm:$0xf]
  %v51 = vld [vmem:[%s1 + $0x10] sm:$0xf]
  %v52 = vld [vmem:[%s1 + $0x14] sm:$0xf]
  %v53 = vld [vmem:[%s1 + $0x18] sm:$0xf]
  %v54 = vld [vmem:[%s1 + $0x1c] sm:$0xf]
  %v55 = vld [vmem:[%s2] sm:$0x1]
  %v57 = vperm.slane %v55, 0
  %v67 = vunpack.c.l.b16 %v39
  %v68 = vunpack.c.l.b16 %v40
  %v69 = vunpack.c.l.b16 %v41
  %v70 = vunpack.c.l.b16 %v42
  %v71 = vunpack.c.l.b16 %v43
  %v72 = vunpack.c.l.b16 %v44
  %v73 = vunpack.c.l.b16 %v45
  %v74 = vunpack.c.l.b16 %v46
  %v75 = vrot.slane %v68, 7
  %vm76 = vcmask 1041409
  %v77 = vsel %vm76, %v75, %v67
  %v78 = vrot.slane %v69, 6
  %vm79 = vcmask 1042434
  %v80 = vsel %vm79, %v78, %v77
  %v81 = vrot.slane %v70, 5
  %vm82 = vcmask 1043459
  %v83 = vsel %vm82, %v81, %v80
  %v84 = vrot.slane %v71, 4
  %vm85 = vcmask 1044484
  %v86 = vsel %vm85, %v84, %v83
  %v87 = vrot.slane %v72, 3
  %vm88 = vcmask 1045509
  %v89 = vsel %vm88, %v87, %v86
  %v90 = vrot.slane %v73, 2
  %vm91 = vcmask 1046534
  %v92 = vsel %vm91, %v90, %v89
  %v93 = vrot.slane %v74, 1
  %vm94 = vcmask 1047559
  %v95 = vsel %vm94, %v93, %v92
  %v96 = vpack.c.b16 %v95, %v95
  %v105 = vunpack.c.l.b16 %v47
  %v106 = vunpack.c.l.b16 %v48
  %v107 = vunpack.c.l.b16 %v49
  %v108 = vunpack.c.l.b16 %v50
  %v109 = vunpack.c.l.b16 %v51
  %v110 = vunpack.c.l.b16 %v52
  %v111 = vunpack.c.l.b16 %v53
  %v112 = vunpack.c.l.b16 %v54
  %v113 = vpack.c.b16 %v106, %v105
  %v114 = vpack.c.b16 %v108, %v107
  %v115 = vpack.c.b16 %v110, %v109
  %v116 = vpack.c.b16 %v112, %v111
  %vm121 = vcmask 523264
  %v123 = vsel %vm121, %v96, 0
  %125 = vmatpush.bf16.msra.mxu0 0
  %126 = vmatpush.bf16.msra.mxu0 0
  %127 = vmatpush.bf16.msra.mxu0 0
  %128 = vmatpush.bf16.msra.mxu0 0
  %129 = vmatpush.bf16.msra.mxu0 %v116
  %130 = vmatpush.bf16.msra.mxu0 %v115
  %131 = vmatpush.bf16.msra.mxu0 %v114
  %132 = vmatpush.bf16.msra.mxu0 %v113
  %133 = vmatmul.bf16.gmra.mxu0 %v123
  %v134 = vpop.f32.mrf.mxu0
  %v135 = vadd.f32 %v57, %v134
  %v136 = vpop.f32.mrf.mxu0
  %137 = vdwg.mxu0
  %138 = vst [vmem:[%s3] sm:$0xff] %v135
  // Predicated region
  $region14: #{resnet_forward.37} parent=0 // pred_check
    _
  $region15: #{resnet_forward.37} parent=0 // pred_check_branch
    %140 = sbr.rel (0) target = $region17
  $region16: #{resnet_forward.37} parent=0 // pred_region
    _
  $region17: #{resnet_forward.37} parent=0 // pred_fallthru
    _
  // Predicated region
  $region18: #{resnet_forward.37} parent=0 // pred_check
    _
  $region19: #{resnet_forward.37} parent=0 // pred_check_branch
    %142 = sbr.rel (0) target = $region21
  $region20: #{resnet_forward.37} parent=0 // pred_region
    _
  $region21: #{resnet_forward.37} parent=0 // pred_fallthru
    _

// kernel: resnet_forward.34
$region0: #{resnet_forward.34}
  #allocation0 [shape = 'u32[]', space=smem, size = 0x4, offset = 0x4, fixed_abs, tag = 'smem constant byte address 0x4 - core index']
  #allocation1 [shape = 'u32[72,128]{1,0:T(1,128)}', space=vmem, size = 0x9000, scoped, tag = 'internal scratch']
  %s0 = inlined_call_operand.vmem [shape: bf16[8,640], index: 0, kind: input, shape index: {}]
  %s1 = inlined_call_operand.vmem [shape: bf16[640,128], index: 1, kind: input, shape index: {}]
  %s2 = inlined_call_operand.vmem [shape: f32[1,128], index: 2, kind: input, shape index: {}]
  %s3 = inlined_call_operand.vmem [shape: bf16[8,128], index: 3, kind: input, shape index: {}]
  %s4 = inlined_call_operand.vmem [shape: bf16[128,128], index: 4, kind: input, shape index: {}]
  %s5 = inlined_call_operand.vmem [shape: f32[1,128], index: 5, kind: input, shape index: {}]
  %s6 = inlined_call_operand.vmem [shape: bf16[8,128], index: 6, kind: output, shape index: {}]
  %s7 = sld [smem:[#allocation0]]
  $region34: #{resnet_forward.34} parent=0
    _
  %s9 = ssub.s32 1, %s7
  %s10 = scalar_select 0, %s9, %s7
  // Predicated region
  $region2: #{resnet_forward.34} parent=0 // pred_check
    _
  $region3: #{resnet_forward.34} parent=0 // pred_check_branch
    %12 = sbr.rel (0) target = $region5
  $region4: #{resnet_forward.34} parent=0 // pred_region
    _
  $region5: #{resnet_forward.34} parent=0 // pred_fallthru
    _
  // Predicated region
  $region6: #{resnet_forward.34} parent=0 // pred_check
    _
  $region7: #{resnet_forward.34} parent=0 // pred_check_branch
    %14 = sbr.rel (0) target = $region9
  $region8: #{resnet_forward.34} parent=0 // pred_region
    _
  $region9: #{resnet_forward.34} parent=0 // pred_fallthru
    _
  // Predicated region
  $region10: #{resnet_forward.34} parent=0 // pred_check
    _
  $region11: #{resnet_forward.34} parent=0 // pred_check_branch
    %16 = sbr.rel (0) target = $region13
  $region12: #{resnet_forward.34} parent=0 // pred_region
    _
  $region13: #{resnet_forward.34} parent=0 // pred_fallthru
    _
  // Predicated region
  $region14: #{resnet_forward.34} parent=0 // pred_check
    _
  $region15: #{resnet_forward.34} parent=0 // pred_check_branch
    %18 = sbr.rel (0) target = $region17
  $region16: #{resnet_forward.34} parent=0 // pred_region
    _
  $region17: #{resnet_forward.34} parent=0 // pred_fallthru
    _
  // Predicated region
  $region18: #{resnet_forward.34} parent=0 // pred_check
    _
  $region19: #{resnet_forward.34} parent=0 // pred_check_branch
    %20 = sbr.rel (0) target = $region21
  $region20: #{resnet_forward.34} parent=0 // pred_region
    _
  $region21: #{resnet_forward.34} parent=0 // pred_fallthru
    _
  // Predicated region
  $region22: #{resnet_forward.34} parent=0 // pred_check
    _
  $region23: #{resnet_forward.34} parent=0 // pred_check_branch
    %22 = sbr.rel (0) target = $region25
  $region24: #{resnet_forward.34} parent=0 // pred_region
    _
  $region25: #{resnet_forward.34} parent=0 // pred_fallthru
    _
  %v23 = vld [vmem:[%s0] sm:$0xff]
  %v24 = vld [vmem:[%s0 + $0x8] sm:$0xff]
  %v25 = vld [vmem:[%s0 + $0x10] sm:$0xf]
  %v26 = vld [vmem:[%s1] sm:$0xf]
  %v27 = vld [vmem:[%s1 + $0x4] sm:$0xf]
  %v28 = vld [vmem:[%s1 + $0x8] sm:$0xf]
  %v29 = vld [vmem:[%s1 + $0xc] sm:$0xf]
  %v30 = vld [vmem:[%s1 + $0x10] sm:$0xf]
  %v31 = vld [vmem:[%s1 + $0x14] sm:$0xf]
  %v32 = vld [vmem:[%s1 + $0x18] sm:$0xf]
  %v33 = vld [vmem:[%s1 + $0x1c] sm:$0xf]
  %v34 = vld [vmem:[%s1 + $0x20] sm:$0xf]
  %v35 = vld [vmem:[%s1 + $0x24] sm:$0xf]
  %v36 = vld [vmem:[%s1 + $0x28] sm:$0xf]
  %v37 = vld [vmem:[%s1 + $0x2c] sm:$0xf]
  %v38 = vld [vmem:[%s1 + $0x30] sm:$0xf]
  %v39 = vld [vmem:[%s1 + $0x34] sm:$0xf]
  %v40 = vld [vmem:[%s1 + $0x38] sm:$0xf]
  %v41 = vld [vmem:[%s1 + $0x3c] sm:$0xf]
  %v42 = vld [vmem:[%s1 + $0x40] sm:$0xf]
  %v43 = vld [vmem:[%s1 + $0x44] sm:$0xf]
  %v44 = vld [vmem:[%s1 + $0x48] sm:$0xf]
  %v45 = vld [vmem:[%s1 + $0x4c] sm:$0xf]
  %v46 = vld [vmem:[%s1 + $0x50] sm:$0xf]
  %v47 = vld [vmem:[%s1 + $0x54] sm:$0xf]
  %v48 = vld [vmem:[%s1 + $0x58] sm:$0xf]
  %v49 = vld [vmem:[%s1 + $0x5c] sm:$0xf]
  %v50 = vld [vmem:[%s1 + $0x60] sm:$0xf]
  %v51 = vld [vmem:[%s1 + $0x64] sm:$0xf]
  %v52 = vld [vmem:[%s1 + $0x68] sm:$0xf]
  %v53 = vld [vmem:[%s1 + $0x6c] sm:$0xf]
  %v54 = vld [vmem:[%s1 + $0x70] sm:$0xf]
  %v55 = vld [vmem:[%s1 + $0x74] sm:$0xf]
  %v56 = vld [vmem:[%s1 + $0x78] sm:$0xf]
  %v57 = vld [vmem:[%s1 + $0x7c] sm:$0xf]
  %v58 = vld [vmem:[%s1 + $0x80] sm:$0xf]
  %v59 = vld [vmem:[%s1 + $0x84] sm:$0xf]
  %v60 = vld [vmem:[%s1 + $0x88] sm:$0xf]
  %v61 = vld [vmem:[%s1 + $0x8c] sm:$0xf]
  %v62 = vld [vmem:[%s1 + $0x90] sm:$0xf]
  %v63 = vld [vmem:[%s1 + $0x94] sm:$0xf]
  %v64 = vld [vmem:[%s1 + $0x98] sm:$0xf]
  %v65 = vld [vmem:[%s1 + $0x9c] sm:$0xf]
  %v66 = vld [vmem:[%s1 + $0xa0] sm:$0xf]
  %v67 = vld [vmem:[%s1 + $0xa4] sm:$0xf]
  %v68 = vld [vmem:[%s1 + $0xa8] sm:$0xf]
  %v69 = vld [vmem:[%s1 + $0xac] sm:$0xf]
  %v70 = vld [vmem:[%s1 + $0xb0] sm:$0xf]
  %v71 = vld [vmem:[%s1 + $0xb4] sm:$0xf]
  %v72 = vld [vmem:[%s1 + $0xb8] sm:$0xf]
  %v73 = vld [vmem:[%s1 + $0xbc] sm:$0xf]
  %v74 = vld [vmem:[%s1 + $0xc0] sm:$0xf]
  %v75 = vld [vmem:[%s1 + $0xc4] sm:$0xf]
  %v76 = vld [vmem:[%s1 + $0xc8] sm:$0xf]
  %v77 = vld [vmem:[%s1 + $0xcc] sm:$0xf]
  %v78 = vld [vmem:[%s1 + $0xd0] sm:$0xf]
  %v79 = vld [vmem:[%s1 + $0xd4] sm:$0xf]
  %v80 = vld [vmem:[%s1 + $0xd8] sm:$0xf]
  %v81 = vld [vmem:[%s1 + $0xdc] sm:$0xf]
  %v82 = vld [vmem:[%s1 + $0xe0] sm:$0xf]
  %v83 = vld [vmem:[%s1 + $0xe4] sm:$0xf]
  %v84 = vld [vmem:[%s1 + $0xe8] sm:$0xf]
  %v85 = vld [vmem:[%s1 + $0xec] sm:$0xf]
  %v86 = vld [vmem:[%s1 + $0xf0] sm:$0xf]
  %v87 = vld [vmem:[%s1 + $0xf4] sm:$0xf]
  %v88 = vld [vmem:[%s1 + $0xf8] sm:$0xf]
  %v89 = vld [vmem:[%s1 + $0xfc] sm:$0xf]
  %v90 = vld [vmem:[%s1 + $0x100] sm:$0xf]
  %v91 = vld [vmem:[%s1 + $0x104] sm:$0xf]
  %v92 = vld [vmem:[%s1 + $0x108] sm:$0xf]
  %v93 = vld [vmem:[%s1 + $0x10c] sm:$0xf]
  %v94 = vld [vmem:[%s1 + $0x110] sm:$0xf]
  %v95 = vld [vmem:[%s1 + $0x114] sm:$0xf]
  %v96 = vld [vmem:[%s1 + $0x118] sm:$0xf]
  %v97 = vld [vmem:[%s1 + $0x11c] sm:$0xf]
  %v98 = vld [vmem:[%s1 + $0x120] sm:$0xf]
  %v99 = vld [vmem:[%s1 + $0x124] sm:$0xf]
  %v100 = vld [vmem:[%s1 + $0x128] sm:$0xf]
  %v101 = vld [vmem:[%s1 + $0x12c] sm:$0xf]
  %v102 = vld [vmem:[%s1 + $0x130] sm:$0xf]
  %v103 = vld [vmem:[%s1 + $0x134] sm:$0xf]
  %v104 = vld [vmem:[%s1 + $0x138] sm:$0xf]
  %v105 = vld [vmem:[%s1 + $0x13c] sm:$0xf]
  %v106 = vld [vmem:[%s3] sm:$0xf]
  %v107 = vld [vmem:[%s4] sm:$0xf]
  %v108 = vld [vmem:[%s4 + $0x4] sm:$0xf]
  %v109 = vld [vmem:[%s4 + $0x8] sm:$0xf]
  %v110 = vld [vmem:[%s4 + $0xc] sm:$0xf]
  %v111 = vld [vmem:[%s4 + $0x10] sm:$0xf]
  %v112 = vld [vmem:[%s4 + $0x14] sm:$0xf]
  %v113 = vld [vmem:[%s4 + $0x18] sm:$0xf]
  %v114 = vld [vmem:[%s4 + $0x1c] sm:$0xf]
  %v115 = vld [vmem:[%s4 + $0x20] sm:$0xf]
  %v116 = vld [vmem:[%s4 + $0x24] sm:$0xf]
  %v117 = vld [vmem:[%s4 + $0x28] sm:$0xf]
  %v118 = vld [vmem:[%s4 + $0x2c] sm:$0xf]
  %v119 = vld [vmem:[%s4 + $0x30] sm:$0xf]
  %v120 = vld [vmem:[%s4 + $0x34] sm:$0xf]
  %v121 = vld [vmem:[%s4 + $0x38] sm:$0xf]
  %v122 = vld [vmem:[%s4 + $0x3c] sm:$0xf]
  %v139 = vunpack.c.l.b16 %v107
  %v140 = vunpack.c.l.b16 %v108
  %v141 = vunpack.c.l.b16 %v109
  %v142 = vunpack.c.l.b16 %v110
  %v143 = vunpack.c.l.b16 %v111
  %v144 = vunpack.c.l.b16 %v112
  %v145 = vunpack.c.l.b16 %v113
  %v146 = vunpack.c.l.b16 %v114
  %v147 = vunpack.c.l.b16 %v115
  %v148 = vunpack.c.l.b16 %v116
  %v149 = vunpack.c.l.b16 %v117
  %v150 = vunpack.c.l.b16 %v118
  %v151 = vunpack.c.l.b16 %v119
  %v152 = vunpack.c.l.b16 %v120
  %v153 = vunpack.c.l.b16 %v121
  %v154 = vunpack.c.l.b16 %v122
  %v155 = vpack.c.b16 %v140, %v139
  %v156 = vpack.c.b16 %v142, %v141
  %v157 = vpack.c.b16 %v144, %v143
  %v158 = vpack.c.b16 %v146, %v145
  %v159 = vpack.c.b16 %v148, %v147
  %v160 = vpack.c.b16 %v150, %v149
  %v161 = vpack.c.b16 %v152, %v151
  %v162 = vpack.c.b16 %v154, %v153
  %171 = vmatpush.bf16.msra.mxu0 %v162
  %172 = vmatpush.bf16.msra.mxu0 %v161
  %173 = vmatpush.bf16.msra.mxu0 %v160
  %174 = vmatpush.bf16.msra.mxu0 %v159
  %175 = vmatpush.bf16.msra.mxu0 %v158
  %176 = vmatpush.bf16.msra.mxu0 %v157
  %177 = vmatpush.bf16.msra.mxu0 %v156
  %178 = vmatpush.bf16.msra.mxu0 %v155
  %179 = vmatmul.bf16.gmra.mxu0 %v106
  %v180 = vpop.f32.mrf.mxu0
  %v181 = vadd.f32 0.0, %v180
  %v182 = vpop.f32.mrf.mxu0
  %183 = vdwg.mxu0
  %v187 = vunpack.c.l.b16 %v23
  %v188 = vunpack.c.h.b16 %v23
  %v189 = vunpack.c.l.b16 %v24
  %v190 = vunpack.c.h.b16 %v24
  %v191 = vunpack.c.l.b16 %v25
  %v192 = vpack.c.b16 %v187, %v187
  %v193 = vpack.c.b16 %v188, %v188
  %v194 = vpack.c.b16 %v189, %v189
  %v195 = vpack.c.b16 %v190, %v190
  %v196 = vpack.c.b16 %v191, %v191
  %v282 = vunpack.c.l.b16 %v26
  %v283 = vunpack.c.l.b16 %v27
  %v284 = vunpack.c.l.b16 %v28
  %v285 = vunpack.c.l.b16 %v29
  %v286 = vunpack.c.l.b16 %v30
  %v287 = vunpack.c.l.b16 %v31
  %v288 = vunpack.c.l.b16 %v32
  %v289 = vunpack.c.l.b16 %v33
  %v290 = vunpack.c.l.b16 %v34
  %v291 = vunpack.c.l.b16 %v35
  %v292 = vunpack.c.l.b16 %v36
  %v293 = vunpack.c.l.b16 %v37
  %v294 = vunpack.c.l.b16 %v38
  %v295 = vunpack.c.l.b16 %v39
  %v296 = vunpack.c.l.b16 %v40
  %v297 = vunpack.c.l.b16 %v41
  %v298 = vunpack.c.l.b16 %v42
  %v299 = vunpack.c.l.b16 %v43
  %v300 = vunpack.c.l.b16 %v44
  %v301 = vunpack.c.l.b16 %v45
  %v302 = vunpack.c.l.b16 %v46
  %v303 = vunpack.c.l.b16 %v47
  %v304 = vunpack.c.l.b16 %v48
  %v305 = vunpack.c.l.b16 %v49
  %v306 = vunpack.c.l.b16 %v50
  %v307 = vunpack.c.l.b16 %v51
  %v308 = vunpack.c.l.b16 %v52
  %v309 = vunpack.c.l.b16 %v53
  %v310 = vunpack.c.l.b16 %v54
  %v311 = vunpack.c.l.b16 %v55
  %v312 = vunpack.c.l.b16 %v56
  %v313 = vunpack.c.l.b16 %v57
  %v314 = vunpack.c.l.b16 %v58
  %v315 = vunpack.c.l.b16 %v59
  %v316 = vunpack.c.l.b16 %v60
  %v317 = vunpack.c.l.b16 %v61
  %v318 = vunpack.c.l.b16 %v62
  %v319 = vunpack.c.l.b16 %v63
  %v320 = vunpack.c.l.b16 %v64
  %v321 = vunpack.c.l.b16 %v65
  %v322 = vunpack.c.l.b16 %v66
  %v323 = vunpack.c.l.b16 %v67
  %v324 = vunpack.c.l.b16 %v68
  %v325 = vunpack.c.l.b16 %v69
  %v326 = vunpack.c.l.b16 %v70
  %v327 = vunpack.c.l.b16 %v71
  %v328 = vunpack.c.l.b16 %v72
  %v329 = vunpack.c.l.b16 %v73
  %v330 = vunpack.c.l.b16 %v74
  %v331 = vunpack.c.l.b16 %v75
  %v332 = vunpack.c.l.b16 %v76
  %v333 = vunpack.c.l.b16 %v77
  %v334 = vunpack.c.l.b16 %v78
  %v335 = vunpack.c.l.b16 %v79
  %v336 = vunpack.c.l.b16 %v80
  %v337 = vunpack.c.l.b16 %v81
  %v338 = vunpack.c.l.b16 %v82
  %v339 = vunpack.c.l.b16 %v83
  %v340 = vunpack.c.l.b16 %v84
  %v341 = vunpack.c.l.b16 %v85
  %v342 = vunpack.c.l.b16 %v86
  %v343 = vunpack.c.l.b16 %v87
  %v344 = vunpack.c.l.b16 %v88
  %v345 = vunpack.c.l.b16 %v89
  %v346 = vunpack.c.l.b16 %v90
  %v347 = vunpack.c.l.b16 %v91
  %v348 = vunpack.c.l.b16 %v92
  %v349 = vunpack.c.l.b16 %v93
  %v350 = vunpack.c.l.b16 %v94
  %v351 = vunpack.c.l.b16 %v95
  %v352 = vunpack.c.l.b16 %v96
  %v353 = vunpack.c.l.b16 %v97
  %v354 = vunpack.c.l.b16 %v98
  %v355 = vunpack.c.l.b16 %v99
  %v356 = vunpack.c.l.b16 %v100
  %v357 = vunpack.c.l.b16 %v101
  %v358 = vunpack.c.l.b16 %v102
  %v359 = vunpack.c.l.b16 %v103
  %v360 = vunpack.c.l.b16 %v104
  %v361 = vunpack.c.l.b16 %v105
  %v362 = vpack.c.b16 %v283, %v282
  %v363 = vpack.c.b16 %v285, %v284
  %v364 = vpack.c.b16 %v287, %v286
  %v365 = vpack.c.b16 %v289, %v288
  %v366 = vpack.c.b16 %v291, %v290
  %v367 = vpack.c.b16 %v293, %v292
  %v368 = vpack.c.b16 %v295, %v294
  %v369 = vpack.c.b16 %v297, %v296
  %v370 = vpack.c.b16 %v299, %v298
  %v371 = vpack.c.b16 %v301, %v300
  %v372 = vpack.c.b16 %v303, %v302
  %v373 = vpack.c.b16 %v305, %v304
  %v374 = vpack.c.b16 %v307, %v306
  %v375 = vpack.c.b16 %v309, %v308
  %v376 = vpack.c.b16 %v311, %v310
  %v377 = vpack.c.b16 %v313, %v312
  %v378 = vpack.c.b16 %v315, %v314
  %v379 = vpack.c.b16 %v317, %v316
  %v380 = vpack.c.b16 %v319, %v318
  %v381 = vpack.c.b16 %v321, %v320
  %v382 = vpack.c.b16 %v323, %v322
  %v383 = vpack.c.b16 %v325, %v324
  %v384 = vpack.c.b16 %v327, %v326
  %v385 = vpack.c.b16 %v329, %v328
  %v386 = vpack.c.b16 %v331, %v330
  %v387 = vpack.c.b16 %v333, %v332
  %v388 = vpack.c.b16 %v335, %v334
  %v389 = vpack.c.b16 %v337, %v336
  %v390 = vpack.c.b16 %v339, %v338
  %v391 = vpack.c.b16 %v341, %v340
  %v392 = vpack.c.b16 %v343, %v342
  %v393 = vpack.c.b16 %v345, %v344
  %v394 = vpack.c.b16 %v347, %v346
  %v395 = vpack.c.b16 %v349, %v348
  %v396 = vpack.c.b16 %v351, %v350
  %v397 = vpack.c.b16 %v353, %v352
  %v398 = vpack.c.b16 %v355, %v354
  %v399 = vpack.c.b16 %v357, %v356
  %v400 = vpack.c.b16 %v359, %v358
  %v401 = vpack.c.b16 %v361, %v360
  %442 = vmatpush.bf16.msra.mxu0 %v369
  %443 = vmatpush.bf16.msra.mxu0 %v368
  %444 = vmatpush.bf16.msra.mxu0 %v367
  %445 = vmatpush.bf16.msra.mxu0 %v366
  %446 = vmatpush.bf16.msra.mxu0 %v365
  %447 = vmatpush.bf16.msra.mxu0 %v364
  %448 = vmatpush.bf16.msra.mxu0 %v363
  %449 = vmatpush.bf16.msra.mxu0 %v362
  %450 = vmatmul.bf16.gmra.mxu0 %v192
  %v451 = vpop.f32.mrf.mxu0
  %v452 = vadd.f32 %v181, %v451
  %v453 = vpop.f32.mrf.mxu0
  %454 = vdwg.mxu0
  %455 = vmatpush.bf16.msra.mxu0 %v377
  %456 = vmatpush.bf16.msra.mxu0 %v376
  %457 = vmatpush.bf16.msra.mxu0 %v375
  %458 = vmatpush.bf16.msra.mxu0 %v374
  %459 = vmatpush.bf16.msra.mxu0 %v373
  %460 = vmatpush.bf16.msra.mxu0 %v372
  %461 = vmatpush.bf16.msra.mxu0 %v371
  %462 = vmatpush.bf16.msra.mxu0 %v370
  %463 = vmatmul.bf16.gmra.mxu0 %v193
  %v464 = vpop.f32.mrf.mxu0
  %v465 = vadd.f32 %v452, %v464
  %v466 = vpop.f32.mrf.mxu0
  %467 = vdwg.mxu0
  %468 = vmatpush.bf16.msra.mxu0 %v385
  %469 = vmatpush.bf16.msra.mxu0 %v384
  %470 = vmatpush.bf16.msra.mxu0 %v383
  %471 = vmatpush.bf16.msra.mxu0 %v382
  %472 = vmatpush.bf16.msra.mxu0 %v381
  %473 = vmatpush.bf16.msra.mxu0 %v380
  %474 = vmatpush.bf16.msra.mxu0 %v379
  %475 = vmatpush.bf16.msra.mxu0 %v378
  %476 = vmatmul.bf16.gmra.mxu0 %v194
  %v477 = vpop.f32.mrf.mxu0
  %v478 = vadd.f32 %v465, %v477
  %v479 = vpop.f32.mrf.mxu0
  %480 = vdwg.mxu0
  %481 = vmatpush.bf16.msra.mxu0 %v393
  %482 = vmatpush.bf16.msra.mxu0 %v392
  %483 = vmatpush.bf16.msra.mxu0 %v391
  %484 = vmatpush.bf16.msra.mxu0 %v390
  %485 = vmatpush.bf16.msra.mxu0 %v389
  %486 = vmatpush.bf16.msra.mxu0 %v388
  %487 = vmatpush.bf16.msra.mxu0 %v387
  %488 = vmatpush.bf16.msra.mxu0 %v386
  %489 = vmatmul.bf16.gmra.mxu0 %v195
  %v490 = vpop.f32.mrf.mxu0
  %v491 = vadd.f32 %v478, %v490
  %v492 = vpop.f32.mrf.mxu0
  %493 = vdwg.mxu0
  %494 = vmatpush.bf16.msra.mxu0 %v401
  %495 = vmatpush.bf16.msra.mxu0 %v400
  %496 = vmatpush.bf16.msra.mxu0 %v399
  %497 = vmatpush.bf16.msra.mxu0 %v398
  %498 = vmatpush.bf16.msra.mxu0 %v397
  %499 = vmatpush.bf16.msra.mxu0 %v396
  %500 = vmatpush.bf16.msra.mxu0 %v395
  %501 = vmatpush.bf16.msra.mxu0 %v394
  %502 = vmatmul.bf16.gmra.mxu0 %v196
  %v503 = vpop.f32.mrf.mxu0
  %v504 = vadd.f32 %v491, %v503
  %v505 = vpop.f32.mrf.mxu0
  %506 = vdwg.mxu0
  %v507 = vld [vmem:[%s2] sm:$0x1]
  %v509 = vperm.slane %v507, 0
  %v511 = vadd.f32 %v504, %v509
  %v512 = vld [vmem:[%s5] sm:$0x1]
  %v514 = vperm.slane %v512, 0
  %v516 = vadd.f32 %v511, %v514
  %v517 = vmax.f32 %v516, 0.0
  %v518 = vpack.c.bf16 %v517, %v517
  %519 = vst [vmem:[%s6] sm:$0xf] %v518
  // Predicated region
  $region26: #{resnet_forward.34} parent=0 // pred_check
    _
  $region27: #{resnet_forward.34} parent=0 // pred_check_branch
    %521 = sbr.rel (0) target = $region29
  $region28: #{resnet_forward.34} parent=0 // pred_region
    _
  $region29: #{resnet_forward.34} parent=0 // pred_fallthru
    _
  // Predicated region
  $region30: #{resnet_forward.34} parent=0 // pred_check
    _
  $region31: #{resnet_forward.34} parent=0 // pred_check_branch
    %523 = sbr.rel (0) target = $region33
  $region32: #{resnet_forward.34} parent=0 // pred_region
    _
  $region33: #{resnet_forward.34} parent=0 // pred_fallthru
    _

</llo_original>
